<compile_context>
chip_gen: v7x
topology: tpu7x:2x2x1
jax: 0.10.0
libtpu: 0.0.40
codegen_flags: <defaults>
</compile_context>

<pallas_src>
import jax
import jax.numpy as jnp
from jax import lax
from jax.experimental import pallas as pl
from jax.experimental.pallas import tpu as pltpu

_CP = 128       # lane-aligned channel width for the 3x3-conv activations
_OUT_PAD = 128  # lane-dense output width (sliced back to n_obj in the wrapper)


def _decoder_kernel(x_ref, w1_ref, st1_ref, w2_ref, st2_ref, w3_ref, st3_ref,
                    w4_ref, st4_ref, w5_ref, b5_ref, out_ref,
                    pad7_ref, pad3_ref):
    # x_ref:   (H, W, cin) f32        -- one batch element, NHWC
    # w1_ref:  (49*cin, 128) bf16     -- layer-1 im2col weight (compact)
    # w2_ref:  (3, 3*128, 64) bf16    -- layer-2 weight in matmul layout
    # w3_ref:  (3, 3, 64, 48) bf16    -- compact, expanded to 128 rows in-kernel
    # w4_ref:  (3, 3, 48, 48) bf16    -- compact, expanded to 128 rows in-kernel
    # w5_ref:  (48, 128) bf16, b5_ref: (1, 128) f32  (out lanes padded to 128)
    # stN_ref: (2, coutN) f32         -- [scale; shift] of folded eval-mode BN
    # out_ref: (H*W, 128) f32
    # pad7_ref: (H+6, W+6, cin) f32, pad3_ref: (H+2, W+2, 128) f32  (VMEM)
    H, W, cin = x_ref.shape
    HW = H * W
    CP = pad3_ref.shape[-1]
    K1 = pad7_ref.shape[1] - W + 1            # 7
    p1 = (K1 - 1) // 2                        # 3

    def bn_relu(acc, st_ref):
        # eval-mode BatchNorm (per-channel scale/shift) + ReLU, all in f32.
        return jnp.maximum(acc * st_ref[0:1, :] + st_ref[1:2, :], 0.0)

    # ------------------------------------------------------------- layer 1
    # 7x7 conv, cin -> 128, pad 3.  Compact im2col: all 49 taps folded into a
    # single contraction of depth 49*cin (no zero-channel padding on the MXU).
    pad7_ref[...] = jnp.zeros_like(pad7_ref)
    pad7_ref[p1:p1 + H, p1:p1 + W, :] = x_ref[...]
    rk = jnp.concatenate([pad7_ref[:, kw:kw + W, :] for kw in range(K1)],
                         axis=-1)                              # (H+6, W, 7*cin)
    im2col = jnp.concatenate([rk[kh:kh + H] for kh in range(K1)],
                             axis=-1)                          # (H, W, 49*cin)
    acc = jnp.dot(im2col.reshape(HW, K1 * K1 * cin).astype(jnp.bfloat16),
                  w1_ref[...], preferred_element_type=jnp.float32)
    act = bn_relu(acc, st1_ref)                                # (HW, 128) f32

    # ----------------------------------------------------------- layers 2..4
    # Zero only the 1-pixel halo ring, once per grid step.
    pad3_ref[0:1] = jnp.zeros((1, W + 2, CP), pad3_ref.dtype)
    pad3_ref[H + 1:H + 2] = jnp.zeros((1, W + 2, CP), pad3_ref.dtype)
    pad3_ref[:, 0:1] = jnp.zeros((H + 2, 1, CP), pad3_ref.dtype)
    pad3_ref[:, W + 1:W + 2] = jnp.zeros((H + 2, 1, CP), pad3_ref.dtype)

    def conv3(act_f32, w_kh, st_ref):
        # 3x3 conv via row-folded im2col on the 128-lane padded activation.
        c_prev = act_f32.shape[-1]
        pad3_ref[1:1 + H, 1:1 + W, :c_prev] = act_f32.reshape(H, W, c_prev)
        rowcat = jnp.concatenate(
            [pad3_ref[:, kw:kw + W, :] for kw in range(3)],
            axis=-1).astype(jnp.bfloat16)                      # one cast / layer
        acc = jnp.dot(rowcat[0:H].reshape(HW, 3 * CP), w_kh[0],
                      preferred_element_type=jnp.float32)
        for kh in (1, 2):
            acc = acc + jnp.dot(rowcat[kh:kh + H].reshape(HW, 3 * CP), w_kh[kh],
                                preferred_element_type=jnp.float32)
        return bn_relu(acc, st_ref)

    def expand_w(w_ref):
        # (3, 3, cin_real, cout) compact weight -> (3, 3*CP, cout) with zero
        # rows for the padded / stale input lanes (aligned concat in VMEM).
        _, _, ci, co = w_ref.shape
        wz = jnp.concatenate(
            [w_ref[...], jnp.zeros((3, 3, CP - ci, co), jnp.bfloat16)], axis=2)
        return wz.reshape(3, 3 * CP, co)

    # layer 2: 128 -> 64 (cin already == CP; weight ships in matmul layout)
    act = conv3(act, [w2_ref[k] for k in range(3)], st2_ref)
    # layer 3: 64 -> 48
    w3p = expand_w(w3_ref)
    act = conv3(act, [w3p[k] for k in range(3)], st3_ref)
    # layer 4: 48 -> 48
    w4p = expand_w(w4_ref)
    act = conv3(act, [w4p[k] for k in range(3)], st4_ref)

    # ------------------------------------------------------------- layer 5
    # 1x1 conv, 48 -> n_obj, bias.  Output lanes padded to 128 => dense vst.
    out_ref[...] = (jnp.dot(act.astype(jnp.bfloat16), w5_ref[...],
                            preferred_element_type=jnp.float32) + b5_ref[...])


def _fold_bn(gamma, beta, mean, var, eps=1e-5):
    s = gamma / jnp.sqrt(var + eps)
    t = beta - mean * s
    return s, t


def decoder_forward(params, memory_nchw):
    """memory_nchw: (N, feat_dim, H, W) -> (N, n_obj_classes, H, W)."""
    N, cin, H, W = memory_nchw.shape
    HW = H * W
    x = jnp.transpose(memory_nchw, (0, 2, 3, 1)).astype(jnp.float32)  # NHWC

    # Compact bf16 weights in matmul (im2col) layout -- no channel padding in
    # HBM.  BN scale/shift stay as small separate f32 arrays.
    c1 = params["w1"].shape[-1]                       # 128
    c2 = params["w2"].shape[-1]                       # 64
    c3 = params["w3"].shape[-1]                       # 48
    c4 = params["w4"].shape[-1]                       # 48
    w1 = params["w1"].reshape(7 * 7 * cin, c1).astype(jnp.bfloat16)
    w2 = params["w2"].reshape(3, 3 * _CP, c2).astype(jnp.bfloat16)
    w3 = params["w3"].astype(jnp.bfloat16)            # (3, 3, 64, 48)
    w4 = params["w4"].astype(jnp.bfloat16)            # (3, 3, 48, 48)
    st1 = jnp.stack([params["s1"], params["t1"]]).astype(jnp.float32)
    st2 = jnp.stack([params["s2"], params["t2"]]).astype(jnp.float32)
    st3 = jnp.stack([params["s3"], params["t3"]]).astype(jnp.float32)
    st4 = jnp.stack([params["s4"], params["t4"]]).astype(jnp.float32)
    n_obj = params["b5"].shape[0]
    c5 = params["w5"].shape[2]
    w5 = jnp.pad(params["w5"].reshape(c5, n_obj),
                 ((0, 0), (0, _OUT_PAD - n_obj))).astype(jnp.bfloat16)
    b5 = jnp.pad(params["b5"],
                 (0, _OUT_PAD - n_obj)).reshape(1, _OUT_PAD).astype(jnp.float32)

    flops = 2 * N * HW * (49 * cin * c1 + 3 * _CP * (c2 + c3 + c4)
                          + c4 * _OUT_PAD)
    bytes_accessed = sum(int(a.size) * a.dtype.itemsize
                         for a in (x, w1, st1, w2, st2, w3, st3, w4, st4, w5, b5))
    bytes_accessed += N * HW * _OUT_PAD * 4

    out = pl.pallas_call(
        _decoder_kernel,
        out_shape=jax.ShapeDtypeStruct((N, HW, _OUT_PAD), jnp.float32),
        grid_spec=pltpu.PrefetchScalarGridSpec(
            num_scalar_prefetch=0,
            grid=(N,),
            in_specs=[
                pl.BlockSpec((None, H, W, cin), lambda b: (b, 0, 0, 0)),
                pl.BlockSpec(w1.shape, lambda b: (0, 0)),
                pl.BlockSpec(st1.shape, lambda b: (0, 0)),
                pl.BlockSpec(w2.shape, lambda b: (0, 0, 0)),
                pl.BlockSpec(st2.shape, lambda b: (0, 0)),
                pl.BlockSpec(w3.shape, lambda b: (0, 0, 0, 0)),
                pl.BlockSpec(st3.shape, lambda b: (0, 0)),
                pl.BlockSpec(w4.shape, lambda b: (0, 0, 0, 0)),
                pl.BlockSpec(st4.shape, lambda b: (0, 0)),
                pl.BlockSpec(w5.shape, lambda b: (0, 0)),
                pl.BlockSpec(b5.shape, lambda b: (0, 0)),
            ],
            out_specs=pl.BlockSpec((None, HW, _OUT_PAD), lambda b: (b, 0, 0)),
            scratch_shapes=[
                pltpu.VMEM((H + 6, W + 6, cin), jnp.float32),   # 7x7 halo buf
                pltpu.VMEM((H + 2, W + 2, _CP), jnp.float32),   # 3x3 halo buf
            ],
        ),
        compiler_params=pltpu.CompilerParams(
            dimension_semantics=("parallel",),
        ),
        cost_estimate=pl.CostEstimate(
            flops=flops, transcendentals=0, bytes_accessed=bytes_accessed),
    )(x, w1, st1, w2, st2, w3, st3, w4, st4, w5, b5)

    # (N, H*W, 128) -> slice real classes -> (N, n_obj, H, W) NCHW like PyTorch.
    return jnp.transpose(out[:, :, :n_obj], (0, 2, 1)).reshape(N, n_obj, H, W)


def init_decoder_params(key, feat_dim, n_obj_classes):
    """Deterministic synthetic parameters matching the module's shapes."""
    keys = jax.random.split(key, 16)
    p = {}

    def conv_w(k, kh, cin, cout):
        return 0.05 * jax.random.normal(k, (kh, kh, cin, cout), jnp.float32)

    def bn(k, c):
        k1, k2, k3 = jax.random.split(k, 3)
        gamma = 1.0 + 0.1 * jax.random.normal(k1, (c,), jnp.float32)
        beta = 0.1 * jax.random.normal(k2, (c,), jnp.float32)
        mean = 0.05 * jax.random.normal(k3, (c,), jnp.float32)
        var = jnp.ones((c,), jnp.float32)
        return _fold_bn(gamma, beta, mean, var)

    # self.layer
    p["w1"] = conv_w(keys[0], 7, feat_dim, 128)
    p["s1"], p["t1"] = bn(keys[1], 128)
    p["w2"] = conv_w(keys[2], 3, 128, 64)
    p["s2"], p["t2"] = bn(keys[3], 64)
    p["w3"] = conv_w(keys[4], 3, 64, 48)
    p["s3"], p["t3"] = bn(keys[5], 48)
    # self.obj_layer
    p["w4"] = conv_w(keys[6], 3, 48, 48)
    p["s4"], p["t4"] = bn(keys[7], 48)
    p["w5"] = conv_w(keys[8], 1, 48, n_obj_classes)
    p["b5"] = 0.05 * jax.random.normal(keys[9], (n_obj_classes,), jnp.float32)
    return p


def _reference_forward(params, memory_nchw):
    """Pure-JAX f32 reference (eval-mode BN folded into scale/shift)."""
    x = jnp.transpose(memory_nchw, (0, 2, 3, 1)).astype(jnp.float32)

    def conv(v, w, p):
        return lax.conv_general_dilated(
            v, w, window_strides=(1, 1), padding=[(p, p), (p, p)],
            dimension_numbers=("NHWC", "HWIO", "NHWC"),
            precision=lax.Precision.HIGHEST)

    y = jnp.maximum(conv(x, params["w1"], 3) * params["s1"] + params["t1"], 0.0)
    y = jnp.maximum(conv(y, params["w2"], 1) * params["s2"] + params["t2"], 0.0)
    y = jnp.maximum(conv(y, params["w3"], 1) * params["s3"] + params["t3"], 0.0)
    y = jnp.maximum(conv(y, params["w4"], 1) * params["s4"] + params["t4"], 0.0)
    y = conv(y, params["w5"], 0) + params["b5"]
    return jnp.transpose(y, (0, 3, 1, 2))


if __name__ == "__main__":
    key = jax.random.PRNGKey(0)
    k_param, k_in = jax.random.split(key)

    N, feat_dim, H, W = 2, 4, 16, 16
    n_obj_classes = 8

    params = init_decoder_params(k_param, feat_dim, n_obj_classes)
    memory = jax.random.normal(k_in, (N, feat_dim, H, W), jnp.float32)

    out = jax.jit(decoder_forward)(params, memory)
    out = jax.block_until_ready(out)

    assert out.shape == (N, n_obj_classes, H, W), out.shape
    assert out.dtype == jnp.float32
    assert bool(jnp.all(jnp.isfinite(out)))

    # bf16 matmul operands / f32 accumulation + f32 BN => loose abs tolerance.
    ref = _reference_forward(params, memory)
    max_err = float(jnp.max(jnp.abs(out - ref)))
    assert max_err < 2e-1, f"max abs error vs f32 reference: {max_err}"

    print("KERNEL_OK")
</pallas_src>

<mosaic_0001>
module attributes {stable_mosaic.version = 11 : i64} {
  func.func @_decoder_kernel(%arg0: i32, %arg1: memref<1x16x16x4xf32, #tpu.memory_space<vmem>>, %arg2: memref<196x128xbf16, #tpu.memory_space<vmem>>, %arg3: memref<2x128xf32, #tpu.memory_space<vmem>>, %arg4: memref<3x384x64xbf16, #tpu.memory_space<vmem>>, %arg5: memref<2x64xf32, #tpu.memory_space<vmem>>, %arg6: memref<3x3x64x48xbf16, #tpu.memory_space<vmem>>, %arg7: memref<2x48xf32, #tpu.memory_space<vmem>>, %arg8: memref<3x3x48x48xbf16, #tpu.memory_space<vmem>>, %arg9: memref<2x48xf32, #tpu.memory_space<vmem>>, %arg10: memref<48x128xbf16, #tpu.memory_space<vmem>>, %arg11: memref<1x128xf32, #tpu.memory_space<vmem>>, %arg12: memref<1x256x128xf32, #tpu.memory_space<vmem>>, %arg13: memref<22x22x4xf32, #tpu.memory_space<vmem>>, %arg14: memref<18x18x128xf32, #tpu.memory_space<vmem>>) attributes {dimension_semantics = [#tpu.dimension_semantics<parallel>], iteration_bounds = array<i64: 2>, scalar_prefetch = 0 : i64, scratch_operands = 2 : i64, tpu.core_type = #tpu.core_type<tc>, window_params = [{transform_indices = @transform_0, window_bounds = array<i64: 1, 16, 16, 4>}, {pipeline_mode = #tpu.pipeline_mode<synchronous>, transform_indices = @transform_1, window_bounds = array<i64: 196, 128>}, {pipeline_mode = #tpu.pipeline_mode<synchronous>, transform_indices = @transform_2, window_bounds = array<i64: 2, 128>}, {pipeline_mode = #tpu.pipeline_mode<synchronous>, transform_indices = @transform_3, window_bounds = array<i64: 3, 384, 64>}, {pipeline_mode = #tpu.pipeline_mode<synchronous>, transform_indices = @transform_4, window_bounds = array<i64: 2, 64>}, {pipeline_mode = #tpu.pipeline_mode<synchronous>, transform_indices = @transform_5, window_bounds = array<i64: 3, 3, 64, 48>}, {pipeline_mode = #tpu.pipeline_mode<synchronous>, transform_indices = @transform_6, window_bounds = array<i64: 2, 48>}, {pipeline_mode = #tpu.pipeline_mode<synchronous>, transform_indices = @transform_7, window_bounds = array<i64: 3, 3, 48, 48>}, {pipeline_mode = #tpu.pipeline_mode<synchronous>, transform_indices = @transform_8, window_bounds = array<i64: 2, 48>}, {pipeline_mode = #tpu.pipeline_mode<synchronous>, transform_indices = @transform_9, window_bounds = array<i64: 48, 128>}, {pipeline_mode = #tpu.pipeline_mode<synchronous>, transform_indices = @transform_10, window_bounds = array<i64: 1, 128>}, {transform_indices = @transform_11, window_bounds = array<i64: 1, 256, 128>}]} {
    %cst = arith.constant 0.000000e+00 : f32
    %0 = vector.broadcast %cst : f32 to vector<22x22x4xf32>
    %c0 = arith.constant 0 : index
    %c0_0 = arith.constant 0 : index
    %c0_1 = arith.constant 0 : index
    %1 = vector.load %arg13[%c0, %c0_0, %c0_1] : memref<22x22x4xf32, #tpu.memory_space<vmem>>, vector<22x22x4xf32>
    tpu.vector_store %arg13[%c0, %c0_0, %c0_1], %0 {strides = array<i32>} : memref<22x22x4xf32, #tpu.memory_space<vmem>>, vector<22x22x4xf32>,
    %c0_2 = arith.constant 0 : index
    %c0_3 = arith.constant 0 : index
    %c0_4 = arith.constant 0 : index
    %c0_5 = arith.constant 0 : index
    %2 = vector.load %arg1[%c0_2, %c0_3, %c0_4, %c0_5] : memref<1x16x16x4xf32, #tpu.memory_space<vmem>>, vector<1x16x16x4xf32>
    %3 = vector.shape_cast %2 : vector<1x16x16x4xf32> to vector<16x16x4xf32>
    %c3 = arith.constant 3 : index
    %c3_6 = arith.constant 3 : index
    %c0_7 = arith.constant 0 : index
    %4 = vector.load %arg13[%c3, %c3_6, %c0_7] : memref<22x22x4xf32, #tpu.memory_space<vmem>>, vector<16x16x4xf32>
    tpu.vector_store %arg13[%c3, %c3_6, %c0_7], %3 {strides = array<i32>} : memref<22x22x4xf32, #tpu.memory_space<vmem>>, vector<16x16x4xf32>,
    %c0_8 = arith.constant 0 : index
    %c0_9 = arith.constant 0 : index
    %c0_10 = arith.constant 0 : index
    %5 = vector.load %arg13[%c0_8, %c0_9, %c0_10] : memref<22x22x4xf32, #tpu.memory_space<vmem>>, vector<22x16x4xf32>
    %c0_11 = arith.constant 0 : index
    %c1 = arith.constant 1 : index
    %c0_12 = arith.constant 0 : index
    %6 = vector.load %arg13[%c0_11, %c1, %c0_12] : memref<22x22x4xf32, #tpu.memory_space<vmem>>, vector<22x16x4xf32>
    %c0_13 = arith.constant 0 : index
    %c2 = arith.constant 2 : index
    %c0_14 = arith.constant 0 : index
    %7 = vector.load %arg13[%c0_13, %c2, %c0_14] : memref<22x22x4xf32, #tpu.memory_space<vmem>>, vector<22x16x4xf32>
    %c0_15 = arith.constant 0 : index
    %c3_16 = arith.constant 3 : index
    %c0_17 = arith.constant 0 : index
    %8 = vector.load %arg13[%c0_15, %c3_16, %c0_17] : memref<22x22x4xf32, #tpu.memory_space<vmem>>, vector<22x16x4xf32>
    %c0_18 = arith.constant 0 : index
    %c4 = arith.constant 4 : index
    %c0_19 = arith.constant 0 : index
    %9 = vector.load %arg13[%c0_18, %c4, %c0_19] : memref<22x22x4xf32, #tpu.memory_space<vmem>>, vector<22x16x4xf32>
    %c0_20 = arith.constant 0 : index
    %c5 = arith.constant 5 : index
    %c0_21 = arith.constant 0 : index
    %10 = vector.load %arg13[%c0_20, %c5, %c0_21] : memref<22x22x4xf32, #tpu.memory_space<vmem>>, vector<22x16x4xf32>
    %c0_22 = arith.constant 0 : index
    %c6 = arith.constant 6 : index
    %c0_23 = arith.constant 0 : index
    %11 = vector.load %arg13[%c0_22, %c6, %c0_23] : memref<22x22x4xf32, #tpu.memory_space<vmem>>, vector<22x16x4xf32>
    %12 = tpu.concatenate %5, %6, %7, %8, %9, %10, %11 in 2 : vector<22x16x4xf32>, vector<22x16x4xf32>, vector<22x16x4xf32>, vector<22x16x4xf32>, vector<22x16x4xf32>, vector<22x16x4xf32>, vector<22x16x4xf32> -> vector<22x16x28xf32>
    %13 = vector.extract_strided_slice %12 {offsets = [0, 0, 0], sizes = [16, 16, 28], strides = [1, 1, 1]} : vector<22x16x28xf32> to vector<16x16x28xf32>
    %14 = vector.extract_strided_slice %12 {offsets = [1, 0, 0], sizes = [16, 16, 28], strides = [1, 1, 1]} : vector<22x16x28xf32> to vector<16x16x28xf32>
    %15 = vector.extract_strided_slice %12 {offsets = [2, 0, 0], sizes = [16, 16, 28], strides = [1, 1, 1]} : vector<22x16x28xf32> to vector<16x16x28xf32>
    %16 = vector.extract_strided_slice %12 {offsets = [3, 0, 0], sizes = [16, 16, 28], strides = [1, 1, 1]} : vector<22x16x28xf32> to vector<16x16x28xf32>
    %17 = vector.extract_strided_slice %12 {offsets = [4, 0, 0], sizes = [16, 16, 28], strides = [1, 1, 1]} : vector<22x16x28xf32> to vector<16x16x28xf32>
    %18 = vector.extract_strided_slice %12 {offsets = [5, 0, 0], sizes = [16, 16, 28], strides = [1, 1, 1]} : vector<22x16x28xf32> to vector<16x16x28xf32>
    %19 = vector.extract_strided_slice %12 {offsets = [6, 0, 0], sizes = [16, 16, 28], strides = [1, 1, 1]} : vector<22x16x28xf32> to vector<16x16x28xf32>
    %20 = tpu.concatenate %13, %14, %15, %16, %17, %18, %19 in 2 : vector<16x16x28xf32>, vector<16x16x28xf32>, vector<16x16x28xf32>, vector<16x16x28xf32>, vector<16x16x28xf32>, vector<16x16x28xf32>, vector<16x16x28xf32> -> vector<16x16x196xf32>
    %21 = vector.shape_cast %20 : vector<16x16x196xf32> to vector<256x196xf32>
    %22 = arith.truncf %21 : vector<256x196xf32> to vector<256x196xbf16>
    %c0_24 = arith.constant 0 : index
    %c0_25 = arith.constant 0 : index
    %23 = vector.load %arg2[%c0_24, %c0_25] : memref<196x128xbf16, #tpu.memory_space<vmem>>, vector<196x128xbf16>
    %cst_26 = arith.constant dense<0.000000e+00> : vector<256x128xf32>
    %24 = tpu.matmul %22, %23, %cst_26 {dimension_numbers = #tpu.dot_dimension_numbers<[1], [0], [0], [1], [0, 0, 1, 1], [], []>} : vector<256x196xbf16>, vector<196x128xbf16>, vector<256x128xf32> -> vector<256x128xf32>
    %c0_27 = arith.constant 0 : index
    %c0_28 = arith.constant 0 : index
    %25 = vector.load %arg3[%c0_27, %c0_28] : memref<2x128xf32, #tpu.memory_space<vmem>>, vector<1x128xf32>
    %26 = vector.broadcast %25 : vector<1x128xf32> to vector<256x128xf32>
    %27 = arith.mulf %24, %26 : vector<256x128xf32>
    %c1_29 = arith.constant 1 : index
    %c0_30 = arith.constant 0 : index
    %28 = vector.load %arg3[%c1_29, %c0_30] : memref<2x128xf32, #tpu.memory_space<vmem>>, vector<1x128xf32>
    %29 = vector.broadcast %28 : vector<1x128xf32> to vector<256x128xf32>
    %30 = arith.addf %27, %29 : vector<256x128xf32>
    %cst_31 = arith.constant 0.000000e+00 : f32
    %31 = vector.broadcast %cst_31 : f32 to vector<256x128xf32>
    %32 = arith.maximumf %30, %31 : vector<256x128xf32>
    %cst_32 = arith.constant 0.000000e+00 : f32
    %33 = vector.broadcast %cst_32 : f32 to vector<1x18x128xf32>
    %c0_33 = arith.constant 0 : index
    %c0_34 = arith.constant 0 : index
    %c0_35 = arith.constant 0 : index
    %34 = vector.load %arg14[%c0_33, %c0_34, %c0_35] : memref<18x18x128xf32, #tpu.memory_space<vmem>>, vector<1x18x128xf32>
    tpu.vector_store %arg14[%c0_33, %c0_34, %c0_35], %33 {strides = array<i32>} : memref<18x18x128xf32, #tpu.memory_space<vmem>>, vector<1x18x128xf32>,
    %cst_36 = arith.constant 0.000000e+00 : f32
    %35 = vector.broadcast %cst_36 : f32 to vector<1x18x128xf32>
    %c17 = arith.constant 17 : index
    %c0_37 = arith.constant 0 : index
    %c0_38 = arith.constant 0 : index
    %36 = vector.load %arg14[%c17, %c0_37, %c0_38] : memref<18x18x128xf32, #tpu.memory_space<vmem>>, vector<1x18x128xf32>
    tpu.vector_store %arg14[%c17, %c0_37, %c0_38], %35 {strides = array<i32>} : memref<18x18x128xf32, #tpu.memory_space<vmem>>, vector<1x18x128xf32>,
    %cst_39 = arith.constant 0.000000e+00 : f32
    %37 = vector.broadcast %cst_39 : f32 to vector<18x1x128xf32>
    %c0_40 = arith.constant 0 : index
    %c0_41 = arith.constant 0 : index
    %c0_42 = arith.constant 0 : index
    %38 = vector.load %arg14[%c0_40, %c0_41, %c0_42] : memref<18x18x128xf32, #tpu.memory_space<vmem>>, vector<18x1x128xf32>
    tpu.vector_store %arg14[%c0_40, %c0_41, %c0_42], %37 {strides = array<i32>} : memref<18x18x128xf32, #tpu.memory_space<vmem>>, vector<18x1x128xf32>,
    %cst_43 = arith.constant 0.000000e+00 : f32
    %39 = vector.broadcast %cst_43 : f32 to vector<18x1x128xf32>
    %c0_44 = arith.constant 0 : index
    %c17_45 = arith.constant 17 : index
    %c0_46 = arith.constant 0 : index
    %40 = vector.load %arg14[%c0_44, %c17_45, %c0_46] : memref<18x18x128xf32, #tpu.memory_space<vmem>>, vector<18x1x128xf32>
    tpu.vector_store %arg14[%c0_44, %c17_45, %c0_46], %39 {strides = array<i32>} : memref<18x18x128xf32, #tpu.memory_space<vmem>>, vector<18x1x128xf32>,
    %c0_47 = arith.constant 0 : index
    %c0_48 = arith.constant 0 : index
    %c0_49 = arith.constant 0 : index
    %41 = vector.load %arg4[%c0_47, %c0_48, %c0_49] : memref<3x384x64xbf16, #tpu.memory_space<vmem>>, vector<1x384x64xbf16>
    %42 = vector.shape_cast %41 : vector<1x384x64xbf16> to vector<384x64xbf16>
    %c1_50 = arith.constant 1 : index
    %c0_51 = arith.constant 0 : index
    %c0_52 = arith.constant 0 : index
    %43 = vector.load %arg4[%c1_50, %c0_51, %c0_52] : memref<3x384x64xbf16, #tpu.memory_space<vmem>>, vector<1x384x64xbf16>
    %44 = vector.shape_cast %43 : vector<1x384x64xbf16> to vector<384x64xbf16>
    %c2_53 = arith.constant 2 : index
    %c0_54 = arith.constant 0 : index
    %c0_55 = arith.constant 0 : index
    %45 = vector.load %arg4[%c2_53, %c0_54, %c0_55] : memref<3x384x64xbf16, #tpu.memory_space<vmem>>, vector<1x384x64xbf16>
    %46 = vector.shape_cast %45 : vector<1x384x64xbf16> to vector<384x64xbf16>
    %47 = vector.shape_cast %32 : vector<256x128xf32> to vector<16x16x128xf32>
    %c1_56 = arith.constant 1 : index
    %c1_57 = arith.constant 1 : index
    %c0_58 = arith.constant 0 : index
    %48 = vector.load %arg14[%c1_56, %c1_57, %c0_58] : memref<18x18x128xf32, #tpu.memory_space<vmem>>, vector<16x16x128xf32>
    tpu.vector_store %arg14[%c1_56, %c1_57, %c0_58], %47 {strides = array<i32>} : memref<18x18x128xf32, #tpu.memory_space<vmem>>, vector<16x16x128xf32>,
    %c0_59 = arith.constant 0 : index
    %c0_60 = arith.constant 0 : index
    %c0_61 = arith.constant 0 : index
    %49 = vector.load %arg14[%c0_59, %c0_60, %c0_61] : memref<18x18x128xf32, #tpu.memory_space<vmem>>, vector<18x16x128xf32>
    %c0_62 = arith.constant 0 : index
    %c1_63 = arith.constant 1 : index
    %c0_64 = arith.constant 0 : index
    %50 = vector.load %arg14[%c0_62, %c1_63, %c0_64] : memref<18x18x128xf32, #tpu.memory_space<vmem>>, vector<18x16x128xf32>
    %c0_65 = arith.constant 0 : index
    %c2_66 = arith.constant 2 : index
    %c0_67 = arith.constant 0 : index
    %51 = vector.load %arg14[%c0_65, %c2_66, %c0_67] : memref<18x18x128xf32, #tpu.memory_space<vmem>>, vector<18x16x128xf32>
    %52 = tpu.concatenate %49, %50, %51 in 2 : vector<18x16x128xf32>, vector<18x16x128xf32>, vector<18x16x128xf32> -> vector<18x16x384xf32>
    %53 = arith.truncf %52 : vector<18x16x384xf32> to vector<18x16x384xbf16>
    %54 = vector.extract_strided_slice %53 {offsets = [0, 0, 0], sizes = [16, 16, 384], strides = [1, 1, 1]} : vector<18x16x384xbf16> to vector<16x16x384xbf16>
    %55 = vector.shape_cast %54 : vector<16x16x384xbf16> to vector<256x384xbf16>
    %cst_68 = arith.constant dense<0.000000e+00> : vector<256x64xf32>
    %56 = tpu.matmul %55, %42, %cst_68 {dimension_numbers = #tpu.dot_dimension_numbers<[1], [0], [0], [1], [0, 0, 1, 1], [], []>} : vector<256x384xbf16>, vector<384x64xbf16>, vector<256x64xf32> -> vector<256x64xf32>
    %57 = vector.extract_strided_slice %53 {offsets = [1, 0, 0], sizes = [16, 16, 384], strides = [1, 1, 1]} : vector<18x16x384xbf16> to vector<16x16x384xbf16>
    %58 = vector.shape_cast %57 : vector<16x16x384xbf16> to vector<256x384xbf16>
    %cst_69 = arith.constant dense<0.000000e+00> : vector<256x64xf32>
    %59 = tpu.matmul %58, %44, %cst_69 {dimension_numbers = #tpu.dot_dimension_numbers<[1], [0], [0], [1], [0, 0, 1, 1], [], []>} : vector<256x384xbf16>, vector<384x64xbf16>, vector<256x64xf32> -> vector<256x64xf32>
    %60 = arith.addf %56, %59 : vector<256x64xf32>
    %61 = vector.extract_strided_slice %53 {offsets = [2, 0, 0], sizes = [16, 16, 384], strides = [1, 1, 1]} : vector<18x16x384xbf16> to vector<16x16x384xbf16>
    %62 = vector.shape_cast %61 : vector<16x16x384xbf16> to vector<256x384xbf16>
    %cst_70 = arith.constant dense<0.000000e+00> : vector<256x64xf32>
    %63 = tpu.matmul %62, %46, %cst_70 {dimension_numbers = #tpu.dot_dimension_numbers<[1], [0], [0], [1], [0, 0, 1, 1], [], []>} : vector<256x384xbf16>, vector<384x64xbf16>, vector<256x64xf32> -> vector<256x64xf32>
    %64 = arith.addf %60, %63 : vector<256x64xf32>
    %c0_71 = arith.constant 0 : index
    %c0_72 = arith.constant 0 : index
    %65 = vector.load %arg5[%c0_71, %c0_72] : memref<2x64xf32, #tpu.memory_space<vmem>>, vector<1x64xf32>
    %66 = vector.broadcast %65 : vector<1x64xf32> to vector<256x64xf32>
    %67 = arith.mulf %64, %66 : vector<256x64xf32>
    %c1_73 = arith.constant 1 : index
    %c0_74 = arith.constant 0 : index
    %68 = vector.load %arg5[%c1_73, %c0_74] : memref<2x64xf32, #tpu.memory_space<vmem>>, vector<1x64xf32>
    %69 = vector.broadcast %68 : vector<1x64xf32> to vector<256x64xf32>
    %70 = arith.addf %67, %69 : vector<256x64xf32>
    %cst_75 = arith.constant 0.000000e+00 : f32
    %71 = vector.broadcast %cst_75 : f32 to vector<256x64xf32>
    %72 = arith.maximumf %70, %71 : vector<256x64xf32>
    %c0_76 = arith.constant 0 : index
    %c0_77 = arith.constant 0 : index
    %c0_78 = arith.constant 0 : index
    %c0_79 = arith.constant 0 : index
    %73 = vector.load %arg6[%c0_76, %c0_77, %c0_78, %c0_79] : memref<3x3x64x48xbf16, #tpu.memory_space<vmem>>, vector<3x3x64x48xbf16>
    %cst_80 = arith.constant 0.000000e+00 : bf16
    %74 = vector.broadcast %cst_80 : bf16 to vector<3x3x64x48xbf16>
    %75 = tpu.concatenate %73, %74 in 2 : vector<3x3x64x48xbf16>, vector<3x3x64x48xbf16> -> vector<3x3x128x48xbf16>
    %76 = vector.shape_cast %75 : vector<3x3x128x48xbf16> to vector<3x384x48xbf16>
    %77 = vector.extract_strided_slice %76 {offsets = [0, 0, 0], sizes = [1, 384, 48], strides = [1, 1, 1]} : vector<3x384x48xbf16> to vector<1x384x48xbf16>
    %78 = vector.shape_cast %77 : vector<1x384x48xbf16> to vector<384x48xbf16>
    %79 = vector.extract_strided_slice %76 {offsets = [1, 0, 0], sizes = [1, 384, 48], strides = [1, 1, 1]} : vector<3x384x48xbf16> to vector<1x384x48xbf16>
    %80 = vector.shape_cast %79 : vector<1x384x48xbf16> to vector<384x48xbf16>
    %81 = vector.extract_strided_slice %76 {offsets = [2, 0, 0], sizes = [1, 384, 48], strides = [1, 1, 1]} : vector<3x384x48xbf16> to vector<1x384x48xbf16>
    %82 = vector.shape_cast %81 : vector<1x384x48xbf16> to vector<384x48xbf16>
    %83 = vector.shape_cast %72 : vector<256x64xf32> to vector<16x16x64xf32>
    %c1_81 = arith.constant 1 : index
    %c1_82 = arith.constant 1 : index
    %c0_83 = arith.constant 0 : index
    %84 = vector.load %arg14[%c1_81, %c1_82, %c0_83] : memref<18x18x128xf32, #tpu.memory_space<vmem>>, vector<16x16x64xf32>
    tpu.vector_store %arg14[%c1_81, %c1_82, %c0_83], %83 {strides = array<i32>} : memref<18x18x128xf32, #tpu.memory_space<vmem>>, vector<16x16x64xf32>,
    %c0_84 = arith.constant 0 : index
    %c0_85 = arith.constant 0 : index
    %c0_86 = arith.constant 0 : index
    %85 = vector.load %arg14[%c0_84, %c0_85, %c0_86] : memref<18x18x128xf32, #tpu.memory_space<vmem>>, vector<18x16x128xf32>
    %c0_87 = arith.constant 0 : index
    %c1_88 = arith.constant 1 : index
    %c0_89 = arith.constant 0 : index
    %86 = vector.load %arg14[%c0_87, %c1_88, %c0_89] : memref<18x18x128xf32, #tpu.memory_space<vmem>>, vector<18x16x128xf32>
    %c0_90 = arith.constant 0 : index
    %c2_91 = arith.constant 2 : index
    %c0_92 = arith.constant 0 : index
    %87 = vector.load %arg14[%c0_90, %c2_91, %c0_92] : memref<18x18x128xf32, #tpu.memory_space<vmem>>, vector<18x16x128xf32>
    %88 = tpu.concatenate %85, %86, %87 in 2 : vector<18x16x128xf32>, vector<18x16x128xf32>, vector<18x16x128xf32> -> vector<18x16x384xf32>
    %89 = arith.truncf %88 : vector<18x16x384xf32> to vector<18x16x384xbf16>
    %90 = vector.extract_strided_slice %89 {offsets = [0, 0, 0], sizes = [16, 16, 384], strides = [1, 1, 1]} : vector<18x16x384xbf16> to vector<16x16x384xbf16>
    %91 = vector.shape_cast %90 : vector<16x16x384xbf16> to vector<256x384xbf16>
    %cst_93 = arith.constant dense<0.000000e+00> : vector<256x48xf32>
    %92 = tpu.matmul %91, %78, %cst_93 {dimension_numbers = #tpu.dot_dimension_numbers<[1], [0], [0], [1], [0, 0, 1, 1], [], []>} : vector<256x384xbf16>, vector<384x48xbf16>, vector<256x48xf32> -> vector<256x48xf32>
    %93 = vector.extract_strided_slice %89 {offsets = [1, 0, 0], sizes = [16, 16, 384], strides = [1, 1, 1]} : vector<18x16x384xbf16> to vector<16x16x384xbf16>
    %94 = vector.shape_cast %93 : vector<16x16x384xbf16> to vector<256x384xbf16>
    %cst_94 = arith.constant dense<0.000000e+00> : vector<256x48xf32>
    %95 = tpu.matmul %94, %80, %cst_94 {dimension_numbers = #tpu.dot_dimension_numbers<[1], [0], [0], [1], [0, 0, 1, 1], [], []>} : vector<256x384xbf16>, vector<384x48xbf16>, vector<256x48xf32> -> vector<256x48xf32>
    %96 = arith.addf %92, %95 : vector<256x48xf32>
    %97 = vector.extract_strided_slice %89 {offsets = [2, 0, 0], sizes = [16, 16, 384], strides = [1, 1, 1]} : vector<18x16x384xbf16> to vector<16x16x384xbf16>
    %98 = vector.shape_cast %97 : vector<16x16x384xbf16> to vector<256x384xbf16>
    %cst_95 = arith.constant dense<0.000000e+00> : vector<256x48xf32>
    %99 = tpu.matmul %98, %82, %cst_95 {dimension_numbers = #tpu.dot_dimension_numbers<[1], [0], [0], [1], [0, 0, 1, 1], [], []>} : vector<256x384xbf16>, vector<384x48xbf16>, vector<256x48xf32> -> vector<256x48xf32>
    %100 = arith.addf %96, %99 : vector<256x48xf32>
    %c0_96 = arith.constant 0 : index
    %c0_97 = arith.constant 0 : index
    %101 = vector.load %arg7[%c0_96, %c0_97] : memref<2x48xf32, #tpu.memory_space<vmem>>, vector<1x48xf32>
    %102 = vector.broadcast %101 : vector<1x48xf32> to vector<256x48xf32>
    %103 = arith.mulf %100, %102 : vector<256x48xf32>
    %c1_98 = arith.constant 1 : index
    %c0_99 = arith.constant 0 : index
    %104 = vector.load %arg7[%c1_98, %c0_99] : memref<2x48xf32, #tpu.memory_space<vmem>>, vector<1x48xf32>
    %105 = vector.broadcast %104 : vector<1x48xf32> to vector<256x48xf32>
    %106 = arith.addf %103, %105 : vector<256x48xf32>
    %cst_100 = arith.constant 0.000000e+00 : f32
    %107 = vector.broadcast %cst_100 : f32 to vector<256x48xf32>
    %108 = arith.maximumf %106, %107 : vector<256x48xf32>
    %c0_101 = arith.constant 0 : index
    %c0_102 = arith.constant 0 : index
    %c0_103 = arith.constant 0 : index
    %c0_104 = arith.constant 0 : index
    %109 = vector.load %arg8[%c0_101, %c0_102, %c0_103, %c0_104] : memref<3x3x48x48xbf16, #tpu.memory_space<vmem>>, vector<3x3x48x48xbf16>
    %cst_105 = arith.constant 0.000000e+00 : bf16
    %110 = vector.broadcast %cst_105 : bf16 to vector<3x3x80x48xbf16>
    %111 = tpu.concatenate %109, %110 in 2 : vector<3x3x48x48xbf16>, vector<3x3x80x48xbf16> -> vector<3x3x128x48xbf16>
    %112 = vector.shape_cast %111 : vector<3x3x128x48xbf16> to vector<3x384x48xbf16>
    %113 = vector.extract_strided_slice %112 {offsets = [0, 0, 0], sizes = [1, 384, 48], strides = [1, 1, 1]} : vector<3x384x48xbf16> to vector<1x384x48xbf16>
    %114 = vector.shape_cast %113 : vector<1x384x48xbf16> to vector<384x48xbf16>
    %115 = vector.extract_strided_slice %112 {offsets = [1, 0, 0], sizes = [1, 384, 48], strides = [1, 1, 1]} : vector<3x384x48xbf16> to vector<1x384x48xbf16>
    %116 = vector.shape_cast %115 : vector<1x384x48xbf16> to vector<384x48xbf16>
    %117 = vector.extract_strided_slice %112 {offsets = [2, 0, 0], sizes = [1, 384, 48], strides = [1, 1, 1]} : vector<3x384x48xbf16> to vector<1x384x48xbf16>
    %118 = vector.shape_cast %117 : vector<1x384x48xbf16> to vector<384x48xbf16>
    %119 = vector.shape_cast %108 : vector<256x48xf32> to vector<16x16x48xf32>
    %c1_106 = arith.constant 1 : index
    %c1_107 = arith.constant 1 : index
    %c0_108 = arith.constant 0 : index
    %120 = vector.load %arg14[%c1_106, %c1_107, %c0_108] : memref<18x18x128xf32, #tpu.memory_space<vmem>>, vector<16x16x48xf32>
    tpu.vector_store %arg14[%c1_106, %c1_107, %c0_108], %119 {strides = array<i32>} : memref<18x18x128xf32, #tpu.memory_space<vmem>>, vector<16x16x48xf32>,
    %c0_109 = arith.constant 0 : index
    %c0_110 = arith.constant 0 : index
    %c0_111 = arith.constant 0 : index
    %121 = vector.load %arg14[%c0_109, %c0_110, %c0_111] : memref<18x18x128xf32, #tpu.memory_space<vmem>>, vector<18x16x128xf32>
    %c0_112 = arith.constant 0 : index
    %c1_113 = arith.constant 1 : index
    %c0_114 = arith.constant 0 : index
    %122 = vector.load %arg14[%c0_112, %c1_113, %c0_114] : memref<18x18x128xf32, #tpu.memory_space<vmem>>, vector<18x16x128xf32>
    %c0_115 = arith.constant 0 : index
    %c2_116 = arith.constant 2 : index
    %c0_117 = arith.constant 0 : index
    %123 = vector.load %arg14[%c0_115, %c2_116, %c0_117] : memref<18x18x128xf32, #tpu.memory_space<vmem>>, vector<18x16x128xf32>
    %124 = tpu.concatenate %121, %122, %123 in 2 : vector<18x16x128xf32>, vector<18x16x128xf32>, vector<18x16x128xf32> -> vector<18x16x384xf32>
    %125 = arith.truncf %124 : vector<18x16x384xf32> to vector<18x16x384xbf16>
    %126 = vector.extract_strided_slice %125 {offsets = [0, 0, 0], sizes = [16, 16, 384], strides = [1, 1, 1]} : vector<18x16x384xbf16> to vector<16x16x384xbf16>
    %127 = vector.shape_cast %126 : vector<16x16x384xbf16> to vector<256x384xbf16>
    %cst_118 = arith.constant dense<0.000000e+00> : vector<256x48xf32>
    %128 = tpu.matmul %127, %114, %cst_118 {dimension_numbers = #tpu.dot_dimension_numbers<[1], [0], [0], [1], [0, 0, 1, 1], [], []>} : vector<256x384xbf16>, vector<384x48xbf16>, vector<256x48xf32> -> vector<256x48xf32>
    %129 = vector.extract_strided_slice %125 {offsets = [1, 0, 0], sizes = [16, 16, 384], strides = [1, 1, 1]} : vector<18x16x384xbf16> to vector<16x16x384xbf16>
    %130 = vector.shape_cast %129 : vector<16x16x384xbf16> to vector<256x384xbf16>
    %cst_119 = arith.constant dense<0.000000e+00> : vector<256x48xf32>
    %131 = tpu.matmul %130, %116, %cst_119 {dimension_numbers = #tpu.dot_dimension_numbers<[1], [0], [0], [1], [0, 0, 1, 1], [], []>} : vector<256x384xbf16>, vector<384x48xbf16>, vector<256x48xf32> -> vector<256x48xf32>
    %132 = arith.addf %128, %131 : vector<256x48xf32>
    %133 = vector.extract_strided_slice %125 {offsets = [2, 0, 0], sizes = [16, 16, 384], strides = [1, 1, 1]} : vector<18x16x384xbf16> to vector<16x16x384xbf16>
    %134 = vector.shape_cast %133 : vector<16x16x384xbf16> to vector<256x384xbf16>
    %cst_120 = arith.constant dense<0.000000e+00> : vector<256x48xf32>
    %135 = tpu.matmul %134, %118, %cst_120 {dimension_numbers = #tpu.dot_dimension_numbers<[1], [0], [0], [1], [0, 0, 1, 1], [], []>} : vector<256x384xbf16>, vector<384x48xbf16>, vector<256x48xf32> -> vector<256x48xf32>
    %136 = arith.addf %132, %135 : vector<256x48xf32>
    %c0_121 = arith.constant 0 : index
    %c0_122 = arith.constant 0 : index
    %137 = vector.load %arg9[%c0_121, %c0_122] : memref<2x48xf32, #tpu.memory_space<vmem>>, vector<1x48xf32>
    %138 = vector.broadcast %137 : vector<1x48xf32> to vector<256x48xf32>
    %139 = arith.mulf %136, %138 : vector<256x48xf32>
    %c1_123 = arith.constant 1 : index
    %c0_124 = arith.constant 0 : index
    %140 = vector.load %arg9[%c1_123, %c0_124] : memref<2x48xf32, #tpu.memory_space<vmem>>, vector<1x48xf32>
    %141 = vector.broadcast %140 : vector<1x48xf32> to vector<256x48xf32>
    %142 = arith.addf %139, %141 : vector<256x48xf32>
    %cst_125 = arith.constant 0.000000e+00 : f32
    %143 = vector.broadcast %cst_125 : f32 to vector<256x48xf32>
    %144 = arith.maximumf %142, %143 : vector<256x48xf32>
    %145 = arith.truncf %144 : vector<256x48xf32> to vector<256x48xbf16>
    %c0_126 = arith.constant 0 : index
    %c0_127 = arith.constant 0 : index
    %146 = vector.load %arg10[%c0_126, %c0_127] : memref<48x128xbf16, #tpu.memory_space<vmem>>, vector<48x128xbf16>
    %cst_128 = arith.constant dense<0.000000e+00> : vector<256x128xf32>
    %147 = tpu.matmul %145, %146, %cst_128 {dimension_numbers = #tpu.dot_dimension_numbers<[1], [0], [0], [1], [0, 0, 1, 1], [], []>} : vector<256x48xbf16>, vector<48x128xbf16>, vector<256x128xf32> -> vector<256x128xf32>
    %c0_129 = arith.constant 0 : index
    %c0_130 = arith.constant 0 : index
    %148 = vector.load %arg11[%c0_129, %c0_130] : memref<1x128xf32, #tpu.memory_space<vmem>>, vector<1x128xf32>
    %149 = vector.broadcast %148 : vector<1x128xf32> to vector<256x128xf32>
    %150 = arith.addf %147, %149 : vector<256x128xf32>
    %c0_131 = arith.constant 0 : index
    %c0_132 = arith.constant 0 : index
    %c0_133 = arith.constant 0 : index
    %151 = vector.load %arg12[%c0_131, %c0_132, %c0_133] : memref<1x256x128xf32, #tpu.memory_space<vmem>>, vector<1x256x128xf32>
    %152 = vector.shape_cast %151 : vector<1x256x128xf32> to vector<256x128xf32>
    %153 = vector.shape_cast %150 : vector<256x128xf32> to vector<1x256x128xf32>
    tpu.vector_store %arg12[%c0_131, %c0_132, %c0_133], %153 {strides = array<i32>} : memref<1x256x128xf32, #tpu.memory_space<vmem>>, vector<1x256x128xf32>,
    return
  }
  func.func @transform_0(%arg0: i32) -> (i32, i32, i32, i32) {
    %c0_i32 = arith.constant 0 : i32
    %c0_i32_0 = arith.constant 0 : i32
    %c0_i32_1 = arith.constant 0 : i32
    %c0_i32_2 = arith.constant 0 : i32
    return %arg0, %c0_i32, %c0_i32_0, %c0_i32_1 : i32, i32, i32, i32
  }
  func.func @transform_1(%arg0: i32) -> (i32, i32) {
    %c0_i32 = arith.constant 0 : i32
    %c0_i32_0 = arith.constant 0 : i32
    %c0_i32_1 = arith.constant 0 : i32
    return %c0_i32, %c0_i32_0 : i32, i32
  }
  func.func @transform_2(%arg0: i32) -> (i32, i32) {
    %c0_i32 = arith.constant 0 : i32
    %c0_i32_0 = arith.constant 0 : i32
    %c0_i32_1 = arith.constant 0 : i32
    return %c0_i32, %c0_i32_0 : i32, i32
  }
  func.func @transform_3(%arg0: i32) -> (i32, i32, i32) {
    %c0_i32 = arith.constant 0 : i32
    %c0_i32_0 = arith.constant 0 : i32
    %c0_i32_1 = arith.constant 0 : i32
    %c0_i32_2 = arith.constant 0 : i32
    return %c0_i32, %c0_i32_0, %c0_i32_1 : i32, i32, i32
  }
  func.func @transform_4(%arg0: i32) -> (i32, i32) {
    %c0_i32 = arith.constant 0 : i32
    %c0_i32_0 = arith.constant 0 : i32
    %c0_i32_1 = arith.constant 0 : i32
    return %c0_i32, %c0_i32_0 : i32, i32
  }
  func.func @transform_5(%arg0: i32) -> (i32, i32, i32, i32) {
    %c0_i32 = arith.constant 0 : i32
    %c0_i32_0 = arith.constant 0 : i32
    %c0_i32_1 = arith.constant 0 : i32
    %c0_i32_2 = arith.constant 0 : i32
    %c0_i32_3 = arith.constant 0 : i32
    return %c0_i32, %c0_i32_0, %c0_i32_1, %c0_i32_2 : i32, i32, i32, i32
  }
  func.func @transform_6(%arg0: i32) -> (i32, i32) {
    %c0_i32 = arith.constant 0 : i32
    %c0_i32_0 = arith.constant 0 : i32
    %c0_i32_1 = arith.constant 0 : i32
    return %c0_i32, %c0_i32_0 : i32, i32
  }
  func.func @transform_7(%arg0: i32) -> (i32, i32, i32, i32) {
    %c0_i32 = arith.constant 0 : i32
    %c0_i32_0 = arith.constant 0 : i32
    %c0_i32_1 = arith.constant 0 : i32
    %c0_i32_2 = arith.constant 0 : i32
    %c0_i32_3 = arith.constant 0 : i32
    return %c0_i32, %c0_i32_0, %c0_i32_1, %c0_i32_2 : i32, i32, i32, i32
  }
  func.func @transform_8(%arg0: i32) -> (i32, i32) {
    %c0_i32 = arith.constant 0 : i32
    %c0_i32_0 = arith.constant 0 : i32
    %c0_i32_1 = arith.constant 0 : i32
    return %c0_i32, %c0_i32_0 : i32, i32
  }
  func.func @transform_9(%arg0: i32) -> (i32, i32) {
    %c0_i32 = arith.constant 0 : i32
    %c0_i32_0 = arith.constant 0 : i32
    %c0_i32_1 = arith.constant 0 : i32
    return %c0_i32, %c0_i32_0 : i32, i32
  }
  func.func @transform_10(%arg0: i32) -> (i32, i32) {
    %c0_i32 = arith.constant 0 : i32
    %c0_i32_0 = arith.constant 0 : i32
    %c0_i32_1 = arith.constant 0 : i32
    return %c0_i32, %c0_i32_0 : i32, i32
  }
  func.func @transform_11(%arg0: i32) -> (i32, i32, i32) {
    %c0_i32 = arith.constant 0 : i32
    %c0_i32_0 = arith.constant 0 : i32
    %c0_i32_1 = arith.constant 0 : i32
    return %arg0, %c0_i32, %c0_i32_0 : i32, i32, i32
  }
}

</mosaic_0001>

<llo_original>
// kernel: decoder_forward.1
$region0: #{decoder_forward.1}
  #allocation0 [shape = 'u32[]', space=smem, size = 0x4, offset = 0x4, fixed_abs, tag = 'smem constant byte address 0x4 - core index']
  #allocation1 [shape = 'u32[144,128]{1,0:T(1,128)}', space=vmem, size = 0x12000, scoped, tag = 'internal scratch']
  #allocation2 [shape = 'f32[22,22,4]{2,1,0:T(8,128)}', space=vmem, size = 0x42000, scoped, tag = 'scratch operand']
  #allocation3 [shape = 'f32[18,18,128]{2,1,0:T(8,128)}', space=vmem, size = 0x36000, scoped, tag = 'scratch operand']
  %s0 = inlined_call_operand.vmem [shape: f32[2,16,16,4], index: 0, kind: input, shape index: {}]
  %s1 = inlined_call_operand.vmem [shape: bf16[196,128], index: 1, kind: input, shape index: {}]
  %s2 = inlined_call_operand.vmem [shape: f32[2,128], index: 2, kind: input, shape index: {}]
  %s3 = inlined_call_operand.vmem [shape: bf16[3,384,64], index: 3, kind: input, shape index: {}]
  %s4 = inlined_call_operand.vmem [shape: f32[2,64], index: 4, kind: input, shape index: {}]
  %s5 = inlined_call_operand.vmem [shape: bf16[3,3,64,48], index: 5, kind: input, shape index: {}]
  %s6 = inlined_call_operand.vmem [shape: f32[2,48], index: 6, kind: input, shape index: {}]
  %s7 = inlined_call_operand.vmem [shape: bf16[3,3,48,48], index: 7, kind: input, shape index: {}]
  %s8 = inlined_call_operand.vmem [shape: f32[2,48], index: 8, kind: input, shape index: {}]
  %s9 = inlined_call_operand.vmem [shape: bf16[48,128], index: 9, kind: input, shape index: {}]
  %s10 = inlined_call_operand.vmem [shape: f32[1,128], index: 10, kind: input, shape index: {}]
  %s11 = inlined_call_operand.vmem [shape: f32[2,256,128], index: 11, kind: output, shape index: {}]
  %s12 = sld [smem:[#allocation0]]
  $region77: #{decoder_forward.1} parent=0
    _
  %s14 = ssub.s32 1, %s12
  %s15 = scalar_select 0, %s14, %s12
  loop: start=0, step=1, limit=4
  $region2: #{decoder_forward.1} parent=0 // loop_pre_header
    _
  $region3: #{decoder_forward.1} parent=0 // loop_header
    %s17 = sphi 0, %s21
    %p18 = scmp.ge.s32.totalorder %s17, 4
    %s27 = sphi 0, %s29
    %s30 = sphi 0, %s27
    %s31 = sphi 0, %s30
    %s47 = sphi 0, %s31
    %s51 = sphi 0, %s51
    %s53 = sphi 0, %s51
    %s54 = sphi 0, %s53
    %s68 = sphi 0, %s54
    %s72 = sphi 0, %s72
    %s74 = sphi 0, %s72
    %s75 = sphi 0, %s74
    %s89 = sphi 0, %s75
    %s93 = sphi 0, %s93
    %s95 = sphi 0, %s93
    %s96 = sphi 0, %s95
    %s110 = sphi 0, %s96
    %s114 = sphi 0, %s114
    %s116 = sphi 0, %s114
    %s117 = sphi 0, %s116
    %s131 = sphi 0, %s117
    %s135 = sphi 0, %s135
    %s137 = sphi 0, %s135
    %s138 = sphi 0, %s137
    %s152 = sphi 0, %s138
    %s156 = sphi 0, %s156
    %s158 = sphi 0, %s156
    %s159 = sphi 0, %s158
    %s173 = sphi 0, %s159
    %s177 = sphi 0, %s177
    %s179 = sphi 0, %s177
    %s180 = sphi 0, %s179
    %s194 = sphi 0, %s180
    %s198 = sphi 0, %s198
    %s200 = sphi 0, %s198
    %s201 = sphi 0, %s200
    %s215 = sphi 0, %s201
    %s219 = sphi 0, %s219
    %s221 = sphi 0, %s219
    %s222 = sphi 0, %s221
    %s236 = sphi 0, %s222
    %s240 = sphi 0, %s240
    %s242 = sphi 0, %s240
    %s243 = sphi 0, %s242
    %s257 = sphi 0, %s243
    %s263 = sphi 0, %s265
    %s266 = sphi 0, %s263
    %s267 = sphi 0, %s266
    %s283 = sphi 0, %s267
  $region4: #{decoder_forward.1} parent=0 // loop_header_branch
    %20 = sbr.rel (%p18) target = $region8
  $region5: #{decoder_forward.1} parent=0 // loop_body
    %s22 = ssub.s32 %s17, 1
    %s23 = ssub.s32 %s17, 2
    %s24 = sadd.s32 %s17, 1
    %s25 = ssub.s32 %s17, %s24
    %p26 = scmp.eq.s32.totalorder %s25, 0
    %s28 = sadd.s32 %s27, 1
    %s29 = scalar_select %p26, %s27, %s28
    %p32 = pneg %p26
    %p33 = scmp.eq.s32.totalorder %s17, 1
    %p34 = por %p32, %p33
    %p35 = scmp.ne.s32.totalorder %s27, %s30
    %p36 = scmp.eq.s32.totalorder %s17, 0
    %p37 = por %p35, %p36
    %p38 = scmp.ne.s32.totalorder %s27, %s30
    %p39 = scmp.eq.s32.totalorder %s22, 1
    %p40 = por %p38, %p39
    %p41 = scmp.ne.s32.totalorder %s30, %s31
    %p42 = scmp.eq.s32.totalorder %s22, 0
    %p43 = por %p41, %p42
    %p44 = scmp.ne.s32.totalorder %s30, %s31
    %p45 = scmp.eq.s32.totalorder %s23, 1
    %p46 = por %p44, %p45
    %p48 = scmp.ne.s32.totalorder %s31, %s47
    %p49 = scmp.eq.s32.totalorder %s23, 0
    %p50 = por %p48, %p49
    %s52 = sadd.s32 %s51, 1
    %p55 = scmp.eq.s32.totalorder %s17, 1
    %p56 = scmp.ne.s32.totalorder %s51, %s53
    %p57 = scmp.eq.s32.totalorder %s17, 0
    %p58 = por %p56, %p57
    %p59 = scmp.ne.s32.totalorder %s51, %s53
    %p60 = scmp.eq.s32.totalorder %s22, 1
    %p61 = por %p59, %p60
    %p62 = scmp.ne.s32.totalorder %s53, %s54
    %p63 = scmp.eq.s32.totalorder %s22, 0
    %p64 = por %p62, %p63
    %p65 = scmp.ne.s32.totalorder %s53, %s54
    %p66 = scmp.eq.s32.totalorder %s23, 1
    %p67 = por %p65, %p66
    %p69 = scmp.ne.s32.totalorder %s54, %s68
    %p70 = scmp.eq.s32.totalorder %s23, 0
    %p71 = por %p69, %p70
    %s73 = sadd.s32 %s72, 1
    %p76 = scmp.eq.s32.totalorder %s17, 1
    %p77 = scmp.ne.s32.totalorder %s72, %s74
    %p78 = scmp.eq.s32.totalorder %s17, 0
    %p79 = por %p77, %p78
    %p80 = scmp.ne.s32.totalorder %s72, %s74
    %p81 = scmp.eq.s32.totalorder %s22, 1
    %p82 = por %p80, %p81
    %p83 = scmp.ne.s32.totalorder %s74, %s75
    %p84 = scmp.eq.s32.totalorder %s22, 0
    %p85 = por %p83, %p84
    %p86 = scmp.ne.s32.totalorder %s74, %s75
    %p87 = scmp.eq.s32.totalorder %s23, 1
    %p88 = por %p86, %p87
    %p90 = scmp.ne.s32.totalorder %s75, %s89
    %p91 = scmp.eq.s32.totalorder %s23, 0
    %p92 = por %p90, %p91
    %s94 = sadd.s32 %s93, 1
    %p97 = scmp.eq.s32.totalorder %s17, 1
    %p98 = scmp.ne.s32.totalorder %s93, %s95
    %p99 = scmp.eq.s32.totalorder %s17, 0
    %p100 = por %p98, %p99
    %p101 = scmp.ne.s32.totalorder %s93, %s95
    %p102 = scmp.eq.s32.totalorder %s22, 1
    %p103 = por %p101, %p102
    %p104 = scmp.ne.s32.totalorder %s95, %s96
    %p105 = scmp.eq.s32.totalorder %s22, 0
    %p106 = por %p104, %p105
    %p107 = scmp.ne.s32.totalorder %s95, %s96
    %p108 = scmp.eq.s32.totalorder %s23, 1
    %p109 = por %p107, %p108
    %p111 = scmp.ne.s32.totalorder %s96, %s110
    %p112 = scmp.eq.s32.totalorder %s23, 0
    %p113 = por %p111, %p112
    %s115 = sadd.s32 %s114, 1
    %p118 = scmp.eq.s32.totalorder %s17, 1
    %p119 = scmp.ne.s32.totalorder %s114, %s116
    %p120 = scmp.eq.s32.totalorder %s17, 0
    %p121 = por %p119, %p120
    %p122 = scmp.ne.s32.totalorder %s114, %s116
    %p123 = scmp.eq.s32.totalorder %s22, 1
    %p124 = por %p122, %p123
    %p125 = scmp.ne.s32.totalorder %s116, %s117
    %p126 = scmp.eq.s32.totalorder %s22, 0
    %p127 = por %p125, %p126
    %p128 = scmp.ne.s32.totalorder %s116, %s117
    %p129 = scmp.eq.s32.totalorder %s23, 1
    %p130 = por %p128, %p129
    %p132 = scmp.ne.s32.totalorder %s117, %s131
    %p133 = scmp.eq.s32.totalorder %s23, 0
    %p134 = por %p132, %p133
    %s136 = sadd.s32 %s135, 1
    %p139 = scmp.eq.s32.totalorder %s17, 1
    %p140 = scmp.ne.s32.totalorder %s135, %s137
    %p141 = scmp.eq.s32.totalorder %s17, 0
    %p142 = por %p140, %p141
    %p143 = scmp.ne.s32.totalorder %s135, %s137
    %p144 = scmp.eq.s32.totalorder %s22, 1
    %p145 = por %p143, %p144
    %p146 = scmp.ne.s32.totalorder %s137, %s138
    %p147 = scmp.eq.s32.totalorder %s22, 0
    %p148 = por %p146, %p147
    %p149 = scmp.ne.s32.totalorder %s137, %s138
    %p150 = scmp.eq.s32.totalorder %s23, 1
    %p151 = por %p149, %p150
    %p153 = scmp.ne.s32.totalorder %s138, %s152
    %p154 = scmp.eq.s32.totalorder %s23, 0
    %p155 = por %p153, %p154
    %s157 = sadd.s32 %s156, 1
    %p160 = scmp.eq.s32.totalorder %s17, 1
    %p161 = scmp.ne.s32.totalorder %s156, %s158
    %p162 = scmp.eq.s32.totalorder %s17, 0
    %p163 = por %p161, %p162
    %p164 = scmp.ne.s32.totalorder %s156, %s158
    %p165 = scmp.eq.s32.totalorder %s22, 1
    %p166 = por %p164, %p165
    %p167 = scmp.ne.s32.totalorder %s158, %s159
    %p168 = scmp.eq.s32.totalorder %s22, 0
    %p169 = por %p167, %p168
    %p170 = scmp.ne.s32.totalorder %s158, %s159
    %p171 = scmp.eq.s32.totalorder %s23, 1
    %p172 = por %p170, %p171
    %p174 = scmp.ne.s32.totalorder %s159, %s173
    %p175 = scmp.eq.s32.totalorder %s23, 0
    %p176 = por %p174, %p175
    %s178 = sadd.s32 %s177, 1
    %p181 = scmp.eq.s32.totalorder %s17, 1
    %p182 = scmp.ne.s32.totalorder %s177, %s179
    %p183 = scmp.eq.s32.totalorder %s17, 0
    %p184 = por %p182, %p183
    %p185 = scmp.ne.s32.totalorder %s177, %s179
    %p186 = scmp.eq.s32.totalorder %s22, 1
    %p187 = por %p185, %p186
    %p188 = scmp.ne.s32.totalorder %s179, %s180
    %p189 = scmp.eq.s32.totalorder %s22, 0
    %p190 = por %p188, %p189
    %p191 = scmp.ne.s32.totalorder %s179, %s180
    %p192 = scmp.eq.s32.totalorder %s23, 1
    %p193 = por %p191, %p192
    %p195 = scmp.ne.s32.totalorder %s180, %s194
    %p196 = scmp.eq.s32.totalorder %s23, 0
    %p197 = por %p195, %p196
    %s199 = sadd.s32 %s198, 1
    %p202 = scmp.eq.s32.totalorder %s17, 1
    %p203 = scmp.ne.s32.totalorder %s198, %s200
    %p204 = scmp.eq.s32.totalorder %s17, 0
    %p205 = por %p203, %p204
    %p206 = scmp.ne.s32.totalorder %s198, %s200
    %p207 = scmp.eq.s32.totalorder %s22, 1
    %p208 = por %p206, %p207
    %p209 = scmp.ne.s32.totalorder %s200, %s201
    %p210 = scmp.eq.s32.totalorder %s22, 0
    %p211 = por %p209, %p210
    %p212 = scmp.ne.s32.totalorder %s200, %s201
    %p213 = scmp.eq.s32.totalorder %s23, 1
    %p214 = por %p212, %p213
    %p216 = scmp.ne.s32.totalorder %s201, %s215
    %p217 = scmp.eq.s32.totalorder %s23, 0
    %p218 = por %p216, %p217
    %s220 = sadd.s32 %s219, 1
    %p223 = scmp.eq.s32.totalorder %s17, 1
    %p224 = scmp.ne.s32.totalorder %s219, %s221
    %p225 = scmp.eq.s32.totalorder %s17, 0
    %p226 = por %p224, %p225
    %p227 = scmp.ne.s32.totalorder %s219, %s221
    %p228 = scmp.eq.s32.totalorder %s22, 1
    %p229 = por %p227, %p228
    %p230 = scmp.ne.s32.totalorder %s221, %s222
    %p231 = scmp.eq.s32.totalorder %s22, 0
    %p232 = por %p230, %p231
    %p233 = scmp.ne.s32.totalorder %s221, %s222
    %p234 = scmp.eq.s32.totalorder %s23, 1
    %p235 = por %p233, %p234
    %p237 = scmp.ne.s32.totalorder %s222, %s236
    %p238 = scmp.eq.s32.totalorder %s23, 0
    %p239 = por %p237, %p238
    %s241 = sadd.s32 %s240, 1
    %p244 = scmp.eq.s32.totalorder %s17, 1
    %p245 = scmp.ne.s32.totalorder %s240, %s242
    %p246 = scmp.eq.s32.totalorder %s17, 0
    %p247 = por %p245, %p246
    %p248 = scmp.ne.s32.totalorder %s240, %s242
    %p249 = scmp.eq.s32.totalorder %s22, 1
    %p250 = por %p248, %p249
    %p251 = scmp.ne.s32.totalorder %s242, %s243
    %p252 = scmp.eq.s32.totalorder %s22, 0
    %p253 = por %p251, %p252
    %p254 = scmp.ne.s32.totalorder %s242, %s243
    %p255 = scmp.eq.s32.totalorder %s23, 1
    %p256 = por %p254, %p255
    %p258 = scmp.ne.s32.totalorder %s243, %s257
    %p259 = scmp.eq.s32.totalorder %s23, 0
    %p260 = por %p258, %p259
    %s261 = ssub.s32 %s17, %s24
    %p262 = scmp.eq.s32.totalorder %s261, 0
    %s264 = sadd.s32 %s263, 1
    %s265 = scalar_select %p262, %s263, %s264
    %p268 = pneg %p262
    %p269 = scmp.eq.s32.totalorder %s17, 1
    %p270 = por %p268, %p269
    %p271 = scmp.ne.s32.totalorder %s263, %s266
    %p272 = scmp.eq.s32.totalorder %s17, 0
    %p273 = por %p271, %p272
    %p274 = scmp.ne.s32.totalorder %s263, %s266
    %p275 = scmp.eq.s32.totalorder %s22, 1
    %p276 = por %p274, %p275
    %p277 = scmp.ne.s32.totalorder %s266, %s267
    %p278 = scmp.eq.s32.totalorder %s22, 0
    %p279 = por %p277, %p278
    %p280 = scmp.ne.s32.totalorder %s266, %s267
    %p281 = scmp.eq.s32.totalorder %s23, 1
    %p282 = por %p280, %p281
    %p284 = scmp.ne.s32.totalorder %s267, %s283
    %p285 = scmp.eq.s32.totalorder %s23, 0
    %p286 = por %p284, %p285
    %p287 = scmp.le.s32.totalorder 1, %s17
    %p288 = scmp.lt.s32.totalorder %s17, 3
    %p289 = pnand %p287, %p288
    %p290 = pneg %p289
    // Predicated region
    $region9: #{decoder_forward.1} parent=5 // pred_check
      _
    $region10: #{decoder_forward.1} parent=5 // pred_check_branch
      %292 = sbr.rel (%p289) target = $region12
    $region11: #{decoder_forward.1} parent=5 // pred_region
      %s293 = ssub.s32 %s17, 1
      // Predicated region
      $region13: #{decoder_forward.1} parent=11 // pred_check
        %p294 = pneg %p64
      $region14: #{decoder_forward.1} parent=11 // pred_check_branch
        %296 = sbr.rel (%p294) target = $region16
      $region15: #{decoder_forward.1} parent=11 // pred_region
        _
      $region16: #{decoder_forward.1} parent=11 // pred_fallthru
        _
      // Predicated region
      $region17: #{decoder_forward.1} parent=11 // pred_check
        %p297 = pneg %p85
      $region18: #{decoder_forward.1} parent=11 // pred_check_branch
        %299 = sbr.rel (%p297) target = $region20
      $region19: #{decoder_forward.1} parent=11 // pred_region
        _
      $region20: #{decoder_forward.1} parent=11 // pred_fallthru
        _
      // Predicated region
      $region21: #{decoder_forward.1} parent=11 // pred_check
        %p300 = pneg %p106
      $region22: #{decoder_forward.1} parent=11 // pred_check_branch
        %302 = sbr.rel (%p300) target = $region24
      $region23: #{decoder_forward.1} parent=11 // pred_region
        _
      $region24: #{decoder_forward.1} parent=11 // pred_fallthru
        _
      // Predicated region
      $region25: #{decoder_forward.1} parent=11 // pred_check
        %p303 = pneg %p127
      $region26: #{decoder_forward.1} parent=11 // pred_check_branch
        %305 = sbr.rel (%p303) target = $region28
      $region27: #{decoder_forward.1} parent=11 // pred_region
        _
      $region28: #{decoder_forward.1} parent=11 // pred_fallthru
        _
      // Predicated region
      $region29: #{decoder_forward.1} parent=11 // pred_check
        %p306 = pneg %p148
      $region30: #{decoder_forward.1} parent=11 // pred_check_branch
        %308 = sbr.rel (%p306) target = $region32
      $region31: #{decoder_forward.1} parent=11 // pred_region
        _
      $region32: #{decoder_forward.1} parent=11 // pred_fallthru
        _
      // Predicated region
      $region33: #{decoder_forward.1} parent=11 // pred_check
        %p309 = pneg %p169
      $region34: #{decoder_forward.1} parent=11 // pred_check_branch
        %311 = sbr.rel (%p309) target = $region36
      $region35: #{decoder_forward.1} parent=11 // pred_region
        _
      $region36: #{decoder_forward.1} parent=11 // pred_fallthru
        _
      // Predicated region
      $region37: #{decoder_forward.1} parent=11 // pred_check
        %p312 = pneg %p190
      $region38: #{decoder_forward.1} parent=11 // pred_check_branch
        %314 = sbr.rel (%p312) target = $region40
      $region39: #{decoder_forward.1} parent=11 // pred_region
        _
      $region40: #{decoder_forward.1} parent=11 // pred_fallthru
        _
      // Predicated region
      $region41: #{decoder_forward.1} parent=11 // pred_check
        %p315 = pneg %p211
      $region42: #{decoder_forward.1} parent=11 // pred_check_branch
        %317 = sbr.rel (%p315) target = $region44
      $region43: #{decoder_forward.1} parent=11 // pred_region
        _
      $region44: #{decoder_forward.1} parent=11 // pred_fallthru
        _
      // Predicated region
      $region45: #{decoder_forward.1} parent=11 // pred_check
        %p318 = pneg %p232
      $region46: #{decoder_forward.1} parent=11 // pred_check_branch
        %320 = sbr.rel (%p318) target = $region48
      $region47: #{decoder_forward.1} parent=11 // pred_region
        _
      $region48: #{decoder_forward.1} parent=11 // pred_fallthru
        _
      // Predicated region
      $region49: #{decoder_forward.1} parent=11 // pred_check
        %p321 = pneg %p253
      $region50: #{decoder_forward.1} parent=11 // pred_check_branch
        %323 = sbr.rel (%p321) target = $region52
      $region51: #{decoder_forward.1} parent=11 // pred_region
        _
      $region52: #{decoder_forward.1} parent=11 // pred_fallthru
        _
    $region12: #{decoder_forward.1} parent=5 // pred_fallthru
      _
    %p324 = scmp.lt.s32.totalorder %s17, 2
    // Predicated region
    $region53: #{decoder_forward.1} parent=5 // pred_check
      %p325 = pneg %p324
    $region54: #{decoder_forward.1} parent=5 // pred_check_branch
      %327 = sbr.rel (%p325) target = $region56
    $region55: #{decoder_forward.1} parent=5 // pred_region
      // Predicated region
      $region57: #{decoder_forward.1} parent=55 // pred_check
        %p328 = pneg %p37
      $region58: #{decoder_forward.1} parent=55 // pred_check_branch
        %330 = sbr.rel (%p328) target = $region60
      $region59: #{decoder_forward.1} parent=55 // pred_region
        %p331 = scmp.lt.s32.totalorder %s17, 1
        %s332 = scalar_select %p331, %s17, 1
        %s333 = smul.addr %s332, 32
        %s334 = smul.addr %s333, 8
        %s335 = scalar_lea.vmem %s0, %s334
      $region60: #{decoder_forward.1} parent=55 // pred_fallthru
        _
    $region56: #{decoder_forward.1} parent=5 // pred_fallthru
      _
    %p336 = scmp.le.s32.totalorder 1, %s17
    %p337 = scmp.lt.s32.totalorder %s17, 3
    %p338 = pnand %p336, %p337
    %p339 = pneg %p338
    // Predicated region
    $region61: #{decoder_forward.1} parent=5 // pred_check
      _
    $region62: #{decoder_forward.1} parent=5 // pred_check_branch
      %341 = sbr.rel (%p338) target = $region64
    $region63: #{decoder_forward.1} parent=5 // pred_region
      %s342 = ssub.s32 %s17, 1
      %p343 = scmp.lt.s32.totalorder %s22, 1
      %s344 = scalar_select %p343, %s22, 1
      %s345 = smul.addr %s344, 32
      %s346 = smul.addr %s345, 8
      %s347 = scalar_lea.vmem %s0, %s346
      %p348 = pneg %p43
      %p349 = pneg %p40
      %p350 = pneg %p64
      %p351 = pneg %p61
      %p352 = pneg %p85
      %p353 = pneg %p82
      %p354 = pneg %p106
      %p355 = pneg %p103
      %p356 = pneg %p127
      %p357 = pneg %p124
      %p358 = pneg %p148
      %p359 = pneg %p145
      %p360 = pneg %p169
      %p361 = pneg %p166
      %p362 = pneg %p190
      %p363 = pneg %p187
      %p364 = pneg %p211
      %p365 = pneg %p208
      %p366 = pneg %p232
      %p367 = pneg %p229
      %p368 = pneg %p253
      %p369 = pneg %p250
      %p370 = pneg %p279
      %p371 = pneg %p276
      %p372 = scmp.lt.s32.totalorder %s22, 1
      %s373 = scalar_select %p372, %s22, 1
      %s374 = smul.addr %s373, 32
      %s375 = smul.addr %s374, 8
      %s376 = scalar_lea.vmem %s11, %s375
      %p377 = scmp.lt.s32.totalorder %s22, 1
      %s378 = scalar_select %p377, %s22, 1
      %s379 = smul.addr %s378, 32
      %s380 = smul.addr %s379, 8
      %s381 = scalar_lea.vmem %s0, %s380
      %p382 = scmp.lt.s32.totalorder %s22, 1
      %s383 = scalar_select %p382, %s22, 1
      %s384 = smul.addr %s383, 32
      %s385 = smul.addr %s384, 8
      %s386 = scalar_lea.vmem %s11, %s385
      %vm388 = vcmask 31744
      %389 = vst.msk [vmem:[#allocation2] sm:$0xff] %vm388, 0.0
      %390 = vst.msk [vmem:[#allocation2 + $0x8] sm:$0xff] %vm388, 0.0
      %vm391 = vcmask 29696
      %392 = vst.msk [vmem:[#allocation2 + $0x10] sm:$0x3f] %vm391, 0.0
      %393 = vst.msk [vmem:[#allocation2 + $0x18] sm:$0xff] %vm388, 0.0
      %394 = vst.msk [vmem:[#allocation2 + $0x20] sm:$0xff] %vm388, 0.0
      %395 = vst.msk [vmem:[#allocation2 + $0x28] sm:$0x3f] %vm391, 0.0
      %396 = vst.msk [vmem:[#allocation2 + $0x30] sm:$0xff] %vm388, 0.0
      %397 = vst.msk [vmem:[#allocation2 + $0x38] sm:$0xff] %vm388, 0.0
      %398 = vst.msk [vmem:[#allocation2 + $0x40] sm:$0x3f] %vm391, 0.0
      %399 = vst.msk [vmem:[#allocation2 + $0x48] sm:$0xff] %vm388, 0.0
      %400 = vst.msk [vmem:[#allocation2 + $0x50] sm:$0xff] %vm388, 0.0
      %401 = vst.msk [vmem:[#allocation2 + $0x58] sm:$0x3f] %vm391, 0.0
      %402 = vst.msk [vmem:[#allocation2 + $0x60] sm:$0xff] %vm388, 0.0
      %403 = vst.msk [vmem:[#allocation2 + $0x68] sm:$0xff] %vm388, 0.0
      %404 = vst.msk [vmem:[#allocation2 + $0x70] sm:$0x3f] %vm391, 0.0
      %405 = vst.msk [vmem:[#allocation2 + $0x78] sm:$0xff] %vm388, 0.0
      %406 = vst.msk [vmem:[#allocation2 + $0x80] sm:$0xff] %vm388, 0.0
      %407 = vst.msk [vmem:[#allocation2 + $0x88] sm:$0x3f] %vm391, 0.0
      %408 = vst.msk [vmem:[#allocation2 + $0x90] sm:$0xff] %vm388, 0.0
      %409 = vst.msk [vmem:[#allocation2 + $0x98] sm:$0xff] %vm388, 0.0
      %410 = vst.msk [vmem:[#allocation2 + $0xa0] sm:$0x3f] %vm391, 0.0
      %411 = vst.msk [vmem:[#allocation2 + $0xa8] sm:$0xff] %vm388, 0.0
      %412 = vst.msk [vmem:[#allocation2 + $0xb0] sm:$0xff] %vm388, 0.0
      %413 = vst.msk [vmem:[#allocation2 + $0xb8] sm:$0x3f] %vm391, 0.0
      %414 = vst.msk [vmem:[#allocation2 + $0xc0] sm:$0xff] %vm388, 0.0
      %415 = vst.msk [vmem:[#allocation2 + $0xc8] sm:$0xff] %vm388, 0.0
      %416 = vst.msk [vmem:[#allocation2 + $0xd0] sm:$0x3f] %vm391, 0.0
      %417 = vst.msk [vmem:[#allocation2 + $0xd8] sm:$0xff] %vm388, 0.0
      %418 = vst.msk [vmem:[#allocation2 + $0xe0] sm:$0xff] %vm388, 0.0
      %419 = vst.msk [vmem:[#allocation2 + $0xe8] sm:$0x3f] %vm391, 0.0
      %420 = vst.msk [vmem:[#allocation2 + $0xf0] sm:$0xff] %vm388, 0.0
      %421 = vst.msk [vmem:[#allocation2 + $0xf8] sm:$0xff] %vm388, 0.0
      %422 = vst.msk [vmem:[#allocation2 + $0x100] sm:$0x3f] %vm391, 0.0
      %423 = vst.msk [vmem:[#allocation2 + $0x108] sm:$0xff] %vm388, 0.0
      %424 = vst.msk [vmem:[#allocation2 + $0x110] sm:$0xff] %vm388, 0.0
      %425 = vst.msk [vmem:[#allocation2 + $0x118] sm:$0x3f] %vm391, 0.0
      %426 = vst.msk [vmem:[#allocation2 + $0x120] sm:$0xff] %vm388, 0.0
      %427 = vst.msk [vmem:[#allocation2 + $0x128] sm:$0xff] %vm388, 0.0
      %428 = vst.msk [vmem:[#allocation2 + $0x130] sm:$0x3f] %vm391, 0.0
      %429 = vst.msk [vmem:[#allocation2 + $0x138] sm:$0xff] %vm388, 0.0
      %430 = vst.msk [vmem:[#allocation2 + $0x140] sm:$0xff] %vm388, 0.0
      %431 = vst.msk [vmem:[#allocation2 + $0x148] sm:$0x3f] %vm391, 0.0
      %432 = vst.msk [vmem:[#allocation2 + $0x150] sm:$0xff] %vm388, 0.0
      %433 = vst.msk [vmem:[#allocation2 + $0x158] sm:$0xff] %vm388, 0.0
      %434 = vst.msk [vmem:[#allocation2 + $0x160] sm:$0x3f] %vm391, 0.0
      %435 = vst.msk [vmem:[#allocation2 + $0x168] sm:$0xff] %vm388, 0.0
      %436 = vst.msk [vmem:[#allocation2 + $0x170] sm:$0xff] %vm388, 0.0
      %437 = vst.msk [vmem:[#allocation2 + $0x178] sm:$0x3f] %vm391, 0.0
      %438 = vst.msk [vmem:[#allocation2 + $0x180] sm:$0xff] %vm388, 0.0
      %439 = vst.msk [vmem:[#allocation2 + $0x188] sm:$0xff] %vm388, 0.0
      %440 = vst.msk [vmem:[#allocation2 + $0x190] sm:$0x3f] %vm391, 0.0
      %441 = vst.msk [vmem:[#allocation2 + $0x198] sm:$0xff] %vm388, 0.0
      %442 = vst.msk [vmem:[#allocation2 + $0x1a0] sm:$0xff] %vm388, 0.0
      %443 = vst.msk [vmem:[#allocation2 + $0x1a8] sm:$0x3f] %vm391, 0.0
      %444 = vst.msk [vmem:[#allocation2 + $0x1b0] sm:$0xff] %vm388, 0.0
      %445 = vst.msk [vmem:[#allocation2 + $0x1b8] sm:$0xff] %vm388, 0.0
      %446 = vst.msk [vmem:[#allocation2 + $0x1c0] sm:$0x3f] %vm391, 0.0
      %447 = vst.msk [vmem:[#allocation2 + $0x1c8] sm:$0xff] %vm388, 0.0
      %448 = vst.msk [vmem:[#allocation2 + $0x1d0] sm:$0xff] %vm388, 0.0
      %449 = vst.msk [vmem:[#allocation2 + $0x1d8] sm:$0x3f] %vm391, 0.0
      %450 = vst.msk [vmem:[#allocation2 + $0x1e0] sm:$0xff] %vm388, 0.0
      %451 = vst.msk [vmem:[#allocation2 + $0x1e8] sm:$0xff] %vm388, 0.0
      %452 = vst.msk [vmem:[#allocation2 + $0x1f0] sm:$0x3f] %vm391, 0.0
      %453 = vst.msk [vmem:[#allocation2 + $0x1f8] sm:$0xff] %vm388, 0.0
      %454 = vst.msk [vmem:[#allocation2 + $0x200] sm:$0xff] %vm388, 0.0
      %455 = vst.msk [vmem:[#allocation2 + $0x208] sm:$0x3f] %vm391, 0.0
      %v456 = vld [vmem:[%s381] sm:$0xff]
      %v457 = vld [vmem:[%s381 + $0x8] sm:$0xff]
      %v458 = vld [vmem:[%s381 + $0x10] sm:$0xff]
      %v459 = vld [vmem:[%s381 + $0x18] sm:$0xff]
      %v460 = vld [vmem:[%s381 + $0x20] sm:$0xff]
      %v461 = vld [vmem:[%s381 + $0x28] sm:$0xff]
      %v462 = vld [vmem:[%s381 + $0x30] sm:$0xff]
      %v463 = vld [vmem:[%s381 + $0x38] sm:$0xff]
      %v464 = vld [vmem:[%s381 + $0x40] sm:$0xff]
      %v465 = vld [vmem:[%s381 + $0x48] sm:$0xff]
      %v466 = vld [vmem:[%s381 + $0x50] sm:$0xff]
      %v467 = vld [vmem:[%s381 + $0x58] sm:$0xff]
      %v468 = vld [vmem:[%s381 + $0x60] sm:$0xff]
      %v469 = vld [vmem:[%s381 + $0x68] sm:$0xff]
      %v470 = vld [vmem:[%s381 + $0x70] sm:$0xff]
      %v471 = vld [vmem:[%s381 + $0x78] sm:$0xff]
      %v472 = vld [vmem:[%s381 + $0x80] sm:$0xff]
      %v473 = vld [vmem:[%s381 + $0x88] sm:$0xff]
      %v474 = vld [vmem:[%s381 + $0x90] sm:$0xff]
      %v475 = vld [vmem:[%s381 + $0x98] sm:$0xff]
      %v476 = vld [vmem:[%s381 + $0xa0] sm:$0xff]
      %v477 = vld [vmem:[%s381 + $0xa8] sm:$0xff]
      %v478 = vld [vmem:[%s381 + $0xb0] sm:$0xff]
      %v479 = vld [vmem:[%s381 + $0xb8] sm:$0xff]
      %v480 = vld [vmem:[%s381 + $0xc0] sm:$0xff]
      %v481 = vld [vmem:[%s381 + $0xc8] sm:$0xff]
      %v482 = vld [vmem:[%s381 + $0xd0] sm:$0xff]
      %v483 = vld [vmem:[%s381 + $0xd8] sm:$0xff]
      %v484 = vld [vmem:[%s381 + $0xe0] sm:$0xff]
      %v485 = vld [vmem:[%s381 + $0xe8] sm:$0xff]
      %v486 = vld [vmem:[%s381 + $0xf0] sm:$0xff]
      %v487 = vld [vmem:[%s381 + $0xf8] sm:$0xff]
      %s488 = scalar_lea.vmem [#allocation2], 72
      %489 = vst.msk [vmem:[%s488 + $0x3] sm:$0xff] %vm388, %v456
      %490 = vst.msk [vmem:[%s488 + $0xb] sm:$0xff] %vm388, %v457
      %491 = vst.msk [vmem:[%s488 + $0x1b] sm:$0xff] %vm388, %v458
      %492 = vst.msk [vmem:[%s488 + $0x23] sm:$0xff] %vm388, %v459
      %493 = vst.msk [vmem:[%s488 + $0x33] sm:$0xff] %vm388, %v460
      %494 = vst.msk [vmem:[%s488 + $0x3b] sm:$0xff] %vm388, %v461
      %495 = vst.msk [vmem:[%s488 + $0x4b] sm:$0xff] %vm388, %v462
      %496 = vst.msk [vmem:[%s488 + $0x53] sm:$0xff] %vm388, %v463
      %497 = vst.msk [vmem:[%s488 + $0x63] sm:$0xff] %vm388, %v464
      %498 = vst.msk [vmem:[%s488 + $0x6b] sm:$0xff] %vm388, %v465
      %499 = vst.msk [vmem:[%s488 + $0x7b] sm:$0xff] %vm388, %v466
      %500 = vst.msk [vmem:[%s488 + $0x83] sm:$0xff] %vm388, %v467
      %501 = vst.msk [vmem:[%s488 + $0x93] sm:$0xff] %vm388, %v468
      %502 = vst.msk [vmem:[%s488 + $0x9b] sm:$0xff] %vm388, %v469
      %503 = vst.msk [vmem:[%s488 + $0xab] sm:$0xff] %vm388, %v470
      %504 = vst.msk [vmem:[%s488 + $0xb3] sm:$0xff] %vm388, %v471
      %505 = vst.msk [vmem:[%s488 + $0xc3] sm:$0xff] %vm388, %v472
      %506 = vst.msk [vmem:[%s488 + $0xcb] sm:$0xff] %vm388, %v473
      %507 = vst.msk [vmem:[%s488 + $0xdb] sm:$0xff] %vm388, %v474
      %508 = vst.msk [vmem:[%s488 + $0xe3] sm:$0xff] %vm388, %v475
      %509 = vst.msk [vmem:[%s488 + $0xf3] sm:$0xff] %vm388, %v476
      %510 = vst.msk [vmem:[%s488 + $0xfb] sm:$0xff] %vm388, %v477
      %511 = vst.msk [vmem:[%s488 + $0x10b] sm:$0xff] %vm388, %v478
      %512 = vst.msk [vmem:[%s488 + $0x113] sm:$0xff] %vm388, %v479
      %513 = vst.msk [vmem:[%s488 + $0x123] sm:$0xff] %vm388, %v480
      %514 = vst.msk [vmem:[%s488 + $0x12b] sm:$0xff] %vm388, %v481
      %515 = vst.msk [vmem:[%s488 + $0x13b] sm:$0xff] %vm388, %v482
      %516 = vst.msk [vmem:[%s488 + $0x143] sm:$0xff] %vm388, %v483
      %517 = vst.msk [vmem:[%s488 + $0x153] sm:$0xff] %vm388, %v484
      %518 = vst.msk [vmem:[%s488 + $0x15b] sm:$0xff] %vm388, %v485
      %519 = vst.msk [vmem:[%s488 + $0x16b] sm:$0xff] %vm388, %v486
      %520 = vst.msk [vmem:[%s488 + $0x173] sm:$0xff] %vm388, %v487
      %v521 = vld [vmem:[#allocation2] sm:$0xff]
      %v522 = vld [vmem:[#allocation2 + $0x8] sm:$0xff]
      %v523 = vld [vmem:[#allocation2 + $0x18] sm:$0xff]
      %v524 = vld [vmem:[#allocation2 + $0x20] sm:$0xff]
      %v525 = vld [vmem:[#allocation2 + $0x30] sm:$0xff]
      %v526 = vld [vmem:[#allocation2 + $0x38] sm:$0xff]
      %v527 = vld [vmem:[#allocation2 + $0x48] sm:$0xff]
      %v528 = vld [vmem:[#allocation2 + $0x50] sm:$0xff]
      %v529 = vld [vmem:[#allocation2 + $0x60] sm:$0xff]
      %v530 = vld [vmem:[#allocation2 + $0x68] sm:$0xff]
      %v531 = vld [vmem:[#allocation2 + $0x78] sm:$0xff]
      %v532 = vld [vmem:[#allocation2 + $0x80] sm:$0xff]
      %v533 = vld [vmem:[#allocation2 + $0x90] sm:$0xff]
      %v534 = vld [vmem:[#allocation2 + $0x98] sm:$0xff]
      %v535 = vld [vmem:[#allocation2 + $0xa8] sm:$0xff]
      %v536 = vld [vmem:[#allocation2 + $0xb0] sm:$0xff]
      %v537 = vld [vmem:[#allocation2 + $0xc0] sm:$0xff]
      %v538 = vld [vmem:[#allocation2 + $0xc8] sm:$0xff]
      %v539 = vld [vmem:[#allocation2 + $0xd8] sm:$0xff]
      %v540 = vld [vmem:[#allocation2 + $0xe0] sm:$0xff]
      %v541 = vld [vmem:[#allocation2 + $0xf0] sm:$0xff]
      %v542 = vld [vmem:[#allocation2 + $0xf8] sm:$0xff]
      %v543 = vld [vmem:[#allocation2 + $0x108] sm:$0xff]
      %v544 = vld [vmem:[#allocation2 + $0x110] sm:$0xff]
      %v545 = vld [vmem:[#allocation2 + $0x120] sm:$0xff]
      %v546 = vld [vmem:[#allocation2 + $0x128] sm:$0xff]
      %v547 = vld [vmem:[#allocation2 + $0x138] sm:$0xff]
      %v548 = vld [vmem:[#allocation2 + $0x140] sm:$0xff]
      %v549 = vld [vmem:[#allocation2 + $0x150] sm:$0xff]
      %v550 = vld [vmem:[#allocation2 + $0x158] sm:$0xff]
      %v551 = vld [vmem:[#allocation2 + $0x168] sm:$0xff]
      %v552 = vld [vmem:[#allocation2 + $0x170] sm:$0xff]
      %v553 = vld [vmem:[#allocation2 + $0x180] sm:$0xff]
      %v554 = vld [vmem:[#allocation2 + $0x188] sm:$0xff]
      %v555 = vld [vmem:[#allocation2 + $0x198] sm:$0xff]
      %v556 = vld [vmem:[#allocation2 + $0x1a0] sm:$0xff]
      %v557 = vld [vmem:[#allocation2 + $0x1b0] sm:$0xff]
      %v558 = vld [vmem:[#allocation2 + $0x1b8] sm:$0xff]
      %v559 = vld [vmem:[#allocation2 + $0x1c8] sm:$0xff]
      %v560 = vld [vmem:[#allocation2 + $0x1d0] sm:$0xff]
      %v561 = vld [vmem:[#allocation2 + $0x1e0] sm:$0xff]
      %v562 = vld [vmem:[#allocation2 + $0x1e8] sm:$0xff]
      %v563 = vld [vmem:[#allocation2 + $0x1f8] sm:$0xff]
      %v564 = vld [vmem:[#allocation2 + $0x200] sm:$0xff]
      %v565 = vld [vmem:[#allocation2 + $0x1] sm:$0xff]
      %v566 = vld [vmem:[#allocation2 + $0x9] sm:$0xff]
      %v567 = vld [vmem:[#allocation2 + $0x19] sm:$0xff]
      %v568 = vld [vmem:[#allocation2 + $0x21] sm:$0xff]
      %v569 = vld [vmem:[#allocation2 + $0x31] sm:$0xff]
      %v570 = vld [vmem:[#allocation2 + $0x39] sm:$0xff]
      %v571 = vld [vmem:[#allocation2 + $0x49] sm:$0xff]
      %v572 = vld [vmem:[#allocation2 + $0x51] sm:$0xff]
      %v573 = vld [vmem:[#allocation2 + $0x61] sm:$0xff]
      %v574 = vld [vmem:[#allocation2 + $0x69] sm:$0xff]
      %v575 = vld [vmem:[#allocation2 + $0x79] sm:$0xff]
      %v576 = vld [vmem:[#allocation2 + $0x81] sm:$0xff]
      %v577 = vld [vmem:[#allocation2 + $0x91] sm:$0xff]
      %v578 = vld [vmem:[#allocation2 + $0x99] sm:$0xff]
      %v579 = vld [vmem:[#allocation2 + $0xa9] sm:$0xff]
      %v580 = vld [vmem:[#allocation2 + $0xb1] sm:$0xff]
      %v581 = vld [vmem:[#allocation2 + $0xc1] sm:$0xff]
      %v582 = vld [vmem:[#allocation2 + $0xc9] sm:$0xff]
      %v583 = vld [vmem:[#allocation2 + $0xd9] sm:$0xff]
      %v584 = vld [vmem:[#allocation2 + $0xe1] sm:$0xff]
      %v585 = vld [vmem:[#allocation2 + $0xf1] sm:$0xff]
      %v586 = vld [vmem:[#allocation2 + $0xf9] sm:$0xff]
      %v587 = vld [vmem:[#allocation2 + $0x109] sm:$0xff]
      %v588 = vld [vmem:[#allocation2 + $0x111] sm:$0xff]
      %v589 = vld [vmem:[#allocation2 + $0x121] sm:$0xff]
      %v590 = vld [vmem:[#allocation2 + $0x129] sm:$0xff]
      %v591 = vld [vmem:[#allocation2 + $0x139] sm:$0xff]
      %v592 = vld [vmem:[#allocation2 + $0x141] sm:$0xff]
      %v593 = vld [vmem:[#allocation2 + $0x151] sm:$0xff]
      %v594 = vld [vmem:[#allocation2 + $0x159] sm:$0xff]
      %v595 = vld [vmem:[#allocation2 + $0x169] sm:$0xff]
      %v596 = vld [vmem:[#allocation2 + $0x171] sm:$0xff]
      %v597 = vld [vmem:[#allocation2 + $0x181] sm:$0xff]
      %v598 = vld [vmem:[#allocation2 + $0x189] sm:$0xff]
      %v599 = vld [vmem:[#allocation2 + $0x199] sm:$0xff]
      %v600 = vld [vmem:[#allocation2 + $0x1a1] sm:$0xff]
      %v601 = vld [vmem:[#allocation2 + $0x1b1] sm:$0xff]
      %v602 = vld [vmem:[#allocation2 + $0x1b9] sm:$0xff]
      %v603 = vld [vmem:[#allocation2 + $0x1c9] sm:$0xff]
      %v604 = vld [vmem:[#allocation2 + $0x1d1] sm:$0xff]
      %v605 = vld [vmem:[#allocation2 + $0x1e1] sm:$0xff]
      %v606 = vld [vmem:[#allocation2 + $0x1e9] sm:$0xff]
      %v607 = vld [vmem:[#allocation2 + $0x1f9] sm:$0xff]
      %v608 = vld [vmem:[#allocation2 + $0x201] sm:$0xff]
      %v609 = vld [vmem:[#allocation2 + $0x2] sm:$0xff]
      %v610 = vld [vmem:[#allocation2 + $0xa] sm:$0xff]
      %v611 = vld [vmem:[#allocation2 + $0x1a] sm:$0xff]
      %v612 = vld [vmem:[#allocation2 + $0x22] sm:$0xff]
      %v613 = vld [vmem:[#allocation2 + $0x32] sm:$0xff]
      %v614 = vld [vmem:[#allocation2 + $0x3a] sm:$0xff]
      %v615 = vld [vmem:[#allocation2 + $0x4a] sm:$0xff]
      %v616 = vld [vmem:[#allocation2 + $0x52] sm:$0xff]
      %v617 = vld [vmem:[#allocation2 + $0x62] sm:$0xff]
      %v618 = vld [vmem:[#allocation2 + $0x6a] sm:$0xff]
      %v619 = vld [vmem:[#allocation2 + $0x7a] sm:$0xff]
      %v620 = vld [vmem:[#allocation2 + $0x82] sm:$0xff]
      %v621 = vld [vmem:[#allocation2 + $0x92] sm:$0xff]
      %v622 = vld [vmem:[#allocation2 + $0x9a] sm:$0xff]
      %v623 = vld [vmem:[#allocation2 + $0xaa] sm:$0xff]
      %v624 = vld [vmem:[#allocation2 + $0xb2] sm:$0xff]
      %v625 = vld [vmem:[#allocation2 + $0xc2] sm:$0xff]
      %v626 = vld [vmem:[#allocation2 + $0xca] sm:$0xff]
      %v627 = vld [vmem:[#allocation2 + $0xda] sm:$0xff]
      %v628 = vld [vmem:[#allocation2 + $0xe2] sm:$0xff]
      %v629 = vld [vmem:[#allocation2 + $0xf2] sm:$0xff]
      %v630 = vld [vmem:[#allocation2 + $0xfa] sm:$0xff]
      %v631 = vld [vmem:[#allocation2 + $0x10a] sm:$0xff]
      %v632 = vld [vmem:[#allocation2 + $0x112] sm:$0xff]
      %v633 = vld [vmem:[#allocation2 + $0x122] sm:$0xff]
      %v634 = vld [vmem:[#allocation2 + $0x12a] sm:$0xff]
      %v635 = vld [vmem:[#allocation2 + $0x13a] sm:$0xff]
      %v636 = vld [vmem:[#allocation2 + $0x142] sm:$0xff]
      %v637 = vld [vmem:[#allocation2 + $0x152] sm:$0xff]
      %v638 = vld [vmem:[#allocation2 + $0x15a] sm:$0xff]
      %v639 = vld [vmem:[#allocation2 + $0x16a] sm:$0xff]
      %v640 = vld [vmem:[#allocation2 + $0x172] sm:$0xff]
      %v641 = vld [vmem:[#allocation2 + $0x182] sm:$0xff]
      %v642 = vld [vmem:[#allocation2 + $0x18a] sm:$0xff]
      %v643 = vld [vmem:[#allocation2 + $0x19a] sm:$0xff]
      %v644 = vld [vmem:[#allocation2 + $0x1a2] sm:$0xff]
      %v645 = vld [vmem:[#allocation2 + $0x1b2] sm:$0xff]
      %v646 = vld [vmem:[#allocation2 + $0x1ba] sm:$0xff]
      %v647 = vld [vmem:[#allocation2 + $0x1ca] sm:$0xff]
      %v648 = vld [vmem:[#allocation2 + $0x1d2] sm:$0xff]
      %v649 = vld [vmem:[#allocation2 + $0x1e2] sm:$0xff]
      %v650 = vld [vmem:[#allocation2 + $0x1ea] sm:$0xff]
      %v651 = vld [vmem:[#allocation2 + $0x1fa] sm:$0xff]
      %v652 = vld [vmem:[#allocation2 + $0x202] sm:$0xff]
      %v653 = vld [vmem:[#allocation2 + $0x3] sm:$0xff]
      %v654 = vld [vmem:[#allocation2 + $0xb] sm:$0xff]
      %v655 = vld [vmem:[#allocation2 + $0x1b] sm:$0xff]
      %v656 = vld [vmem:[#allocation2 + $0x23] sm:$0xff]
      %v657 = vld [vmem:[#allocation2 + $0x33] sm:$0xff]
      %v658 = vld [vmem:[#allocation2 + $0x3b] sm:$0xff]
      %v659 = vld [vmem:[#allocation2 + $0x4b] sm:$0xff]
      %v660 = vld [vmem:[#allocation2 + $0x53] sm:$0xff]
      %v661 = vld [vmem:[#allocation2 + $0x63] sm:$0xff]
      %v662 = vld [vmem:[#allocation2 + $0x6b] sm:$0xff]
      %v663 = vld [vmem:[#allocation2 + $0x7b] sm:$0xff]
      %v664 = vld [vmem:[#allocation2 + $0x83] sm:$0xff]
      %v665 = vld [vmem:[#allocation2 + $0x93] sm:$0xff]
      %v666 = vld [vmem:[#allocation2 + $0x9b] sm:$0xff]
      %v667 = vld [vmem:[#allocation2 + $0xab] sm:$0xff]
      %v668 = vld [vmem:[#allocation2 + $0xb3] sm:$0xff]
      %v669 = vld [vmem:[#allocation2 + $0xc3] sm:$0xff]
      %v670 = vld [vmem:[#allocation2 + $0xcb] sm:$0xff]
      %v671 = vld [vmem:[#allocation2 + $0xdb] sm:$0xff]
      %v672 = vld [vmem:[#allocation2 + $0xe3] sm:$0xff]
      %v673 = vld [vmem:[#allocation2 + $0xf3] sm:$0xff]
      %v674 = vld [vmem:[#allocation2 + $0xfb] sm:$0xff]
      %v675 = vld [vmem:[#allocation2 + $0x10b] sm:$0xff]
      %v676 = vld [vmem:[#allocation2 + $0x113] sm:$0xff]
      %v677 = vld [vmem:[#allocation2 + $0x123] sm:$0xff]
      %v678 = vld [vmem:[#allocation2 + $0x12b] sm:$0xff]
      %v679 = vld [vmem:[#allocation2 + $0x13b] sm:$0xff]
      %v680 = vld [vmem:[#allocation2 + $0x143] sm:$0xff]
      %v681 = vld [vmem:[#allocation2 + $0x153] sm:$0xff]
      %v682 = vld [vmem:[#allocation2 + $0x15b] sm:$0xff]
      %v683 = vld [vmem:[#allocation2 + $0x16b] sm:$0xff]
      %v684 = vld [vmem:[#allocation2 + $0x173] sm:$0xff]
      %v685 = vld [vmem:[#allocation2 + $0x183] sm:$0xff]
      %v686 = vld [vmem:[#allocation2 + $0x18b] sm:$0xff]
      %v687 = vld [vmem:[#allocation2 + $0x19b] sm:$0xff]
      %v688 = vld [vmem:[#allocation2 + $0x1a3] sm:$0xff]
      %v689 = vld [vmem:[#allocation2 + $0x1b3] sm:$0xff]
      %v690 = vld [vmem:[#allocation2 + $0x1bb] sm:$0xff]
      %v691 = vld [vmem:[#allocation2 + $0x1cb] sm:$0xff]
      %v692 = vld [vmem:[#allocation2 + $0x1d3] sm:$0xff]
      %v693 = vld [vmem:[#allocation2 + $0x1e3] sm:$0xff]
      %v694 = vld [vmem:[#allocation2 + $0x1eb] sm:$0xff]
      %v695 = vld [vmem:[#allocation2 + $0x1fb] sm:$0xff]
      %v696 = vld [vmem:[#allocation2 + $0x203] sm:$0xff]
      %v697 = vld [vmem:[#allocation2 + $0x4] sm:$0xff]
      %v698 = vld [vmem:[#allocation2 + $0xc] sm:$0xff]
      %v699 = vld [vmem:[#allocation2 + $0x1c] sm:$0xff]
      %v700 = vld [vmem:[#allocation2 + $0x24] sm:$0xff]
      %v701 = vld [vmem:[#allocation2 + $0x34] sm:$0xff]
      %v702 = vld [vmem:[#allocation2 + $0x3c] sm:$0xff]
      %v703 = vld [vmem:[#allocation2 + $0x4c] sm:$0xff]
      %v704 = vld [vmem:[#allocation2 + $0x54] sm:$0xff]
      %v705 = vld [vmem:[#allocation2 + $0x64] sm:$0xff]
      %v706 = vld [vmem:[#allocation2 + $0x6c] sm:$0xff]
      %v707 = vld [vmem:[#allocation2 + $0x7c] sm:$0xff]
      %v708 = vld [vmem:[#allocation2 + $0x84] sm:$0xff]
      %v709 = vld [vmem:[#allocation2 + $0x94] sm:$0xff]
      %v710 = vld [vmem:[#allocation2 + $0x9c] sm:$0xff]
      %v711 = vld [vmem:[#allocation2 + $0xac] sm:$0xff]
      %v712 = vld [vmem:[#allocation2 + $0xb4] sm:$0xff]
      %v713 = vld [vmem:[#allocation2 + $0xc4] sm:$0xff]
      %v714 = vld [vmem:[#allocation2 + $0xcc] sm:$0xff]
      %v715 = vld [vmem:[#allocation2 + $0xdc] sm:$0xff]
      %v716 = vld [vmem:[#allocation2 + $0xe4] sm:$0xff]
      %v717 = vld [vmem:[#allocation2 + $0xf4] sm:$0xff]
      %v718 = vld [vmem:[#allocation2 + $0xfc] sm:$0xff]
      %v719 = vld [vmem:[#allocation2 + $0x10c] sm:$0xff]
      %v720 = vld [vmem:[#allocation2 + $0x114] sm:$0xff]
      %v721 = vld [vmem:[#allocation2 + $0x124] sm:$0xff]
      %v722 = vld [vmem:[#allocation2 + $0x12c] sm:$0xff]
      %v723 = vld [vmem:[#allocation2 + $0x13c] sm:$0xff]
      %v724 = vld [vmem:[#allocation2 + $0x144] sm:$0xff]
      %v725 = vld [vmem:[#allocation2 + $0x154] sm:$0xff]
      %v726 = vld [vmem:[#allocation2 + $0x15c] sm:$0xff]
      %v727 = vld [vmem:[#allocation2 + $0x16c] sm:$0xff]
      %v728 = vld [vmem:[#allocation2 + $0x174] sm:$0xff]
      %v729 = vld [vmem:[#allocation2 + $0x184] sm:$0xff]
      %v730 = vld [vmem:[#allocation2 + $0x18c] sm:$0xff]
      %v731 = vld [vmem:[#allocation2 + $0x19c] sm:$0xff]
      %v732 = vld [vmem:[#allocation2 + $0x1a4] sm:$0xff]
      %v733 = vld [vmem:[#allocation2 + $0x1b4] sm:$0xff]
      %v734 = vld [vmem:[#allocation2 + $0x1bc] sm:$0xff]
      %v735 = vld [vmem:[#allocation2 + $0x1cc] sm:$0xff]
      %v736 = vld [vmem:[#allocation2 + $0x1d4] sm:$0xff]
      %v737 = vld [vmem:[#allocation2 + $0x1e4] sm:$0xff]
      %v738 = vld [vmem:[#allocation2 + $0x1ec] sm:$0xff]
      %v739 = vld [vmem:[#allocation2 + $0x1fc] sm:$0xff]
      %v740 = vld [vmem:[#allocation2 + $0x204] sm:$0xff]
      %v741 = vld [vmem:[#allocation2 + $0x5] sm:$0xff]
      %v742 = vld [vmem:[#allocation2 + $0xd] sm:$0xff]
      %v743 = vld [vmem:[#allocation2 + $0x1d] sm:$0xff]
      %v744 = vld [vmem:[#allocation2 + $0x25] sm:$0xff]
      %v745 = vld [vmem:[#allocation2 + $0x35] sm:$0xff]
      %v746 = vld [vmem:[#allocation2 + $0x3d] sm:$0xff]
      %v747 = vld [vmem:[#allocation2 + $0x4d] sm:$0xff]
      %v748 = vld [vmem:[#allocation2 + $0x55] sm:$0xff]
      %v749 = vld [vmem:[#allocation2 + $0x65] sm:$0xff]
      %v750 = vld [vmem:[#allocation2 + $0x6d] sm:$0xff]
      %v751 = vld [vmem:[#allocation2 + $0x7d] sm:$0xff]
      %v752 = vld [vmem:[#allocation2 + $0x85] sm:$0xff]
      %v753 = vld [vmem:[#allocation2 + $0x95] sm:$0xff]
      %v754 = vld [vmem:[#allocation2 + $0x9d] sm:$0xff]
      %v755 = vld [vmem:[#allocation2 + $0xad] sm:$0xff]
      %v756 = vld [vmem:[#allocation2 + $0xb5] sm:$0xff]
      %v757 = vld [vmem:[#allocation2 + $0xc5] sm:$0xff]
      %v758 = vld [vmem:[#allocation2 + $0xcd] sm:$0xff]
      %v759 = vld [vmem:[#allocation2 + $0xdd] sm:$0xff]
      %v760 = vld [vmem:[#allocation2 + $0xe5] sm:$0xff]
      %v761 = vld [vmem:[#allocation2 + $0xf5] sm:$0xff]
      %v762 = vld [vmem:[#allocation2 + $0xfd] sm:$0xff]
      %v763 = vld [vmem:[#allocation2 + $0x10d] sm:$0xff]
      %v764 = vld [vmem:[#allocation2 + $0x115] sm:$0xff]
      %v765 = vld [vmem:[#allocation2 + $0x125] sm:$0xff]
      %v766 = vld [vmem:[#allocation2 + $0x12d] sm:$0xff]
      %v767 = vld [vmem:[#allocation2 + $0x13d] sm:$0xff]
      %v768 = vld [vmem:[#allocation2 + $0x145] sm:$0xff]
      %v769 = vld [vmem:[#allocation2 + $0x155] sm:$0xff]
      %v770 = vld [vmem:[#allocation2 + $0x15d] sm:$0xff]
      %v771 = vld [vmem:[#allocation2 + $0x16d] sm:$0xff]
      %v772 = vld [vmem:[#allocation2 + $0x175] sm:$0xff]
      %v773 = vld [vmem:[#allocation2 + $0x185] sm:$0xff]
      %v774 = vld [vmem:[#allocation2 + $0x18d] sm:$0xff]
      %v775 = vld [vmem:[#allocation2 + $0x19d] sm:$0xff]
      %v776 = vld [vmem:[#allocation2 + $0x1a5] sm:$0xff]
      %v777 = vld [vmem:[#allocation2 + $0x1b5] sm:$0xff]
      %v778 = vld [vmem:[#allocation2 + $0x1bd] sm:$0xff]
      %v779 = vld [vmem:[#allocation2 + $0x1cd] sm:$0xff]
      %v780 = vld [vmem:[#allocation2 + $0x1d5] sm:$0xff]
      %v781 = vld [vmem:[#allocation2 + $0x1e5] sm:$0xff]
      %v782 = vld [vmem:[#allocation2 + $0x1ed] sm:$0xff]
      %v783 = vld [vmem:[#allocation2 + $0x1fd] sm:$0xff]
      %v784 = vld [vmem:[#allocation2 + $0x205] sm:$0xff]
      %v785 = vld [vmem:[#allocation2 + $0x6] sm:$0xff]
      %v786 = vld [vmem:[#allocation2 + $0xe] sm:$0xff]
      %v787 = vld [vmem:[#allocation2 + $0x1e] sm:$0xff]
      %v788 = vld [vmem:[#allocation2 + $0x26] sm:$0xff]
      %v789 = vld [vmem:[#allocation2 + $0x36] sm:$0xff]
      %v790 = vld [vmem:[#allocation2 + $0x3e] sm:$0xff]
      %v791 = vld [vmem:[#allocation2 + $0x4e] sm:$0xff]
      %v792 = vld [vmem:[#allocation2 + $0x56] sm:$0xff]
      %v793 = vld [vmem:[#allocation2 + $0x66] sm:$0xff]
      %v794 = vld [vmem:[#allocation2 + $0x6e] sm:$0xff]
      %v795 = vld [vmem:[#allocation2 + $0x7e] sm:$0xff]
      %v796 = vld [vmem:[#allocation2 + $0x86] sm:$0xff]
      %v797 = vld [vmem:[#allocation2 + $0x96] sm:$0xff]
      %v798 = vld [vmem:[#allocation2 + $0x9e] sm:$0xff]
      %v799 = vld [vmem:[#allocation2 + $0xae] sm:$0xff]
      %v800 = vld [vmem:[#allocation2 + $0xb6] sm:$0xff]
      %v801 = vld [vmem:[#allocation2 + $0xc6] sm:$0xff]
      %v802 = vld [vmem:[#allocation2 + $0xce] sm:$0xff]
      %v803 = vld [vmem:[#allocation2 + $0xde] sm:$0xff]
      %v804 = vld [vmem:[#allocation2 + $0xe6] sm:$0xff]
      %v805 = vld [vmem:[#allocation2 + $0xf6] sm:$0xff]
      %v806 = vld [vmem:[#allocation2 + $0xfe] sm:$0xff]
      %v807 = vld [vmem:[#allocation2 + $0x10e] sm:$0xff]
      %v808 = vld [vmem:[#allocation2 + $0x116] sm:$0xff]
      %v809 = vld [vmem:[#allocation2 + $0x126] sm:$0xff]
      %v810 = vld [vmem:[#allocation2 + $0x12e] sm:$0xff]
      %v811 = vld [vmem:[#allocation2 + $0x13e] sm:$0xff]
      %v812 = vld [vmem:[#allocation2 + $0x146] sm:$0xff]
      %v813 = vld [vmem:[#allocation2 + $0x156] sm:$0xff]
      %v814 = vld [vmem:[#allocation2 + $0x15e] sm:$0xff]
      %v815 = vld [vmem:[#allocation2 + $0x16e] sm:$0xff]
      %v816 = vld [vmem:[#allocation2 + $0x176] sm:$0xff]
      %v817 = vld [vmem:[#allocation2 + $0x186] sm:$0xff]
      %v818 = vld [vmem:[#allocation2 + $0x18e] sm:$0xff]
      %v819 = vld [vmem:[#allocation2 + $0x19e] sm:$0xff]
      %v820 = vld [vmem:[#allocation2 + $0x1a6] sm:$0xff]
      %v821 = vld [vmem:[#allocation2 + $0x1b6] sm:$0xff]
      %v822 = vld [vmem:[#allocation2 + $0x1be] sm:$0xff]
      %v823 = vld [vmem:[#allocation2 + $0x1ce] sm:$0xff]
      %v824 = vld [vmem:[#allocation2 + $0x1d6] sm:$0xff]
      %v825 = vld [vmem:[#allocation2 + $0x1e6] sm:$0xff]
      %v826 = vld [vmem:[#allocation2 + $0x1ee] sm:$0xff]
      %v827 = vld [vmem:[#allocation2 + $0x1fe] sm:$0xff]
      %v828 = vld [vmem:[#allocation2 + $0x206] sm:$0xff]
      %873 = vrot.lane.b32.xlu0 %v565, 4
      %v874 = vpop.permute.xlu0 %873
      %875 = vrot.lane.b32.xlu0 %v566, 4
      %v876 = vpop.permute.xlu0 %875
      %877 = vrot.lane.b32.xlu0 %v567, 4
      %v878 = vpop.permute.xlu0 %877
      %879 = vrot.lane.b32.xlu0 %v568, 4
      %v880 = vpop.permute.xlu0 %879
      %881 = vrot.lane.b32.xlu0 %v569, 4
      %v882 = vpop.permute.xlu0 %881
      %883 = vrot.lane.b32.xlu0 %v570, 4
      %v884 = vpop.permute.xlu0 %883
      %885 = vrot.lane.b32.xlu0 %v571, 4
      %v886 = vpop.permute.xlu0 %885
      %887 = vrot.lane.b32.xlu0 %v572, 4
      %v888 = vpop.permute.xlu0 %887
      %889 = vrot.lane.b32.xlu0 %v573, 4
      %v890 = vpop.permute.xlu0 %889
      %891 = vrot.lane.b32.xlu0 %v574, 4
      %v892 = vpop.permute.xlu0 %891
      %893 = vrot.lane.b32.xlu0 %v575, 4
      %v894 = vpop.permute.xlu0 %893
      %895 = vrot.lane.b32.xlu0 %v576, 4
      %v896 = vpop.permute.xlu0 %895
      %897 = vrot.lane.b32.xlu0 %v577, 4
      %v898 = vpop.permute.xlu0 %897
      %899 = vrot.lane.b32.xlu0 %v578, 4
      %v900 = vpop.permute.xlu0 %899
      %901 = vrot.lane.b32.xlu0 %v579, 4
      %v902 = vpop.permute.xlu0 %901
      %903 = vrot.lane.b32.xlu0 %v580, 4
      %v904 = vpop.permute.xlu0 %903
      %905 = vrot.lane.b32.xlu0 %v581, 4
      %v906 = vpop.permute.xlu0 %905
      %907 = vrot.lane.b32.xlu0 %v582, 4
      %v908 = vpop.permute.xlu0 %907
      %909 = vrot.lane.b32.xlu0 %v583, 4
      %v910 = vpop.permute.xlu0 %909
      %911 = vrot.lane.b32.xlu0 %v584, 4
      %v912 = vpop.permute.xlu0 %911
      %913 = vrot.lane.b32.xlu0 %v585, 4
      %v914 = vpop.permute.xlu0 %913
      %915 = vrot.lane.b32.xlu0 %v586, 4
      %v916 = vpop.permute.xlu0 %915
      %917 = vrot.lane.b32.xlu0 %v587, 4
      %v918 = vpop.permute.xlu0 %917
      %919 = vrot.lane.b32.xlu0 %v588, 4
      %v920 = vpop.permute.xlu0 %919
      %921 = vrot.lane.b32.xlu0 %v589, 4
      %v922 = vpop.permute.xlu0 %921
      %923 = vrot.lane.b32.xlu0 %v590, 4
      %v924 = vpop.permute.xlu0 %923
      %925 = vrot.lane.b32.xlu0 %v591, 4
      %v926 = vpop.permute.xlu0 %925
      %927 = vrot.lane.b32.xlu0 %v592, 4
      %v928 = vpop.permute.xlu0 %927
      %929 = vrot.lane.b32.xlu0 %v593, 4
      %v930 = vpop.permute.xlu0 %929
      %931 = vrot.lane.b32.xlu0 %v594, 4
      %v932 = vpop.permute.xlu0 %931
      %933 = vrot.lane.b32.xlu0 %v595, 4
      %v934 = vpop.permute.xlu0 %933
      %935 = vrot.lane.b32.xlu0 %v596, 4
      %v936 = vpop.permute.xlu0 %935
      %937 = vrot.lane.b32.xlu0 %v597, 4
      %v938 = vpop.permute.xlu0 %937
      %939 = vrot.lane.b32.xlu0 %v598, 4
      %v940 = vpop.permute.xlu0 %939
      %941 = vrot.lane.b32.xlu0 %v599, 4
      %v942 = vpop.permute.xlu0 %941
      %943 = vrot.lane.b32.xlu0 %v600, 4
      %v944 = vpop.permute.xlu0 %943
      %945 = vrot.lane.b32.xlu0 %v601, 4
      %v946 = vpop.permute.xlu0 %945
      %947 = vrot.lane.b32.xlu0 %v602, 4
      %v948 = vpop.permute.xlu0 %947
      %949 = vrot.lane.b32.xlu0 %v603, 4
      %v950 = vpop.permute.xlu0 %949
      %951 = vrot.lane.b32.xlu0 %v604, 4
      %v952 = vpop.permute.xlu0 %951
      %953 = vrot.lane.b32.xlu0 %v605, 4
      %v954 = vpop.permute.xlu0 %953
      %955 = vrot.lane.b32.xlu0 %v606, 4
      %v956 = vpop.permute.xlu0 %955
      %957 = vrot.lane.b32.xlu0 %v607, 4
      %v958 = vpop.permute.xlu0 %957
      %959 = vrot.lane.b32.xlu0 %v608, 4
      %v960 = vpop.permute.xlu0 %959
      %1049 = vrot.lane.b32.xlu0 %v609, 8
      %v1050 = vpop.permute.xlu0 %1049
      %1051 = vrot.lane.b32.xlu0 %v610, 8
      %v1052 = vpop.permute.xlu0 %1051
      %1053 = vrot.lane.b32.xlu0 %v611, 8
      %v1054 = vpop.permute.xlu0 %1053
      %1055 = vrot.lane.b32.xlu0 %v612, 8
      %v1056 = vpop.permute.xlu0 %1055
      %1057 = vrot.lane.b32.xlu0 %v613, 8
      %v1058 = vpop.permute.xlu0 %1057
      %1059 = vrot.lane.b32.xlu0 %v614, 8
      %v1060 = vpop.permute.xlu0 %1059
      %1061 = vrot.lane.b32.xlu0 %v615, 8
      %v1062 = vpop.permute.xlu0 %1061
      %1063 = vrot.lane.b32.xlu0 %v616, 8
      %v1064 = vpop.permute.xlu0 %1063
      %1065 = vrot.lane.b32.xlu0 %v617, 8
      %v1066 = vpop.permute.xlu0 %1065
      %1067 = vrot.lane.b32.xlu0 %v618, 8
      %v1068 = vpop.permute.xlu0 %1067
      %1069 = vrot.lane.b32.xlu0 %v619, 8
      %v1070 = vpop.permute.xlu0 %1069
      %1071 = vrot.lane.b32.xlu0 %v620, 8
      %v1072 = vpop.permute.xlu0 %1071
      %1073 = vrot.lane.b32.xlu0 %v621, 8
      %v1074 = vpop.permute.xlu0 %1073
      %1075 = vrot.lane.b32.xlu0 %v622, 8
      %v1076 = vpop.permute.xlu0 %1075
      %1077 = vrot.lane.b32.xlu0 %v623, 8
      %v1078 = vpop.permute.xlu0 %1077
      %1079 = vrot.lane.b32.xlu0 %v624, 8
      %v1080 = vpop.permute.xlu0 %1079
      %1081 = vrot.lane.b32.xlu0 %v625, 8
      %v1082 = vpop.permute.xlu0 %1081
      %1083 = vrot.lane.b32.xlu0 %v626, 8
      %v1084 = vpop.permute.xlu0 %1083
      %1085 = vrot.lane.b32.xlu0 %v627, 8
      %v1086 = vpop.permute.xlu0 %1085
      %1087 = vrot.lane.b32.xlu0 %v628, 8
      %v1088 = vpop.permute.xlu0 %1087
      %1089 = vrot.lane.b32.xlu0 %v629, 8
      %v1090 = vpop.permute.xlu0 %1089
      %1091 = vrot.lane.b32.xlu0 %v630, 8
      %v1092 = vpop.permute.xlu0 %1091
      %1093 = vrot.lane.b32.xlu0 %v631, 8
      %v1094 = vpop.permute.xlu0 %1093
      %1095 = vrot.lane.b32.xlu0 %v632, 8
      %v1096 = vpop.permute.xlu0 %1095
      %1097 = vrot.lane.b32.xlu0 %v633, 8
      %v1098 = vpop.permute.xlu0 %1097
      %1099 = vrot.lane.b32.xlu0 %v634, 8
      %v1100 = vpop.permute.xlu0 %1099
      %1101 = vrot.lane.b32.xlu0 %v635, 8
      %v1102 = vpop.permute.xlu0 %1101
      %1103 = vrot.lane.b32.xlu0 %v636, 8
      %v1104 = vpop.permute.xlu0 %1103
      %1105 = vrot.lane.b32.xlu0 %v637, 8
      %v1106 = vpop.permute.xlu0 %1105
      %1107 = vrot.lane.b32.xlu0 %v638, 8
      %v1108 = vpop.permute.xlu0 %1107
      %1109 = vrot.lane.b32.xlu0 %v639, 8
      %v1110 = vpop.permute.xlu0 %1109
      %1111 = vrot.lane.b32.xlu0 %v640, 8
      %v1112 = vpop.permute.xlu0 %1111
      %1113 = vrot.lane.b32.xlu0 %v641, 8
      %v1114 = vpop.permute.xlu0 %1113
      %1115 = vrot.lane.b32.xlu0 %v642, 8
      %v1116 = vpop.permute.xlu0 %1115
      %1117 = vrot.lane.b32.xlu0 %v643, 8
      %v1118 = vpop.permute.xlu0 %1117
      %1119 = vrot.lane.b32.xlu0 %v644, 8
      %v1120 = vpop.permute.xlu0 %1119
      %1121 = vrot.lane.b32.xlu0 %v645, 8
      %v1122 = vpop.permute.xlu0 %1121
      %1123 = vrot.lane.b32.xlu0 %v646, 8
      %v1124 = vpop.permute.xlu0 %1123
      %1125 = vrot.lane.b32.xlu0 %v647, 8
      %v1126 = vpop.permute.xlu0 %1125
      %1127 = vrot.lane.b32.xlu0 %v648, 8
      %v1128 = vpop.permute.xlu0 %1127
      %1129 = vrot.lane.b32.xlu0 %v649, 8
      %v1130 = vpop.permute.xlu0 %1129
      %1131 = vrot.lane.b32.xlu0 %v650, 8
      %v1132 = vpop.permute.xlu0 %1131
      %1133 = vrot.lane.b32.xlu0 %v651, 8
      %v1134 = vpop.permute.xlu0 %1133
      %1135 = vrot.lane.b32.xlu0 %v652, 8
      %v1136 = vpop.permute.xlu0 %1135
      %1225 = vrot.lane.b32.xlu0 %v653, 12
      %v1226 = vpop.permute.xlu0 %1225
      %1227 = vrot.lane.b32.xlu0 %v654, 12
      %v1228 = vpop.permute.xlu0 %1227
      %1229 = vrot.lane.b32.xlu0 %v655, 12
      %v1230 = vpop.permute.xlu0 %1229
      %1231 = vrot.lane.b32.xlu0 %v656, 12
      %v1232 = vpop.permute.xlu0 %1231
      %1233 = vrot.lane.b32.xlu0 %v657, 12
      %v1234 = vpop.permute.xlu0 %1233
      %1235 = vrot.lane.b32.xlu0 %v658, 12
      %v1236 = vpop.permute.xlu0 %1235
      %1237 = vrot.lane.b32.xlu0 %v659, 12
      %v1238 = vpop.permute.xlu0 %1237
      %1239 = vrot.lane.b32.xlu0 %v660, 12
      %v1240 = vpop.permute.xlu0 %1239
      %1241 = vrot.lane.b32.xlu0 %v661, 12
      %v1242 = vpop.permute.xlu0 %1241
      %1243 = vrot.lane.b32.xlu0 %v662, 12
      %v1244 = vpop.permute.xlu0 %1243
      %1245 = vrot.lane.b32.xlu0 %v663, 12
      %v1246 = vpop.permute.xlu0 %1245
      %1247 = vrot.lane.b32.xlu0 %v664, 12
      %v1248 = vpop.permute.xlu0 %1247
      %1249 = vrot.lane.b32.xlu0 %v665, 12
      %v1250 = vpop.permute.xlu0 %1249
      %1251 = vrot.lane.b32.xlu0 %v666, 12
      %v1252 = vpop.permute.xlu0 %1251
      %1253 = vrot.lane.b32.xlu0 %v667, 12
      %v1254 = vpop.permute.xlu0 %1253
      %1255 = vrot.lane.b32.xlu0 %v668, 12
      %v1256 = vpop.permute.xlu0 %1255
      %1257 = vrot.lane.b32.xlu0 %v669, 12
      %v1258 = vpop.permute.xlu0 %1257
      %1259 = vrot.lane.b32.xlu0 %v670, 12
      %v1260 = vpop.permute.xlu0 %1259
      %1261 = vrot.lane.b32.xlu0 %v671, 12
      %v1262 = vpop.permute.xlu0 %1261
      %1263 = vrot.lane.b32.xlu0 %v672, 12
      %v1264 = vpop.permute.xlu0 %1263
      %1265 = vrot.lane.b32.xlu0 %v673, 12
      %v1266 = vpop.permute.xlu0 %1265
      %1267 = vrot.lane.b32.xlu0 %v674, 12
      %v1268 = vpop.permute.xlu0 %1267
      %1269 = vrot.lane.b32.xlu0 %v675, 12
      %v1270 = vpop.permute.xlu0 %1269
      %1271 = vrot.lane.b32.xlu0 %v676, 12
      %v1272 = vpop.permute.xlu0 %1271
      %1273 = vrot.lane.b32.xlu0 %v677, 12
      %v1274 = vpop.permute.xlu0 %1273
      %1275 = vrot.lane.b32.xlu0 %v678, 12
      %v1276 = vpop.permute.xlu0 %1275
      %1277 = vrot.lane.b32.xlu0 %v679, 12
      %v1278 = vpop.permute.xlu0 %1277
      %1279 = vrot.lane.b32.xlu0 %v680, 12
      %v1280 = vpop.permute.xlu0 %1279
      %1281 = vrot.lane.b32.xlu0 %v681, 12
      %v1282 = vpop.permute.xlu0 %1281
      %1283 = vrot.lane.b32.xlu0 %v682, 12
      %v1284 = vpop.permute.xlu0 %1283
      %1285 = vrot.lane.b32.xlu0 %v683, 12
      %v1286 = vpop.permute.xlu0 %1285
      %1287 = vrot.lane.b32.xlu0 %v684, 12
      %v1288 = vpop.permute.xlu0 %1287
      %1289 = vrot.lane.b32.xlu0 %v685, 12
      %v1290 = vpop.permute.xlu0 %1289
      %1291 = vrot.lane.b32.xlu0 %v686, 12
      %v1292 = vpop.permute.xlu0 %1291
      %1293 = vrot.lane.b32.xlu0 %v687, 12
      %v1294 = vpop.permute.xlu0 %1293
      %1295 = vrot.lane.b32.xlu0 %v688, 12
      %v1296 = vpop.permute.xlu0 %1295
      %1297 = vrot.lane.b32.xlu0 %v689, 12
      %v1298 = vpop.permute.xlu0 %1297
      %1299 = vrot.lane.b32.xlu0 %v690, 12
      %v1300 = vpop.permute.xlu0 %1299
      %1301 = vrot.lane.b32.xlu0 %v691, 12
      %v1302 = vpop.permute.xlu0 %1301
      %1303 = vrot.lane.b32.xlu0 %v692, 12
      %v1304 = vpop.permute.xlu0 %1303
      %1305 = vrot.lane.b32.xlu0 %v693, 12
      %v1306 = vpop.permute.xlu0 %1305
      %1307 = vrot.lane.b32.xlu0 %v694, 12
      %v1308 = vpop.permute.xlu0 %1307
      %1309 = vrot.lane.b32.xlu0 %v695, 12
      %v1310 = vpop.permute.xlu0 %1309
      %1311 = vrot.lane.b32.xlu0 %v696, 12
      %v1312 = vpop.permute.xlu0 %1311
      %1401 = vrot.lane.b32.xlu0 %v697, 16
      %v1402 = vpop.permute.xlu0 %1401
      %1403 = vrot.lane.b32.xlu0 %v698, 16
      %v1404 = vpop.permute.xlu0 %1403
      %1405 = vrot.lane.b32.xlu0 %v699, 16
      %v1406 = vpop.permute.xlu0 %1405
      %1407 = vrot.lane.b32.xlu0 %v700, 16
      %v1408 = vpop.permute.xlu0 %1407
      %1409 = vrot.lane.b32.xlu0 %v701, 16
      %v1410 = vpop.permute.xlu0 %1409
      %1411 = vrot.lane.b32.xlu0 %v702, 16
      %v1412 = vpop.permute.xlu0 %1411
      %1413 = vrot.lane.b32.xlu0 %v703, 16
      %v1414 = vpop.permute.xlu0 %1413
      %1415 = vrot.lane.b32.xlu0 %v704, 16
      %v1416 = vpop.permute.xlu0 %1415
      %1417 = vrot.lane.b32.xlu0 %v705, 16
      %v1418 = vpop.permute.xlu0 %1417
      %1419 = vrot.lane.b32.xlu0 %v706, 16
      %v1420 = vpop.permute.xlu0 %1419
      %1421 = vrot.lane.b32.xlu0 %v707, 16
      %v1422 = vpop.permute.xlu0 %1421
      %1423 = vrot.lane.b32.xlu0 %v708, 16
      %v1424 = vpop.permute.xlu0 %1423
      %1425 = vrot.lane.b32.xlu0 %v709, 16
      %v1426 = vpop.permute.xlu0 %1425
      %1427 = vrot.lane.b32.xlu0 %v710, 16
      %v1428 = vpop.permute.xlu0 %1427
      %1429 = vrot.lane.b32.xlu0 %v711, 16
      %v1430 = vpop.permute.xlu0 %1429
      %1431 = vrot.lane.b32.xlu0 %v712, 16
      %v1432 = vpop.permute.xlu0 %1431
      %1433 = vrot.lane.b32.xlu0 %v713, 16
      %v1434 = vpop.permute.xlu0 %1433
      %1435 = vrot.lane.b32.xlu0 %v714, 16
      %v1436 = vpop.permute.xlu0 %1435
      %1437 = vrot.lane.b32.xlu0 %v715, 16
      %v1438 = vpop.permute.xlu0 %1437
      %1439 = vrot.lane.b32.xlu0 %v716, 16
      %v1440 = vpop.permute.xlu0 %1439
      %1441 = vrot.lane.b32.xlu0 %v717, 16
      %v1442 = vpop.permute.xlu0 %1441
      %1443 = vrot.lane.b32.xlu0 %v718, 16
      %v1444 = vpop.permute.xlu0 %1443
      %1445 = vrot.lane.b32.xlu0 %v719, 16
      %v1446 = vpop.permute.xlu0 %1445
      %1447 = vrot.lane.b32.xlu0 %v720, 16
      %v1448 = vpop.permute.xlu0 %1447
      %1449 = vrot.lane.b32.xlu0 %v721, 16
      %v1450 = vpop.permute.xlu0 %1449
      %1451 = vrot.lane.b32.xlu0 %v722, 16
      %v1452 = vpop.permute.xlu0 %1451
      %1453 = vrot.lane.b32.xlu0 %v723, 16
      %v1454 = vpop.permute.xlu0 %1453
      %1455 = vrot.lane.b32.xlu0 %v724, 16
      %v1456 = vpop.permute.xlu0 %1455
      %1457 = vrot.lane.b32.xlu0 %v725, 16
      %v1458 = vpop.permute.xlu0 %1457
      %1459 = vrot.lane.b32.xlu0 %v726, 16
      %v1460 = vpop.permute.xlu0 %1459
      %1461 = vrot.lane.b32.xlu0 %v727, 16
      %v1462 = vpop.permute.xlu0 %1461
      %1463 = vrot.lane.b32.xlu0 %v728, 16
      %v1464 = vpop.permute.xlu0 %1463
      %1465 = vrot.lane.b32.xlu0 %v729, 16
      %v1466 = vpop.permute.xlu0 %1465
      %1467 = vrot.lane.b32.xlu0 %v730, 16
      %v1468 = vpop.permute.xlu0 %1467
      %1469 = vrot.lane.b32.xlu0 %v731, 16
      %v1470 = vpop.permute.xlu0 %1469
      %1471 = vrot.lane.b32.xlu0 %v732, 16
      %v1472 = vpop.permute.xlu0 %1471
      %1473 = vrot.lane.b32.xlu0 %v733, 16
      %v1474 = vpop.permute.xlu0 %1473
      %1475 = vrot.lane.b32.xlu0 %v734, 16
      %v1476 = vpop.permute.xlu0 %1475
      %1477 = vrot.lane.b32.xlu0 %v735, 16
      %v1478 = vpop.permute.xlu0 %1477
      %1479 = vrot.lane.b32.xlu0 %v736, 16
      %v1480 = vpop.permute.xlu0 %1479
      %1481 = vrot.lane.b32.xlu0 %v737, 16
      %v1482 = vpop.permute.xlu0 %1481
      %1483 = vrot.lane.b32.xlu0 %v738, 16
      %v1484 = vpop.permute.xlu0 %1483
      %1485 = vrot.lane.b32.xlu0 %v739, 16
      %v1486 = vpop.permute.xlu0 %1485
      %1487 = vrot.lane.b32.xlu0 %v740, 16
      %v1488 = vpop.permute.xlu0 %1487
      %1577 = vrot.lane.b32.xlu0 %v741, 20
      %v1578 = vpop.permute.xlu0 %1577
      %1579 = vrot.lane.b32.xlu0 %v742, 20
      %v1580 = vpop.permute.xlu0 %1579
      %1581 = vrot.lane.b32.xlu0 %v743, 20
      %v1582 = vpop.permute.xlu0 %1581
      %1583 = vrot.lane.b32.xlu0 %v744, 20
      %v1584 = vpop.permute.xlu0 %1583
      %1585 = vrot.lane.b32.xlu0 %v745, 20
      %v1586 = vpop.permute.xlu0 %1585
      %1587 = vrot.lane.b32.xlu0 %v746, 20
      %v1588 = vpop.permute.xlu0 %1587
      %1589 = vrot.lane.b32.xlu0 %v747, 20
      %v1590 = vpop.permute.xlu0 %1589
      %1591 = vrot.lane.b32.xlu0 %v748, 20
      %v1592 = vpop.permute.xlu0 %1591
      %1593 = vrot.lane.b32.xlu0 %v749, 20
      %v1594 = vpop.permute.xlu0 %1593
      %1595 = vrot.lane.b32.xlu0 %v750, 20
      %v1596 = vpop.permute.xlu0 %1595
      %1597 = vrot.lane.b32.xlu0 %v751, 20
      %v1598 = vpop.permute.xlu0 %1597
      %1599 = vrot.lane.b32.xlu0 %v752, 20
      %v1600 = vpop.permute.xlu0 %1599
      %1601 = vrot.lane.b32.xlu0 %v753, 20
      %v1602 = vpop.permute.xlu0 %1601
      %1603 = vrot.lane.b32.xlu0 %v754, 20
      %v1604 = vpop.permute.xlu0 %1603
      %1605 = vrot.lane.b32.xlu0 %v755, 20
      %v1606 = vpop.permute.xlu0 %1605
      %1607 = vrot.lane.b32.xlu0 %v756, 20
      %v1608 = vpop.permute.xlu0 %1607
      %1609 = vrot.lane.b32.xlu0 %v757, 20
      %v1610 = vpop.permute.xlu0 %1609
      %1611 = vrot.lane.b32.xlu0 %v758, 20
      %v1612 = vpop.permute.xlu0 %1611
      %1613 = vrot.lane.b32.xlu0 %v759, 20
      %v1614 = vpop.permute.xlu0 %1613
      %1615 = vrot.lane.b32.xlu0 %v760, 20
      %v1616 = vpop.permute.xlu0 %1615
      %1617 = vrot.lane.b32.xlu0 %v761, 20
      %v1618 = vpop.permute.xlu0 %1617
      %1619 = vrot.lane.b32.xlu0 %v762, 20
      %v1620 = vpop.permute.xlu0 %1619
      %1621 = vrot.lane.b32.xlu0 %v763, 20
      %v1622 = vpop.permute.xlu0 %1621
      %1623 = vrot.lane.b32.xlu0 %v764, 20
      %v1624 = vpop.permute.xlu0 %1623
      %1625 = vrot.lane.b32.xlu0 %v765, 20
      %v1626 = vpop.permute.xlu0 %1625
      %1627 = vrot.lane.b32.xlu0 %v766, 20
      %v1628 = vpop.permute.xlu0 %1627
      %1629 = vrot.lane.b32.xlu0 %v767, 20
      %v1630 = vpop.permute.xlu0 %1629
      %1631 = vrot.lane.b32.xlu0 %v768, 20
      %v1632 = vpop.permute.xlu0 %1631
      %1633 = vrot.lane.b32.xlu0 %v769, 20
      %v1634 = vpop.permute.xlu0 %1633
      %1635 = vrot.lane.b32.xlu0 %v770, 20
      %v1636 = vpop.permute.xlu0 %1635
      %1637 = vrot.lane.b32.xlu0 %v771, 20
      %v1638 = vpop.permute.xlu0 %1637
      %1639 = vrot.lane.b32.xlu0 %v772, 20
      %v1640 = vpop.permute.xlu0 %1639
      %1641 = vrot.lane.b32.xlu0 %v773, 20
      %v1642 = vpop.permute.xlu0 %1641
      %1643 = vrot.lane.b32.xlu0 %v774, 20
      %v1644 = vpop.permute.xlu0 %1643
      %1645 = vrot.lane.b32.xlu0 %v775, 20
      %v1646 = vpop.permute.xlu0 %1645
      %1647 = vrot.lane.b32.xlu0 %v776, 20
      %v1648 = vpop.permute.xlu0 %1647
      %1649 = vrot.lane.b32.xlu0 %v777, 20
      %v1650 = vpop.permute.xlu0 %1649
      %1651 = vrot.lane.b32.xlu0 %v778, 20
      %v1652 = vpop.permute.xlu0 %1651
      %1653 = vrot.lane.b32.xlu0 %v779, 20
      %v1654 = vpop.permute.xlu0 %1653
      %1655 = vrot.lane.b32.xlu0 %v780, 20
      %v1656 = vpop.permute.xlu0 %1655
      %1657 = vrot.lane.b32.xlu0 %v781, 20
      %v1658 = vpop.permute.xlu0 %1657
      %1659 = vrot.lane.b32.xlu0 %v782, 20
      %v1660 = vpop.permute.xlu0 %1659
      %1661 = vrot.lane.b32.xlu0 %v783, 20
      %v1662 = vpop.permute.xlu0 %1661
      %1663 = vrot.lane.b32.xlu0 %v784, 20
      %v1664 = vpop.permute.xlu0 %1663
      %1753 = vrot.lane.b32.xlu0 %v785, 24
      %v1754 = vpop.permute.xlu0 %1753
      %1755 = vrot.lane.b32.xlu0 %v786, 24
      %v1756 = vpop.permute.xlu0 %1755
      %1757 = vrot.lane.b32.xlu0 %v787, 24
      %v1758 = vpop.permute.xlu0 %1757
      %1759 = vrot.lane.b32.xlu0 %v788, 24
      %v1760 = vpop.permute.xlu0 %1759
      %1761 = vrot.lane.b32.xlu0 %v789, 24
      %v1762 = vpop.permute.xlu0 %1761
      %1763 = vrot.lane.b32.xlu0 %v790, 24
      %v1764 = vpop.permute.xlu0 %1763
      %1765 = vrot.lane.b32.xlu0 %v791, 24
      %v1766 = vpop.permute.xlu0 %1765
      %1767 = vrot.lane.b32.xlu0 %v792, 24
      %v1768 = vpop.permute.xlu0 %1767
      %1769 = vrot.lane.b32.xlu0 %v793, 24
      %v1770 = vpop.permute.xlu0 %1769
      %1771 = vrot.lane.b32.xlu0 %v794, 24
      %v1772 = vpop.permute.xlu0 %1771
      %1773 = vrot.lane.b32.xlu0 %v795, 24
      %v1774 = vpop.permute.xlu0 %1773
      %1775 = vrot.lane.b32.xlu0 %v796, 24
      %v1776 = vpop.permute.xlu0 %1775
      %1777 = vrot.lane.b32.xlu0 %v797, 24
      %v1778 = vpop.permute.xlu0 %1777
      %1779 = vrot.lane.b32.xlu0 %v798, 24
      %v1780 = vpop.permute.xlu0 %1779
      %1781 = vrot.lane.b32.xlu0 %v799, 24
      %v1782 = vpop.permute.xlu0 %1781
      %1783 = vrot.lane.b32.xlu0 %v800, 24
      %v1784 = vpop.permute.xlu0 %1783
      %1785 = vrot.lane.b32.xlu0 %v801, 24
      %v1786 = vpop.permute.xlu0 %1785
      %1787 = vrot.lane.b32.xlu0 %v802, 24
      %v1788 = vpop.permute.xlu0 %1787
      %1789 = vrot.lane.b32.xlu0 %v803, 24
      %v1790 = vpop.permute.xlu0 %1789
      %1791 = vrot.lane.b32.xlu0 %v804, 24
      %v1792 = vpop.permute.xlu0 %1791
      %1793 = vrot.lane.b32.xlu0 %v805, 24
      %v1794 = vpop.permute.xlu0 %1793
      %1795 = vrot.lane.b32.xlu0 %v806, 24
      %v1796 = vpop.permute.xlu0 %1795
      %1797 = vrot.lane.b32.xlu0 %v807, 24
      %v1798 = vpop.permute.xlu0 %1797
      %1799 = vrot.lane.b32.xlu0 %v808, 24
      %v1800 = vpop.permute.xlu0 %1799
      %1801 = vrot.lane.b32.xlu0 %v809, 24
      %v1802 = vpop.permute.xlu0 %1801
      %1803 = vrot.lane.b32.xlu0 %v810, 24
      %v1804 = vpop.permute.xlu0 %1803
      %1805 = vrot.lane.b32.xlu0 %v811, 24
      %v1806 = vpop.permute.xlu0 %1805
      %1807 = vrot.lane.b32.xlu0 %v812, 24
      %v1808 = vpop.permute.xlu0 %1807
      %1809 = vrot.lane.b32.xlu0 %v813, 24
      %v1810 = vpop.permute.xlu0 %1809
      %1811 = vrot.lane.b32.xlu0 %v814, 24
      %v1812 = vpop.permute.xlu0 %1811
      %1813 = vrot.lane.b32.xlu0 %v815, 24
      %v1814 = vpop.permute.xlu0 %1813
      %1815 = vrot.lane.b32.xlu0 %v816, 24
      %v1816 = vpop.permute.xlu0 %1815
      %1817 = vrot.lane.b32.xlu0 %v817, 24
      %v1818 = vpop.permute.xlu0 %1817
      %1819 = vrot.lane.b32.xlu0 %v818, 24
      %v1820 = vpop.permute.xlu0 %1819
      %1821 = vrot.lane.b32.xlu0 %v819, 24
      %v1822 = vpop.permute.xlu0 %1821
      %1823 = vrot.lane.b32.xlu0 %v820, 24
      %v1824 = vpop.permute.xlu0 %1823
      %1825 = vrot.lane.b32.xlu0 %v821, 24
      %v1826 = vpop.permute.xlu0 %1825
      %1827 = vrot.lane.b32.xlu0 %v822, 24
      %v1828 = vpop.permute.xlu0 %1827
      %1829 = vrot.lane.b32.xlu0 %v823, 24
      %v1830 = vpop.permute.xlu0 %1829
      %1831 = vrot.lane.b32.xlu0 %v824, 24
      %v1832 = vpop.permute.xlu0 %1831
      %1833 = vrot.lane.b32.xlu0 %v825, 24
      %v1834 = vpop.permute.xlu0 %1833
      %1835 = vrot.lane.b32.xlu0 %v826, 24
      %v1836 = vpop.permute.xlu0 %1835
      %1837 = vrot.lane.b32.xlu0 %v827, 24
      %v1838 = vpop.permute.xlu0 %1837
      %1839 = vrot.lane.b32.xlu0 %v828, 24
      %v1840 = vpop.permute.xlu0 %1839
      %v1885 = vsel %vm388, %v521, %v874
      %v1886 = vsel %vm388, %v522, %v876
      %v1887 = vsel %vm388, %v523, %v878
      %v1888 = vsel %vm388, %v524, %v880
      %v1889 = vsel %vm388, %v525, %v882
      %v1890 = vsel %vm388, %v526, %v884
      %v1891 = vsel %vm388, %v527, %v886
      %v1892 = vsel %vm388, %v528, %v888
      %v1893 = vsel %vm388, %v529, %v890
      %v1894 = vsel %vm388, %v530, %v892
      %v1895 = vsel %vm388, %v531, %v894
      %v1896 = vsel %vm388, %v532, %v896
      %v1897 = vsel %vm388, %v533, %v898
      %v1898 = vsel %vm388, %v534, %v900
      %v1899 = vsel %vm388, %v535, %v902
      %v1900 = vsel %vm388, %v536, %v904
      %v1901 = vsel %vm388, %v537, %v906
      %v1902 = vsel %vm388, %v538, %v908
      %v1903 = vsel %vm388, %v539, %v910
      %v1904 = vsel %vm388, %v540, %v912
      %v1905 = vsel %vm388, %v541, %v914
      %v1906 = vsel %vm388, %v542, %v916
      %v1907 = vsel %vm388, %v543, %v918
      %v1908 = vsel %vm388, %v544, %v920
      %v1909 = vsel %vm388, %v545, %v922
      %v1910 = vsel %vm388, %v546, %v924
      %v1911 = vsel %vm388, %v547, %v926
      %v1912 = vsel %vm388, %v548, %v928
      %v1913 = vsel %vm388, %v549, %v930
      %v1914 = vsel %vm388, %v550, %v932
      %v1915 = vsel %vm388, %v551, %v934
      %v1916 = vsel %vm388, %v552, %v936
      %v1917 = vsel %vm388, %v553, %v938
      %v1918 = vsel %vm388, %v554, %v940
      %v1919 = vsel %vm388, %v555, %v942
      %v1920 = vsel %vm388, %v556, %v944
      %v1921 = vsel %vm388, %v557, %v946
      %v1922 = vsel %vm388, %v558, %v948
      %v1923 = vsel %vm388, %v559, %v950
      %v1924 = vsel %vm388, %v560, %v952
      %v1925 = vsel %vm388, %v561, %v954
      %v1926 = vsel %vm388, %v562, %v956
      %v1927 = vsel %vm388, %v563, %v958
      %v1928 = vsel %vm388, %v564, %v960
      %vm1929 = vcmask 64512
      %v1930 = vsel %vm1929, %v1885, %v1050
      %v1931 = vsel %vm1929, %v1886, %v1052
      %v1932 = vsel %vm1929, %v1887, %v1054
      %v1933 = vsel %vm1929, %v1888, %v1056
      %v1934 = vsel %vm1929, %v1889, %v1058
      %v1935 = vsel %vm1929, %v1890, %v1060
      %v1936 = vsel %vm1929, %v1891, %v1062
      %v1937 = vsel %vm1929, %v1892, %v1064
      %v1938 = vsel %vm1929, %v1893, %v1066
      %v1939 = vsel %vm1929, %v1894, %v1068
      %v1940 = vsel %vm1929, %v1895, %v1070
      %v1941 = vsel %vm1929, %v1896, %v1072
      %v1942 = vsel %vm1929, %v1897, %v1074
      %v1943 = vsel %vm1929, %v1898, %v1076
      %v1944 = vsel %vm1929, %v1899, %v1078
      %v1945 = vsel %vm1929, %v1900, %v1080
      %v1946 = vsel %vm1929, %v1901, %v1082
      %v1947 = vsel %vm1929, %v1902, %v1084
      %v1948 = vsel %vm1929, %v1903, %v1086
      %v1949 = vsel %vm1929, %v1904, %v1088
      %v1950 = vsel %vm1929, %v1905, %v1090
      %v1951 = vsel %vm1929, %v1906, %v1092
      %v1952 = vsel %vm1929, %v1907, %v1094
      %v1953 = vsel %vm1929, %v1908, %v1096
      %v1954 = vsel %vm1929, %v1909, %v1098
      %v1955 = vsel %vm1929, %v1910, %v1100
      %v1956 = vsel %vm1929, %v1911, %v1102
      %v1957 = vsel %vm1929, %v1912, %v1104
      %v1958 = vsel %vm1929, %v1913, %v1106
      %v1959 = vsel %vm1929, %v1914, %v1108
      %v1960 = vsel %vm1929, %v1915, %v1110
      %v1961 = vsel %vm1929, %v1916, %v1112
      %v1962 = vsel %vm1929, %v1917, %v1114
      %v1963 = vsel %vm1929, %v1918, %v1116
      %v1964 = vsel %vm1929, %v1919, %v1118
      %v1965 = vsel %vm1929, %v1920, %v1120
      %v1966 = vsel %vm1929, %v1921, %v1122
      %v1967 = vsel %vm1929, %v1922, %v1124
      %v1968 = vsel %vm1929, %v1923, %v1126
      %v1969 = vsel %vm1929, %v1924, %v1128
      %v1970 = vsel %vm1929, %v1925, %v1130
      %v1971 = vsel %vm1929, %v1926, %v1132
      %v1972 = vsel %vm1929, %v1927, %v1134
      %v1973 = vsel %vm1929, %v1928, %v1136
      %vm1974 = vcmask 97280
      %v1975 = vsel %vm1974, %v1930, %v1226
      %v1976 = vsel %vm1974, %v1931, %v1228
      %v1977 = vsel %vm1974, %v1932, %v1230
      %v1978 = vsel %vm1974, %v1933, %v1232
      %v1979 = vsel %vm1974, %v1934, %v1234
      %v1980 = vsel %vm1974, %v1935, %v1236
      %v1981 = vsel %vm1974, %v1936, %v1238
      %v1982 = vsel %vm1974, %v1937, %v1240
      %v1983 = vsel %vm1974, %v1938, %v1242
      %v1984 = vsel %vm1974, %v1939, %v1244
      %v1985 = vsel %vm1974, %v1940, %v1246
      %v1986 = vsel %vm1974, %v1941, %v1248
      %v1987 = vsel %vm1974, %v1942, %v1250
      %v1988 = vsel %vm1974, %v1943, %v1252
      %v1989 = vsel %vm1974, %v1944, %v1254
      %v1990 = vsel %vm1974, %v1945, %v1256
      %v1991 = vsel %vm1974, %v1946, %v1258
      %v1992 = vsel %vm1974, %v1947, %v1260
      %v1993 = vsel %vm1974, %v1948, %v1262
      %v1994 = vsel %vm1974, %v1949, %v1264
      %v1995 = vsel %vm1974, %v1950, %v1266
      %v1996 = vsel %vm1974, %v1951, %v1268
      %v1997 = vsel %vm1974, %v1952, %v1270
      %v1998 = vsel %vm1974, %v1953, %v1272
      %v1999 = vsel %vm1974, %v1954, %v1274
      %v2000 = vsel %vm1974, %v1955, %v1276
      %v2001 = vsel %vm1974, %v1956, %v1278
      %v2002 = vsel %vm1974, %v1957, %v1280
      %v2003 = vsel %vm1974, %v1958, %v1282
      %v2004 = vsel %vm1974, %v1959, %v1284
      %v2005 = vsel %vm1974, %v1960, %v1286
      %v2006 = vsel %vm1974, %v1961, %v1288
      %v2007 = vsel %vm1974, %v1962, %v1290
      %v2008 = vsel %vm1974, %v1963, %v1292
      %v2009 = vsel %vm1974, %v1964, %v1294
      %v2010 = vsel %vm1974, %v1965, %v1296
      %v2011 = vsel %vm1974, %v1966, %v1298
      %v2012 = vsel %vm1974, %v1967, %v1300
      %v2013 = vsel %vm1974, %v1968, %v1302
      %v2014 = vsel %vm1974, %v1969, %v1304
      %v2015 = vsel %vm1974, %v1970, %v1306
      %v2016 = vsel %vm1974, %v1971, %v1308
      %v2017 = vsel %vm1974, %v1972, %v1310
      %v2018 = vsel %vm1974, %v1973, %v1312
      %vm2019 = vcmask 130048
      %v2020 = vsel %vm2019, %v1975, %v1402
      %v2021 = vsel %vm2019, %v1976, %v1404
      %v2022 = vsel %vm2019, %v1977, %v1406
      %v2023 = vsel %vm2019, %v1978, %v1408
      %v2024 = vsel %vm2019, %v1979, %v1410
      %v2025 = vsel %vm2019, %v1980, %v1412
      %v2026 = vsel %vm2019, %v1981, %v1414
      %v2027 = vsel %vm2019, %v1982, %v1416
      %v2028 = vsel %vm2019, %v1983, %v1418
      %v2029 = vsel %vm2019, %v1984, %v1420
      %v2030 = vsel %vm2019, %v1985, %v1422
      %v2031 = vsel %vm2019, %v1986, %v1424
      %v2032 = vsel %vm2019, %v1987, %v1426
      %v2033 = vsel %vm2019, %v1988, %v1428
      %v2034 = vsel %vm2019, %v1989, %v1430
      %v2035 = vsel %vm2019, %v1990, %v1432
      %v2036 = vsel %vm2019, %v1991, %v1434
      %v2037 = vsel %vm2019, %v1992, %v1436
      %v2038 = vsel %vm2019, %v1993, %v1438
      %v2039 = vsel %vm2019, %v1994, %v1440
      %v2040 = vsel %vm2019, %v1995, %v1442
      %v2041 = vsel %vm2019, %v1996, %v1444
      %v2042 = vsel %vm2019, %v1997, %v1446
      %v2043 = vsel %vm2019, %v1998, %v1448
      %v2044 = vsel %vm2019, %v1999, %v1450
      %v2045 = vsel %vm2019, %v2000, %v1452
      %v2046 = vsel %vm2019, %v2001, %v1454
      %v2047 = vsel %vm2019, %v2002, %v1456
      %v2048 = vsel %vm2019, %v2003, %v1458
      %v2049 = vsel %vm2019, %v2004, %v1460
      %v2050 = vsel %vm2019, %v2005, %v1462
      %v2051 = vsel %vm2019, %v2006, %v1464
      %v2052 = vsel %vm2019, %v2007, %v1466
      %v2053 = vsel %vm2019, %v2008, %v1468
      %v2054 = vsel %vm2019, %v2009, %v1470
      %v2055 = vsel %vm2019, %v2010, %v1472
      %v2056 = vsel %vm2019, %v2011, %v1474
      %v2057 = vsel %vm2019, %v2012, %v1476
      %v2058 = vsel %vm2019, %v2013, %v1478
      %v2059 = vsel %vm2019, %v2014, %v1480
      %v2060 = vsel %vm2019, %v2015, %v1482
      %v2061 = vsel %vm2019, %v2016, %v1484
      %v2062 = vsel %vm2019, %v2017, %v1486
      %v2063 = vsel %vm2019, %v2018, %v1488
      %vm2064 = vcmask 162816
      %v2065 = vsel %vm2064, %v2020, %v1578
      %v2066 = vsel %vm2064, %v2021, %v1580
      %v2067 = vsel %vm2064, %v2022, %v1582
      %v2068 = vsel %vm2064, %v2023, %v1584
      %v2069 = vsel %vm2064, %v2024, %v1586
      %v2070 = vsel %vm2064, %v2025, %v1588
      %v2071 = vsel %vm2064, %v2026, %v1590
      %v2072 = vsel %vm2064, %v2027, %v1592
      %v2073 = vsel %vm2064, %v2028, %v1594
      %v2074 = vsel %vm2064, %v2029, %v1596
      %v2075 = vsel %vm2064, %v2030, %v1598
      %v2076 = vsel %vm2064, %v2031, %v1600
      %v2077 = vsel %vm2064, %v2032, %v1602
      %v2078 = vsel %vm2064, %v2033, %v1604
      %v2079 = vsel %vm2064, %v2034, %v1606
      %v2080 = vsel %vm2064, %v2035, %v1608
      %v2081 = vsel %vm2064, %v2036, %v1610
      %v2082 = vsel %vm2064, %v2037, %v1612
      %v2083 = vsel %vm2064, %v2038, %v1614
      %v2084 = vsel %vm2064, %v2039, %v1616
      %v2085 = vsel %vm2064, %v2040, %v1618
      %v2086 = vsel %vm2064, %v2041, %v1620
      %v2087 = vsel %vm2064, %v2042, %v1622
      %v2088 = vsel %vm2064, %v2043, %v1624
      %v2089 = vsel %vm2064, %v2044, %v1626
      %v2090 = vsel %vm2064, %v2045, %v1628
      %v2091 = vsel %vm2064, %v2046, %v1630
      %v2092 = vsel %vm2064, %v2047, %v1632
      %v2093 = vsel %vm2064, %v2048, %v1634
      %v2094 = vsel %vm2064, %v2049, %v1636
      %v2095 = vsel %vm2064, %v2050, %v1638
      %v2096 = vsel %vm2064, %v2051, %v1640
      %v2097 = vsel %vm2064, %v2052, %v1642
      %v2098 = vsel %vm2064, %v2053, %v1644
      %v2099 = vsel %vm2064, %v2054, %v1646
      %v2100 = vsel %vm2064, %v2055, %v1648
      %v2101 = vsel %vm2064, %v2056, %v1650
      %v2102 = vsel %vm2064, %v2057, %v1652
      %v2103 = vsel %vm2064, %v2058, %v1654
      %v2104 = vsel %vm2064, %v2059, %v1656
      %v2105 = vsel %vm2064, %v2060, %v1658
      %v2106 = vsel %vm2064, %v2061, %v1660
      %v2107 = vsel %vm2064, %v2062, %v1662
      %v2108 = vsel %vm2064, %v2063, %v1664
      %vm2109 = vcmask 195584
      %v2110 = vsel %vm2109, %v2065, %v1754
      %v2111 = vsel %vm2109, %v2066, %v1756
      %v2112 = vsel %vm2109, %v2067, %v1758
      %v2113 = vsel %vm2109, %v2068, %v1760
      %v2114 = vsel %vm2109, %v2069, %v1762
      %v2115 = vsel %vm2109, %v2070, %v1764
      %v2116 = vsel %vm2109, %v2071, %v1766
      %v2117 = vsel %vm2109, %v2072, %v1768
      %v2118 = vsel %vm2109, %v2073, %v1770
      %v2119 = vsel %vm2109, %v2074, %v1772
      %v2120 = vsel %vm2109, %v2075, %v1774
      %v2121 = vsel %vm2109, %v2076, %v1776
      %v2122 = vsel %vm2109, %v2077, %v1778
      %v2123 = vsel %vm2109, %v2078, %v1780
      %v2124 = vsel %vm2109, %v2079, %v1782
      %v2125 = vsel %vm2109, %v2080, %v1784
      %v2126 = vsel %vm2109, %v2081, %v1786
      %v2127 = vsel %vm2109, %v2082, %v1788
      %v2128 = vsel %vm2109, %v2083, %v1790
      %v2129 = vsel %vm2109, %v2084, %v1792
      %v2130 = vsel %vm2109, %v2085, %v1794
      %v2131 = vsel %vm2109, %v2086, %v1796
      %v2132 = vsel %vm2109, %v2087, %v1798
      %v2133 = vsel %vm2109, %v2088, %v1800
      %v2134 = vsel %vm2109, %v2089, %v1802
      %v2135 = vsel %vm2109, %v2090, %v1804
      %v2136 = vsel %vm2109, %v2091, %v1806
      %v2137 = vsel %vm2109, %v2092, %v1808
      %v2138 = vsel %vm2109, %v2093, %v1810
      %v2139 = vsel %vm2109, %v2094, %v1812
      %v2140 = vsel %vm2109, %v2095, %v1814
      %v2141 = vsel %vm2109, %v2096, %v1816
      %v2142 = vsel %vm2109, %v2097, %v1818
      %v2143 = vsel %vm2109, %v2098, %v1820
      %v2144 = vsel %vm2109, %v2099, %v1822
      %v2145 = vsel %vm2109, %v2100, %v1824
      %v2146 = vsel %vm2109, %v2101, %v1826
      %v2147 = vsel %vm2109, %v2102, %v1828
      %v2148 = vsel %vm2109, %v2103, %v1830
      %v2149 = vsel %vm2109, %v2104, %v1832
      %v2150 = vsel %vm2109, %v2105, %v1834
      %v2151 = vsel %vm2109, %v2106, %v1836
      %v2152 = vsel %vm2109, %v2107, %v1838
      %v2153 = vsel %vm2109, %v2108, %v1840
      %2186 = vrot.lane.b32.xlu0 %v2112, 28
      %v2187 = vpop.permute.xlu0 %2186
      %2188 = vrot.lane.b32.xlu0 %v2113, 28
      %v2189 = vpop.permute.xlu0 %2188
      %2190 = vrot.lane.b32.xlu0 %v2114, 28
      %v2191 = vpop.permute.xlu0 %2190
      %2192 = vrot.lane.b32.xlu0 %v2115, 28
      %v2193 = vpop.permute.xlu0 %2192
      %2194 = vrot.lane.b32.xlu0 %v2116, 28
      %v2195 = vpop.permute.xlu0 %2194
      %2196 = vrot.lane.b32.xlu0 %v2117, 28
      %v2197 = vpop.permute.xlu0 %2196
      %2198 = vrot.lane.b32.xlu0 %v2118, 28
      %v2199 = vpop.permute.xlu0 %2198
      %2200 = vrot.lane.b32.xlu0 %v2119, 28
      %v2201 = vpop.permute.xlu0 %2200
      %2202 = vrot.lane.b32.xlu0 %v2120, 28
      %v2203 = vpop.permute.xlu0 %2202
      %2204 = vrot.lane.b32.xlu0 %v2121, 28
      %v2205 = vpop.permute.xlu0 %2204
      %2206 = vrot.lane.b32.xlu0 %v2122, 28
      %v2207 = vpop.permute.xlu0 %2206
      %2208 = vrot.lane.b32.xlu0 %v2123, 28
      %v2209 = vpop.permute.xlu0 %2208
      %2210 = vrot.lane.b32.xlu0 %v2124, 28
      %v2211 = vpop.permute.xlu0 %2210
      %2212 = vrot.lane.b32.xlu0 %v2125, 28
      %v2213 = vpop.permute.xlu0 %2212
      %2214 = vrot.lane.b32.xlu0 %v2126, 28
      %v2215 = vpop.permute.xlu0 %2214
      %2216 = vrot.lane.b32.xlu0 %v2127, 28
      %v2217 = vpop.permute.xlu0 %2216
      %2218 = vrot.lane.b32.xlu0 %v2128, 28
      %v2219 = vpop.permute.xlu0 %2218
      %2220 = vrot.lane.b32.xlu0 %v2129, 28
      %v2221 = vpop.permute.xlu0 %2220
      %2222 = vrot.lane.b32.xlu0 %v2130, 28
      %v2223 = vpop.permute.xlu0 %2222
      %2224 = vrot.lane.b32.xlu0 %v2131, 28
      %v2225 = vpop.permute.xlu0 %2224
      %2226 = vrot.lane.b32.xlu0 %v2132, 28
      %v2227 = vpop.permute.xlu0 %2226
      %2228 = vrot.lane.b32.xlu0 %v2133, 28
      %v2229 = vpop.permute.xlu0 %2228
      %2230 = vrot.lane.b32.xlu0 %v2134, 28
      %v2231 = vpop.permute.xlu0 %2230
      %2232 = vrot.lane.b32.xlu0 %v2135, 28
      %v2233 = vpop.permute.xlu0 %2232
      %2234 = vrot.lane.b32.xlu0 %v2136, 28
      %v2235 = vpop.permute.xlu0 %2234
      %2236 = vrot.lane.b32.xlu0 %v2137, 28
      %v2237 = vpop.permute.xlu0 %2236
      %2238 = vrot.lane.b32.xlu0 %v2138, 28
      %v2239 = vpop.permute.xlu0 %2238
      %2240 = vrot.lane.b32.xlu0 %v2139, 28
      %v2241 = vpop.permute.xlu0 %2240
      %2242 = vrot.lane.b32.xlu0 %v2140, 28
      %v2243 = vpop.permute.xlu0 %2242
      %2244 = vrot.lane.b32.xlu0 %v2141, 28
      %v2245 = vpop.permute.xlu0 %2244
      %2246 = vrot.lane.b32.xlu0 %v2142, 28
      %v2247 = vpop.permute.xlu0 %2246
      %2248 = vrot.lane.b32.xlu0 %v2143, 28
      %v2249 = vpop.permute.xlu0 %2248
      %2284 = vrot.lane.b32.xlu0 %v2114, 56
      %v2285 = vpop.permute.xlu0 %2284
      %2286 = vrot.lane.b32.xlu0 %v2115, 56
      %v2287 = vpop.permute.xlu0 %2286
      %2288 = vrot.lane.b32.xlu0 %v2116, 56
      %v2289 = vpop.permute.xlu0 %2288
      %2290 = vrot.lane.b32.xlu0 %v2117, 56
      %v2291 = vpop.permute.xlu0 %2290
      %2292 = vrot.lane.b32.xlu0 %v2118, 56
      %v2293 = vpop.permute.xlu0 %2292
      %2294 = vrot.lane.b32.xlu0 %v2119, 56
      %v2295 = vpop.permute.xlu0 %2294
      %2296 = vrot.lane.b32.xlu0 %v2120, 56
      %v2297 = vpop.permute.xlu0 %2296
      %2298 = vrot.lane.b32.xlu0 %v2121, 56
      %v2299 = vpop.permute.xlu0 %2298
      %2300 = vrot.lane.b32.xlu0 %v2122, 56
      %v2301 = vpop.permute.xlu0 %2300
      %2302 = vrot.lane.b32.xlu0 %v2123, 56
      %v2303 = vpop.permute.xlu0 %2302
      %2304 = vrot.lane.b32.xlu0 %v2124, 56
      %v2305 = vpop.permute.xlu0 %2304
      %2306 = vrot.lane.b32.xlu0 %v2125, 56
      %v2307 = vpop.permute.xlu0 %2306
      %2308 = vrot.lane.b32.xlu0 %v2126, 56
      %v2309 = vpop.permute.xlu0 %2308
      %2310 = vrot.lane.b32.xlu0 %v2127, 56
      %v2311 = vpop.permute.xlu0 %2310
      %2312 = vrot.lane.b32.xlu0 %v2128, 56
      %v2313 = vpop.permute.xlu0 %2312
      %2314 = vrot.lane.b32.xlu0 %v2129, 56
      %v2315 = vpop.permute.xlu0 %2314
      %2316 = vrot.lane.b32.xlu0 %v2130, 56
      %v2317 = vpop.permute.xlu0 %2316
      %2318 = vrot.lane.b32.xlu0 %v2131, 56
      %v2319 = vpop.permute.xlu0 %2318
      %2320 = vrot.lane.b32.xlu0 %v2132, 56
      %v2321 = vpop.permute.xlu0 %2320
      %2322 = vrot.lane.b32.xlu0 %v2133, 56
      %v2323 = vpop.permute.xlu0 %2322
      %2324 = vrot.lane.b32.xlu0 %v2134, 56
      %v2325 = vpop.permute.xlu0 %2324
      %2326 = vrot.lane.b32.xlu0 %v2135, 56
      %v2327 = vpop.permute.xlu0 %2326
      %2328 = vrot.lane.b32.xlu0 %v2136, 56
      %v2329 = vpop.permute.xlu0 %2328
      %2330 = vrot.lane.b32.xlu0 %v2137, 56
      %v2331 = vpop.permute.xlu0 %2330
      %2332 = vrot.lane.b32.xlu0 %v2138, 56
      %v2333 = vpop.permute.xlu0 %2332
      %2334 = vrot.lane.b32.xlu0 %v2139, 56
      %v2335 = vpop.permute.xlu0 %2334
      %2336 = vrot.lane.b32.xlu0 %v2140, 56
      %v2337 = vpop.permute.xlu0 %2336
      %2338 = vrot.lane.b32.xlu0 %v2141, 56
      %v2339 = vpop.permute.xlu0 %2338
      %2340 = vrot.lane.b32.xlu0 %v2142, 56
      %v2341 = vpop.permute.xlu0 %2340
      %2342 = vrot.lane.b32.xlu0 %v2143, 56
      %v2343 = vpop.permute.xlu0 %2342
      %2344 = vrot.lane.b32.xlu0 %v2144, 56
      %v2345 = vpop.permute.xlu0 %2344
      %2346 = vrot.lane.b32.xlu0 %v2145, 56
      %v2347 = vpop.permute.xlu0 %2346
      %2382 = vrot.lane.b32.xlu0 %v2116, 84
      %v2383 = vpop.permute.xlu0 %2382
      %2384 = vrot.lane.b32.xlu0 %v2117, 84
      %v2385 = vpop.permute.xlu0 %2384
      %2386 = vrot.lane.b32.xlu0 %v2118, 84
      %v2387 = vpop.permute.xlu0 %2386
      %2388 = vrot.lane.b32.xlu0 %v2119, 84
      %v2389 = vpop.permute.xlu0 %2388
      %2390 = vrot.lane.b32.xlu0 %v2120, 84
      %v2391 = vpop.permute.xlu0 %2390
      %2392 = vrot.lane.b32.xlu0 %v2121, 84
      %v2393 = vpop.permute.xlu0 %2392
      %2394 = vrot.lane.b32.xlu0 %v2122, 84
      %v2395 = vpop.permute.xlu0 %2394
      %2396 = vrot.lane.b32.xlu0 %v2123, 84
      %v2397 = vpop.permute.xlu0 %2396
      %2398 = vrot.lane.b32.xlu0 %v2124, 84
      %v2399 = vpop.permute.xlu0 %2398
      %2400 = vrot.lane.b32.xlu0 %v2125, 84
      %v2401 = vpop.permute.xlu0 %2400
      %2402 = vrot.lane.b32.xlu0 %v2126, 84
      %v2403 = vpop.permute.xlu0 %2402
      %2404 = vrot.lane.b32.xlu0 %v2127, 84
      %v2405 = vpop.permute.xlu0 %2404
      %2406 = vrot.lane.b32.xlu0 %v2128, 84
      %v2407 = vpop.permute.xlu0 %2406
      %2408 = vrot.lane.b32.xlu0 %v2129, 84
      %v2409 = vpop.permute.xlu0 %2408
      %2410 = vrot.lane.b32.xlu0 %v2130, 84
      %v2411 = vpop.permute.xlu0 %2410
      %2412 = vrot.lane.b32.xlu0 %v2131, 84
      %v2413 = vpop.permute.xlu0 %2412
      %2414 = vrot.lane.b32.xlu0 %v2132, 84
      %v2415 = vpop.permute.xlu0 %2414
      %2416 = vrot.lane.b32.xlu0 %v2133, 84
      %v2417 = vpop.permute.xlu0 %2416
      %2418 = vrot.lane.b32.xlu0 %v2134, 84
      %v2419 = vpop.permute.xlu0 %2418
      %2420 = vrot.lane.b32.xlu0 %v2135, 84
      %v2421 = vpop.permute.xlu0 %2420
      %2422 = vrot.lane.b32.xlu0 %v2136, 84
      %v2423 = vpop.permute.xlu0 %2422
      %2424 = vrot.lane.b32.xlu0 %v2137, 84
      %v2425 = vpop.permute.xlu0 %2424
      %2426 = vrot.lane.b32.xlu0 %v2138, 84
      %v2427 = vpop.permute.xlu0 %2426
      %2428 = vrot.lane.b32.xlu0 %v2139, 84
      %v2429 = vpop.permute.xlu0 %2428
      %2430 = vrot.lane.b32.xlu0 %v2140, 84
      %v2431 = vpop.permute.xlu0 %2430
      %2432 = vrot.lane.b32.xlu0 %v2141, 84
      %v2433 = vpop.permute.xlu0 %2432
      %2434 = vrot.lane.b32.xlu0 %v2142, 84
      %v2435 = vpop.permute.xlu0 %2434
      %2436 = vrot.lane.b32.xlu0 %v2143, 84
      %v2437 = vpop.permute.xlu0 %2436
      %2438 = vrot.lane.b32.xlu0 %v2144, 84
      %v2439 = vpop.permute.xlu0 %2438
      %2440 = vrot.lane.b32.xlu0 %v2145, 84
      %v2441 = vpop.permute.xlu0 %2440
      %2442 = vrot.lane.b32.xlu0 %v2146, 84
      %v2443 = vpop.permute.xlu0 %2442
      %2444 = vrot.lane.b32.xlu0 %v2147, 84
      %v2445 = vpop.permute.xlu0 %2444
      %2480 = vrot.lane.b32.xlu0 %v2118, 112
      %v2481 = vpop.permute.xlu0 %2480
      %2482 = vrot.lane.b32.xlu0 %v2119, 112
      %v2483 = vpop.permute.xlu0 %2482
      %2484 = vrot.lane.b32.xlu0 %v2120, 112
      %v2485 = vpop.permute.xlu0 %2484
      %2486 = vrot.lane.b32.xlu0 %v2121, 112
      %v2487 = vpop.permute.xlu0 %2486
      %2488 = vrot.lane.b32.xlu0 %v2122, 112
      %v2489 = vpop.permute.xlu0 %2488
      %2490 = vrot.lane.b32.xlu0 %v2123, 112
      %v2491 = vpop.permute.xlu0 %2490
      %2492 = vrot.lane.b32.xlu0 %v2124, 112
      %v2493 = vpop.permute.xlu0 %2492
      %2494 = vrot.lane.b32.xlu0 %v2125, 112
      %v2495 = vpop.permute.xlu0 %2494
      %2496 = vrot.lane.b32.xlu0 %v2126, 112
      %v2497 = vpop.permute.xlu0 %2496
      %2498 = vrot.lane.b32.xlu0 %v2127, 112
      %v2499 = vpop.permute.xlu0 %2498
      %2500 = vrot.lane.b32.xlu0 %v2128, 112
      %v2501 = vpop.permute.xlu0 %2500
      %2502 = vrot.lane.b32.xlu0 %v2129, 112
      %v2503 = vpop.permute.xlu0 %2502
      %2504 = vrot.lane.b32.xlu0 %v2130, 112
      %v2505 = vpop.permute.xlu0 %2504
      %2506 = vrot.lane.b32.xlu0 %v2131, 112
      %v2507 = vpop.permute.xlu0 %2506
      %2508 = vrot.lane.b32.xlu0 %v2132, 112
      %v2509 = vpop.permute.xlu0 %2508
      %2510 = vrot.lane.b32.xlu0 %v2133, 112
      %v2511 = vpop.permute.xlu0 %2510
      %2512 = vrot.lane.b32.xlu0 %v2134, 112
      %v2513 = vpop.permute.xlu0 %2512
      %2514 = vrot.lane.b32.xlu0 %v2135, 112
      %v2515 = vpop.permute.xlu0 %2514
      %2516 = vrot.lane.b32.xlu0 %v2136, 112
      %v2517 = vpop.permute.xlu0 %2516
      %2518 = vrot.lane.b32.xlu0 %v2137, 112
      %v2519 = vpop.permute.xlu0 %2518
      %2520 = vrot.lane.b32.xlu0 %v2138, 112
      %v2521 = vpop.permute.xlu0 %2520
      %2522 = vrot.lane.b32.xlu0 %v2139, 112
      %v2523 = vpop.permute.xlu0 %2522
      %2524 = vrot.lane.b32.xlu0 %v2140, 112
      %v2525 = vpop.permute.xlu0 %2524
      %2526 = vrot.lane.b32.xlu0 %v2141, 112
      %v2527 = vpop.permute.xlu0 %2526
      %2528 = vrot.lane.b32.xlu0 %v2142, 112
      %v2529 = vpop.permute.xlu0 %2528
      %2530 = vrot.lane.b32.xlu0 %v2143, 112
      %v2531 = vpop.permute.xlu0 %2530
      %2532 = vrot.lane.b32.xlu0 %v2144, 112
      %v2533 = vpop.permute.xlu0 %2532
      %2534 = vrot.lane.b32.xlu0 %v2145, 112
      %v2535 = vpop.permute.xlu0 %2534
      %2536 = vrot.lane.b32.xlu0 %v2146, 112
      %v2537 = vpop.permute.xlu0 %2536
      %2538 = vrot.lane.b32.xlu0 %v2147, 112
      %v2539 = vpop.permute.xlu0 %2538
      %2540 = vrot.lane.b32.xlu0 %v2148, 112
      %v2541 = vpop.permute.xlu0 %2540
      %2542 = vrot.lane.b32.xlu0 %v2149, 112
      %v2543 = vpop.permute.xlu0 %2542
      %2578 = vrot.lane.b32.xlu0 %v2120, 12
      %v2579 = vpop.permute.xlu0 %2578
      %2580 = vrot.lane.b32.xlu0 %v2121, 12
      %v2581 = vpop.permute.xlu0 %2580
      %2582 = vrot.lane.b32.xlu0 %v2122, 12
      %v2583 = vpop.permute.xlu0 %2582
      %2584 = vrot.lane.b32.xlu0 %v2123, 12
      %v2585 = vpop.permute.xlu0 %2584
      %2586 = vrot.lane.b32.xlu0 %v2124, 12
      %v2587 = vpop.permute.xlu0 %2586
      %2588 = vrot.lane.b32.xlu0 %v2125, 12
      %v2589 = vpop.permute.xlu0 %2588
      %2590 = vrot.lane.b32.xlu0 %v2126, 12
      %v2591 = vpop.permute.xlu0 %2590
      %2592 = vrot.lane.b32.xlu0 %v2127, 12
      %v2593 = vpop.permute.xlu0 %2592
      %2594 = vrot.lane.b32.xlu0 %v2128, 12
      %v2595 = vpop.permute.xlu0 %2594
      %2596 = vrot.lane.b32.xlu0 %v2129, 12
      %v2597 = vpop.permute.xlu0 %2596
      %2598 = vrot.lane.b32.xlu0 %v2130, 12
      %v2599 = vpop.permute.xlu0 %2598
      %2600 = vrot.lane.b32.xlu0 %v2131, 12
      %v2601 = vpop.permute.xlu0 %2600
      %2602 = vrot.lane.b32.xlu0 %v2132, 12
      %v2603 = vpop.permute.xlu0 %2602
      %2604 = vrot.lane.b32.xlu0 %v2133, 12
      %v2605 = vpop.permute.xlu0 %2604
      %2606 = vrot.lane.b32.xlu0 %v2134, 12
      %v2607 = vpop.permute.xlu0 %2606
      %2608 = vrot.lane.b32.xlu0 %v2135, 12
      %v2609 = vpop.permute.xlu0 %2608
      %2610 = vrot.lane.b32.xlu0 %v2136, 12
      %v2611 = vpop.permute.xlu0 %2610
      %2612 = vrot.lane.b32.xlu0 %v2137, 12
      %v2613 = vpop.permute.xlu0 %2612
      %2614 = vrot.lane.b32.xlu0 %v2138, 12
      %v2615 = vpop.permute.xlu0 %2614
      %2616 = vrot.lane.b32.xlu0 %v2139, 12
      %v2617 = vpop.permute.xlu0 %2616
      %2618 = vrot.lane.b32.xlu0 %v2140, 12
      %v2619 = vpop.permute.xlu0 %2618
      %2620 = vrot.lane.b32.xlu0 %v2141, 12
      %v2621 = vpop.permute.xlu0 %2620
      %2622 = vrot.lane.b32.xlu0 %v2142, 12
      %v2623 = vpop.permute.xlu0 %2622
      %2624 = vrot.lane.b32.xlu0 %v2143, 12
      %v2625 = vpop.permute.xlu0 %2624
      %2626 = vrot.lane.b32.xlu0 %v2144, 12
      %v2627 = vpop.permute.xlu0 %2626
      %2628 = vrot.lane.b32.xlu0 %v2145, 12
      %v2629 = vpop.permute.xlu0 %2628
      %2630 = vrot.lane.b32.xlu0 %v2146, 12
      %v2631 = vpop.permute.xlu0 %2630
      %2632 = vrot.lane.b32.xlu0 %v2147, 12
      %v2633 = vpop.permute.xlu0 %2632
      %2634 = vrot.lane.b32.xlu0 %v2148, 12
      %v2635 = vpop.permute.xlu0 %2634
      %2636 = vrot.lane.b32.xlu0 %v2149, 12
      %v2637 = vpop.permute.xlu0 %2636
      %2638 = vrot.lane.b32.xlu0 %v2150, 12
      %v2639 = vpop.permute.xlu0 %2638
      %2640 = vrot.lane.b32.xlu0 %v2151, 12
      %v2641 = vpop.permute.xlu0 %2640
      %2676 = vrot.lane.b32.xlu0 %v2122, 40
      %v2677 = vpop.permute.xlu0 %2676
      %2678 = vrot.lane.b32.xlu0 %v2123, 40
      %v2679 = vpop.permute.xlu0 %2678
      %2680 = vrot.lane.b32.xlu0 %v2124, 40
      %v2681 = vpop.permute.xlu0 %2680
      %2682 = vrot.lane.b32.xlu0 %v2125, 40
      %v2683 = vpop.permute.xlu0 %2682
      %2684 = vrot.lane.b32.xlu0 %v2126, 40
      %v2685 = vpop.permute.xlu0 %2684
      %2686 = vrot.lane.b32.xlu0 %v2127, 40
      %v2687 = vpop.permute.xlu0 %2686
      %2688 = vrot.lane.b32.xlu0 %v2128, 40
      %v2689 = vpop.permute.xlu0 %2688
      %2690 = vrot.lane.b32.xlu0 %v2129, 40
      %v2691 = vpop.permute.xlu0 %2690
      %2692 = vrot.lane.b32.xlu0 %v2130, 40
      %v2693 = vpop.permute.xlu0 %2692
      %2694 = vrot.lane.b32.xlu0 %v2131, 40
      %v2695 = vpop.permute.xlu0 %2694
      %2696 = vrot.lane.b32.xlu0 %v2132, 40
      %v2697 = vpop.permute.xlu0 %2696
      %2698 = vrot.lane.b32.xlu0 %v2133, 40
      %v2699 = vpop.permute.xlu0 %2698
      %2700 = vrot.lane.b32.xlu0 %v2134, 40
      %v2701 = vpop.permute.xlu0 %2700
      %2702 = vrot.lane.b32.xlu0 %v2135, 40
      %v2703 = vpop.permute.xlu0 %2702
      %2704 = vrot.lane.b32.xlu0 %v2136, 40
      %v2705 = vpop.permute.xlu0 %2704
      %2706 = vrot.lane.b32.xlu0 %v2137, 40
      %v2707 = vpop.permute.xlu0 %2706
      %2708 = vrot.lane.b32.xlu0 %v2138, 40
      %v2709 = vpop.permute.xlu0 %2708
      %2710 = vrot.lane.b32.xlu0 %v2139, 40
      %v2711 = vpop.permute.xlu0 %2710
      %2712 = vrot.lane.b32.xlu0 %v2140, 40
      %v2713 = vpop.permute.xlu0 %2712
      %2714 = vrot.lane.b32.xlu0 %v2141, 40
      %v2715 = vpop.permute.xlu0 %2714
      %2716 = vrot.lane.b32.xlu0 %v2142, 40
      %v2717 = vpop.permute.xlu0 %2716
      %2718 = vrot.lane.b32.xlu0 %v2143, 40
      %v2719 = vpop.permute.xlu0 %2718
      %2720 = vrot.lane.b32.xlu0 %v2144, 40
      %v2721 = vpop.permute.xlu0 %2720
      %2722 = vrot.lane.b32.xlu0 %v2145, 40
      %v2723 = vpop.permute.xlu0 %2722
      %2724 = vrot.lane.b32.xlu0 %v2146, 40
      %v2725 = vpop.permute.xlu0 %2724
      %2726 = vrot.lane.b32.xlu0 %v2147, 40
      %v2727 = vpop.permute.xlu0 %2726
      %2728 = vrot.lane.b32.xlu0 %v2148, 40
      %v2729 = vpop.permute.xlu0 %2728
      %2730 = vrot.lane.b32.xlu0 %v2149, 40
      %v2731 = vpop.permute.xlu0 %2730
      %2732 = vrot.lane.b32.xlu0 %v2150, 40
      %v2733 = vpop.permute.xlu0 %2732
      %2734 = vrot.lane.b32.xlu0 %v2151, 40
      %v2735 = vpop.permute.xlu0 %2734
      %2736 = vrot.lane.b32.xlu0 %v2152, 40
      %v2737 = vpop.permute.xlu0 %2736
      %2738 = vrot.lane.b32.xlu0 %v2153, 40
      %v2739 = vpop.permute.xlu0 %2738
      %vm2772 = vcmask 228352
      %v2773 = vsel %vm2772, %v2110, %v2187
      %v2774 = vsel %vm2772, %v2111, %v2189
      %v2775 = vsel %vm2772, %v2112, %v2191
      %v2776 = vsel %vm2772, %v2113, %v2193
      %v2777 = vsel %vm2772, %v2114, %v2195
      %v2778 = vsel %vm2772, %v2115, %v2197
      %v2779 = vsel %vm2772, %v2116, %v2199
      %v2780 = vsel %vm2772, %v2117, %v2201
      %v2781 = vsel %vm2772, %v2118, %v2203
      %v2782 = vsel %vm2772, %v2119, %v2205
      %v2783 = vsel %vm2772, %v2120, %v2207
      %v2784 = vsel %vm2772, %v2121, %v2209
      %v2785 = vsel %vm2772, %v2122, %v2211
      %v2786 = vsel %vm2772, %v2123, %v2213
      %v2787 = vsel %vm2772, %v2124, %v2215
      %v2788 = vsel %vm2772, %v2125, %v2217
      %v2789 = vsel %vm2772, %v2126, %v2219
      %v2790 = vsel %vm2772, %v2127, %v2221
      %v2791 = vsel %vm2772, %v2128, %v2223
      %v2792 = vsel %vm2772, %v2129, %v2225
      %v2793 = vsel %vm2772, %v2130, %v2227
      %v2794 = vsel %vm2772, %v2131, %v2229
      %v2795 = vsel %vm2772, %v2132, %v2231
      %v2796 = vsel %vm2772, %v2133, %v2233
      %v2797 = vsel %vm2772, %v2134, %v2235
      %v2798 = vsel %vm2772, %v2135, %v2237
      %v2799 = vsel %vm2772, %v2136, %v2239
      %v2800 = vsel %vm2772, %v2137, %v2241
      %v2801 = vsel %vm2772, %v2138, %v2243
      %v2802 = vsel %vm2772, %v2139, %v2245
      %v2803 = vsel %vm2772, %v2140, %v2247
      %v2804 = vsel %vm2772, %v2141, %v2249
      %vm2805 = vcmask 457728
      %v2806 = vsel %vm2805, %v2773, %v2285
      %v2807 = vsel %vm2805, %v2774, %v2287
      %v2808 = vsel %vm2805, %v2775, %v2289
      %v2809 = vsel %vm2805, %v2776, %v2291
      %v2810 = vsel %vm2805, %v2777, %v2293
      %v2811 = vsel %vm2805, %v2778, %v2295
      %v2812 = vsel %vm2805, %v2779, %v2297
      %v2813 = vsel %vm2805, %v2780, %v2299
      %v2814 = vsel %vm2805, %v2781, %v2301
      %v2815 = vsel %vm2805, %v2782, %v2303
      %v2816 = vsel %vm2805, %v2783, %v2305
      %v2817 = vsel %vm2805, %v2784, %v2307
      %v2818 = vsel %vm2805, %v2785, %v2309
      %v2819 = vsel %vm2805, %v2786, %v2311
      %v2820 = vsel %vm2805, %v2787, %v2313
      %v2821 = vsel %vm2805, %v2788, %v2315
      %v2822 = vsel %vm2805, %v2789, %v2317
      %v2823 = vsel %vm2805, %v2790, %v2319
      %v2824 = vsel %vm2805, %v2791, %v2321
      %v2825 = vsel %vm2805, %v2792, %v2323
      %v2826 = vsel %vm2805, %v2793, %v2325
      %v2827 = vsel %vm2805, %v2794, %v2327
      %v2828 = vsel %vm2805, %v2795, %v2329
      %v2829 = vsel %vm2805, %v2796, %v2331
      %v2830 = vsel %vm2805, %v2797, %v2333
      %v2831 = vsel %vm2805, %v2798, %v2335
      %v2832 = vsel %vm2805, %v2799, %v2337
      %v2833 = vsel %vm2805, %v2800, %v2339
      %v2834 = vsel %vm2805, %v2801, %v2341
      %v2835 = vsel %vm2805, %v2802, %v2343
      %v2836 = vsel %vm2805, %v2803, %v2345
      %v2837 = vsel %vm2805, %v2804, %v2347
      %vm2838 = vcmask 687104
      %v2839 = vsel %vm2838, %v2806, %v2383
      %v2840 = vsel %vm2838, %v2807, %v2385
      %v2841 = vsel %vm2838, %v2808, %v2387
      %v2842 = vsel %vm2838, %v2809, %v2389
      %v2843 = vsel %vm2838, %v2810, %v2391
      %v2844 = vsel %vm2838, %v2811, %v2393
      %v2845 = vsel %vm2838, %v2812, %v2395
      %v2846 = vsel %vm2838, %v2813, %v2397
      %v2847 = vsel %vm2838, %v2814, %v2399
      %v2848 = vsel %vm2838, %v2815, %v2401
      %v2849 = vsel %vm2838, %v2816, %v2403
      %v2850 = vsel %vm2838, %v2817, %v2405
      %v2851 = vsel %vm2838, %v2818, %v2407
      %v2852 = vsel %vm2838, %v2819, %v2409
      %v2853 = vsel %vm2838, %v2820, %v2411
      %v2854 = vsel %vm2838, %v2821, %v2413
      %v2855 = vsel %vm2838, %v2822, %v2415
      %v2856 = vsel %vm2838, %v2823, %v2417
      %v2857 = vsel %vm2838, %v2824, %v2419
      %v2858 = vsel %vm2838, %v2825, %v2421
      %v2859 = vsel %vm2838, %v2826, %v2423
      %v2860 = vsel %vm2838, %v2827, %v2425
      %v2861 = vsel %vm2838, %v2828, %v2427
      %v2862 = vsel %vm2838, %v2829, %v2429
      %v2863 = vsel %vm2838, %v2830, %v2431
      %v2864 = vsel %vm2838, %v2831, %v2433
      %v2865 = vsel %vm2838, %v2832, %v2435
      %v2866 = vsel %vm2838, %v2833, %v2437
      %v2867 = vsel %vm2838, %v2834, %v2439
      %v2868 = vsel %vm2838, %v2835, %v2441
      %v2869 = vsel %vm2838, %v2836, %v2443
      %v2870 = vsel %vm2838, %v2837, %v2445
      %vm2871 = vcmask 916480
      %v2872 = vsel %vm2871, %v2839, %v2481
      %v2873 = vsel %vm2871, %v2840, %v2483
      %v2874 = vsel %vm2871, %v2841, %v2485
      %v2875 = vsel %vm2871, %v2842, %v2487
      %v2876 = vsel %vm2871, %v2843, %v2489
      %v2877 = vsel %vm2871, %v2844, %v2491
      %v2878 = vsel %vm2871, %v2845, %v2493
      %v2879 = vsel %vm2871, %v2846, %v2495
      %v2880 = vsel %vm2871, %v2847, %v2497
      %v2881 = vsel %vm2871, %v2848, %v2499
      %v2882 = vsel %vm2871, %v2849, %v2501
      %v2883 = vsel %vm2871, %v2850, %v2503
      %v2884 = vsel %vm2871, %v2851, %v2505
      %v2885 = vsel %vm2871, %v2852, %v2507
      %v2886 = vsel %vm2871, %v2853, %v2509
      %v2887 = vsel %vm2871, %v2854, %v2511
      %v2888 = vsel %vm2871, %v2855, %v2513
      %v2889 = vsel %vm2871, %v2856, %v2515
      %v2890 = vsel %vm2871, %v2857, %v2517
      %v2891 = vsel %vm2871, %v2858, %v2519
      %v2892 = vsel %vm2871, %v2859, %v2521
      %v2893 = vsel %vm2871, %v2860, %v2523
      %v2894 = vsel %vm2871, %v2861, %v2525
      %v2895 = vsel %vm2871, %v2862, %v2527
      %v2896 = vsel %vm2871, %v2863, %v2529
      %v2897 = vsel %vm2871, %v2864, %v2531
      %v2898 = vsel %vm2871, %v2865, %v2533
      %v2899 = vsel %vm2871, %v2866, %v2535
      %v2900 = vsel %vm2871, %v2867, %v2537
      %v2901 = vsel %vm2871, %v2868, %v2539
      %v2902 = vsel %vm2871, %v2869, %v2541
      %v2903 = vsel %vm2871, %v2870, %v2543
      %v2904 = vsel %vm1974, %v2481, %v2579
      %v2905 = vsel %vm1974, %v2483, %v2581
      %v2906 = vsel %vm1974, %v2485, %v2583
      %v2907 = vsel %vm1974, %v2487, %v2585
      %v2908 = vsel %vm1974, %v2489, %v2587
      %v2909 = vsel %vm1974, %v2491, %v2589
      %v2910 = vsel %vm1974, %v2493, %v2591
      %v2911 = vsel %vm1974, %v2495, %v2593
      %v2912 = vsel %vm1974, %v2497, %v2595
      %v2913 = vsel %vm1974, %v2499, %v2597
      %v2914 = vsel %vm1974, %v2501, %v2599
      %v2915 = vsel %vm1974, %v2503, %v2601
      %v2916 = vsel %vm1974, %v2505, %v2603
      %v2917 = vsel %vm1974, %v2507, %v2605
      %v2918 = vsel %vm1974, %v2509, %v2607
      %v2919 = vsel %vm1974, %v2511, %v2609
      %v2920 = vsel %vm1974, %v2513, %v2611
      %v2921 = vsel %vm1974, %v2515, %v2613
      %v2922 = vsel %vm1974, %v2517, %v2615
      %v2923 = vsel %vm1974, %v2519, %v2617
      %v2924 = vsel %vm1974, %v2521, %v2619
      %v2925 = vsel %vm1974, %v2523, %v2621
      %v2926 = vsel %vm1974, %v2525, %v2623
      %v2927 = vsel %vm1974, %v2527, %v2625
      %v2928 = vsel %vm1974, %v2529, %v2627
      %v2929 = vsel %vm1974, %v2531, %v2629
      %v2930 = vsel %vm1974, %v2533, %v2631
      %v2931 = vsel %vm1974, %v2535, %v2633
      %v2932 = vsel %vm1974, %v2537, %v2635
      %v2933 = vsel %vm1974, %v2539, %v2637
      %v2934 = vsel %vm1974, %v2541, %v2639
      %v2935 = vsel %vm1974, %v2543, %v2641
      %vm2936 = vcmask 326656
      %v2937 = vsel %vm2936, %v2904, %v2677
      %v2938 = vsel %vm2936, %v2905, %v2679
      %v2939 = vsel %vm2936, %v2906, %v2681
      %v2940 = vsel %vm2936, %v2907, %v2683
      %v2941 = vsel %vm2936, %v2908, %v2685
      %v2942 = vsel %vm2936, %v2909, %v2687
      %v2943 = vsel %vm2936, %v2910, %v2689
      %v2944 = vsel %vm2936, %v2911, %v2691
      %v2945 = vsel %vm2936, %v2912, %v2693
      %v2946 = vsel %vm2936, %v2913, %v2695
      %v2947 = vsel %vm2936, %v2914, %v2697
      %v2948 = vsel %vm2936, %v2915, %v2699
      %v2949 = vsel %vm2936, %v2916, %v2701
      %v2950 = vsel %vm2936, %v2917, %v2703
      %v2951 = vsel %vm2936, %v2918, %v2705
      %v2952 = vsel %vm2936, %v2919, %v2707
      %v2953 = vsel %vm2936, %v2920, %v2709
      %v2954 = vsel %vm2936, %v2921, %v2711
      %v2955 = vsel %vm2936, %v2922, %v2713
      %v2956 = vsel %vm2936, %v2923, %v2715
      %v2957 = vsel %vm2936, %v2924, %v2717
      %v2958 = vsel %vm2936, %v2925, %v2719
      %v2959 = vsel %vm2936, %v2926, %v2721
      %v2960 = vsel %vm2936, %v2927, %v2723
      %v2961 = vsel %vm2936, %v2928, %v2725
      %v2962 = vsel %vm2936, %v2929, %v2727
      %v2963 = vsel %vm2936, %v2930, %v2729
      %v2964 = vsel %vm2936, %v2931, %v2731
      %v2965 = vsel %vm2936, %v2932, %v2733
      %v2966 = vsel %vm2936, %v2933, %v2735
      %v2967 = vsel %vm2936, %v2934, %v2737
      %v2968 = vsel %vm2936, %v2935, %v2739
      %v2969 = vpack.c.bf16 %v2873, %v2872
      %v2970 = vpack.c.bf16 %v2938, %v2937
      %v2971 = vpack.c.bf16 %v2875, %v2874
      %v2972 = vpack.c.bf16 %v2940, %v2939
      %v2973 = vpack.c.bf16 %v2877, %v2876
      %v2974 = vpack.c.bf16 %v2942, %v2941
      %v2975 = vpack.c.bf16 %v2879, %v2878
      %v2976 = vpack.c.bf16 %v2944, %v2943
      %v2977 = vpack.c.bf16 %v2881, %v2880
      %v2978 = vpack.c.bf16 %v2946, %v2945
      %v2979 = vpack.c.bf16 %v2883, %v2882
      %v2980 = vpack.c.bf16 %v2948, %v2947
      %v2981 = vpack.c.bf16 %v2885, %v2884
      %v2982 = vpack.c.bf16 %v2950, %v2949
      %v2983 = vpack.c.bf16 %v2887, %v2886
      %v2984 = vpack.c.bf16 %v2952, %v2951
      %v2985 = vpack.c.bf16 %v2889, %v2888
      %v2986 = vpack.c.bf16 %v2954, %v2953
      %v2987 = vpack.c.bf16 %v2891, %v2890
      %v2988 = vpack.c.bf16 %v2956, %v2955
      %v2989 = vpack.c.bf16 %v2893, %v2892
      %v2990 = vpack.c.bf16 %v2958, %v2957
      %v2991 = vpack.c.bf16 %v2895, %v2894
      %v2992 = vpack.c.bf16 %v2960, %v2959
      %v2993 = vpack.c.bf16 %v2897, %v2896
      %v2994 = vpack.c.bf16 %v2962, %v2961
      %v2995 = vpack.c.bf16 %v2899, %v2898
      %v2996 = vpack.c.bf16 %v2964, %v2963
      %v2997 = vpack.c.bf16 %v2901, %v2900
      %v2998 = vpack.c.bf16 %v2966, %v2965
      %v2999 = vpack.c.bf16 %v2903, %v2902
      %v3000 = vpack.c.bf16 %v2968, %v2967
      %v3001 = vld [vmem:[%s1] sm:$0xf]
      %v3002 = vld [vmem:[%s1 + $0x4] sm:$0xf]
      %v3003 = vld [vmem:[%s1 + $0x8] sm:$0xf]
      %v3004 = vld [vmem:[%s1 + $0xc] sm:$0xf]
      %v3005 = vld [vmem:[%s1 + $0x10] sm:$0xf]
      %v3006 = vld [vmem:[%s1 + $0x14] sm:$0xf]
      %v3007 = vld [vmem:[%s1 + $0x18] sm:$0xf]
      %v3008 = vld [vmem:[%s1 + $0x1c] sm:$0xf]
      %v3009 = vld [vmem:[%s1 + $0x20] sm:$0xf]
      %v3010 = vld [vmem:[%s1 + $0x24] sm:$0xf]
      %v3011 = vld [vmem:[%s1 + $0x28] sm:$0xf]
      %v3012 = vld [vmem:[%s1 + $0x2c] sm:$0xf]
      %v3013 = vld [vmem:[%s1 + $0x30] sm:$0xf]
      %v3014 = vld [vmem:[%s1 + $0x34] sm:$0xf]
      %v3015 = vld [vmem:[%s1 + $0x38] sm:$0xf]
      %v3016 = vld [vmem:[%s1 + $0x3c] sm:$0xf]
      %v3017 = vld [vmem:[%s1 + $0x40] sm:$0xf]
      %v3018 = vld [vmem:[%s1 + $0x44] sm:$0xf]
      %v3019 = vld [vmem:[%s1 + $0x48] sm:$0xf]
      %v3020 = vld [vmem:[%s1 + $0x4c] sm:$0xf]
      %v3021 = vld [vmem:[%s1 + $0x50] sm:$0xf]
      %v3022 = vld [vmem:[%s1 + $0x54] sm:$0xf]
      %v3023 = vld [vmem:[%s1 + $0x58] sm:$0xf]
      %v3024 = vld [vmem:[%s1 + $0x5c] sm:$0xf]
      %v3025 = vld [vmem:[%s1 + $0x60] sm:$0x3]
      %v3051 = vunpack.c.l.b16 %v3001
      %v3052 = vunpack.c.l.b16 %v3002
      %v3053 = vunpack.c.l.b16 %v3003
      %v3054 = vunpack.c.l.b16 %v3004
      %v3055 = vunpack.c.l.b16 %v3005
      %v3056 = vunpack.c.l.b16 %v3006
      %v3057 = vunpack.c.l.b16 %v3007
      %v3058 = vunpack.c.l.b16 %v3008
      %v3059 = vunpack.c.l.b16 %v3009
      %v3060 = vunpack.c.l.b16 %v3010
      %v3061 = vunpack.c.l.b16 %v3011
      %v3062 = vunpack.c.l.b16 %v3012
      %v3063 = vunpack.c.l.b16 %v3013
      %v3064 = vunpack.c.l.b16 %v3014
      %v3065 = vunpack.c.l.b16 %v3015
      %v3066 = vunpack.c.l.b16 %v3016
      %v3067 = vunpack.c.l.b16 %v3017
      %v3068 = vunpack.c.l.b16 %v3018
      %v3069 = vunpack.c.l.b16 %v3019
      %v3070 = vunpack.c.l.b16 %v3020
      %v3071 = vunpack.c.l.b16 %v3021
      %v3072 = vunpack.c.l.b16 %v3022
      %v3073 = vunpack.c.l.b16 %v3023
      %v3074 = vunpack.c.l.b16 %v3024
      %v3075 = vunpack.c.l.b16 %v3025
      %v3076 = vpack.c.b16 %v3052, %v3051
      %v3077 = vpack.c.b16 %v3054, %v3053
      %v3078 = vpack.c.b16 %v3056, %v3055
      %v3079 = vpack.c.b16 %v3058, %v3057
      %v3080 = vpack.c.b16 %v3060, %v3059
      %v3081 = vpack.c.b16 %v3062, %v3061
      %v3082 = vpack.c.b16 %v3064, %v3063
      %v3083 = vpack.c.b16 %v3066, %v3065
      %v3084 = vpack.c.b16 %v3068, %v3067
      %v3085 = vpack.c.b16 %v3070, %v3069
      %v3086 = vpack.c.b16 %v3072, %v3071
      %v3087 = vpack.c.b16 %v3074, %v3073
      %v3088 = vpack.c.b16 %v3075, %v3075
      %vm3101 = vcmask 556032
      %v3103 = vsel %vm3101, %v2970, 0
      %v3106 = vsel %vm3101, %v2972, 0
      %v3109 = vsel %vm3101, %v2974, 0
      %v3112 = vsel %vm3101, %v2976, 0
      %v3115 = vsel %vm3101, %v2978, 0
      %v3118 = vsel %vm3101, %v2980, 0
      %v3121 = vsel %vm3101, %v2982, 0
      %v3124 = vsel %vm3101, %v2984, 0
      %v3127 = vsel %vm3101, %v2986, 0
      %v3130 = vsel %vm3101, %v2988, 0
      %v3133 = vsel %vm3101, %v2990, 0
      %v3136 = vsel %vm3101, %v2992, 0
      %v3139 = vsel %vm3101, %v2994, 0
      %v3142 = vsel %vm3101, %v2996, 0
      %v3145 = vsel %vm3101, %v2998, 0
      %v3148 = vsel %vm3101, %v3000, 0
      %vm3150 = vcmask 1041408
      %v3152 = vsel %vm3150, %v3088, 0
      %3154 = vmatprep.subr.bf16.mxu0 0
      %3155 = vmatpush1.bf16.msra.mxu0 %v3076
      %3156 = vmatprep.subr.bf16.mxu0 0
      %3157 = vmatpush1.bf16.msra.mxu0 %v3077
      %3158 = vmatprep.subr.bf16.mxu0 0
      %3159 = vmatpush1.bf16.msra.mxu0 %v3078
      %3160 = vmatprep.subr.bf16.mxu0 0
      %3161 = vmatpush1.bf16.msra.mxu0 %v3079
      %3162 = vmatprep.subr.bf16.mxu0 0
      %3163 = vmatpush1.bf16.msra.mxu0 %v3080
      %3164 = vmatprep.subr.bf16.mxu0 0
      %3165 = vmatpush1.bf16.msra.mxu0 %v3081
      %3166 = vmatprep.subr.bf16.mxu0 0
      %3167 = vmatpush1.bf16.msra.mxu0 %v3082
      %3168 = vmatprep.subr.bf16.mxu0 0
      %3169 = vmatpush1.bf16.msra.mxu0 %v3083
      %3170 = vmatprep.subr.bf16.mxu0 0
      %3171 = vmatpush1.bf16.msra.mxu0 %v3084
      %3172 = vmatprep.subr.bf16.mxu0 0
      %3173 = vmatpush1.bf16.msra.mxu0 %v3085
      %3174 = vmatprep.subr.bf16.mxu0 0
      %3175 = vmatpush1.bf16.msra.mxu0 %v3086
      %3176 = vmatprep.subr.bf16.mxu0 0
      %3177 = vmatpush1.bf16.msra.mxu0 %v3087
      %3178 = vmatprep.subr.bf16.mxu0 0
      %3179 = vmatpush1.bf16.msra.mxu0 %v3152
      %3180 = vmatprep.subr.bf16.mxu0 0
      %3181 = vmatpush1.bf16.msra.mxu0 0
      %3182 = vmatprep.subr.bf16.mxu0 0
      %3183 = vmatpush1.bf16.msra.mxu0 0
      %3184 = vmatprep.subr.bf16.mxu0 0
      %3185 = vmatpush1.bf16.msra.mxu0 0
      %3186 = vmatprep.mubr.bf16.mxu0 %v3103
      %3187 = vmatmul.mubr.bf16.gmra.mrb[0].mxu0 %v2969
      %v3188 = vpop.f32.mrb[0].mxu0
      %v3189 = vadd.f32 0.0, %v3188
      %v3190 = vpop.f32.mrb[0].mxu0
      %v3191 = vpop.f32.mrb[0].mxu0
      %v3192 = vadd.f32 0.0, %v3191
      %v3193 = vpop.f32.mrb[0].mxu0
      %3194 = vmatprep.mubr.bf16.mxu0 %v3106
      %3195 = vmatmul.mubr.bf16.gmra.mrb[0].mxu0 %v2971
      %v3196 = vpop.f32.mrb[0].mxu0
      %v3197 = vadd.f32 0.0, %v3196
      %v3198 = vpop.f32.mrb[0].mxu0
      %v3199 = vpop.f32.mrb[0].mxu0
      %v3200 = vadd.f32 0.0, %v3199
      %v3201 = vpop.f32.mrb[0].mxu0
      %3202 = vmatprep.mubr.bf16.mxu0 %v3109
      %3203 = vmatmul.mubr.bf16.gmra.mrb[0].mxu0 %v2973
      %v3204 = vpop.f32.mrb[0].mxu0
      %v3205 = vadd.f32 0.0, %v3204
      %v3206 = vpop.f32.mrb[0].mxu0
      %v3207 = vpop.f32.mrb[0].mxu0
      %v3208 = vadd.f32 0.0, %v3207
      %v3209 = vpop.f32.mrb[0].mxu0
      %3210 = vmatprep.mubr.bf16.mxu0 %v3112
      %3211 = vmatmul.mubr.bf16.gmra.mrb[0].mxu0 %v2975
      %v3212 = vpop.f32.mrb[0].mxu0
      %v3213 = vadd.f32 0.0, %v3212
      %v3214 = vpop.f32.mrb[0].mxu0
      %v3215 = vpop.f32.mrb[0].mxu0
      %v3216 = vadd.f32 0.0, %v3215
      %v3217 = vpop.f32.mrb[0].mxu0
      %3218 = vmatprep.mubr.bf16.mxu0 %v3115
      %3219 = vmatmul.mubr.bf16.gmra.mrb[0].mxu0 %v2977
      %v3220 = vpop.f32.mrb[0].mxu0
      %v3221 = vadd.f32 0.0, %v3220
      %v3222 = vpop.f32.mrb[0].mxu0
      %v3223 = vpop.f32.mrb[0].mxu0
      %v3224 = vadd.f32 0.0, %v3223
      %v3225 = vpop.f32.mrb[0].mxu0
      %3226 = vmatprep.mubr.bf16.mxu0 %v3118
      %3227 = vmatmul.mubr.bf16.gmra.mrb[0].mxu0 %v2979
      %v3228 = vpop.f32.mrb[0].mxu0
      %v3229 = vadd.f32 0.0, %v3228
      %v3230 = vpop.f32.mrb[0].mxu0
      %v3231 = vpop.f32.mrb[0].mxu0
      %v3232 = vadd.f32 0.0, %v3231
      %v3233 = vpop.f32.mrb[0].mxu0
      %3234 = vmatprep.mubr.bf16.mxu0 %v3121
      %3235 = vmatmul.mubr.bf16.gmra.mrb[0].mxu0 %v2981
      %v3236 = vpop.f32.mrb[0].mxu0
      %v3237 = vadd.f32 0.0, %v3236
      %v3238 = vpop.f32.mrb[0].mxu0
      %v3239 = vpop.f32.mrb[0].mxu0
      %v3240 = vadd.f32 0.0, %v3239
      %v3241 = vpop.f32.mrb[0].mxu0
      %3242 = vmatprep.mubr.bf16.mxu0 %v3124
      %3243 = vmatmul.mubr.bf16.gmra.mrb[0].mxu0 %v2983
      %v3244 = vpop.f32.mrb[0].mxu0
      %v3245 = vadd.f32 0.0, %v3244
      %v3246 = vpop.f32.mrb[0].mxu0
      %v3247 = vpop.f32.mrb[0].mxu0
      %v3248 = vadd.f32 0.0, %v3247
      %v3249 = vpop.f32.mrb[0].mxu0
      %3250 = vmatprep.mubr.bf16.mxu0 %v3127
      %3251 = vmatmul.mubr.bf16.gmra.mrb[0].mxu0 %v2985
      %v3252 = vpop.f32.mrb[0].mxu0
      %v3253 = vadd.f32 0.0, %v3252
      %v3254 = vpop.f32.mrb[0].mxu0
      %v3255 = vpop.f32.mrb[0].mxu0
      %v3256 = vadd.f32 0.0, %v3255
      %v3257 = vpop.f32.mrb[0].mxu0
      %3258 = vmatprep.mubr.bf16.mxu0 %v3130
      %3259 = vmatmul.mubr.bf16.gmra.mrb[0].mxu0 %v2987
      %v3260 = vpop.f32.mrb[0].mxu0
      %v3261 = vadd.f32 0.0, %v3260
      %v3262 = vpop.f32.mrb[0].mxu0
      %v3263 = vpop.f32.mrb[0].mxu0
      %v3264 = vadd.f32 0.0, %v3263
      %v3265 = vpop.f32.mrb[0].mxu0
      %3266 = vmatprep.mubr.bf16.mxu0 %v3133
      %3267 = vmatmul.mubr.bf16.gmra.mrb[0].mxu0 %v2989
      %v3268 = vpop.f32.mrb[0].mxu0
      %v3269 = vadd.f32 0.0, %v3268
      %v3270 = vpop.f32.mrb[0].mxu0
      %v3271 = vpop.f32.mrb[0].mxu0
      %v3272 = vadd.f32 0.0, %v3271
      %v3273 = vpop.f32.mrb[0].mxu0
      %3274 = vmatprep.mubr.bf16.mxu0 %v3136
      %3275 = vmatmul.mubr.bf16.gmra.mrb[0].mxu0 %v2991
      %v3276 = vpop.f32.mrb[0].mxu0
      %v3277 = vadd.f32 0.0, %v3276
      %v3278 = vpop.f32.mrb[0].mxu0
      %v3279 = vpop.f32.mrb[0].mxu0
      %v3280 = vadd.f32 0.0, %v3279
      %v3281 = vpop.f32.mrb[0].mxu0
      %3282 = vmatprep.mubr.bf16.mxu0 %v3139
      %3283 = vmatmul.mubr.bf16.gmra.mrb[0].mxu0 %v2993
      %v3284 = vpop.f32.mrb[0].mxu0
      %v3285 = vadd.f32 0.0, %v3284
      %v3286 = vpop.f32.mrb[0].mxu0
      %v3287 = vpop.f32.mrb[0].mxu0
      %v3288 = vadd.f32 0.0, %v3287
      %v3289 = vpop.f32.mrb[0].mxu0
      %3290 = vmatprep.mubr.bf16.mxu0 %v3142
      %3291 = vmatmul.mubr.bf16.gmra.mrb[0].mxu0 %v2995
      %v3292 = vpop.f32.mrb[0].mxu0
      %v3293 = vadd.f32 0.0, %v3292
      %v3294 = vpop.f32.mrb[0].mxu0
      %v3295 = vpop.f32.mrb[0].mxu0
      %v3296 = vadd.f32 0.0, %v3295
      %v3297 = vpop.f32.mrb[0].mxu0
      %3298 = vmatprep.mubr.bf16.mxu0 %v3145
      %3299 = vmatmul.mubr.bf16.gmra.mrb[0].mxu0 %v2997
      %v3300 = vpop.f32.mrb[0].mxu0
      %v3301 = vadd.f32 0.0, %v3300
      %v3302 = vpop.f32.mrb[0].mxu0
      %v3303 = vpop.f32.mrb[0].mxu0
      %v3304 = vadd.f32 0.0, %v3303
      %v3305 = vpop.f32.mrb[0].mxu0
      %3306 = vmatprep.mubr.bf16.mxu0 %v3148
      %3307 = vmatmul.mubr.bf16.gmra.mrb[0].mxu0 %v2999
      %v3308 = vpop.f32.mrb[0].mxu0
      %v3309 = vadd.f32 0.0, %v3308
      %v3310 = vpop.f32.mrb[0].mxu0
      %v3311 = vpop.f32.mrb[0].mxu0
      %v3312 = vadd.f32 0.0, %v3311
      %v3313 = vpop.f32.mrb[0].mxu0
      %3314 = vdwg.mxu0
      %v3315 = vld [vmem:[%s2] sm:$0x1]
      %v3316 = vlaneseq
      %v3317 = vshrl.u32 %v3316, 7
      %v3318 = vsub.s32 0, %v3317
      %v3319 = vrot.slane %v3315, %v3318
      %v3320 = vmul.f32 %v3189, %v3319
      %v3321 = vmul.f32 %v3192, %v3319
      %v3322 = vmul.f32 %v3197, %v3319
      %v3323 = vmul.f32 %v3200, %v3319
      %v3324 = vmul.f32 %v3205, %v3319
      %v3325 = vmul.f32 %v3208, %v3319
      %v3326 = vmul.f32 %v3213, %v3319
      %v3327 = vmul.f32 %v3216, %v3319
      %v3328 = vmul.f32 %v3221, %v3319
      %v3329 = vmul.f32 %v3224, %v3319
      %v3330 = vmul.f32 %v3229, %v3319
      %v3331 = vmul.f32 %v3232, %v3319
      %v3332 = vmul.f32 %v3237, %v3319
      %v3333 = vmul.f32 %v3240, %v3319
      %v3334 = vmul.f32 %v3245, %v3319
      %v3335 = vmul.f32 %v3248, %v3319
      %v3336 = vmul.f32 %v3253, %v3319
      %v3337 = vmul.f32 %v3256, %v3319
      %v3338 = vmul.f32 %v3261, %v3319
      %v3339 = vmul.f32 %v3264, %v3319
      %v3340 = vmul.f32 %v3269, %v3319
      %v3341 = vmul.f32 %v3272, %v3319
      %v3342 = vmul.f32 %v3277, %v3319
      %v3343 = vmul.f32 %v3280, %v3319
      %v3344 = vmul.f32 %v3285, %v3319
      %v3345 = vmul.f32 %v3288, %v3319
      %v3346 = vmul.f32 %v3293, %v3319
      %v3347 = vmul.f32 %v3296, %v3319
      %v3348 = vmul.f32 %v3301, %v3319
      %v3349 = vmul.f32 %v3304, %v3319
      %v3350 = vmul.f32 %v3309, %v3319
      %v3351 = vmul.f32 %v3312, %v3319
      %v3352 = vld [vmem:[%s2 + $0x1] sm:$0x1]
      %v3353 = vlaneseq
      %v3354 = vshrl.u32 %v3353, 7
      %v3355 = vsub.s32 0, %v3354
      %v3356 = vrot.slane %v3352, %v3355
      %v3357 = vadd.f32 %v3320, %v3356
      %v3358 = vadd.f32 %v3321, %v3356
      %v3359 = vadd.f32 %v3322, %v3356
      %v3360 = vadd.f32 %v3323, %v3356
      %v3361 = vadd.f32 %v3324, %v3356
      %v3362 = vadd.f32 %v3325, %v3356
      %v3363 = vadd.f32 %v3326, %v3356
      %v3364 = vadd.f32 %v3327, %v3356
      %v3365 = vadd.f32 %v3328, %v3356
      %v3366 = vadd.f32 %v3329, %v3356
      %v3367 = vadd.f32 %v3330, %v3356
      %v3368 = vadd.f32 %v3331, %v3356
      %v3369 = vadd.f32 %v3332, %v3356
      %v3370 = vadd.f32 %v3333, %v3356
      %v3371 = vadd.f32 %v3334, %v3356
      %v3372 = vadd.f32 %v3335, %v3356
      %v3373 = vadd.f32 %v3336, %v3356
      %v3374 = vadd.f32 %v3337, %v3356
      %v3375 = vadd.f32 %v3338, %v3356
      %v3376 = vadd.f32 %v3339, %v3356
      %v3377 = vadd.f32 %v3340, %v3356
      %v3378 = vadd.f32 %v3341, %v3356
      %v3379 = vadd.f32 %v3342, %v3356
      %v3380 = vadd.f32 %v3343, %v3356
      %v3381 = vadd.f32 %v3344, %v3356
      %v3382 = vadd.f32 %v3345, %v3356
      %v3383 = vadd.f32 %v3346, %v3356
      %v3384 = vadd.f32 %v3347, %v3356
      %v3385 = vadd.f32 %v3348, %v3356
      %v3386 = vadd.f32 %v3349, %v3356
      %v3387 = vadd.f32 %v3350, %v3356
      %v3388 = vadd.f32 %v3351, %v3356
      %v3389 = vmax.f32 %v3357, 0.0
      %v3390 = vmax.f32 %v3358, 0.0
      %v3391 = vmax.f32 %v3359, 0.0
      %v3392 = vmax.f32 %v3360, 0.0
      %v3393 = vmax.f32 %v3361, 0.0
      %v3394 = vmax.f32 %v3362, 0.0
      %v3395 = vmax.f32 %v3363, 0.0
      %v3396 = vmax.f32 %v3364, 0.0
      %v3397 = vmax.f32 %v3365, 0.0
      %v3398 = vmax.f32 %v3366, 0.0
      %v3399 = vmax.f32 %v3367, 0.0
      %v3400 = vmax.f32 %v3368, 0.0
      %v3401 = vmax.f32 %v3369, 0.0
      %v3402 = vmax.f32 %v3370, 0.0
      %v3403 = vmax.f32 %v3371, 0.0
      %v3404 = vmax.f32 %v3372, 0.0
      %v3405 = vmax.f32 %v3373, 0.0
      %v3406 = vmax.f32 %v3374, 0.0
      %v3407 = vmax.f32 %v3375, 0.0
      %v3408 = vmax.f32 %v3376, 0.0
      %v3409 = vmax.f32 %v3377, 0.0
      %v3410 = vmax.f32 %v3378, 0.0
      %v3411 = vmax.f32 %v3379, 0.0
      %v3412 = vmax.f32 %v3380, 0.0
      %v3413 = vmax.f32 %v3381, 0.0
      %v3414 = vmax.f32 %v3382, 0.0
      %v3415 = vmax.f32 %v3383, 0.0
      %v3416 = vmax.f32 %v3384, 0.0
      %v3417 = vmax.f32 %v3385, 0.0
      %v3418 = vmax.f32 %v3386, 0.0
      %v3419 = vmax.f32 %v3387, 0.0
      %v3420 = vmax.f32 %v3388, 0.0
      %3421 = vst [vmem:[#allocation3] sm:$0xff] 0.0
      %3422 = vst [vmem:[#allocation3 + $0x8] sm:$0xff] 0.0
      %3423 = vst [vmem:[#allocation3 + $0x10] sm:$0x3] 0.0
      %s3424 = scalar_lea.vmem [#allocation3], 408
      %3425 = vst [vmem:[%s3424] sm:$0xff] 0.0
      %3426 = vst [vmem:[%s3424 + $0x8] sm:$0xff] 0.0
      %3427 = vst [vmem:[%s3424 + $0x10] sm:$0x3] 0.0
      %3428 = vst [vmem:[#allocation3] sm:$0x1] 0.0
      %3429 = vst [vmem:[#allocation3 + $0x18] sm:$0x1] 0.0
      %3430 = vst [vmem:[#allocation3 + $0x30] sm:$0x1] 0.0
      %3431 = vst [vmem:[#allocation3 + $0x48] sm:$0x1] 0.0
      %3432 = vst [vmem:[#allocation3 + $0x60] sm:$0x1] 0.0
      %3433 = vst [vmem:[#allocation3 + $0x78] sm:$0x1] 0.0
      %3434 = vst [vmem:[#allocation3 + $0x90] sm:$0x1] 0.0
      %3435 = vst [vmem:[#allocation3 + $0xa8] sm:$0x1] 0.0
      %3436 = vst [vmem:[#allocation3 + $0xc0] sm:$0x1] 0.0
      %3437 = vst [vmem:[#allocation3 + $0xd8] sm:$0x1] 0.0
      %3438 = vst [vmem:[#allocation3 + $0xf0] sm:$0x1] 0.0
      %3439 = vst [vmem:[#allocation3 + $0x108] sm:$0x1] 0.0
      %3440 = vst [vmem:[#allocation3 + $0x120] sm:$0x1] 0.0
      %3441 = vst [vmem:[#allocation3 + $0x138] sm:$0x1] 0.0
      %3442 = vst [vmem:[#allocation3 + $0x150] sm:$0x1] 0.0
      %3443 = vst [vmem:[#allocation3 + $0x168] sm:$0x1] 0.0
      %3444 = vst [vmem:[#allocation3 + $0x180] sm:$0x1] 0.0
      %3445 = vst [vmem:[#allocation3 + $0x198] sm:$0x1] 0.0
      %3446 = vst [vmem:[#allocation3 + $0x11] sm:$0x1] 0.0
      %3447 = vst [vmem:[#allocation3 + $0x29] sm:$0x1] 0.0
      %3448 = vst [vmem:[#allocation3 + $0x41] sm:$0x1] 0.0
      %3449 = vst [vmem:[#allocation3 + $0x59] sm:$0x1] 0.0
      %3450 = vst [vmem:[#allocation3 + $0x71] sm:$0x1] 0.0
      %3451 = vst [vmem:[#allocation3 + $0x89] sm:$0x1] 0.0
      %3452 = vst [vmem:[#allocation3 + $0xa1] sm:$0x1] 0.0
      %3453 = vst [vmem:[#allocation3 + $0xb9] sm:$0x1] 0.0
      %3454 = vst [vmem:[#allocation3 + $0xd1] sm:$0x1] 0.0
      %3455 = vst [vmem:[#allocation3 + $0xe9] sm:$0x1] 0.0
      %3456 = vst [vmem:[#allocation3 + $0x101] sm:$0x1] 0.0
      %3457 = vst [vmem:[#allocation3 + $0x119] sm:$0x1] 0.0
      %3458 = vst [vmem:[#allocation3 + $0x131] sm:$0x1] 0.0
      %3459 = vst [vmem:[#allocation3 + $0x149] sm:$0x1] 0.0
      %3460 = vst [vmem:[#allocation3 + $0x161] sm:$0x1] 0.0
      %3461 = vst [vmem:[#allocation3 + $0x179] sm:$0x1] 0.0
      %3462 = vst [vmem:[#allocation3 + $0x191] sm:$0x1] 0.0
      %3463 = vst [vmem:[#allocation3 + $0x1a9] sm:$0x1] 0.0
      %v3464 = vld [vmem:[%s3] sm:$0xf]
      %v3465 = vld [vmem:[%s3 + $0x4] sm:$0xf]
      %v3466 = vld [vmem:[%s3 + $0x8] sm:$0xf]
      %v3467 = vld [vmem:[%s3 + $0xc] sm:$0xf]
      %v3468 = vld [vmem:[%s3 + $0x10] sm:$0xf]
      %v3469 = vld [vmem:[%s3 + $0x14] sm:$0xf]
      %v3470 = vld [vmem:[%s3 + $0x18] sm:$0xf]
      %v3471 = vld [vmem:[%s3 + $0x1c] sm:$0xf]
      %v3472 = vld [vmem:[%s3 + $0x20] sm:$0xf]
      %v3473 = vld [vmem:[%s3 + $0x24] sm:$0xf]
      %v3474 = vld [vmem:[%s3 + $0x28] sm:$0xf]
      %v3475 = vld [vmem:[%s3 + $0x2c] sm:$0xf]
      %v3476 = vld [vmem:[%s3 + $0x30] sm:$0xf]
      %v3477 = vld [vmem:[%s3 + $0x34] sm:$0xf]
      %v3478 = vld [vmem:[%s3 + $0x38] sm:$0xf]
      %v3479 = vld [vmem:[%s3 + $0x3c] sm:$0xf]
      %v3480 = vld [vmem:[%s3 + $0x40] sm:$0xf]
      %v3481 = vld [vmem:[%s3 + $0x44] sm:$0xf]
      %v3482 = vld [vmem:[%s3 + $0x48] sm:$0xf]
      %v3483 = vld [vmem:[%s3 + $0x4c] sm:$0xf]
      %v3484 = vld [vmem:[%s3 + $0x50] sm:$0xf]
      %v3485 = vld [vmem:[%s3 + $0x54] sm:$0xf]
      %v3486 = vld [vmem:[%s3 + $0x58] sm:$0xf]
      %v3487 = vld [vmem:[%s3 + $0x5c] sm:$0xf]
      %v3488 = vld [vmem:[%s3 + $0x60] sm:$0xf]
      %v3489 = vld [vmem:[%s3 + $0x64] sm:$0xf]
      %v3490 = vld [vmem:[%s3 + $0x68] sm:$0xf]
      %v3491 = vld [vmem:[%s3 + $0x6c] sm:$0xf]
      %v3492 = vld [vmem:[%s3 + $0x70] sm:$0xf]
      %v3493 = vld [vmem:[%s3 + $0x74] sm:$0xf]
      %v3494 = vld [vmem:[%s3 + $0x78] sm:$0xf]
      %v3495 = vld [vmem:[%s3 + $0x7c] sm:$0xf]
      %v3496 = vld [vmem:[%s3 + $0x80] sm:$0xf]
      %v3497 = vld [vmem:[%s3 + $0x84] sm:$0xf]
      %v3498 = vld [vmem:[%s3 + $0x88] sm:$0xf]
      %v3499 = vld [vmem:[%s3 + $0x8c] sm:$0xf]
      %v3500 = vld [vmem:[%s3 + $0x90] sm:$0xf]
      %v3501 = vld [vmem:[%s3 + $0x94] sm:$0xf]
      %v3502 = vld [vmem:[%s3 + $0x98] sm:$0xf]
      %v3503 = vld [vmem:[%s3 + $0x9c] sm:$0xf]
      %v3504 = vld [vmem:[%s3 + $0xa0] sm:$0xf]
      %v3505 = vld [vmem:[%s3 + $0xa4] sm:$0xf]
      %v3506 = vld [vmem:[%s3 + $0xa8] sm:$0xf]
      %v3507 = vld [vmem:[%s3 + $0xac] sm:$0xf]
      %v3508 = vld [vmem:[%s3 + $0xb0] sm:$0xf]
      %v3509 = vld [vmem:[%s3 + $0xb4] sm:$0xf]
      %v3510 = vld [vmem:[%s3 + $0xb8] sm:$0xf]
      %v3511 = vld [vmem:[%s3 + $0xbc] sm:$0xf]
      %s3512 = scalar_lea.vmem %s3, 192
      %v3513 = vld [vmem:[%s3512] sm:$0xf]
      %v3514 = vld [vmem:[%s3512 + $0x4] sm:$0xf]
      %v3515 = vld [vmem:[%s3512 + $0x8] sm:$0xf]
      %v3516 = vld [vmem:[%s3512 + $0xc] sm:$0xf]
      %v3517 = vld [vmem:[%s3512 + $0x10] sm:$0xf]
      %v3518 = vld [vmem:[%s3512 + $0x14] sm:$0xf]
      %v3519 = vld [vmem:[%s3512 + $0x18] sm:$0xf]
      %v3520 = vld [vmem:[%s3512 + $0x1c] sm:$0xf]
      %v3521 = vld [vmem:[%s3512 + $0x20] sm:$0xf]
      %v3522 = vld [vmem:[%s3512 + $0x24] sm:$0xf]
      %v3523 = vld [vmem:[%s3512 + $0x28] sm:$0xf]
      %v3524 = vld [vmem:[%s3512 + $0x2c] sm:$0xf]
      %v3525 = vld [vmem:[%s3512 + $0x30] sm:$0xf]
      %v3526 = vld [vmem:[%s3512 + $0x34] sm:$0xf]
      %v3527 = vld [vmem:[%s3512 + $0x38] sm:$0xf]
      %v3528 = vld [vmem:[%s3512 + $0x3c] sm:$0xf]
      %v3529 = vld [vmem:[%s3512 + $0x40] sm:$0xf]
      %v3530 = vld [vmem:[%s3512 + $0x44] sm:$0xf]
      %v3531 = vld [vmem:[%s3512 + $0x48] sm:$0xf]
      %v3532 = vld [vmem:[%s3512 + $0x4c] sm:$0xf]
      %v3533 = vld [vmem:[%s3512 + $0x50] sm:$0xf]
      %v3534 = vld [vmem:[%s3512 + $0x54] sm:$0xf]
      %v3535 = vld [vmem:[%s3512 + $0x58] sm:$0xf]
      %v3536 = vld [vmem:[%s3512 + $0x5c] sm:$0xf]
      %v3537 = vld [vmem:[%s3512 + $0x60] sm:$0xf]
      %v3538 = vld [vmem:[%s3512 + $0x64] sm:$0xf]
      %v3539 = vld [vmem:[%s3512 + $0x68] sm:$0xf]
      %v3540 = vld [vmem:[%s3512 + $0x6c] sm:$0xf]
      %v3541 = vld [vmem:[%s3512 + $0x70] sm:$0xf]
      %v3542 = vld [vmem:[%s3512 + $0x74] sm:$0xf]
      %v3543 = vld [vmem:[%s3512 + $0x78] sm:$0xf]
      %v3544 = vld [vmem:[%s3512 + $0x7c] sm:$0xf]
      %v3545 = vld [vmem:[%s3512 + $0x80] sm:$0xf]
      %v3546 = vld [vmem:[%s3512 + $0x84] sm:$0xf]
      %v3547 = vld [vmem:[%s3512 + $0x88] sm:$0xf]
      %v3548 = vld [vmem:[%s3512 + $0x8c] sm:$0xf]
      %v3549 = vld [vmem:[%s3512 + $0x90] sm:$0xf]
      %v3550 = vld [vmem:[%s3512 + $0x94] sm:$0xf]
      %v3551 = vld [vmem:[%s3512 + $0x98] sm:$0xf]
      %v3552 = vld [vmem:[%s3512 + $0x9c] sm:$0xf]
      %v3553 = vld [vmem:[%s3512 + $0xa0] sm:$0xf]
      %v3554 = vld [vmem:[%s3512 + $0xa4] sm:$0xf]
      %v3555 = vld [vmem:[%s3512 + $0xa8] sm:$0xf]
      %v3556 = vld [vmem:[%s3512 + $0xac] sm:$0xf]
      %v3557 = vld [vmem:[%s3512 + $0xb0] sm:$0xf]
      %v3558 = vld [vmem:[%s3512 + $0xb4] sm:$0xf]
      %v3559 = vld [vmem:[%s3512 + $0xb8] sm:$0xf]
      %v3560 = vld [vmem:[%s3512 + $0xbc] sm:$0xf]
      %s3561 = scalar_lea.vmem %s3, 384
      %v3562 = vld [vmem:[%s3561] sm:$0xf]
      %v3563 = vld [vmem:[%s3561 + $0x4] sm:$0xf]
      %v3564 = vld [vmem:[%s3561 + $0x8] sm:$0xf]
      %v3565 = vld [vmem:[%s3561 + $0xc] sm:$0xf]
      %v3566 = vld [vmem:[%s3561 + $0x10] sm:$0xf]
      %v3567 = vld [vmem:[%s3561 + $0x14] sm:$0xf]
      %v3568 = vld [vmem:[%s3561 + $0x18] sm:$0xf]
      %v3569 = vld [vmem:[%s3561 + $0x1c] sm:$0xf]
      %v3570 = vld [vmem:[%s3561 + $0x20] sm:$0xf]
      %v3571 = vld [vmem:[%s3561 + $0x24] sm:$0xf]
      %v3572 = vld [vmem:[%s3561 + $0x28] sm:$0xf]
      %v3573 = vld [vmem:[%s3561 + $0x2c] sm:$0xf]
      %v3574 = vld [vmem:[%s3561 + $0x30] sm:$0xf]
      %v3575 = vld [vmem:[%s3561 + $0x34] sm:$0xf]
      %v3576 = vld [vmem:[%s3561 + $0x38] sm:$0xf]
      %v3577 = vld [vmem:[%s3561 + $0x3c] sm:$0xf]
      %v3578 = vld [vmem:[%s3561 + $0x40] sm:$0xf]
      %v3579 = vld [vmem:[%s3561 + $0x44] sm:$0xf]
      %v3580 = vld [vmem:[%s3561 + $0x48] sm:$0xf]
      %v3581 = vld [vmem:[%s3561 + $0x4c] sm:$0xf]
      %v3582 = vld [vmem:[%s3561 + $0x50] sm:$0xf]
      %v3583 = vld [vmem:[%s3561 + $0x54] sm:$0xf]
      %v3584 = vld [vmem:[%s3561 + $0x58] sm:$0xf]
      %v3585 = vld [vmem:[%s3561 + $0x5c] sm:$0xf]
      %v3586 = vld [vmem:[%s3561 + $0x60] sm:$0xf]
      %v3587 = vld [vmem:[%s3561 + $0x64] sm:$0xf]
      %v3588 = vld [vmem:[%s3561 + $0x68] sm:$0xf]
      %v3589 = vld [vmem:[%s3561 + $0x6c] sm:$0xf]
      %v3590 = vld [vmem:[%s3561 + $0x70] sm:$0xf]
      %v3591 = vld [vmem:[%s3561 + $0x74] sm:$0xf]
      %v3592 = vld [vmem:[%s3561 + $0x78] sm:$0xf]
      %v3593 = vld [vmem:[%s3561 + $0x7c] sm:$0xf]
      %v3594 = vld [vmem:[%s3561 + $0x80] sm:$0xf]
      %v3595 = vld [vmem:[%s3561 + $0x84] sm:$0xf]
      %v3596 = vld [vmem:[%s3561 + $0x88] sm:$0xf]
      %v3597 = vld [vmem:[%s3561 + $0x8c] sm:$0xf]
      %v3598 = vld [vmem:[%s3561 + $0x90] sm:$0xf]
      %v3599 = vld [vmem:[%s3561 + $0x94] sm:$0xf]
      %v3600 = vld [vmem:[%s3561 + $0x98] sm:$0xf]
      %v3601 = vld [vmem:[%s3561 + $0x9c] sm:$0xf]
      %v3602 = vld [vmem:[%s3561 + $0xa0] sm:$0xf]
      %v3603 = vld [vmem:[%s3561 + $0xa4] sm:$0xf]
      %v3604 = vld [vmem:[%s3561 + $0xa8] sm:$0xf]
      %v3605 = vld [vmem:[%s3561 + $0xac] sm:$0xf]
      %v3606 = vld [vmem:[%s3561 + $0xb0] sm:$0xf]
      %v3607 = vld [vmem:[%s3561 + $0xb4] sm:$0xf]
      %v3608 = vld [vmem:[%s3561 + $0xb8] sm:$0xf]
      %v3609 = vld [vmem:[%s3561 + $0xbc] sm:$0xf]
      %s3610 = scalar_lea.vmem [#allocation3], 24
      %3611 = vst [vmem:[%s3610 + $0x1] sm:$0xff] %v3389
      %3612 = vst [vmem:[%s3610 + $0x9] sm:$0xff] %v3390
      %3613 = vst [vmem:[%s3610 + $0x19] sm:$0xff] %v3391
      %3614 = vst [vmem:[%s3610 + $0x21] sm:$0xff] %v3392
      %3615 = vst [vmem:[%s3610 + $0x31] sm:$0xff] %v3393
      %3616 = vst [vmem:[%s3610 + $0x39] sm:$0xff] %v3394
      %3617 = vst [vmem:[%s3610 + $0x49] sm:$0xff] %v3395
      %3618 = vst [vmem:[%s3610 + $0x51] sm:$0xff] %v3396
      %3619 = vst [vmem:[%s3610 + $0x61] sm:$0xff] %v3397
      %3620 = vst [vmem:[%s3610 + $0x69] sm:$0xff] %v3398
      %3621 = vst [vmem:[%s3610 + $0x79] sm:$0xff] %v3399
      %3622 = vst [vmem:[%s3610 + $0x81] sm:$0xff] %v3400
      %3623 = vst [vmem:[%s3610 + $0x91] sm:$0xff] %v3401
      %3624 = vst [vmem:[%s3610 + $0x99] sm:$0xff] %v3402
      %3625 = vst [vmem:[%s3610 + $0xa9] sm:$0xff] %v3403
      %3626 = vst [vmem:[%s3610 + $0xb1] sm:$0xff] %v3404
      %3627 = vst [vmem:[%s3610 + $0xc1] sm:$0xff] %v3405
      %3628 = vst [vmem:[%s3610 + $0xc9] sm:$0xff] %v3406
      %3629 = vst [vmem:[%s3610 + $0xd9] sm:$0xff] %v3407
      %3630 = vst [vmem:[%s3610 + $0xe1] sm:$0xff] %v3408
      %3631 = vst [vmem:[%s3610 + $0xf1] sm:$0xff] %v3409
      %3632 = vst [vmem:[%s3610 + $0xf9] sm:$0xff] %v3410
      %3633 = vst [vmem:[%s3610 + $0x109] sm:$0xff] %v3411
      %3634 = vst [vmem:[%s3610 + $0x111] sm:$0xff] %v3412
      %3635 = vst [vmem:[%s3610 + $0x121] sm:$0xff] %v3413
      %3636 = vst [vmem:[%s3610 + $0x129] sm:$0xff] %v3414
      %3637 = vst [vmem:[%s3610 + $0x139] sm:$0xff] %v3415
      %3638 = vst [vmem:[%s3610 + $0x141] sm:$0xff] %v3416
      %3639 = vst [vmem:[%s3610 + $0x151] sm:$0xff] %v3417
      %3640 = vst [vmem:[%s3610 + $0x159] sm:$0xff] %v3418
      %3641 = vst [vmem:[%s3610 + $0x169] sm:$0xff] %v3419
      %3642 = vst [vmem:[%s3610 + $0x171] sm:$0xff] %v3420
      %v3643 = vld [vmem:[#allocation3] sm:$0xff]
      %v3644 = vld [vmem:[#allocation3 + $0x8] sm:$0xff]
      %v3645 = vld [vmem:[#allocation3 + $0x18] sm:$0xff]
      %v3646 = vld [vmem:[#allocation3 + $0x20] sm:$0xff]
      %v3647 = vld [vmem:[#allocation3 + $0x30] sm:$0xff]
      %v3648 = vld [vmem:[#allocation3 + $0x38] sm:$0xff]
      %v3649 = vld [vmem:[#allocation3 + $0x48] sm:$0xff]
      %v3650 = vld [vmem:[#allocation3 + $0x50] sm:$0xff]
      %v3651 = vld [vmem:[#allocation3 + $0x60] sm:$0xff]
      %v3652 = vld [vmem:[#allocation3 + $0x68] sm:$0xff]
      %v3653 = vld [vmem:[#allocation3 + $0x78] sm:$0xff]
      %v3654 = vld [vmem:[#allocation3 + $0x80] sm:$0xff]
      %v3655 = vld [vmem:[#allocation3 + $0x90] sm:$0xff]
      %v3656 = vld [vmem:[#allocation3 + $0x98] sm:$0xff]
      %v3657 = vld [vmem:[#allocation3 + $0xa8] sm:$0xff]
      %v3658 = vld [vmem:[#allocation3 + $0xb0] sm:$0xff]
      %v3659 = vld [vmem:[#allocation3 + $0xc0] sm:$0xff]
      %v3660 = vld [vmem:[#allocation3 + $0xc8] sm:$0xff]
      %v3661 = vld [vmem:[#allocation3 + $0xd8] sm:$0xff]
      %v3662 = vld [vmem:[#allocation3 + $0xe0] sm:$0xff]
      %v3663 = vld [vmem:[#allocation3 + $0xf0] sm:$0xff]
      %v3664 = vld [vmem:[#allocation3 + $0xf8] sm:$0xff]
      %v3665 = vld [vmem:[#allocation3 + $0x108] sm:$0xff]
      %v3666 = vld [vmem:[#allocation3 + $0x110] sm:$0xff]
      %v3667 = vld [vmem:[#allocation3 + $0x120] sm:$0xff]
      %v3668 = vld [vmem:[#allocation3 + $0x128] sm:$0xff]
      %v3669 = vld [vmem:[#allocation3 + $0x138] sm:$0xff]
      %v3670 = vld [vmem:[#allocation3 + $0x140] sm:$0xff]
      %v3671 = vld [vmem:[#allocation3 + $0x150] sm:$0xff]
      %v3672 = vld [vmem:[#allocation3 + $0x158] sm:$0xff]
      %v3673 = vld [vmem:[#allocation3 + $0x168] sm:$0xff]
      %v3674 = vld [vmem:[#allocation3 + $0x170] sm:$0xff]
      %v3675 = vld [vmem:[#allocation3 + $0x180] sm:$0xff]
      %v3676 = vld [vmem:[#allocation3 + $0x188] sm:$0xff]
      %v3677 = vld [vmem:[#allocation3 + $0x198] sm:$0xff]
      %v3678 = vld [vmem:[#allocation3 + $0x1a0] sm:$0xff]
      %v3679 = vld [vmem:[#allocation3 + $0x1] sm:$0xff]
      %v3680 = vld [vmem:[#allocation3 + $0x9] sm:$0xff]
      %v3681 = vld [vmem:[#allocation3 + $0x19] sm:$0xff]
      %v3682 = vld [vmem:[#allocation3 + $0x21] sm:$0xff]
      %v3683 = vld [vmem:[#allocation3 + $0x31] sm:$0xff]
      %v3684 = vld [vmem:[#allocation3 + $0x39] sm:$0xff]
      %v3685 = vld [vmem:[#allocation3 + $0x49] sm:$0xff]
      %v3686 = vld [vmem:[#allocation3 + $0x51] sm:$0xff]
      %v3687 = vld [vmem:[#allocation3 + $0x61] sm:$0xff]
      %v3688 = vld [vmem:[#allocation3 + $0x69] sm:$0xff]
      %v3689 = vld [vmem:[#allocation3 + $0x79] sm:$0xff]
      %v3690 = vld [vmem:[#allocation3 + $0x81] sm:$0xff]
      %v3691 = vld [vmem:[#allocation3 + $0x91] sm:$0xff]
      %v3692 = vld [vmem:[#allocation3 + $0x99] sm:$0xff]
      %v3693 = vld [vmem:[#allocation3 + $0xa9] sm:$0xff]
      %v3694 = vld [vmem:[#allocation3 + $0xb1] sm:$0xff]
      %v3695 = vld [vmem:[#allocation3 + $0xc1] sm:$0xff]
      %v3696 = vld [vmem:[#allocation3 + $0xc9] sm:$0xff]
      %v3697 = vld [vmem:[#allocation3 + $0xd9] sm:$0xff]
      %v3698 = vld [vmem:[#allocation3 + $0xe1] sm:$0xff]
      %v3699 = vld [vmem:[#allocation3 + $0xf1] sm:$0xff]
      %v3700 = vld [vmem:[#allocation3 + $0xf9] sm:$0xff]
      %v3701 = vld [vmem:[#allocation3 + $0x109] sm:$0xff]
      %v3702 = vld [vmem:[#allocation3 + $0x111] sm:$0xff]
      %v3703 = vld [vmem:[#allocation3 + $0x121] sm:$0xff]
      %v3704 = vld [vmem:[#allocation3 + $0x129] sm:$0xff]
      %v3705 = vld [vmem:[#allocation3 + $0x139] sm:$0xff]
      %v3706 = vld [vmem:[#allocation3 + $0x141] sm:$0xff]
      %v3707 = vld [vmem:[#allocation3 + $0x151] sm:$0xff]
      %v3708 = vld [vmem:[#allocation3 + $0x159] sm:$0xff]
      %v3709 = vld [vmem:[#allocation3 + $0x169] sm:$0xff]
      %v3710 = vld [vmem:[#allocation3 + $0x171] sm:$0xff]
      %v3711 = vld [vmem:[#allocation3 + $0x181] sm:$0xff]
      %v3712 = vld [vmem:[#allocation3 + $0x189] sm:$0xff]
      %v3713 = vld [vmem:[#allocation3 + $0x199] sm:$0xff]
      %v3714 = vld [vmem:[#allocation3 + $0x1a1] sm:$0xff]
      %v3715 = vld [vmem:[#allocation3 + $0x2] sm:$0xff]
      %v3716 = vld [vmem:[#allocation3 + $0xa] sm:$0xff]
      %v3717 = vld [vmem:[#allocation3 + $0x1a] sm:$0xff]
      %v3718 = vld [vmem:[#allocation3 + $0x22] sm:$0xff]
      %v3719 = vld [vmem:[#allocation3 + $0x32] sm:$0xff]
      %v3720 = vld [vmem:[#allocation3 + $0x3a] sm:$0xff]
      %v3721 = vld [vmem:[#allocation3 + $0x4a] sm:$0xff]
      %v3722 = vld [vmem:[#allocation3 + $0x52] sm:$0xff]
      %v3723 = vld [vmem:[#allocation3 + $0x62] sm:$0xff]
      %v3724 = vld [vmem:[#allocation3 + $0x6a] sm:$0xff]
      %v3725 = vld [vmem:[#allocation3 + $0x7a] sm:$0xff]
      %v3726 = vld [vmem:[#allocation3 + $0x82] sm:$0xff]
      %v3727 = vld [vmem:[#allocation3 + $0x92] sm:$0xff]
      %v3728 = vld [vmem:[#allocation3 + $0x9a] sm:$0xff]
      %v3729 = vld [vmem:[#allocation3 + $0xaa] sm:$0xff]
      %v3730 = vld [vmem:[#allocation3 + $0xb2] sm:$0xff]
      %v3731 = vld [vmem:[#allocation3 + $0xc2] sm:$0xff]
      %v3732 = vld [vmem:[#allocation3 + $0xca] sm:$0xff]
      %v3733 = vld [vmem:[#allocation3 + $0xda] sm:$0xff]
      %v3734 = vld [vmem:[#allocation3 + $0xe2] sm:$0xff]
      %v3735 = vld [vmem:[#allocation3 + $0xf2] sm:$0xff]
      %v3736 = vld [vmem:[#allocation3 + $0xfa] sm:$0xff]
      %v3737 = vld [vmem:[#allocation3 + $0x10a] sm:$0xff]
      %v3738 = vld [vmem:[#allocation3 + $0x112] sm:$0xff]
      %v3739 = vld [vmem:[#allocation3 + $0x122] sm:$0xff]
      %v3740 = vld [vmem:[#allocation3 + $0x12a] sm:$0xff]
      %v3741 = vld [vmem:[#allocation3 + $0x13a] sm:$0xff]
      %v3742 = vld [vmem:[#allocation3 + $0x142] sm:$0xff]
      %v3743 = vld [vmem:[#allocation3 + $0x152] sm:$0xff]
      %v3744 = vld [vmem:[#allocation3 + $0x15a] sm:$0xff]
      %v3745 = vld [vmem:[#allocation3 + $0x16a] sm:$0xff]
      %v3746 = vld [vmem:[#allocation3 + $0x172] sm:$0xff]
      %v3747 = vld [vmem:[#allocation3 + $0x182] sm:$0xff]
      %v3748 = vld [vmem:[#allocation3 + $0x18a] sm:$0xff]
      %v3749 = vld [vmem:[#allocation3 + $0x19a] sm:$0xff]
      %v3750 = vld [vmem:[#allocation3 + $0x1a2] sm:$0xff]
      %v3751 = vpack.c.bf16 %v3644, %v3643
      %v3752 = vpack.c.bf16 %v3680, %v3679
      %v3753 = vpack.c.bf16 %v3716, %v3715
      %v3754 = vpack.c.bf16 %v3646, %v3645
      %v3755 = vpack.c.bf16 %v3682, %v3681
      %v3756 = vpack.c.bf16 %v3718, %v3717
      %v3757 = vpack.c.bf16 %v3648, %v3647
      %v3758 = vpack.c.bf16 %v3684, %v3683
      %v3759 = vpack.c.bf16 %v3720, %v3719
      %v3760 = vpack.c.bf16 %v3650, %v3649
      %v3761 = vpack.c.bf16 %v3686, %v3685
      %v3762 = vpack.c.bf16 %v3722, %v3721
      %v3763 = vpack.c.bf16 %v3652, %v3651
      %v3764 = vpack.c.bf16 %v3688, %v3687
      %v3765 = vpack.c.bf16 %v3724, %v3723
      %v3766 = vpack.c.bf16 %v3654, %v3653
      %v3767 = vpack.c.bf16 %v3690, %v3689
      %v3768 = vpack.c.bf16 %v3726, %v3725
      %v3769 = vpack.c.bf16 %v3656, %v3655
      %v3770 = vpack.c.bf16 %v3692, %v3691
      %v3771 = vpack.c.bf16 %v3728, %v3727
      %v3772 = vpack.c.bf16 %v3658, %v3657
      %v3773 = vpack.c.bf16 %v3694, %v3693
      %v3774 = vpack.c.bf16 %v3730, %v3729
      %v3775 = vpack.c.bf16 %v3660, %v3659
      %v3776 = vpack.c.bf16 %v3696, %v3695
      %v3777 = vpack.c.bf16 %v3732, %v3731
      %v3778 = vpack.c.bf16 %v3662, %v3661
      %v3779 = vpack.c.bf16 %v3698, %v3697
      %v3780 = vpack.c.bf16 %v3734, %v3733
      %v3781 = vpack.c.bf16 %v3664, %v3663
      %v3782 = vpack.c.bf16 %v3700, %v3699
      %v3783 = vpack.c.bf16 %v3736, %v3735
      %v3784 = vpack.c.bf16 %v3666, %v3665
      %v3785 = vpack.c.bf16 %v3702, %v3701
      %v3786 = vpack.c.bf16 %v3738, %v3737
      %v3787 = vpack.c.bf16 %v3668, %v3667
      %v3788 = vpack.c.bf16 %v3704, %v3703
      %v3789 = vpack.c.bf16 %v3740, %v3739
      %v3790 = vpack.c.bf16 %v3670, %v3669
      %v3791 = vpack.c.bf16 %v3706, %v3705
      %v3792 = vpack.c.bf16 %v3742, %v3741
      %v3793 = vpack.c.bf16 %v3672, %v3671
      %v3794 = vpack.c.bf16 %v3708, %v3707
      %v3795 = vpack.c.bf16 %v3744, %v3743
      %v3796 = vpack.c.bf16 %v3674, %v3673
      %v3797 = vpack.c.bf16 %v3710, %v3709
      %v3798 = vpack.c.bf16 %v3746, %v3745
      %v3799 = vpack.c.bf16 %v3676, %v3675
      %v3800 = vpack.c.bf16 %v3712, %v3711
      %v3801 = vpack.c.bf16 %v3748, %v3747
      %v3802 = vpack.c.bf16 %v3678, %v3677
      %v3803 = vpack.c.bf16 %v3714, %v3713
      %v3804 = vpack.c.bf16 %v3750, %v3749
      %v3853 = vunpack.c.l.b16 %v3513
      %v3854 = vunpack.c.l.b16 %v3514
      %v3855 = vunpack.c.l.b16 %v3515
      %v3856 = vunpack.c.l.b16 %v3516
      %v3857 = vunpack.c.l.b16 %v3517
      %v3858 = vunpack.c.l.b16 %v3518
      %v3859 = vunpack.c.l.b16 %v3519
      %v3860 = vunpack.c.l.b16 %v3520
      %v3861 = vunpack.c.l.b16 %v3521
      %v3862 = vunpack.c.l.b16 %v3522
      %v3863 = vunpack.c.l.b16 %v3523
      %v3864 = vunpack.c.l.b16 %v3524
      %v3865 = vunpack.c.l.b16 %v3525
      %v3866 = vunpack.c.l.b16 %v3526
      %v3867 = vunpack.c.l.b16 %v3527
      %v3868 = vunpack.c.l.b16 %v3528
      %v3869 = vunpack.c.l.b16 %v3529
      %v3870 = vunpack.c.l.b16 %v3530
      %v3871 = vunpack.c.l.b16 %v3531
      %v3872 = vunpack.c.l.b16 %v3532
      %v3873 = vunpack.c.l.b16 %v3533
      %v3874 = vunpack.c.l.b16 %v3534
      %v3875 = vunpack.c.l.b16 %v3535
      %v3876 = vunpack.c.l.b16 %v3536
      %v3877 = vunpack.c.l.b16 %v3537
      %v3878 = vunpack.c.l.b16 %v3538
      %v3879 = vunpack.c.l.b16 %v3539
      %v3880 = vunpack.c.l.b16 %v3540
      %v3881 = vunpack.c.l.b16 %v3541
      %v3882 = vunpack.c.l.b16 %v3542
      %v3883 = vunpack.c.l.b16 %v3543
      %v3884 = vunpack.c.l.b16 %v3544
      %v3885 = vunpack.c.l.b16 %v3545
      %v3886 = vunpack.c.l.b16 %v3546
      %v3887 = vunpack.c.l.b16 %v3547
      %v3888 = vunpack.c.l.b16 %v3548
      %v3889 = vunpack.c.l.b16 %v3549
      %v3890 = vunpack.c.l.b16 %v3550
      %v3891 = vunpack.c.l.b16 %v3551
      %v3892 = vunpack.c.l.b16 %v3552
      %v3893 = vunpack.c.l.b16 %v3553
      %v3894 = vunpack.c.l.b16 %v3554
      %v3895 = vunpack.c.l.b16 %v3555
      %v3896 = vunpack.c.l.b16 %v3556
      %v3897 = vunpack.c.l.b16 %v3557
      %v3898 = vunpack.c.l.b16 %v3558
      %v3899 = vunpack.c.l.b16 %v3559
      %v3900 = vunpack.c.l.b16 %v3560
      %v3901 = vpack.c.b16 %v3854, %v3853
      %v3902 = vpack.c.b16 %v3856, %v3855
      %v3903 = vpack.c.b16 %v3858, %v3857
      %v3904 = vpack.c.b16 %v3860, %v3859
      %v3905 = vpack.c.b16 %v3862, %v3861
      %v3906 = vpack.c.b16 %v3864, %v3863
      %v3907 = vpack.c.b16 %v3866, %v3865
      %v3908 = vpack.c.b16 %v3868, %v3867
      %v3909 = vpack.c.b16 %v3870, %v3869
      %v3910 = vpack.c.b16 %v3872, %v3871
      %v3911 = vpack.c.b16 %v3874, %v3873
      %v3912 = vpack.c.b16 %v3876, %v3875
      %v3913 = vpack.c.b16 %v3878, %v3877
      %v3914 = vpack.c.b16 %v3880, %v3879
      %v3915 = vpack.c.b16 %v3882, %v3881
      %v3916 = vpack.c.b16 %v3884, %v3883
      %v3917 = vpack.c.b16 %v3886, %v3885
      %v3918 = vpack.c.b16 %v3888, %v3887
      %v3919 = vpack.c.b16 %v3890, %v3889
      %v3920 = vpack.c.b16 %v3892, %v3891
      %v3921 = vpack.c.b16 %v3894, %v3893
      %v3922 = vpack.c.b16 %v3896, %v3895
      %v3923 = vpack.c.b16 %v3898, %v3897
      %v3924 = vpack.c.b16 %v3900, %v3899
      %3949 = vmatprep.subr.bf16.mxu0 0
      %3950 = vmatpush1.bf16.msra.mxu0 %v3901
      %3951 = vmatprep.subr.bf16.mxu0 0
      %3952 = vmatpush1.bf16.msra.mxu0 %v3902
      %3953 = vmatprep.subr.bf16.mxu0 0
      %3954 = vmatpush1.bf16.msra.mxu0 %v3903
      %3955 = vmatprep.subr.bf16.mxu0 0
      %3956 = vmatpush1.bf16.msra.mxu0 %v3904
      %3957 = vmatprep.subr.bf16.mxu0 0
      %3958 = vmatpush1.bf16.msra.mxu0 %v3905
      %3959 = vmatprep.subr.bf16.mxu0 0
      %3960 = vmatpush1.bf16.msra.mxu0 %v3906
      %3961 = vmatprep.subr.bf16.mxu0 0
      %3962 = vmatpush1.bf16.msra.mxu0 %v3907
      %3963 = vmatprep.subr.bf16.mxu0 0
      %3964 = vmatpush1.bf16.msra.mxu0 %v3908
      %3965 = vmatprep.subr.bf16.mxu0 0
      %3966 = vmatpush1.bf16.msra.mxu0 %v3909
      %3967 = vmatprep.subr.bf16.mxu0 0
      %3968 = vmatpush1.bf16.msra.mxu0 %v3910
      %3969 = vmatprep.subr.bf16.mxu0 0
      %3970 = vmatpush1.bf16.msra.mxu0 %v3911
      %3971 = vmatprep.subr.bf16.mxu0 0
      %3972 = vmatpush1.bf16.msra.mxu0 %v3912
      %3973 = vmatprep.subr.bf16.mxu0 0
      %3974 = vmatpush1.bf16.msra.mxu0 %v3913
      %3975 = vmatprep.subr.bf16.mxu0 0
      %3976 = vmatpush1.bf16.msra.mxu0 %v3914
      %3977 = vmatprep.subr.bf16.mxu0 0
      %3978 = vmatpush1.bf16.msra.mxu0 %v3915
      %3979 = vmatprep.subr.bf16.mxu0 0
      %3980 = vmatpush1.bf16.msra.mxu0 %v3916
      %3981 = vmatprep.mubr.bf16.mxu0 %v3755
      %3982 = vmatmul.mubr.bf16.gmra.mrb[0].mxu0 %v3754
      %v3983 = vpop.f32.mrb[0].mxu0
      %v3984 = vadd.f32 0.0, %v3983
      %v3985 = vpop.f32.mrb[0].mxu0
      %v3986 = vpop.f32.mrb[0].mxu0
      %v3987 = vadd.f32 0.0, %v3986
      %v3988 = vpop.f32.mrb[0].mxu0
      %3989 = vmatprep.mubr.bf16.mxu0 %v3758
      %3990 = vmatmul.mubr.bf16.gmra.mrb[0].mxu0 %v3757
      %v3991 = vpop.f32.mrb[0].mxu0
      %v3992 = vadd.f32 0.0, %v3991
      %v3993 = vpop.f32.mrb[0].mxu0
      %v3994 = vpop.f32.mrb[0].mxu0
      %v3995 = vadd.f32 0.0, %v3994
      %v3996 = vpop.f32.mrb[0].mxu0
      %3997 = vmatprep.mubr.bf16.mxu0 %v3761
      %3998 = vmatmul.mubr.bf16.gmra.mrb[0].mxu0 %v3760
      %v3999 = vpop.f32.mrb[0].mxu0
      %v4000 = vadd.f32 0.0, %v3999
      %v4001 = vpop.f32.mrb[0].mxu0
      %v4002 = vpop.f32.mrb[0].mxu0
      %v4003 = vadd.f32 0.0, %v4002
      %v4004 = vpop.f32.mrb[0].mxu0
      %4005 = vmatprep.mubr.bf16.mxu0 %v3764
      %4006 = vmatmul.mubr.bf16.gmra.mrb[0].mxu0 %v3763
      %v4007 = vpop.f32.mrb[0].mxu0
      %v4008 = vadd.f32 0.0, %v4007
      %v4009 = vpop.f32.mrb[0].mxu0
      %v4010 = vpop.f32.mrb[0].mxu0
      %v4011 = vadd.f32 0.0, %v4010
      %v4012 = vpop.f32.mrb[0].mxu0
      %4013 = vmatprep.mubr.bf16.mxu0 %v3767
      %4014 = vmatmul.mubr.bf16.gmra.mrb[0].mxu0 %v3766
      %v4015 = vpop.f32.mrb[0].mxu0
      %v4016 = vadd.f32 0.0, %v4015
      %v4017 = vpop.f32.mrb[0].mxu0
      %v4018 = vpop.f32.mrb[0].mxu0
      %v4019 = vadd.f32 0.0, %v4018
      %v4020 = vpop.f32.mrb[0].mxu0
      %4021 = vmatprep.mubr.bf16.mxu0 %v3770
      %4022 = vmatmul.mubr.bf16.gmra.mrb[0].mxu0 %v3769
      %v4023 = vpop.f32.mrb[0].mxu0
      %v4024 = vadd.f32 0.0, %v4023
      %v4025 = vpop.f32.mrb[0].mxu0
      %v4026 = vpop.f32.mrb[0].mxu0
      %v4027 = vadd.f32 0.0, %v4026
      %v4028 = vpop.f32.mrb[0].mxu0
      %4029 = vmatprep.mubr.bf16.mxu0 %v3773
      %4030 = vmatmul.mubr.bf16.gmra.mrb[0].mxu0 %v3772
      %v4031 = vpop.f32.mrb[0].mxu0
      %v4032 = vadd.f32 0.0, %v4031
      %v4033 = vpop.f32.mrb[0].mxu0
      %v4034 = vpop.f32.mrb[0].mxu0
      %v4035 = vadd.f32 0.0, %v4034
      %v4036 = vpop.f32.mrb[0].mxu0
      %4037 = vmatprep.mubr.bf16.mxu0 %v3776
      %4038 = vmatmul.mubr.bf16.gmra.mrb[0].mxu0 %v3775
      %v4039 = vpop.f32.mrb[0].mxu0
      %v4040 = vadd.f32 0.0, %v4039
      %v4041 = vpop.f32.mrb[0].mxu0
      %v4042 = vpop.f32.mrb[0].mxu0
      %v4043 = vadd.f32 0.0, %v4042
      %v4044 = vpop.f32.mrb[0].mxu0
      %4045 = vmatprep.mubr.bf16.mxu0 %v3779
      %4046 = vmatmul.mubr.bf16.gmra.mrb[0].mxu0 %v3778
      %v4047 = vpop.f32.mrb[0].mxu0
      %v4048 = vadd.f32 0.0, %v4047
      %v4049 = vpop.f32.mrb[0].mxu0
      %v4050 = vpop.f32.mrb[0].mxu0
      %v4051 = vadd.f32 0.0, %v4050
      %v4052 = vpop.f32.mrb[0].mxu0
      %4053 = vmatprep.mubr.bf16.mxu0 %v3782
      %4054 = vmatmul.mubr.bf16.gmra.mrb[0].mxu0 %v3781
      %v4055 = vpop.f32.mrb[0].mxu0
      %v4056 = vadd.f32 0.0, %v4055
      %v4057 = vpop.f32.mrb[0].mxu0
      %v4058 = vpop.f32.mrb[0].mxu0
      %v4059 = vadd.f32 0.0, %v4058
      %v4060 = vpop.f32.mrb[0].mxu0
      %4061 = vmatprep.mubr.bf16.mxu0 %v3785
      %4062 = vmatmul.mubr.bf16.gmra.mrb[0].mxu0 %v3784
      %v4063 = vpop.f32.mrb[0].mxu0
      %v4064 = vadd.f32 0.0, %v4063
      %v4065 = vpop.f32.mrb[0].mxu0
      %v4066 = vpop.f32.mrb[0].mxu0
      %v4067 = vadd.f32 0.0, %v4066
      %v4068 = vpop.f32.mrb[0].mxu0
      %4069 = vmatprep.mubr.bf16.mxu0 %v3788
      %4070 = vmatmul.mubr.bf16.gmra.mrb[0].mxu0 %v3787
      %v4071 = vpop.f32.mrb[0].mxu0
      %v4072 = vadd.f32 0.0, %v4071
      %v4073 = vpop.f32.mrb[0].mxu0
      %v4074 = vpop.f32.mrb[0].mxu0
      %v4075 = vadd.f32 0.0, %v4074
      %v4076 = vpop.f32.mrb[0].mxu0
      %4077 = vmatprep.mubr.bf16.mxu0 %v3791
      %4078 = vmatmul.mubr.bf16.gmra.mrb[0].mxu0 %v3790
      %v4079 = vpop.f32.mrb[0].mxu0
      %v4080 = vadd.f32 0.0, %v4079
      %v4081 = vpop.f32.mrb[0].mxu0
      %v4082 = vpop.f32.mrb[0].mxu0
      %v4083 = vadd.f32 0.0, %v4082
      %v4084 = vpop.f32.mrb[0].mxu0
      %4085 = vmatprep.mubr.bf16.mxu0 %v3794
      %4086 = vmatmul.mubr.bf16.gmra.mrb[0].mxu0 %v3793
      %v4087 = vpop.f32.mrb[0].mxu0
      %v4088 = vadd.f32 0.0, %v4087
      %v4089 = vpop.f32.mrb[0].mxu0
      %v4090 = vpop.f32.mrb[0].mxu0
      %v4091 = vadd.f32 0.0, %v4090
      %v4092 = vpop.f32.mrb[0].mxu0
      %4093 = vmatprep.mubr.bf16.mxu0 %v3797
      %4094 = vmatmul.mubr.bf16.gmra.mrb[0].mxu0 %v3796
      %v4095 = vpop.f32.mrb[0].mxu0
      %v4096 = vadd.f32 0.0, %v4095
      %v4097 = vpop.f32.mrb[0].mxu0
      %v4098 = vpop.f32.mrb[0].mxu0
      %v4099 = vadd.f32 0.0, %v4098
      %v4100 = vpop.f32.mrb[0].mxu0
      %4101 = vmatprep.mubr.bf16.mxu0 %v3800
      %4102 = vmatmul.mubr.bf16.gmra.mrb[0].mxu0 %v3799
      %v4103 = vpop.f32.mrb[0].mxu0
      %v4104 = vadd.f32 0.0, %v4103
      %v4105 = vpop.f32.mrb[0].mxu0
      %v4106 = vpop.f32.mrb[0].mxu0
      %v4107 = vadd.f32 0.0, %v4106
      %v4108 = vpop.f32.mrb[0].mxu0
      %4109 = vdwg.mxu0
      %4110 = vmatprep.subr.bf16.mxu0 0
      %4111 = vmatpush1.bf16.msra.mxu0 %v3917
      %4112 = vmatprep.subr.bf16.mxu0 0
      %4113 = vmatpush1.bf16.msra.mxu0 %v3918
      %4114 = vmatprep.subr.bf16.mxu0 0
      %4115 = vmatpush1.bf16.msra.mxu0 %v3919
      %4116 = vmatprep.subr.bf16.mxu0 0
      %4117 = vmatpush1.bf16.msra.mxu0 %v3920
      %4118 = vmatprep.subr.bf16.mxu0 0
      %4119 = vmatpush1.bf16.msra.mxu0 %v3921
      %4120 = vmatprep.subr.bf16.mxu0 0
      %4121 = vmatpush1.bf16.msra.mxu0 %v3922
      %4122 = vmatprep.subr.bf16.mxu0 0
      %4123 = vmatpush1.bf16.msra.mxu0 %v3923
      %4124 = vmatprep.subr.bf16.mxu0 0
      %4125 = vmatpush1.bf16.msra.mxu0 %v3924
      %4126 = vmatprep.subr.bf16.mxu0 0
      %4127 = vmatpush1.bf16.msra.mxu0 0
      %4128 = vmatprep.subr.bf16.mxu0 0
      %4129 = vmatpush1.bf16.msra.mxu0 0
      %4130 = vmatprep.subr.bf16.mxu0 0
      %4131 = vmatpush1.bf16.msra.mxu0 0
      %4132 = vmatprep.subr.bf16.mxu0 0
      %4133 = vmatpush1.bf16.msra.mxu0 0
      %4134 = vmatprep.subr.bf16.mxu0 0
      %4135 = vmatpush1.bf16.msra.mxu0 0
      %4136 = vmatprep.subr.bf16.mxu0 0
      %4137 = vmatpush1.bf16.msra.mxu0 0
      %4138 = vmatprep.subr.bf16.mxu0 0
      %4139 = vmatpush1.bf16.msra.mxu0 0
      %4140 = vmatprep.subr.bf16.mxu0 0
      %4141 = vmatpush1.bf16.msra.mxu0 0
      %4142 = vmatprep.mubr.bf16.mxu0 0
      %4143 = vmatmul.mubr.bf16.gmra.mrb[0].mxu0 %v3756
      %v4144 = vpop.f32.mrb[0].mxu0
      %v4145 = vadd.f32 %v3984, %v4144
      %v4146 = vpop.f32.mrb[0].mxu0
      %v4147 = vpop.f32.mrb[0].mxu0
      %v4148 = vadd.f32 %v3987, %v4147
      %v4149 = vpop.f32.mrb[0].mxu0
      %4150 = vmatprep.mubr.bf16.mxu0 0
      %4151 = vmatmul.mubr.bf16.gmra.mrb[0].mxu0 %v3759
      %v4152 = vpop.f32.mrb[0].mxu0
      %v4153 = vadd.f32 %v3992, %v4152
      %v4154 = vpop.f32.mrb[0].mxu0
      %v4155 = vpop.f32.mrb[0].mxu0
      %v4156 = vadd.f32 %v3995, %v4155
      %v4157 = vpop.f32.mrb[0].mxu0
      %4158 = vmatprep.mubr.bf16.mxu0 0
      %4159 = vmatmul.mubr.bf16.gmra.mrb[0].mxu0 %v3762
      %v4160 = vpop.f32.mrb[0].mxu0
      %v4161 = vadd.f32 %v4000, %v4160
      %v4162 = vpop.f32.mrb[0].mxu0
      %v4163 = vpop.f32.mrb[0].mxu0
      %v4164 = vadd.f32 %v4003, %v4163
      %v4165 = vpop.f32.mrb[0].mxu0
      %4166 = vmatprep.mubr.bf16.mxu0 0
      %4167 = vmatmul.mubr.bf16.gmra.mrb[0].mxu0 %v3765
      %v4168 = vpop.f32.mrb[0].mxu0
      %v4169 = vadd.f32 %v4008, %v4168
      %v4170 = vpop.f32.mrb[0].mxu0
      %v4171 = vpop.f32.mrb[0].mxu0
      %v4172 = vadd.f32 %v4011, %v4171
      %v4173 = vpop.f32.mrb[0].mxu0
      %4174 = vmatprep.mubr.bf16.mxu0 0
      %4175 = vmatmul.mubr.bf16.gmra.mrb[0].mxu0 %v3768
      %v4176 = vpop.f32.mrb[0].mxu0
      %v4177 = vadd.f32 %v4016, %v4176
      %v4178 = vpop.f32.mrb[0].mxu0
      %v4179 = vpop.f32.mrb[0].mxu0
      %v4180 = vadd.f32 %v4019, %v4179
      %v4181 = vpop.f32.mrb[0].mxu0
      %4182 = vmatprep.mubr.bf16.mxu0 0
      %4183 = vmatmul.mubr.bf16.gmra.mrb[0].mxu0 %v3771
      %v4184 = vpop.f32.mrb[0].mxu0
      %v4185 = vadd.f32 %v4024, %v4184
      %v4186 = vpop.f32.mrb[0].mxu0
      %v4187 = vpop.f32.mrb[0].mxu0
      %v4188 = vadd.f32 %v4027, %v4187
      %v4189 = vpop.f32.mrb[0].mxu0
      %4190 = vmatprep.mubr.bf16.mxu0 0
      %4191 = vmatmul.mubr.bf16.gmra.mrb[0].mxu0 %v3774
      %v4192 = vpop.f32.mrb[0].mxu0
      %v4193 = vadd.f32 %v4032, %v4192
      %v4194 = vpop.f32.mrb[0].mxu0
      %v4195 = vpop.f32.mrb[0].mxu0
      %v4196 = vadd.f32 %v4035, %v4195
      %v4197 = vpop.f32.mrb[0].mxu0
      %4198 = vmatprep.mubr.bf16.mxu0 0
      %4199 = vmatmul.mubr.bf16.gmra.mrb[0].mxu0 %v3777
      %v4200 = vpop.f32.mrb[0].mxu0
      %v4201 = vadd.f32 %v4040, %v4200
      %v4202 = vpop.f32.mrb[0].mxu0
      %v4203 = vpop.f32.mrb[0].mxu0
      %v4204 = vadd.f32 %v4043, %v4203
      %v4205 = vpop.f32.mrb[0].mxu0
      %4206 = vmatprep.mubr.bf16.mxu0 0
      %4207 = vmatmul.mubr.bf16.gmra.mrb[0].mxu0 %v3780
      %v4208 = vpop.f32.mrb[0].mxu0
      %v4209 = vadd.f32 %v4048, %v4208
      %v4210 = vpop.f32.mrb[0].mxu0
      %v4211 = vpop.f32.mrb[0].mxu0
      %v4212 = vadd.f32 %v4051, %v4211
      %v4213 = vpop.f32.mrb[0].mxu0
      %4214 = vmatprep.mubr.bf16.mxu0 0
      %4215 = vmatmul.mubr.bf16.gmra.mrb[0].mxu0 %v3783
      %v4216 = vpop.f32.mrb[0].mxu0
      %v4217 = vadd.f32 %v4056, %v4216
      %v4218 = vpop.f32.mrb[0].mxu0
      %v4219 = vpop.f32.mrb[0].mxu0
      %v4220 = vadd.f32 %v4059, %v4219
      %v4221 = vpop.f32.mrb[0].mxu0
      %4222 = vmatprep.mubr.bf16.mxu0 0
      %4223 = vmatmul.mubr.bf16.gmra.mrb[0].mxu0 %v3786
      %v4224 = vpop.f32.mrb[0].mxu0
      %v4225 = vadd.f32 %v4064, %v4224
      %v4226 = vpop.f32.mrb[0].mxu0
      %v4227 = vpop.f32.mrb[0].mxu0
      %v4228 = vadd.f32 %v4067, %v4227
      %v4229 = vpop.f32.mrb[0].mxu0
      %4230 = vmatprep.mubr.bf16.mxu0 0
      %4231 = vmatmul.mubr.bf16.gmra.mrb[0].mxu0 %v3789
      %v4232 = vpop.f32.mrb[0].mxu0
      %v4233 = vadd.f32 %v4072, %v4232
      %v4234 = vpop.f32.mrb[0].mxu0
      %v4235 = vpop.f32.mrb[0].mxu0
      %v4236 = vadd.f32 %v4075, %v4235
      %v4237 = vpop.f32.mrb[0].mxu0
      %4238 = vmatprep.mubr.bf16.mxu0 0
      %4239 = vmatmul.mubr.bf16.gmra.mrb[0].mxu0 %v3792
      %v4240 = vpop.f32.mrb[0].mxu0
      %v4241 = vadd.f32 %v4080, %v4240
      %v4242 = vpop.f32.mrb[0].mxu0
      %v4243 = vpop.f32.mrb[0].mxu0
      %v4244 = vadd.f32 %v4083, %v4243
      %v4245 = vpop.f32.mrb[0].mxu0
      %4246 = vmatprep.mubr.bf16.mxu0 0
      %4247 = vmatmul.mubr.bf16.gmra.mrb[0].mxu0 %v3795
      %v4248 = vpop.f32.mrb[0].mxu0
      %v4249 = vadd.f32 %v4088, %v4248
      %v4250 = vpop.f32.mrb[0].mxu0
      %v4251 = vpop.f32.mrb[0].mxu0
      %v4252 = vadd.f32 %v4091, %v4251
      %v4253 = vpop.f32.mrb[0].mxu0
      %4254 = vmatprep.mubr.bf16.mxu0 0
      %4255 = vmatmul.mubr.bf16.gmra.mrb[0].mxu0 %v3798
      %v4256 = vpop.f32.mrb[0].mxu0
      %v4257 = vadd.f32 %v4096, %v4256
      %v4258 = vpop.f32.mrb[0].mxu0
      %v4259 = vpop.f32.mrb[0].mxu0
      %v4260 = vadd.f32 %v4099, %v4259
      %v4261 = vpop.f32.mrb[0].mxu0
      %4262 = vmatprep.mubr.bf16.mxu0 0
      %4263 = vmatmul.mubr.bf16.gmra.mrb[0].mxu0 %v3801
      %v4264 = vpop.f32.mrb[0].mxu0
      %v4265 = vadd.f32 %v4104, %v4264
      %v4266 = vpop.f32.mrb[0].mxu0
      %v4267 = vpop.f32.mrb[0].mxu0
      %v4268 = vadd.f32 %v4107, %v4267
      %v4269 = vpop.f32.mrb[0].mxu0
      %4270 = vdwg.mxu0
      %v4319 = vunpack.c.l.b16 %v3464
      %v4320 = vunpack.c.l.b16 %v3465
      %v4321 = vunpack.c.l.b16 %v3466
      %v4322 = vunpack.c.l.b16 %v3467
      %v4323 = vunpack.c.l.b16 %v3468
      %v4324 = vunpack.c.l.b16 %v3469
      %v4325 = vunpack.c.l.b16 %v3470
      %v4326 = vunpack.c.l.b16 %v3471
      %v4327 = vunpack.c.l.b16 %v3472
      %v4328 = vunpack.c.l.b16 %v3473
      %v4329 = vunpack.c.l.b16 %v3474
      %v4330 = vunpack.c.l.b16 %v3475
      %v4331 = vunpack.c.l.b16 %v3476
      %v4332 = vunpack.c.l.b16 %v3477
      %v4333 = vunpack.c.l.b16 %v3478
      %v4334 = vunpack.c.l.b16 %v3479
      %v4335 = vunpack.c.l.b16 %v3480
      %v4336 = vunpack.c.l.b16 %v3481
      %v4337 = vunpack.c.l.b16 %v3482
      %v4338 = vunpack.c.l.b16 %v3483
      %v4339 = vunpack.c.l.b16 %v3484
      %v4340 = vunpack.c.l.b16 %v3485
      %v4341 = vunpack.c.l.b16 %v3486
      %v4342 = vunpack.c.l.b16 %v3487
      %v4343 = vunpack.c.l.b16 %v3488
      %v4344 = vunpack.c.l.b16 %v3489
      %v4345 = vunpack.c.l.b16 %v3490
      %v4346 = vunpack.c.l.b16 %v3491
      %v4347 = vunpack.c.l.b16 %v3492
      %v4348 = vunpack.c.l.b16 %v3493
      %v4349 = vunpack.c.l.b16 %v3494
      %v4350 = vunpack.c.l.b16 %v3495
      %v4351 = vunpack.c.l.b16 %v3496
      %v4352 = vunpack.c.l.b16 %v3497
      %v4353 = vunpack.c.l.b16 %v3498
      %v4354 = vunpack.c.l.b16 %v3499
      %v4355 = vunpack.c.l.b16 %v3500
      %v4356 = vunpack.c.l.b16 %v3501
      %v4357 = vunpack.c.l.b16 %v3502
      %v4358 = vunpack.c.l.b16 %v3503
      %v4359 = vunpack.c.l.b16 %v3504
      %v4360 = vunpack.c.l.b16 %v3505
      %v4361 = vunpack.c.l.b16 %v3506
      %v4362 = vunpack.c.l.b16 %v3507
      %v4363 = vunpack.c.l.b16 %v3508
      %v4364 = vunpack.c.l.b16 %v3509
      %v4365 = vunpack.c.l.b16 %v3510
      %v4366 = vunpack.c.l.b16 %v3511
      %v4367 = vpack.c.b16 %v4320, %v4319
      %v4368 = vpack.c.b16 %v4322, %v4321
      %v4369 = vpack.c.b16 %v4324, %v4323
      %v4370 = vpack.c.b16 %v4326, %v4325
      %v4371 = vpack.c.b16 %v4328, %v4327
      %v4372 = vpack.c.b16 %v4330, %v4329
      %v4373 = vpack.c.b16 %v4332, %v4331
      %v4374 = vpack.c.b16 %v4334, %v4333
      %v4375 = vpack.c.b16 %v4336, %v4335
      %v4376 = vpack.c.b16 %v4338, %v4337
      %v4377 = vpack.c.b16 %v4340, %v4339
      %v4378 = vpack.c.b16 %v4342, %v4341
      %v4379 = vpack.c.b16 %v4344, %v4343
      %v4380 = vpack.c.b16 %v4346, %v4345
      %v4381 = vpack.c.b16 %v4348, %v4347
      %v4382 = vpack.c.b16 %v4350, %v4349
      %v4383 = vpack.c.b16 %v4352, %v4351
      %v4384 = vpack.c.b16 %v4354, %v4353
      %v4385 = vpack.c.b16 %v4356, %v4355
      %v4386 = vpack.c.b16 %v4358, %v4357
      %v4387 = vpack.c.b16 %v4360, %v4359
      %v4388 = vpack.c.b16 %v4362, %v4361
      %v4389 = vpack.c.b16 %v4364, %v4363
      %v4390 = vpack.c.b16 %v4366, %v4365
      %4415 = vmatprep.subr.bf16.mxu0 0
      %4416 = vmatpush1.bf16.msra.mxu0 %v4367
      %4417 = vmatprep.subr.bf16.mxu0 0
      %4418 = vmatpush1.bf16.msra.mxu0 %v4368
      %4419 = vmatprep.subr.bf16.mxu0 0
      %4420 = vmatpush1.bf16.msra.mxu0 %v4369
      %4421 = vmatprep.subr.bf16.mxu0 0
      %4422 = vmatpush1.bf16.msra.mxu0 %v4370
      %4423 = vmatprep.subr.bf16.mxu0 0
      %4424 = vmatpush1.bf16.msra.mxu0 %v4371
      %4425 = vmatprep.subr.bf16.mxu0 0
      %4426 = vmatpush1.bf16.msra.mxu0 %v4372
      %4427 = vmatprep.subr.bf16.mxu0 0
      %4428 = vmatpush1.bf16.msra.mxu0 %v4373
      %4429 = vmatprep.subr.bf16.mxu0 0
      %4430 = vmatpush1.bf16.msra.mxu0 %v4374
      %4431 = vmatprep.subr.bf16.mxu0 0
      %4432 = vmatpush1.bf16.msra.mxu0 %v4375
      %4433 = vmatprep.subr.bf16.mxu0 0
      %4434 = vmatpush1.bf16.msra.mxu0 %v4376
      %4435 = vmatprep.subr.bf16.mxu0 0
      %4436 = vmatpush1.bf16.msra.mxu0 %v4377
      %4437 = vmatprep.subr.bf16.mxu0 0
      %4438 = vmatpush1.bf16.msra.mxu0 %v4378
      %4439 = vmatprep.subr.bf16.mxu0 0
      %4440 = vmatpush1.bf16.msra.mxu0 %v4379
      %4441 = vmatprep.subr.bf16.mxu0 0
      %4442 = vmatpush1.bf16.msra.mxu0 %v4380
      %4443 = vmatprep.subr.bf16.mxu0 0
      %4444 = vmatpush1.bf16.msra.mxu0 %v4381
      %4445 = vmatprep.subr.bf16.mxu0 0
      %4446 = vmatpush1.bf16.msra.mxu0 %v4382
      %4447 = vmatprep.mubr.bf16.mxu0 %v3752
      %4448 = vmatmul.mubr.bf16.gmra.mrb[0].mxu0 %v3751
      %v4449 = vpop.f32.mrb[0].mxu0
      %v4450 = vadd.f32 %v4145, %v4449
      %v4451 = vpop.f32.mrb[0].mxu0
      %v4452 = vpop.f32.mrb[0].mxu0
      %v4453 = vadd.f32 %v4148, %v4452
      %v4454 = vpop.f32.mrb[0].mxu0
      %4455 = vmatprep.mubr.bf16.mxu0 %v3755
      %4456 = vmatmul.mubr.bf16.gmra.mrb[0].mxu0 %v3754
      %v4457 = vpop.f32.mrb[0].mxu0
      %v4458 = vadd.f32 %v4153, %v4457
      %v4459 = vpop.f32.mrb[0].mxu0
      %v4460 = vpop.f32.mrb[0].mxu0
      %v4461 = vadd.f32 %v4156, %v4460
      %v4462 = vpop.f32.mrb[0].mxu0
      %4463 = vmatprep.mubr.bf16.mxu0 %v3758
      %4464 = vmatmul.mubr.bf16.gmra.mrb[0].mxu0 %v3757
      %v4465 = vpop.f32.mrb[0].mxu0
      %v4466 = vadd.f32 %v4161, %v4465
      %v4467 = vpop.f32.mrb[0].mxu0
      %v4468 = vpop.f32.mrb[0].mxu0
      %v4469 = vadd.f32 %v4164, %v4468
      %v4470 = vpop.f32.mrb[0].mxu0
      %4471 = vmatprep.mubr.bf16.mxu0 %v3761
      %4472 = vmatmul.mubr.bf16.gmra.mrb[0].mxu0 %v3760
      %v4473 = vpop.f32.mrb[0].mxu0
      %v4474 = vadd.f32 %v4169, %v4473
      %v4475 = vpop.f32.mrb[0].mxu0
      %v4476 = vpop.f32.mrb[0].mxu0
      %v4477 = vadd.f32 %v4172, %v4476
      %v4478 = vpop.f32.mrb[0].mxu0
      %4479 = vmatprep.mubr.bf16.mxu0 %v3764
      %4480 = vmatmul.mubr.bf16.gmra.mrb[0].mxu0 %v3763
      %v4481 = vpop.f32.mrb[0].mxu0
      %v4482 = vadd.f32 %v4177, %v4481
      %v4483 = vpop.f32.mrb[0].mxu0
      %v4484 = vpop.f32.mrb[0].mxu0
      %v4485 = vadd.f32 %v4180, %v4484
      %v4486 = vpop.f32.mrb[0].mxu0
      %4487 = vmatprep.mubr.bf16.mxu0 %v3767
      %4488 = vmatmul.mubr.bf16.gmra.mrb[0].mxu0 %v3766
      %v4489 = vpop.f32.mrb[0].mxu0
      %v4490 = vadd.f32 %v4185, %v4489
      %v4491 = vpop.f32.mrb[0].mxu0
      %v4492 = vpop.f32.mrb[0].mxu0
      %v4493 = vadd.f32 %v4188, %v4492
      %v4494 = vpop.f32.mrb[0].mxu0
      %4495 = vmatprep.mubr.bf16.mxu0 %v3770
      %4496 = vmatmul.mubr.bf16.gmra.mrb[0].mxu0 %v3769
      %v4497 = vpop.f32.mrb[0].mxu0
      %v4498 = vadd.f32 %v4193, %v4497
      %v4499 = vpop.f32.mrb[0].mxu0
      %v4500 = vpop.f32.mrb[0].mxu0
      %v4501 = vadd.f32 %v4196, %v4500
      %v4502 = vpop.f32.mrb[0].mxu0
      %4503 = vmatprep.mubr.bf16.mxu0 %v3773
      %4504 = vmatmul.mubr.bf16.gmra.mrb[0].mxu0 %v3772
      %v4505 = vpop.f32.mrb[0].mxu0
      %v4506 = vadd.f32 %v4201, %v4505
      %v4507 = vpop.f32.mrb[0].mxu0
      %v4508 = vpop.f32.mrb[0].mxu0
      %v4509 = vadd.f32 %v4204, %v4508
      %v4510 = vpop.f32.mrb[0].mxu0
      %4511 = vmatprep.mubr.bf16.mxu0 %v3776
      %4512 = vmatmul.mubr.bf16.gmra.mrb[0].mxu0 %v3775
      %v4513 = vpop.f32.mrb[0].mxu0
      %v4514 = vadd.f32 %v4209, %v4513
      %v4515 = vpop.f32.mrb[0].mxu0
      %v4516 = vpop.f32.mrb[0].mxu0
      %v4517 = vadd.f32 %v4212, %v4516
      %v4518 = vpop.f32.mrb[0].mxu0
      %4519 = vmatprep.mubr.bf16.mxu0 %v3779
      %4520 = vmatmul.mubr.bf16.gmra.mrb[0].mxu0 %v3778
      %v4521 = vpop.f32.mrb[0].mxu0
      %v4522 = vadd.f32 %v4217, %v4521
      %v4523 = vpop.f32.mrb[0].mxu0
      %v4524 = vpop.f32.mrb[0].mxu0
      %v4525 = vadd.f32 %v4220, %v4524
      %v4526 = vpop.f32.mrb[0].mxu0
      %4527 = vmatprep.mubr.bf16.mxu0 %v3782
      %4528 = vmatmul.mubr.bf16.gmra.mrb[0].mxu0 %v3781
      %v4529 = vpop.f32.mrb[0].mxu0
      %v4530 = vadd.f32 %v4225, %v4529
      %v4531 = vpop.f32.mrb[0].mxu0
      %v4532 = vpop.f32.mrb[0].mxu0
      %v4533 = vadd.f32 %v4228, %v4532
      %v4534 = vpop.f32.mrb[0].mxu0
      %4535 = vmatprep.mubr.bf16.mxu0 %v3785
      %4536 = vmatmul.mubr.bf16.gmra.mrb[0].mxu0 %v3784
      %v4537 = vpop.f32.mrb[0].mxu0
      %v4538 = vadd.f32 %v4233, %v4537
      %v4539 = vpop.f32.mrb[0].mxu0
      %v4540 = vpop.f32.mrb[0].mxu0
      %v4541 = vadd.f32 %v4236, %v4540
      %v4542 = vpop.f32.mrb[0].mxu0
      %4543 = vmatprep.mubr.bf16.mxu0 %v3788
      %4544 = vmatmul.mubr.bf16.gmra.mrb[0].mxu0 %v3787
      %v4545 = vpop.f32.mrb[0].mxu0
      %v4546 = vadd.f32 %v4241, %v4545
      %v4547 = vpop.f32.mrb[0].mxu0
      %v4548 = vpop.f32.mrb[0].mxu0
      %v4549 = vadd.f32 %v4244, %v4548
      %v4550 = vpop.f32.mrb[0].mxu0
      %4551 = vmatprep.mubr.bf16.mxu0 %v3791
      %4552 = vmatmul.mubr.bf16.gmra.mrb[0].mxu0 %v3790
      %v4553 = vpop.f32.mrb[0].mxu0
      %v4554 = vadd.f32 %v4249, %v4553
      %v4555 = vpop.f32.mrb[0].mxu0
      %v4556 = vpop.f32.mrb[0].mxu0
      %v4557 = vadd.f32 %v4252, %v4556
      %v4558 = vpop.f32.mrb[0].mxu0
      %4559 = vmatprep.mubr.bf16.mxu0 %v3794
      %4560 = vmatmul.mubr.bf16.gmra.mrb[0].mxu0 %v3793
      %v4561 = vpop.f32.mrb[0].mxu0
      %v4562 = vadd.f32 %v4257, %v4561
      %v4563 = vpop.f32.mrb[0].mxu0
      %v4564 = vpop.f32.mrb[0].mxu0
      %v4565 = vadd.f32 %v4260, %v4564
      %v4566 = vpop.f32.mrb[0].mxu0
      %4567 = vmatprep.mubr.bf16.mxu0 %v3797
      %4568 = vmatmul.mubr.bf16.gmra.mrb[0].mxu0 %v3796
      %v4569 = vpop.f32.mrb[0].mxu0
      %v4570 = vadd.f32 %v4265, %v4569
      %v4571 = vpop.f32.mrb[0].mxu0
      %v4572 = vpop.f32.mrb[0].mxu0
      %v4573 = vadd.f32 %v4268, %v4572
      %v4574 = vpop.f32.mrb[0].mxu0
      %4575 = vdwg.mxu0
      %4576 = vmatprep.subr.bf16.mxu0 0
      %4577 = vmatpush1.bf16.msra.mxu0 %v4383
      %4578 = vmatprep.subr.bf16.mxu0 0
      %4579 = vmatpush1.bf16.msra.mxu0 %v4384
      %4580 = vmatprep.subr.bf16.mxu0 0
      %4581 = vmatpush1.bf16.msra.mxu0 %v4385
      %4582 = vmatprep.subr.bf16.mxu0 0
      %4583 = vmatpush1.bf16.msra.mxu0 %v4386
      %4584 = vmatprep.subr.bf16.mxu0 0
      %4585 = vmatpush1.bf16.msra.mxu0 %v4387
      %4586 = vmatprep.subr.bf16.mxu0 0
      %4587 = vmatpush1.bf16.msra.mxu0 %v4388
      %4588 = vmatprep.subr.bf16.mxu0 0
      %4589 = vmatpush1.bf16.msra.mxu0 %v4389
      %4590 = vmatprep.subr.bf16.mxu0 0
      %4591 = vmatpush1.bf16.msra.mxu0 %v4390
      %4592 = vmatprep.subr.bf16.mxu0 0
      %4593 = vmatpush1.bf16.msra.mxu0 0
      %4594 = vmatprep.subr.bf16.mxu0 0
      %4595 = vmatpush1.bf16.msra.mxu0 0
      %4596 = vmatprep.subr.bf16.mxu0 0
      %4597 = vmatpush1.bf16.msra.mxu0 0
      %4598 = vmatprep.subr.bf16.mxu0 0
      %4599 = vmatpush1.bf16.msra.mxu0 0
      %4600 = vmatprep.subr.bf16.mxu0 0
      %4601 = vmatpush1.bf16.msra.mxu0 0
      %4602 = vmatprep.subr.bf16.mxu0 0
      %4603 = vmatpush1.bf16.msra.mxu0 0
      %4604 = vmatprep.subr.bf16.mxu0 0
      %4605 = vmatpush1.bf16.msra.mxu0 0
      %4606 = vmatprep.subr.bf16.mxu0 0
      %4607 = vmatpush1.bf16.msra.mxu0 0
      %4608 = vmatprep.mubr.bf16.mxu0 0
      %4609 = vmatmul.mubr.bf16.gmra.mrb[0].mxu0 %v3753
      %v4610 = vpop.f32.mrb[0].mxu0
      %v4611 = vadd.f32 %v4450, %v4610
      %v4612 = vpop.f32.mrb[0].mxu0
      %v4613 = vpop.f32.mrb[0].mxu0
      %v4614 = vadd.f32 %v4453, %v4613
      %v4615 = vpop.f32.mrb[0].mxu0
      %4616 = vmatprep.mubr.bf16.mxu0 0
      %4617 = vmatmul.mubr.bf16.gmra.mrb[0].mxu0 %v3756
      %v4618 = vpop.f32.mrb[0].mxu0
      %v4619 = vadd.f32 %v4458, %v4618
      %v4620 = vpop.f32.mrb[0].mxu0
      %v4621 = vpop.f32.mrb[0].mxu0
      %v4622 = vadd.f32 %v4461, %v4621
      %v4623 = vpop.f32.mrb[0].mxu0
      %4624 = vmatprep.mubr.bf16.mxu0 0
      %4625 = vmatmul.mubr.bf16.gmra.mrb[0].mxu0 %v3759
      %v4626 = vpop.f32.mrb[0].mxu0
      %v4627 = vadd.f32 %v4466, %v4626
      %v4628 = vpop.f32.mrb[0].mxu0
      %v4629 = vpop.f32.mrb[0].mxu0
      %v4630 = vadd.f32 %v4469, %v4629
      %v4631 = vpop.f32.mrb[0].mxu0
      %4632 = vmatprep.mubr.bf16.mxu0 0
      %4633 = vmatmul.mubr.bf16.gmra.mrb[0].mxu0 %v3762
      %v4634 = vpop.f32.mrb[0].mxu0
      %v4635 = vadd.f32 %v4474, %v4634
      %v4636 = vpop.f32.mrb[0].mxu0
      %v4637 = vpop.f32.mrb[0].mxu0
      %v4638 = vadd.f32 %v4477, %v4637
      %v4639 = vpop.f32.mrb[0].mxu0
      %4640 = vmatprep.mubr.bf16.mxu0 0
      %4641 = vmatmul.mubr.bf16.gmra.mrb[0].mxu0 %v3765
      %v4642 = vpop.f32.mrb[0].mxu0
      %v4643 = vadd.f32 %v4482, %v4642
      %v4644 = vpop.f32.mrb[0].mxu0
      %v4645 = vpop.f32.mrb[0].mxu0
      %v4646 = vadd.f32 %v4485, %v4645
      %v4647 = vpop.f32.mrb[0].mxu0
      %4648 = vmatprep.mubr.bf16.mxu0 0
      %4649 = vmatmul.mubr.bf16.gmra.mrb[0].mxu0 %v3768
      %v4650 = vpop.f32.mrb[0].mxu0
      %v4651 = vadd.f32 %v4490, %v4650
      %v4652 = vpop.f32.mrb[0].mxu0
      %v4653 = vpop.f32.mrb[0].mxu0
      %v4654 = vadd.f32 %v4493, %v4653
      %v4655 = vpop.f32.mrb[0].mxu0
      %4656 = vmatprep.mubr.bf16.mxu0 0
      %4657 = vmatmul.mubr.bf16.gmra.mrb[0].mxu0 %v3771
      %v4658 = vpop.f32.mrb[0].mxu0
      %v4659 = vadd.f32 %v4498, %v4658
      %v4660 = vpop.f32.mrb[0].mxu0
      %v4661 = vpop.f32.mrb[0].mxu0
      %v4662 = vadd.f32 %v4501, %v4661
      %v4663 = vpop.f32.mrb[0].mxu0
      %4664 = vmatprep.mubr.bf16.mxu0 0
      %4665 = vmatmul.mubr.bf16.gmra.mrb[0].mxu0 %v3774
      %v4666 = vpop.f32.mrb[0].mxu0
      %v4667 = vadd.f32 %v4506, %v4666
      %v4668 = vpop.f32.mrb[0].mxu0
      %v4669 = vpop.f32.mrb[0].mxu0
      %v4670 = vadd.f32 %v4509, %v4669
      %v4671 = vpop.f32.mrb[0].mxu0
      %4672 = vmatprep.mubr.bf16.mxu0 0
      %4673 = vmatmul.mubr.bf16.gmra.mrb[0].mxu0 %v3777
      %v4674 = vpop.f32.mrb[0].mxu0
      %v4675 = vadd.f32 %v4514, %v4674
      %v4676 = vpop.f32.mrb[0].mxu0
      %v4677 = vpop.f32.mrb[0].mxu0
      %v4678 = vadd.f32 %v4517, %v4677
      %v4679 = vpop.f32.mrb[0].mxu0
      %4680 = vmatprep.mubr.bf16.mxu0 0
      %4681 = vmatmul.mubr.bf16.gmra.mrb[0].mxu0 %v3780
      %v4682 = vpop.f32.mrb[0].mxu0
      %v4683 = vadd.f32 %v4522, %v4682
      %v4684 = vpop.f32.mrb[0].mxu0
      %v4685 = vpop.f32.mrb[0].mxu0
      %v4686 = vadd.f32 %v4525, %v4685
      %v4687 = vpop.f32.mrb[0].mxu0
      %4688 = vmatprep.mubr.bf16.mxu0 0
      %4689 = vmatmul.mubr.bf16.gmra.mrb[0].mxu0 %v3783
      %v4690 = vpop.f32.mrb[0].mxu0
      %v4691 = vadd.f32 %v4530, %v4690
      %v4692 = vpop.f32.mrb[0].mxu0
      %v4693 = vpop.f32.mrb[0].mxu0
      %v4694 = vadd.f32 %v4533, %v4693
      %v4695 = vpop.f32.mrb[0].mxu0
      %4696 = vmatprep.mubr.bf16.mxu0 0
      %4697 = vmatmul.mubr.bf16.gmra.mrb[0].mxu0 %v3786
      %v4698 = vpop.f32.mrb[0].mxu0
      %v4699 = vadd.f32 %v4538, %v4698
      %v4700 = vpop.f32.mrb[0].mxu0
      %v4701 = vpop.f32.mrb[0].mxu0
      %v4702 = vadd.f32 %v4541, %v4701
      %v4703 = vpop.f32.mrb[0].mxu0
      %4704 = vmatprep.mubr.bf16.mxu0 0
      %4705 = vmatmul.mubr.bf16.gmra.mrb[0].mxu0 %v3789
      %v4706 = vpop.f32.mrb[0].mxu0
      %v4707 = vadd.f32 %v4546, %v4706
      %v4708 = vpop.f32.mrb[0].mxu0
      %v4709 = vpop.f32.mrb[0].mxu0
      %v4710 = vadd.f32 %v4549, %v4709
      %v4711 = vpop.f32.mrb[0].mxu0
      %4712 = vmatprep.mubr.bf16.mxu0 0
      %4713 = vmatmul.mubr.bf16.gmra.mrb[0].mxu0 %v3792
      %v4714 = vpop.f32.mrb[0].mxu0
      %v4715 = vadd.f32 %v4554, %v4714
      %v4716 = vpop.f32.mrb[0].mxu0
      %v4717 = vpop.f32.mrb[0].mxu0
      %v4718 = vadd.f32 %v4557, %v4717
      %v4719 = vpop.f32.mrb[0].mxu0
      %4720 = vmatprep.mubr.bf16.mxu0 0
      %4721 = vmatmul.mubr.bf16.gmra.mrb[0].mxu0 %v3795
      %v4722 = vpop.f32.mrb[0].mxu0
      %v4723 = vadd.f32 %v4562, %v4722
      %v4724 = vpop.f32.mrb[0].mxu0
      %v4725 = vpop.f32.mrb[0].mxu0
      %v4726 = vadd.f32 %v4565, %v4725
      %v4727 = vpop.f32.mrb[0].mxu0
      %4728 = vmatprep.mubr.bf16.mxu0 0
      %4729 = vmatmul.mubr.bf16.gmra.mrb[0].mxu0 %v3798
      %v4730 = vpop.f32.mrb[0].mxu0
      %v4731 = vadd.f32 %v4570, %v4730
      %v4732 = vpop.f32.mrb[0].mxu0
      %v4733 = vpop.f32.mrb[0].mxu0
      %v4734 = vadd.f32 %v4573, %v4733
      %v4735 = vpop.f32.mrb[0].mxu0
      %4736 = vdwg.mxu0
      %v4785 = vunpack.c.l.b16 %v3562
      %v4786 = vunpack.c.l.b16 %v3563
      %v4787 = vunpack.c.l.b16 %v3564
      %v4788 = vunpack.c.l.b16 %v3565
      %v4789 = vunpack.c.l.b16 %v3566
      %v4790 = vunpack.c.l.b16 %v3567
      %v4791 = vunpack.c.l.b16 %v3568
      %v4792 = vunpack.c.l.b16 %v3569
      %v4793 = vunpack.c.l.b16 %v3570
      %v4794 = vunpack.c.l.b16 %v3571
      %v4795 = vunpack.c.l.b16 %v3572
      %v4796 = vunpack.c.l.b16 %v3573
      %v4797 = vunpack.c.l.b16 %v3574
      %v4798 = vunpack.c.l.b16 %v3575
      %v4799 = vunpack.c.l.b16 %v3576
      %v4800 = vunpack.c.l.b16 %v3577
      %v4801 = vunpack.c.l.b16 %v3578
      %v4802 = vunpack.c.l.b16 %v3579
      %v4803 = vunpack.c.l.b16 %v3580
      %v4804 = vunpack.c.l.b16 %v3581
      %v4805 = vunpack.c.l.b16 %v3582
      %v4806 = vunpack.c.l.b16 %v3583
      %v4807 = vunpack.c.l.b16 %v3584
      %v4808 = vunpack.c.l.b16 %v3585
      %v4809 = vunpack.c.l.b16 %v3586
      %v4810 = vunpack.c.l.b16 %v3587
      %v4811 = vunpack.c.l.b16 %v3588
      %v4812 = vunpack.c.l.b16 %v3589
      %v4813 = vunpack.c.l.b16 %v3590
      %v4814 = vunpack.c.l.b16 %v3591
      %v4815 = vunpack.c.l.b16 %v3592
      %v4816 = vunpack.c.l.b16 %v3593
      %v4817 = vunpack.c.l.b16 %v3594
      %v4818 = vunpack.c.l.b16 %v3595
      %v4819 = vunpack.c.l.b16 %v3596
      %v4820 = vunpack.c.l.b16 %v3597
      %v4821 = vunpack.c.l.b16 %v3598
      %v4822 = vunpack.c.l.b16 %v3599
      %v4823 = vunpack.c.l.b16 %v3600
      %v4824 = vunpack.c.l.b16 %v3601
      %v4825 = vunpack.c.l.b16 %v3602
      %v4826 = vunpack.c.l.b16 %v3603
      %v4827 = vunpack.c.l.b16 %v3604
      %v4828 = vunpack.c.l.b16 %v3605
      %v4829 = vunpack.c.l.b16 %v3606
      %v4830 = vunpack.c.l.b16 %v3607
      %v4831 = vunpack.c.l.b16 %v3608
      %v4832 = vunpack.c.l.b16 %v3609
      %v4833 = vpack.c.b16 %v4786, %v4785
      %v4834 = vpack.c.b16 %v4788, %v4787
      %v4835 = vpack.c.b16 %v4790, %v4789
      %v4836 = vpack.c.b16 %v4792, %v4791
      %v4837 = vpack.c.b16 %v4794, %v4793
      %v4838 = vpack.c.b16 %v4796, %v4795
      %v4839 = vpack.c.b16 %v4798, %v4797
      %v4840 = vpack.c.b16 %v4800, %v4799
      %v4841 = vpack.c.b16 %v4802, %v4801
      %v4842 = vpack.c.b16 %v4804, %v4803
      %v4843 = vpack.c.b16 %v4806, %v4805
      %v4844 = vpack.c.b16 %v4808, %v4807
      %v4845 = vpack.c.b16 %v4810, %v4809
      %v4846 = vpack.c.b16 %v4812, %v4811
      %v4847 = vpack.c.b16 %v4814, %v4813
      %v4848 = vpack.c.b16 %v4816, %v4815
      %v4849 = vpack.c.b16 %v4818, %v4817
      %v4850 = vpack.c.b16 %v4820, %v4819
      %v4851 = vpack.c.b16 %v4822, %v4821
      %v4852 = vpack.c.b16 %v4824, %v4823
      %v4853 = vpack.c.b16 %v4826, %v4825
      %v4854 = vpack.c.b16 %v4828, %v4827
      %v4855 = vpack.c.b16 %v4830, %v4829
      %v4856 = vpack.c.b16 %v4832, %v4831
      %4881 = vmatprep.subr.bf16.mxu0 0
      %4882 = vmatpush1.bf16.msra.mxu0 %v4833
      %4883 = vmatprep.subr.bf16.mxu0 0
      %4884 = vmatpush1.bf16.msra.mxu0 %v4834
      %4885 = vmatprep.subr.bf16.mxu0 0
      %4886 = vmatpush1.bf16.msra.mxu0 %v4835
      %4887 = vmatprep.subr.bf16.mxu0 0
      %4888 = vmatpush1.bf16.msra.mxu0 %v4836
      %4889 = vmatprep.subr.bf16.mxu0 0
      %4890 = vmatpush1.bf16.msra.mxu0 %v4837
      %4891 = vmatprep.subr.bf16.mxu0 0
      %4892 = vmatpush1.bf16.msra.mxu0 %v4838
      %4893 = vmatprep.subr.bf16.mxu0 0
      %4894 = vmatpush1.bf16.msra.mxu0 %v4839
      %4895 = vmatprep.subr.bf16.mxu0 0
      %4896 = vmatpush1.bf16.msra.mxu0 %v4840
      %4897 = vmatprep.subr.bf16.mxu0 0
      %4898 = vmatpush1.bf16.msra.mxu0 %v4841
      %4899 = vmatprep.subr.bf16.mxu0 0
      %4900 = vmatpush1.bf16.msra.mxu0 %v4842
      %4901 = vmatprep.subr.bf16.mxu0 0
      %4902 = vmatpush1.bf16.msra.mxu0 %v4843
      %4903 = vmatprep.subr.bf16.mxu0 0
      %4904 = vmatpush1.bf16.msra.mxu0 %v4844
      %4905 = vmatprep.subr.bf16.mxu0 0
      %4906 = vmatpush1.bf16.msra.mxu0 %v4845
      %4907 = vmatprep.subr.bf16.mxu0 0
      %4908 = vmatpush1.bf16.msra.mxu0 %v4846
      %4909 = vmatprep.subr.bf16.mxu0 0
      %4910 = vmatpush1.bf16.msra.mxu0 %v4847
      %4911 = vmatprep.subr.bf16.mxu0 0
      %4912 = vmatpush1.bf16.msra.mxu0 %v4848
      %4913 = vmatprep.mubr.bf16.mxu0 %v3758
      %4914 = vmatmul.mubr.bf16.gmra.mrb[0].mxu0 %v3757
      %v4915 = vpop.f32.mrb[0].mxu0
      %v4916 = vadd.f32 0.0, %v4915
      %v4917 = vpop.f32.mrb[0].mxu0
      %v4918 = vpop.f32.mrb[0].mxu0
      %v4919 = vadd.f32 0.0, %v4918
      %v4920 = vpop.f32.mrb[0].mxu0
      %4921 = vmatprep.mubr.bf16.mxu0 %v3761
      %4922 = vmatmul.mubr.bf16.gmra.mrb[0].mxu0 %v3760
      %v4923 = vpop.f32.mrb[0].mxu0
      %v4924 = vadd.f32 0.0, %v4923
      %v4925 = vpop.f32.mrb[0].mxu0
      %v4926 = vpop.f32.mrb[0].mxu0
      %v4927 = vadd.f32 0.0, %v4926
      %v4928 = vpop.f32.mrb[0].mxu0
      %4929 = vmatprep.mubr.bf16.mxu0 %v3764
      %4930 = vmatmul.mubr.bf16.gmra.mrb[0].mxu0 %v3763
      %v4931 = vpop.f32.mrb[0].mxu0
      %v4932 = vadd.f32 0.0, %v4931
      %v4933 = vpop.f32.mrb[0].mxu0
      %v4934 = vpop.f32.mrb[0].mxu0
      %v4935 = vadd.f32 0.0, %v4934
      %v4936 = vpop.f32.mrb[0].mxu0
      %4937 = vmatprep.mubr.bf16.mxu0 %v3767
      %4938 = vmatmul.mubr.bf16.gmra.mrb[0].mxu0 %v3766
      %v4939 = vpop.f32.mrb[0].mxu0
      %v4940 = vadd.f32 0.0, %v4939
      %v4941 = vpop.f32.mrb[0].mxu0
      %v4942 = vpop.f32.mrb[0].mxu0
      %v4943 = vadd.f32 0.0, %v4942
      %v4944 = vpop.f32.mrb[0].mxu0
      %4945 = vmatprep.mubr.bf16.mxu0 %v3770
      %4946 = vmatmul.mubr.bf16.gmra.mrb[0].mxu0 %v3769
      %v4947 = vpop.f32.mrb[0].mxu0
      %v4948 = vadd.f32 0.0, %v4947
      %v4949 = vpop.f32.mrb[0].mxu0
      %v4950 = vpop.f32.mrb[0].mxu0
      %v4951 = vadd.f32 0.0, %v4950
      %v4952 = vpop.f32.mrb[0].mxu0
      %4953 = vmatprep.mubr.bf16.mxu0 %v3773
      %4954 = vmatmul.mubr.bf16.gmra.mrb[0].mxu0 %v3772
      %v4955 = vpop.f32.mrb[0].mxu0
      %v4956 = vadd.f32 0.0, %v4955
      %v4957 = vpop.f32.mrb[0].mxu0
      %v4958 = vpop.f32.mrb[0].mxu0
      %v4959 = vadd.f32 0.0, %v4958
      %v4960 = vpop.f32.mrb[0].mxu0
      %4961 = vmatprep.mubr.bf16.mxu0 %v3776
      %4962 = vmatmul.mubr.bf16.gmra.mrb[0].mxu0 %v3775
      %v4963 = vpop.f32.mrb[0].mxu0
      %v4964 = vadd.f32 0.0, %v4963
      %v4965 = vpop.f32.mrb[0].mxu0
      %v4966 = vpop.f32.mrb[0].mxu0
      %v4967 = vadd.f32 0.0, %v4966
      %v4968 = vpop.f32.mrb[0].mxu0
      %4969 = vmatprep.mubr.bf16.mxu0 %v3779
      %4970 = vmatmul.mubr.bf16.gmra.mrb[0].mxu0 %v3778
      %v4971 = vpop.f32.mrb[0].mxu0
      %v4972 = vadd.f32 0.0, %v4971
      %v4973 = vpop.f32.mrb[0].mxu0
      %v4974 = vpop.f32.mrb[0].mxu0
      %v4975 = vadd.f32 0.0, %v4974
      %v4976 = vpop.f32.mrb[0].mxu0
      %4977 = vmatprep.mubr.bf16.mxu0 %v3782
      %4978 = vmatmul.mubr.bf16.gmra.mrb[0].mxu0 %v3781
      %v4979 = vpop.f32.mrb[0].mxu0
      %v4980 = vadd.f32 0.0, %v4979
      %v4981 = vpop.f32.mrb[0].mxu0
      %v4982 = vpop.f32.mrb[0].mxu0
      %v4983 = vadd.f32 0.0, %v4982
      %v4984 = vpop.f32.mrb[0].mxu0
      %4985 = vmatprep.mubr.bf16.mxu0 %v3785
      %4986 = vmatmul.mubr.bf16.gmra.mrb[0].mxu0 %v3784
      %v4987 = vpop.f32.mrb[0].mxu0
      %v4988 = vadd.f32 0.0, %v4987
      %v4989 = vpop.f32.mrb[0].mxu0
      %v4990 = vpop.f32.mrb[0].mxu0
      %v4991 = vadd.f32 0.0, %v4990
      %v4992 = vpop.f32.mrb[0].mxu0
      %4993 = vmatprep.mubr.bf16.mxu0 %v3788
      %4994 = vmatmul.mubr.bf16.gmra.mrb[0].mxu0 %v3787
      %v4995 = vpop.f32.mrb[0].mxu0
      %v4996 = vadd.f32 0.0, %v4995
      %v4997 = vpop.f32.mrb[0].mxu0
      %v4998 = vpop.f32.mrb[0].mxu0
      %v4999 = vadd.f32 0.0, %v4998
      %v5000 = vpop.f32.mrb[0].mxu0
      %5001 = vmatprep.mubr.bf16.mxu0 %v3791
      %5002 = vmatmul.mubr.bf16.gmra.mrb[0].mxu0 %v3790
      %v5003 = vpop.f32.mrb[0].mxu0
      %v5004 = vadd.f32 0.0, %v5003
      %v5005 = vpop.f32.mrb[0].mxu0
      %v5006 = vpop.f32.mrb[0].mxu0
      %v5007 = vadd.f32 0.0, %v5006
      %v5008 = vpop.f32.mrb[0].mxu0
      %5009 = vmatprep.mubr.bf16.mxu0 %v3794
      %5010 = vmatmul.mubr.bf16.gmra.mrb[0].mxu0 %v3793
      %v5011 = vpop.f32.mrb[0].mxu0
      %v5012 = vadd.f32 0.0, %v5011
      %v5013 = vpop.f32.mrb[0].mxu0
      %v5014 = vpop.f32.mrb[0].mxu0
      %v5015 = vadd.f32 0.0, %v5014
      %v5016 = vpop.f32.mrb[0].mxu0
      %5017 = vmatprep.mubr.bf16.mxu0 %v3797
      %5018 = vmatmul.mubr.bf16.gmra.mrb[0].mxu0 %v3796
      %v5019 = vpop.f32.mrb[0].mxu0
      %v5020 = vadd.f32 0.0, %v5019
      %v5021 = vpop.f32.mrb[0].mxu0
      %v5022 = vpop.f32.mrb[0].mxu0
      %v5023 = vadd.f32 0.0, %v5022
      %v5024 = vpop.f32.mrb[0].mxu0
      %5025 = vmatprep.mubr.bf16.mxu0 %v3800
      %5026 = vmatmul.mubr.bf16.gmra.mrb[0].mxu0 %v3799
      %v5027 = vpop.f32.mrb[0].mxu0
      %v5028 = vadd.f32 0.0, %v5027
      %v5029 = vpop.f32.mrb[0].mxu0
      %v5030 = vpop.f32.mrb[0].mxu0
      %v5031 = vadd.f32 0.0, %v5030
      %v5032 = vpop.f32.mrb[0].mxu0
      %5033 = vmatprep.mubr.bf16.mxu0 %v3803
      %5034 = vmatmul.mubr.bf16.gmra.mrb[0].mxu0 %v3802
      %v5035 = vpop.f32.mrb[0].mxu0
      %v5036 = vadd.f32 0.0, %v5035
      %v5037 = vpop.f32.mrb[0].mxu0
      %v5038 = vpop.f32.mrb[0].mxu0
      %v5039 = vadd.f32 0.0, %v5038
      %v5040 = vpop.f32.mrb[0].mxu0
      %5041 = vdwg.mxu0
      %5042 = vmatprep.subr.bf16.mxu0 0
      %5043 = vmatpush1.bf16.msra.mxu0 %v4849
      %5044 = vmatprep.subr.bf16.mxu0 0
      %5045 = vmatpush1.bf16.msra.mxu0 %v4850
      %5046 = vmatprep.subr.bf16.mxu0 0
      %5047 = vmatpush1.bf16.msra.mxu0 %v4851
      %5048 = vmatprep.subr.bf16.mxu0 0
      %5049 = vmatpush1.bf16.msra.mxu0 %v4852
      %5050 = vmatprep.subr.bf16.mxu0 0
      %5051 = vmatpush1.bf16.msra.mxu0 %v4853
      %5052 = vmatprep.subr.bf16.mxu0 0
      %5053 = vmatpush1.bf16.msra.mxu0 %v4854
      %5054 = vmatprep.subr.bf16.mxu0 0
      %5055 = vmatpush1.bf16.msra.mxu0 %v4855
      %5056 = vmatprep.subr.bf16.mxu0 0
      %5057 = vmatpush1.bf16.msra.mxu0 %v4856
      %5058 = vmatprep.subr.bf16.mxu0 0
      %5059 = vmatpush1.bf16.msra.mxu0 0
      %5060 = vmatprep.subr.bf16.mxu0 0
      %5061 = vmatpush1.bf16.msra.mxu0 0
      %5062 = vmatprep.subr.bf16.mxu0 0
      %5063 = vmatpush1.bf16.msra.mxu0 0
      %5064 = vmatprep.subr.bf16.mxu0 0
      %5065 = vmatpush1.bf16.msra.mxu0 0
      %5066 = vmatprep.subr.bf16.mxu0 0
      %5067 = vmatpush1.bf16.msra.mxu0 0
      %5068 = vmatprep.subr.bf16.mxu0 0
      %5069 = vmatpush1.bf16.msra.mxu0 0
      %5070 = vmatprep.subr.bf16.mxu0 0
      %5071 = vmatpush1.bf16.msra.mxu0 0
      %5072 = vmatprep.subr.bf16.mxu0 0
      %5073 = vmatpush1.bf16.msra.mxu0 0
      %5074 = vmatprep.mubr.bf16.mxu0 0
      %5075 = vmatmul.mubr.bf16.gmra.mrb[0].mxu0 %v3759
      %v5076 = vpop.f32.mrb[0].mxu0
      %v5077 = vadd.f32 %v4916, %v5076
      %v5078 = vpop.f32.mrb[0].mxu0
      %v5079 = vpop.f32.mrb[0].mxu0
      %v5080 = vadd.f32 %v4919, %v5079
      %v5081 = vpop.f32.mrb[0].mxu0
      %5082 = vmatprep.mubr.bf16.mxu0 0
      %5083 = vmatmul.mubr.bf16.gmra.mrb[0].mxu0 %v3762
      %v5084 = vpop.f32.mrb[0].mxu0
      %v5085 = vadd.f32 %v4924, %v5084
      %v5086 = vpop.f32.mrb[0].mxu0
      %v5087 = vpop.f32.mrb[0].mxu0
      %v5088 = vadd.f32 %v4927, %v5087
      %v5089 = vpop.f32.mrb[0].mxu0
      %5090 = vmatprep.mubr.bf16.mxu0 0
      %5091 = vmatmul.mubr.bf16.gmra.mrb[0].mxu0 %v3765
      %v5092 = vpop.f32.mrb[0].mxu0
      %v5093 = vadd.f32 %v4932, %v5092
      %v5094 = vpop.f32.mrb[0].mxu0
      %v5095 = vpop.f32.mrb[0].mxu0
      %v5096 = vadd.f32 %v4935, %v5095
      %v5097 = vpop.f32.mrb[0].mxu0
      %5098 = vmatprep.mubr.bf16.mxu0 0
      %5099 = vmatmul.mubr.bf16.gmra.mrb[0].mxu0 %v3768
      %v5100 = vpop.f32.mrb[0].mxu0
      %v5101 = vadd.f32 %v4940, %v5100
      %v5102 = vpop.f32.mrb[0].mxu0
      %v5103 = vpop.f32.mrb[0].mxu0
      %v5104 = vadd.f32 %v4943, %v5103
      %v5105 = vpop.f32.mrb[0].mxu0
      %5106 = vmatprep.mubr.bf16.mxu0 0
      %5107 = vmatmul.mubr.bf16.gmra.mrb[0].mxu0 %v3771
      %v5108 = vpop.f32.mrb[0].mxu0
      %v5109 = vadd.f32 %v4948, %v5108
      %v5110 = vpop.f32.mrb[0].mxu0
      %v5111 = vpop.f32.mrb[0].mxu0
      %v5112 = vadd.f32 %v4951, %v5111
      %v5113 = vpop.f32.mrb[0].mxu0
      %5114 = vmatprep.mubr.bf16.mxu0 0
      %5115 = vmatmul.mubr.bf16.gmra.mrb[0].mxu0 %v3774
      %v5116 = vpop.f32.mrb[0].mxu0
      %v5117 = vadd.f32 %v4956, %v5116
      %v5118 = vpop.f32.mrb[0].mxu0
      %v5119 = vpop.f32.mrb[0].mxu0
      %v5120 = vadd.f32 %v4959, %v5119
      %v5121 = vpop.f32.mrb[0].mxu0
      %5122 = vmatprep.mubr.bf16.mxu0 0
      %5123 = vmatmul.mubr.bf16.gmra.mrb[0].mxu0 %v3777
      %v5124 = vpop.f32.mrb[0].mxu0
      %v5125 = vadd.f32 %v4964, %v5124
      %v5126 = vpop.f32.mrb[0].mxu0
      %v5127 = vpop.f32.mrb[0].mxu0
      %v5128 = vadd.f32 %v4967, %v5127
      %v5129 = vpop.f32.mrb[0].mxu0
      %5130 = vmatprep.mubr.bf16.mxu0 0
      %5131 = vmatmul.mubr.bf16.gmra.mrb[0].mxu0 %v3780
      %v5132 = vpop.f32.mrb[0].mxu0
      %v5133 = vadd.f32 %v4972, %v5132
      %v5134 = vpop.f32.mrb[0].mxu0
      %v5135 = vpop.f32.mrb[0].mxu0
      %v5136 = vadd.f32 %v4975, %v5135
      %v5137 = vpop.f32.mrb[0].mxu0
      %5138 = vmatprep.mubr.bf16.mxu0 0
      %5139 = vmatmul.mubr.bf16.gmra.mrb[0].mxu0 %v3783
      %v5140 = vpop.f32.mrb[0].mxu0
      %v5141 = vadd.f32 %v4980, %v5140
      %v5142 = vpop.f32.mrb[0].mxu0
      %v5143 = vpop.f32.mrb[0].mxu0
      %v5144 = vadd.f32 %v4983, %v5143
      %v5145 = vpop.f32.mrb[0].mxu0
      %5146 = vmatprep.mubr.bf16.mxu0 0
      %5147 = vmatmul.mubr.bf16.gmra.mrb[0].mxu0 %v3786
      %v5148 = vpop.f32.mrb[0].mxu0
      %v5149 = vadd.f32 %v4988, %v5148
      %v5150 = vpop.f32.mrb[0].mxu0
      %v5151 = vpop.f32.mrb[0].mxu0
      %v5152 = vadd.f32 %v4991, %v5151
      %v5153 = vpop.f32.mrb[0].mxu0
      %5154 = vmatprep.mubr.bf16.mxu0 0
      %5155 = vmatmul.mubr.bf16.gmra.mrb[0].mxu0 %v3789
      %v5156 = vpop.f32.mrb[0].mxu0
      %v5157 = vadd.f32 %v4996, %v5156
      %v5158 = vpop.f32.mrb[0].mxu0
      %v5159 = vpop.f32.mrb[0].mxu0
      %v5160 = vadd.f32 %v4999, %v5159
      %v5161 = vpop.f32.mrb[0].mxu0
      %5162 = vmatprep.mubr.bf16.mxu0 0
      %5163 = vmatmul.mubr.bf16.gmra.mrb[0].mxu0 %v3792
      %v5164 = vpop.f32.mrb[0].mxu0
      %v5165 = vadd.f32 %v5004, %v5164
      %v5166 = vpop.f32.mrb[0].mxu0
      %v5167 = vpop.f32.mrb[0].mxu0
      %v5168 = vadd.f32 %v5007, %v5167
      %v5169 = vpop.f32.mrb[0].mxu0
      %5170 = vmatprep.mubr.bf16.mxu0 0
      %5171 = vmatmul.mubr.bf16.gmra.mrb[0].mxu0 %v3795
      %v5172 = vpop.f32.mrb[0].mxu0
      %v5173 = vadd.f32 %v5012, %v5172
      %v5174 = vpop.f32.mrb[0].mxu0
      %v5175 = vpop.f32.mrb[0].mxu0
      %v5176 = vadd.f32 %v5015, %v5175
      %v5177 = vpop.f32.mrb[0].mxu0
      %5178 = vmatprep.mubr.bf16.mxu0 0
      %5179 = vmatmul.mubr.bf16.gmra.mrb[0].mxu0 %v3798
      %v5180 = vpop.f32.mrb[0].mxu0
      %v5181 = vadd.f32 %v5020, %v5180
      %v5182 = vpop.f32.mrb[0].mxu0
      %v5183 = vpop.f32.mrb[0].mxu0
      %v5184 = vadd.f32 %v5023, %v5183
      %v5185 = vpop.f32.mrb[0].mxu0
      %5186 = vmatprep.mubr.bf16.mxu0 0
      %5187 = vmatmul.mubr.bf16.gmra.mrb[0].mxu0 %v3801
      %v5188 = vpop.f32.mrb[0].mxu0
      %v5189 = vadd.f32 %v5028, %v5188
      %v5190 = vpop.f32.mrb[0].mxu0
      %v5191 = vpop.f32.mrb[0].mxu0
      %v5192 = vadd.f32 %v5031, %v5191
      %v5193 = vpop.f32.mrb[0].mxu0
      %5194 = vmatprep.mubr.bf16.mxu0 0
      %5195 = vmatmul.mubr.bf16.gmra.mrb[0].mxu0 %v3804
      %v5196 = vpop.f32.mrb[0].mxu0
      %v5197 = vadd.f32 %v5036, %v5196
      %v5198 = vpop.f32.mrb[0].mxu0
      %v5199 = vpop.f32.mrb[0].mxu0
      %v5200 = vadd.f32 %v5039, %v5199
      %v5201 = vpop.f32.mrb[0].mxu0
      %5202 = vdwg.mxu0
      %v5203 = vadd.f32 %v4611, %v5077
      %v5204 = vadd.f32 %v4614, %v5080
      %v5205 = vadd.f32 %v4619, %v5085
      %v5206 = vadd.f32 %v4622, %v5088
      %v5207 = vadd.f32 %v4627, %v5093
      %v5208 = vadd.f32 %v4630, %v5096
      %v5209 = vadd.f32 %v4635, %v5101
      %v5210 = vadd.f32 %v4638, %v5104
      %v5211 = vadd.f32 %v4643, %v5109
      %v5212 = vadd.f32 %v4646, %v5112
      %v5213 = vadd.f32 %v4651, %v5117
      %v5214 = vadd.f32 %v4654, %v5120
      %v5215 = vadd.f32 %v4659, %v5125
      %v5216 = vadd.f32 %v4662, %v5128
      %v5217 = vadd.f32 %v4667, %v5133
      %v5218 = vadd.f32 %v4670, %v5136
      %v5219 = vadd.f32 %v4675, %v5141
      %v5220 = vadd.f32 %v4678, %v5144
      %v5221 = vadd.f32 %v4683, %v5149
      %v5222 = vadd.f32 %v4686, %v5152
      %v5223 = vadd.f32 %v4691, %v5157
      %v5224 = vadd.f32 %v4694, %v5160
      %v5225 = vadd.f32 %v4699, %v5165
      %v5226 = vadd.f32 %v4702, %v5168
      %v5227 = vadd.f32 %v4707, %v5173
      %v5228 = vadd.f32 %v4710, %v5176
      %v5229 = vadd.f32 %v4715, %v5181
      %v5230 = vadd.f32 %v4718, %v5184
      %v5231 = vadd.f32 %v4723, %v5189
      %v5232 = vadd.f32 %v4726, %v5192
      %v5233 = vadd.f32 %v4731, %v5197
      %v5234 = vadd.f32 %v4734, %v5200
      %v5235 = vld [vmem:[%s4] sm:$0x1]
      %v5236 = vlaneseq
      %v5237 = vshrl.u32 %v5236, 7
      %v5238 = vsub.s32 0, %v5237
      %v5239 = vrot.slane %v5235, %v5238
      %v5240 = vmul.f32 %v5203, %v5239
      %v5241 = vmul.f32 %v5204, %v5239
      %v5242 = vmul.f32 %v5205, %v5239
      %v5243 = vmul.f32 %v5206, %v5239
      %v5244 = vmul.f32 %v5207, %v5239
      %v5245 = vmul.f32 %v5208, %v5239
      %v5246 = vmul.f32 %v5209, %v5239
      %v5247 = vmul.f32 %v5210, %v5239
      %v5248 = vmul.f32 %v5211, %v5239
      %v5249 = vmul.f32 %v5212, %v5239
      %v5250 = vmul.f32 %v5213, %v5239
      %v5251 = vmul.f32 %v5214, %v5239
      %v5252 = vmul.f32 %v5215, %v5239
      %v5253 = vmul.f32 %v5216, %v5239
      %v5254 = vmul.f32 %v5217, %v5239
      %v5255 = vmul.f32 %v5218, %v5239
      %v5256 = vmul.f32 %v5219, %v5239
      %v5257 = vmul.f32 %v5220, %v5239
      %v5258 = vmul.f32 %v5221, %v5239
      %v5259 = vmul.f32 %v5222, %v5239
      %v5260 = vmul.f32 %v5223, %v5239
      %v5261 = vmul.f32 %v5224, %v5239
      %v5262 = vmul.f32 %v5225, %v5239
      %v5263 = vmul.f32 %v5226, %v5239
      %v5264 = vmul.f32 %v5227, %v5239
      %v5265 = vmul.f32 %v5228, %v5239
      %v5266 = vmul.f32 %v5229, %v5239
      %v5267 = vmul.f32 %v5230, %v5239
      %v5268 = vmul.f32 %v5231, %v5239
      %v5269 = vmul.f32 %v5232, %v5239
      %v5270 = vmul.f32 %v5233, %v5239
      %v5271 = vmul.f32 %v5234, %v5239
      %v5272 = vld [vmem:[%s4 + $0x1] sm:$0x1]
      %v5273 = vlaneseq
      %v5274 = vshrl.u32 %v5273, 7
      %v5275 = vsub.s32 0, %v5274
      %v5276 = vrot.slane %v5272, %v5275
      %v5277 = vadd.f32 %v5240, %v5276
      %v5278 = vadd.f32 %v5241, %v5276
      %v5279 = vadd.f32 %v5242, %v5276
      %v5280 = vadd.f32 %v5243, %v5276
      %v5281 = vadd.f32 %v5244, %v5276
      %v5282 = vadd.f32 %v5245, %v5276
      %v5283 = vadd.f32 %v5246, %v5276
      %v5284 = vadd.f32 %v5247, %v5276
      %v5285 = vadd.f32 %v5248, %v5276
      %v5286 = vadd.f32 %v5249, %v5276
      %v5287 = vadd.f32 %v5250, %v5276
      %v5288 = vadd.f32 %v5251, %v5276
      %v5289 = vadd.f32 %v5252, %v5276
      %v5290 = vadd.f32 %v5253, %v5276
      %v5291 = vadd.f32 %v5254, %v5276
      %v5292 = vadd.f32 %v5255, %v5276
      %v5293 = vadd.f32 %v5256, %v5276
      %v5294 = vadd.f32 %v5257, %v5276
      %v5295 = vadd.f32 %v5258, %v5276
      %v5296 = vadd.f32 %v5259, %v5276
      %v5297 = vadd.f32 %v5260, %v5276
      %v5298 = vadd.f32 %v5261, %v5276
      %v5299 = vadd.f32 %v5262, %v5276
      %v5300 = vadd.f32 %v5263, %v5276
      %v5301 = vadd.f32 %v5264, %v5276
      %v5302 = vadd.f32 %v5265, %v5276
      %v5303 = vadd.f32 %v5266, %v5276
      %v5304 = vadd.f32 %v5267, %v5276
      %v5305 = vadd.f32 %v5268, %v5276
      %v5306 = vadd.f32 %v5269, %v5276
      %v5307 = vadd.f32 %v5270, %v5276
      %v5308 = vadd.f32 %v5271, %v5276
      %v5309 = vmax.f32 %v5277, 0.0
      %v5310 = vmax.f32 %v5278, 0.0
      %v5311 = vmax.f32 %v5279, 0.0
      %v5312 = vmax.f32 %v5280, 0.0
      %v5313 = vmax.f32 %v5281, 0.0
      %v5314 = vmax.f32 %v5282, 0.0
      %v5315 = vmax.f32 %v5283, 0.0
      %v5316 = vmax.f32 %v5284, 0.0
      %v5317 = vmax.f32 %v5285, 0.0
      %v5318 = vmax.f32 %v5286, 0.0
      %v5319 = vmax.f32 %v5287, 0.0
      %v5320 = vmax.f32 %v5288, 0.0
      %v5321 = vmax.f32 %v5289, 0.0
      %v5322 = vmax.f32 %v5290, 0.0
      %v5323 = vmax.f32 %v5291, 0.0
      %v5324 = vmax.f32 %v5292, 0.0
      %v5325 = vmax.f32 %v5293, 0.0
      %v5326 = vmax.f32 %v5294, 0.0
      %v5327 = vmax.f32 %v5295, 0.0
      %v5328 = vmax.f32 %v5296, 0.0
      %v5329 = vmax.f32 %v5297, 0.0
      %v5330 = vmax.f32 %v5298, 0.0
      %v5331 = vmax.f32 %v5299, 0.0
      %v5332 = vmax.f32 %v5300, 0.0
      %v5333 = vmax.f32 %v5301, 0.0
      %v5334 = vmax.f32 %v5302, 0.0
      %v5335 = vmax.f32 %v5303, 0.0
      %v5336 = vmax.f32 %v5304, 0.0
      %v5337 = vmax.f32 %v5305, 0.0
      %v5338 = vmax.f32 %v5306, 0.0
      %v5339 = vmax.f32 %v5307, 0.0
      %v5340 = vmax.f32 %v5308, 0.0
      %v5341 = vld [vmem:[%s5] sm:$0xf]
      %v5342 = vld [vmem:[%s5 + $0x4] sm:$0xf]
      %v5343 = vld [vmem:[%s5 + $0x8] sm:$0xf]
      %v5344 = vld [vmem:[%s5 + $0xc] sm:$0xf]
      %v5345 = vld [vmem:[%s5 + $0x10] sm:$0xf]
      %v5346 = vld [vmem:[%s5 + $0x14] sm:$0xf]
      %v5347 = vld [vmem:[%s5 + $0x18] sm:$0xf]
      %v5348 = vld [vmem:[%s5 + $0x1c] sm:$0xf]
      %v5349 = vld [vmem:[%s5 + $0x20] sm:$0xf]
      %v5350 = vld [vmem:[%s5 + $0x24] sm:$0xf]
      %v5351 = vld [vmem:[%s5 + $0x28] sm:$0xf]
      %v5352 = vld [vmem:[%s5 + $0x2c] sm:$0xf]
      %v5353 = vld [vmem:[%s5 + $0x30] sm:$0xf]
      %v5354 = vld [vmem:[%s5 + $0x34] sm:$0xf]
      %v5355 = vld [vmem:[%s5 + $0x38] sm:$0xf]
      %v5356 = vld [vmem:[%s5 + $0x3c] sm:$0xf]
      %v5357 = vld [vmem:[%s5 + $0x40] sm:$0xf]
      %v5358 = vld [vmem:[%s5 + $0x44] sm:$0xf]
      %v5359 = vld [vmem:[%s5 + $0x48] sm:$0xf]
      %v5360 = vld [vmem:[%s5 + $0x4c] sm:$0xf]
      %v5361 = vld [vmem:[%s5 + $0x50] sm:$0xf]
      %v5362 = vld [vmem:[%s5 + $0x54] sm:$0xf]
      %v5363 = vld [vmem:[%s5 + $0x58] sm:$0xf]
      %v5364 = vld [vmem:[%s5 + $0x5c] sm:$0xf]
      %v5365 = vld [vmem:[%s5 + $0x60] sm:$0xf]
      %v5366 = vld [vmem:[%s5 + $0x64] sm:$0xf]
      %v5367 = vld [vmem:[%s5 + $0x68] sm:$0xf]
      %v5368 = vld [vmem:[%s5 + $0x6c] sm:$0xf]
      %v5369 = vld [vmem:[%s5 + $0x70] sm:$0xf]
      %v5370 = vld [vmem:[%s5 + $0x74] sm:$0xf]
      %v5371 = vld [vmem:[%s5 + $0x78] sm:$0xf]
      %v5372 = vld [vmem:[%s5 + $0x7c] sm:$0xf]
      %v5373 = vld [vmem:[%s5 + $0x80] sm:$0xf]
      %v5374 = vld [vmem:[%s5 + $0x84] sm:$0xf]
      %v5375 = vld [vmem:[%s5 + $0x88] sm:$0xf]
      %v5376 = vld [vmem:[%s5 + $0x8c] sm:$0xf]
      %v5377 = vld [vmem:[%s5 + $0x90] sm:$0xf]
      %v5378 = vld [vmem:[%s5 + $0x94] sm:$0xf]
      %v5379 = vld [vmem:[%s5 + $0x98] sm:$0xf]
      %v5380 = vld [vmem:[%s5 + $0x9c] sm:$0xf]
      %v5381 = vld [vmem:[%s5 + $0xa0] sm:$0xf]
      %v5382 = vld [vmem:[%s5 + $0xa4] sm:$0xf]
      %v5383 = vld [vmem:[%s5 + $0xa8] sm:$0xf]
      %v5384 = vld [vmem:[%s5 + $0xac] sm:$0xf]
      %v5385 = vld [vmem:[%s5 + $0xb0] sm:$0xf]
      %v5386 = vld [vmem:[%s5 + $0xb4] sm:$0xf]
      %v5387 = vld [vmem:[%s5 + $0xb8] sm:$0xf]
      %v5388 = vld [vmem:[%s5 + $0xbc] sm:$0xf]
      %v5389 = vld [vmem:[%s5 + $0xc0] sm:$0xf]
      %v5390 = vld [vmem:[%s5 + $0xc4] sm:$0xf]
      %v5391 = vld [vmem:[%s5 + $0xc8] sm:$0xf]
      %v5392 = vld [vmem:[%s5 + $0xcc] sm:$0xf]
      %v5393 = vld [vmem:[%s5 + $0xd0] sm:$0xf]
      %v5394 = vld [vmem:[%s5 + $0xd4] sm:$0xf]
      %v5395 = vld [vmem:[%s5 + $0xd8] sm:$0xf]
      %v5396 = vld [vmem:[%s5 + $0xdc] sm:$0xf]
      %v5397 = vld [vmem:[%s5 + $0xe0] sm:$0xf]
      %v5398 = vld [vmem:[%s5 + $0xe4] sm:$0xf]
      %v5399 = vld [vmem:[%s5 + $0xe8] sm:$0xf]
      %v5400 = vld [vmem:[%s5 + $0xec] sm:$0xf]
      %v5401 = vld [vmem:[%s5 + $0xf0] sm:$0xf]
      %v5402 = vld [vmem:[%s5 + $0xf4] sm:$0xf]
      %v5403 = vld [vmem:[%s5 + $0xf8] sm:$0xf]
      %v5404 = vld [vmem:[%s5 + $0xfc] sm:$0xf]
      %v5405 = vld [vmem:[%s5 + $0x100] sm:$0xf]
      %v5406 = vld [vmem:[%s5 + $0x104] sm:$0xf]
      %v5407 = vld [vmem:[%s5 + $0x108] sm:$0xf]
      %v5408 = vld [vmem:[%s5 + $0x10c] sm:$0xf]
      %v5409 = vld [vmem:[%s5 + $0x110] sm:$0xf]
      %v5410 = vld [vmem:[%s5 + $0x114] sm:$0xf]
      %v5411 = vld [vmem:[%s5 + $0x118] sm:$0xf]
      %v5412 = vld [vmem:[%s5 + $0x11c] sm:$0xf]
      %v5485 = vunpack.c.l.b16 %v5341
      %v5486 = vunpack.c.l.b16 %v5342
      %v5487 = vunpack.c.l.b16 %v5343
      %v5488 = vunpack.c.l.b16 %v5344
      %v5489 = vunpack.c.l.b16 %v5345
      %v5490 = vunpack.c.l.b16 %v5346
      %v5491 = vunpack.c.l.b16 %v5347
      %v5492 = vunpack.c.l.b16 %v5348
      %v5493 = vunpack.c.l.b16 %v5349
      %v5494 = vunpack.c.l.b16 %v5350
      %v5495 = vunpack.c.l.b16 %v5351
      %v5496 = vunpack.c.l.b16 %v5352
      %v5497 = vunpack.c.l.b16 %v5353
      %v5498 = vunpack.c.l.b16 %v5354
      %v5499 = vunpack.c.l.b16 %v5355
      %v5500 = vunpack.c.l.b16 %v5356
      %v5501 = vunpack.c.l.b16 %v5357
      %v5502 = vunpack.c.l.b16 %v5358
      %v5503 = vunpack.c.l.b16 %v5359
      %v5504 = vunpack.c.l.b16 %v5360
      %v5505 = vunpack.c.l.b16 %v5361
      %v5506 = vunpack.c.l.b16 %v5362
      %v5507 = vunpack.c.l.b16 %v5363
      %v5508 = vunpack.c.l.b16 %v5364
      %v5509 = vunpack.c.l.b16 %v5365
      %v5510 = vunpack.c.l.b16 %v5366
      %v5511 = vunpack.c.l.b16 %v5367
      %v5512 = vunpack.c.l.b16 %v5368
      %v5513 = vunpack.c.l.b16 %v5369
      %v5514 = vunpack.c.l.b16 %v5370
      %v5515 = vunpack.c.l.b16 %v5371
      %v5516 = vunpack.c.l.b16 %v5372
      %v5517 = vunpack.c.l.b16 %v5373
      %v5518 = vunpack.c.l.b16 %v5374
      %v5519 = vunpack.c.l.b16 %v5375
      %v5520 = vunpack.c.l.b16 %v5376
      %v5521 = vunpack.c.l.b16 %v5377
      %v5522 = vunpack.c.l.b16 %v5378
      %v5523 = vunpack.c.l.b16 %v5379
      %v5524 = vunpack.c.l.b16 %v5380
      %v5525 = vunpack.c.l.b16 %v5381
      %v5526 = vunpack.c.l.b16 %v5382
      %v5527 = vunpack.c.l.b16 %v5383
      %v5528 = vunpack.c.l.b16 %v5384
      %v5529 = vunpack.c.l.b16 %v5385
      %v5530 = vunpack.c.l.b16 %v5386
      %v5531 = vunpack.c.l.b16 %v5387
      %v5532 = vunpack.c.l.b16 %v5388
      %v5533 = vunpack.c.l.b16 %v5389
      %v5534 = vunpack.c.l.b16 %v5390
      %v5535 = vunpack.c.l.b16 %v5391
      %v5536 = vunpack.c.l.b16 %v5392
      %v5537 = vunpack.c.l.b16 %v5393
      %v5538 = vunpack.c.l.b16 %v5394
      %v5539 = vunpack.c.l.b16 %v5395
      %v5540 = vunpack.c.l.b16 %v5396
      %v5541 = vunpack.c.l.b16 %v5397
      %v5542 = vunpack.c.l.b16 %v5398
      %v5543 = vunpack.c.l.b16 %v5399
      %v5544 = vunpack.c.l.b16 %v5400
      %v5545 = vunpack.c.l.b16 %v5401
      %v5546 = vunpack.c.l.b16 %v5402
      %v5547 = vunpack.c.l.b16 %v5403
      %v5548 = vunpack.c.l.b16 %v5404
      %v5549 = vunpack.c.l.b16 %v5405
      %v5550 = vunpack.c.l.b16 %v5406
      %v5551 = vunpack.c.l.b16 %v5407
      %v5552 = vunpack.c.l.b16 %v5408
      %v5553 = vunpack.c.l.b16 %v5409
      %v5554 = vunpack.c.l.b16 %v5410
      %v5555 = vunpack.c.l.b16 %v5411
      %v5556 = vunpack.c.l.b16 %v5412
      %v5557 = vpack.c.b16 %v5486, %v5485
      %v5558 = vpack.c.b16 %v5488, %v5487
      %v5559 = vpack.c.b16 %v5490, %v5489
      %v5560 = vpack.c.b16 %v5492, %v5491
      %v5561 = vpack.c.b16 %v5494, %v5493
      %v5562 = vpack.c.b16 %v5496, %v5495
      %v5563 = vpack.c.b16 %v5498, %v5497
      %v5564 = vpack.c.b16 %v5500, %v5499
      %v5565 = vpack.c.b16 %v5502, %v5501
      %v5566 = vpack.c.b16 %v5504, %v5503
      %v5567 = vpack.c.b16 %v5506, %v5505
      %v5568 = vpack.c.b16 %v5508, %v5507
      %v5569 = vpack.c.b16 %v5510, %v5509
      %v5570 = vpack.c.b16 %v5512, %v5511
      %v5571 = vpack.c.b16 %v5514, %v5513
      %v5572 = vpack.c.b16 %v5516, %v5515
      %v5573 = vpack.c.b16 %v5518, %v5517
      %v5574 = vpack.c.b16 %v5520, %v5519
      %v5575 = vpack.c.b16 %v5522, %v5521
      %v5576 = vpack.c.b16 %v5524, %v5523
      %v5577 = vpack.c.b16 %v5526, %v5525
      %v5578 = vpack.c.b16 %v5528, %v5527
      %v5579 = vpack.c.b16 %v5530, %v5529
      %v5580 = vpack.c.b16 %v5532, %v5531
      %v5581 = vpack.c.b16 %v5534, %v5533
      %v5582 = vpack.c.b16 %v5536, %v5535
      %v5583 = vpack.c.b16 %v5538, %v5537
      %v5584 = vpack.c.b16 %v5540, %v5539
      %v5585 = vpack.c.b16 %v5542, %v5541
      %v5586 = vpack.c.b16 %v5544, %v5543
      %v5587 = vpack.c.b16 %v5546, %v5545
      %v5588 = vpack.c.b16 %v5548, %v5547
      %v5589 = vpack.c.b16 %v5550, %v5549
      %v5590 = vpack.c.b16 %v5552, %v5551
      %v5591 = vpack.c.b16 %v5554, %v5553
      %v5592 = vpack.c.b16 %v5556, %v5555
      %vm5629 = vcmask 523264
      %5630 = vst.msk [vmem:[%s3610 + $0x1] sm:$0xff] %vm5629, %v5309
      %5631 = vst.msk [vmem:[%s3610 + $0x9] sm:$0xff] %vm5629, %v5310
      %5632 = vst.msk [vmem:[%s3610 + $0x19] sm:$0xff] %vm5629, %v5311
      %5633 = vst.msk [vmem:[%s3610 + $0x21] sm:$0xff] %vm5629, %v5312
      %5634 = vst.msk [vmem:[%s3610 + $0x31] sm:$0xff] %vm5629, %v5313
      %5635 = vst.msk [vmem:[%s3610 + $0x39] sm:$0xff] %vm5629, %v5314
      %5636 = vst.msk [vmem:[%s3610 + $0x49] sm:$0xff] %vm5629, %v5315
      %5637 = vst.msk [vmem:[%s3610 + $0x51] sm:$0xff] %vm5629, %v5316
      %5638 = vst.msk [vmem:[%s3610 + $0x61] sm:$0xff] %vm5629, %v5317
      %5639 = vst.msk [vmem:[%s3610 + $0x69] sm:$0xff] %vm5629, %v5318
      %5640 = vst.msk [vmem:[%s3610 + $0x79] sm:$0xff] %vm5629, %v5319
      %5641 = vst.msk [vmem:[%s3610 + $0x81] sm:$0xff] %vm5629, %v5320
      %5642 = vst.msk [vmem:[%s3610 + $0x91] sm:$0xff] %vm5629, %v5321
      %5643 = vst.msk [vmem:[%s3610 + $0x99] sm:$0xff] %vm5629, %v5322
      %5644 = vst.msk [vmem:[%s3610 + $0xa9] sm:$0xff] %vm5629, %v5323
      %5645 = vst.msk [vmem:[%s3610 + $0xb1] sm:$0xff] %vm5629, %v5324
      %5646 = vst.msk [vmem:[%s3610 + $0xc1] sm:$0xff] %vm5629, %v5325
      %5647 = vst.msk [vmem:[%s3610 + $0xc9] sm:$0xff] %vm5629, %v5326
      %5648 = vst.msk [vmem:[%s3610 + $0xd9] sm:$0xff] %vm5629, %v5327
      %5649 = vst.msk [vmem:[%s3610 + $0xe1] sm:$0xff] %vm5629, %v5328
      %5650 = vst.msk [vmem:[%s3610 + $0xf1] sm:$0xff] %vm5629, %v5329
      %5651 = vst.msk [vmem:[%s3610 + $0xf9] sm:$0xff] %vm5629, %v5330
      %5652 = vst.msk [vmem:[%s3610 + $0x109] sm:$0xff] %vm5629, %v5331
      %5653 = vst.msk [vmem:[%s3610 + $0x111] sm:$0xff] %vm5629, %v5332
      %5654 = vst.msk [vmem:[%s3610 + $0x121] sm:$0xff] %vm5629, %v5333
      %5655 = vst.msk [vmem:[%s3610 + $0x129] sm:$0xff] %vm5629, %v5334
      %5656 = vst.msk [vmem:[%s3610 + $0x139] sm:$0xff] %vm5629, %v5335
      %5657 = vst.msk [vmem:[%s3610 + $0x141] sm:$0xff] %vm5629, %v5336
      %5658 = vst.msk [vmem:[%s3610 + $0x151] sm:$0xff] %vm5629, %v5337
      %5659 = vst.msk [vmem:[%s3610 + $0x159] sm:$0xff] %vm5629, %v5338
      %5660 = vst.msk [vmem:[%s3610 + $0x169] sm:$0xff] %vm5629, %v5339
      %5661 = vst.msk [vmem:[%s3610 + $0x171] sm:$0xff] %vm5629, %v5340
      %v5662 = vld [vmem:[#allocation3] sm:$0xff]
      %v5663 = vld [vmem:[#allocation3 + $0x8] sm:$0xff]
      %v5664 = vld [vmem:[#allocation3 + $0x18] sm:$0xff]
      %v5665 = vld [vmem:[#allocation3 + $0x20] sm:$0xff]
      %v5666 = vld [vmem:[#allocation3 + $0x30] sm:$0xff]
      %v5667 = vld [vmem:[#allocation3 + $0x38] sm:$0xff]
      %v5668 = vld [vmem:[#allocation3 + $0x48] sm:$0xff]
      %v5669 = vld [vmem:[#allocation3 + $0x50] sm:$0xff]
      %v5670 = vld [vmem:[#allocation3 + $0x60] sm:$0xff]
      %v5671 = vld [vmem:[#allocation3 + $0x68] sm:$0xff]
      %v5672 = vld [vmem:[#allocation3 + $0x78] sm:$0xff]
      %v5673 = vld [vmem:[#allocation3 + $0x80] sm:$0xff]
      %v5674 = vld [vmem:[#allocation3 + $0x90] sm:$0xff]
      %v5675 = vld [vmem:[#allocation3 + $0x98] sm:$0xff]
      %v5676 = vld [vmem:[#allocation3 + $0xa8] sm:$0xff]
      %v5677 = vld [vmem:[#allocation3 + $0xb0] sm:$0xff]
      %v5678 = vld [vmem:[#allocation3 + $0xc0] sm:$0xff]
      %v5679 = vld [vmem:[#allocation3 + $0xc8] sm:$0xff]
      %v5680 = vld [vmem:[#allocation3 + $0xd8] sm:$0xff]
      %v5681 = vld [vmem:[#allocation3 + $0xe0] sm:$0xff]
      %v5682 = vld [vmem:[#allocation3 + $0xf0] sm:$0xff]
      %v5683 = vld [vmem:[#allocation3 + $0xf8] sm:$0xff]
      %v5684 = vld [vmem:[#allocation3 + $0x108] sm:$0xff]
      %v5685 = vld [vmem:[#allocation3 + $0x110] sm:$0xff]
      %v5686 = vld [vmem:[#allocation3 + $0x120] sm:$0xff]
      %v5687 = vld [vmem:[#allocation3 + $0x128] sm:$0xff]
      %v5688 = vld [vmem:[#allocation3 + $0x138] sm:$0xff]
      %v5689 = vld [vmem:[#allocation3 + $0x140] sm:$0xff]
      %v5690 = vld [vmem:[#allocation3 + $0x150] sm:$0xff]
      %v5691 = vld [vmem:[#allocation3 + $0x158] sm:$0xff]
      %v5692 = vld [vmem:[#allocation3 + $0x168] sm:$0xff]
      %v5693 = vld [vmem:[#allocation3 + $0x170] sm:$0xff]
      %v5694 = vld [vmem:[#allocation3 + $0x180] sm:$0xff]
      %v5695 = vld [vmem:[#allocation3 + $0x188] sm:$0xff]
      %v5696 = vld [vmem:[#allocation3 + $0x198] sm:$0xff]
      %v5697 = vld [vmem:[#allocation3 + $0x1a0] sm:$0xff]
      %v5698 = vld [vmem:[#allocation3 + $0x1] sm:$0xff]
      %v5699 = vld [vmem:[#allocation3 + $0x9] sm:$0xff]
      %v5700 = vld [vmem:[#allocation3 + $0x19] sm:$0xff]
      %v5701 = vld [vmem:[#allocation3 + $0x21] sm:$0xff]
      %v5702 = vld [vmem:[#allocation3 + $0x31] sm:$0xff]
      %v5703 = vld [vmem:[#allocation3 + $0x39] sm:$0xff]
      %v5704 = vld [vmem:[#allocation3 + $0x49] sm:$0xff]
      %v5705 = vld [vmem:[#allocation3 + $0x51] sm:$0xff]
      %v5706 = vld [vmem:[#allocation3 + $0x61] sm:$0xff]
      %v5707 = vld [vmem:[#allocation3 + $0x69] sm:$0xff]
      %v5708 = vld [vmem:[#allocation3 + $0x79] sm:$0xff]
      %v5709 = vld [vmem:[#allocation3 + $0x81] sm:$0xff]
      %v5710 = vld [vmem:[#allocation3 + $0x91] sm:$0xff]
      %v5711 = vld [vmem:[#allocation3 + $0x99] sm:$0xff]
      %v5712 = vld [vmem:[#allocation3 + $0xa9] sm:$0xff]
      %v5713 = vld [vmem:[#allocation3 + $0xb1] sm:$0xff]
      %v5714 = vld [vmem:[#allocation3 + $0xc1] sm:$0xff]
      %v5715 = vld [vmem:[#allocation3 + $0xc9] sm:$0xff]
      %v5716 = vld [vmem:[#allocation3 + $0xd9] sm:$0xff]
      %v5717 = vld [vmem:[#allocation3 + $0xe1] sm:$0xff]
      %v5718 = vld [vmem:[#allocation3 + $0xf1] sm:$0xff]
      %v5719 = vld [vmem:[#allocation3 + $0xf9] sm:$0xff]
      %v5720 = vld [vmem:[#allocation3 + $0x109] sm:$0xff]
      %v5721 = vld [vmem:[#allocation3 + $0x111] sm:$0xff]
      %v5722 = vld [vmem:[#allocation3 + $0x121] sm:$0xff]
      %v5723 = vld [vmem:[#allocation3 + $0x129] sm:$0xff]
      %v5724 = vld [vmem:[#allocation3 + $0x139] sm:$0xff]
      %v5725 = vld [vmem:[#allocation3 + $0x141] sm:$0xff]
      %v5726 = vld [vmem:[#allocation3 + $0x151] sm:$0xff]
      %v5727 = vld [vmem:[#allocation3 + $0x159] sm:$0xff]
      %v5728 = vld [vmem:[#allocation3 + $0x169] sm:$0xff]
      %v5729 = vld [vmem:[#allocation3 + $0x171] sm:$0xff]
      %v5730 = vld [vmem:[#allocation3 + $0x181] sm:$0xff]
      %v5731 = vld [vmem:[#allocation3 + $0x189] sm:$0xff]
      %v5732 = vld [vmem:[#allocation3 + $0x199] sm:$0xff]
      %v5733 = vld [vmem:[#allocation3 + $0x1a1] sm:$0xff]
      %v5734 = vld [vmem:[#allocation3 + $0x2] sm:$0xff]
      %v5735 = vld [vmem:[#allocation3 + $0xa] sm:$0xff]
      %v5736 = vld [vmem:[#allocation3 + $0x1a] sm:$0xff]
      %v5737 = vld [vmem:[#allocation3 + $0x22] sm:$0xff]
      %v5738 = vld [vmem:[#allocation3 + $0x32] sm:$0xff]
      %v5739 = vld [vmem:[#allocation3 + $0x3a] sm:$0xff]
      %v5740 = vld [vmem:[#allocation3 + $0x4a] sm:$0xff]
      %v5741 = vld [vmem:[#allocation3 + $0x52] sm:$0xff]
      %v5742 = vld [vmem:[#allocation3 + $0x62] sm:$0xff]
      %v5743 = vld [vmem:[#allocation3 + $0x6a] sm:$0xff]
      %v5744 = vld [vmem:[#allocation3 + $0x7a] sm:$0xff]
      %v5745 = vld [vmem:[#allocation3 + $0x82] sm:$0xff]
      %v5746 = vld [vmem:[#allocation3 + $0x92] sm:$0xff]
      %v5747 = vld [vmem:[#allocation3 + $0x9a] sm:$0xff]
      %v5748 = vld [vmem:[#allocation3 + $0xaa] sm:$0xff]
      %v5749 = vld [vmem:[#allocation3 + $0xb2] sm:$0xff]
      %v5750 = vld [vmem:[#allocation3 + $0xc2] sm:$0xff]
      %v5751 = vld [vmem:[#allocation3 + $0xca] sm:$0xff]
      %v5752 = vld [vmem:[#allocation3 + $0xda] sm:$0xff]
      %v5753 = vld [vmem:[#allocation3 + $0xe2] sm:$0xff]
      %v5754 = vld [vmem:[#allocation3 + $0xf2] sm:$0xff]
      %v5755 = vld [vmem:[#allocation3 + $0xfa] sm:$0xff]
      %v5756 = vld [vmem:[#allocation3 + $0x10a] sm:$0xff]
      %v5757 = vld [vmem:[#allocation3 + $0x112] sm:$0xff]
      %v5758 = vld [vmem:[#allocation3 + $0x122] sm:$0xff]
      %v5759 = vld [vmem:[#allocation3 + $0x12a] sm:$0xff]
      %v5760 = vld [vmem:[#allocation3 + $0x13a] sm:$0xff]
      %v5761 = vld [vmem:[#allocation3 + $0x142] sm:$0xff]
      %v5762 = vld [vmem:[#allocation3 + $0x152] sm:$0xff]
      %v5763 = vld [vmem:[#allocation3 + $0x15a] sm:$0xff]
      %v5764 = vld [vmem:[#allocation3 + $0x16a] sm:$0xff]
      %v5765 = vld [vmem:[#allocation3 + $0x172] sm:$0xff]
      %v5766 = vld [vmem:[#allocation3 + $0x182] sm:$0xff]
      %v5767 = vld [vmem:[#allocation3 + $0x18a] sm:$0xff]
      %v5768 = vld [vmem:[#allocation3 + $0x19a] sm:$0xff]
      %v5769 = vld [vmem:[#allocation3 + $0x1a2] sm:$0xff]
      %v5770 = vpack.c.bf16 %v5663, %v5662
      %v5771 = vpack.c.bf16 %v5699, %v5698
      %v5772 = vpack.c.bf16 %v5735, %v5734
      %v5773 = vpack.c.bf16 %v5665, %v5664
      %v5774 = vpack.c.bf16 %v5701, %v5700
      %v5775 = vpack.c.bf16 %v5737, %v5736
      %v5776 = vpack.c.bf16 %v5667, %v5666
      %v5777 = vpack.c.bf16 %v5703, %v5702
      %v5778 = vpack.c.bf16 %v5739, %v5738
      %v5779 = vpack.c.bf16 %v5669, %v5668
      %v5780 = vpack.c.bf16 %v5705, %v5704
      %v5781 = vpack.c.bf16 %v5741, %v5740
      %v5782 = vpack.c.bf16 %v5671, %v5670
      %v5783 = vpack.c.bf16 %v5707, %v5706
      %v5784 = vpack.c.bf16 %v5743, %v5742
      %v5785 = vpack.c.bf16 %v5673, %v5672
      %v5786 = vpack.c.bf16 %v5709, %v5708
      %v5787 = vpack.c.bf16 %v5745, %v5744
      %v5788 = vpack.c.bf16 %v5675, %v5674
      %v5789 = vpack.c.bf16 %v5711, %v5710
      %v5790 = vpack.c.bf16 %v5747, %v5746
      %v5791 = vpack.c.bf16 %v5677, %v5676
      %v5792 = vpack.c.bf16 %v5713, %v5712
      %v5793 = vpack.c.bf16 %v5749, %v5748
      %v5794 = vpack.c.bf16 %v5679, %v5678
      %v5795 = vpack.c.bf16 %v5715, %v5714
      %v5796 = vpack.c.bf16 %v5751, %v5750
      %v5797 = vpack.c.bf16 %v5681, %v5680
      %v5798 = vpack.c.bf16 %v5717, %v5716
      %v5799 = vpack.c.bf16 %v5753, %v5752
      %v5800 = vpack.c.bf16 %v5683, %v5682
      %v5801 = vpack.c.bf16 %v5719, %v5718
      %v5802 = vpack.c.bf16 %v5755, %v5754
      %v5803 = vpack.c.bf16 %v5685, %v5684
      %v5804 = vpack.c.bf16 %v5721, %v5720
      %v5805 = vpack.c.bf16 %v5757, %v5756
      %v5806 = vpack.c.bf16 %v5687, %v5686
      %v5807 = vpack.c.bf16 %v5723, %v5722
      %v5808 = vpack.c.bf16 %v5759, %v5758
      %v5809 = vpack.c.bf16 %v5689, %v5688
      %v5810 = vpack.c.bf16 %v5725, %v5724
      %v5811 = vpack.c.bf16 %v5761, %v5760
      %v5812 = vpack.c.bf16 %v5691, %v5690
      %v5813 = vpack.c.bf16 %v5727, %v5726
      %v5814 = vpack.c.bf16 %v5763, %v5762
      %v5815 = vpack.c.bf16 %v5693, %v5692
      %v5816 = vpack.c.bf16 %v5729, %v5728
      %v5817 = vpack.c.bf16 %v5765, %v5764
      %v5818 = vpack.c.bf16 %v5695, %v5694
      %v5819 = vpack.c.bf16 %v5731, %v5730
      %v5820 = vpack.c.bf16 %v5767, %v5766
      %v5821 = vpack.c.bf16 %v5697, %v5696
      %v5822 = vpack.c.bf16 %v5733, %v5732
      %v5823 = vpack.c.bf16 %v5769, %v5768
      %5824 = vmatprep.subr.bf16.mxu0 0
      %5825 = vmatpush1.bf16.msra.mxu0 %v5569
      %5826 = vmatprep.subr.bf16.mxu0 0
      %5827 = vmatpush1.bf16.msra.mxu0 %v5570
      %5828 = vmatprep.subr.bf16.mxu0 0
      %5829 = vmatpush1.bf16.msra.mxu0 %v5571
      %5830 = vmatprep.subr.bf16.mxu0 0
      %5831 = vmatpush1.bf16.msra.mxu0 %v5572
      %5832 = vmatprep.subr.bf16.mxu0 0
      %5833 = vmatpush1.bf16.msra.mxu0 0
      %5834 = vmatprep.subr.bf16.mxu0 0
      %5835 = vmatpush1.bf16.msra.mxu0 0
      %5836 = vmatprep.subr.bf16.mxu0 0
      %5837 = vmatpush1.bf16.msra.mxu0 0
      %5838 = vmatprep.subr.bf16.mxu0 0
      %5839 = vmatpush1.bf16.msra.mxu0 0
      %5840 = vmatprep.subr.bf16.mxu0 0
      %5841 = vmatpush1.bf16.msra.mxu0 %v5573
      %5842 = vmatprep.subr.bf16.mxu0 0
      %5843 = vmatpush1.bf16.msra.mxu0 %v5574
      %5844 = vmatprep.subr.bf16.mxu0 0
      %5845 = vmatpush1.bf16.msra.mxu0 %v5575
      %5846 = vmatprep.subr.bf16.mxu0 0
      %5847 = vmatpush1.bf16.msra.mxu0 %v5576
      %5848 = vmatprep.subr.bf16.mxu0 0
      %5849 = vmatpush1.bf16.msra.mxu0 0
      %5850 = vmatprep.subr.bf16.mxu0 0
      %5851 = vmatpush1.bf16.msra.mxu0 0
      %5852 = vmatprep.subr.bf16.mxu0 0
      %5853 = vmatpush1.bf16.msra.mxu0 0
      %5854 = vmatprep.subr.bf16.mxu0 0
      %5855 = vmatpush1.bf16.msra.mxu0 0
      %5856 = vmatprep.mubr.bf16.mxu0 %v5774
      %5857 = vmatmul.mubr.bf16.gmra.mrb[0].mxu0 %v5773
      %v5858 = vpop.f32.mrb[0].mxu0
      %v5859 = vadd.f32 0.0, %v5858
      %v5860 = vpop.f32.mrb[0].mxu0
      %v5861 = vpop.f32.mrb[0].mxu0
      %v5862 = vadd.f32 0.0, %v5861
      %v5863 = vpop.f32.mrb[0].mxu0
      %5864 = vmatprep.mubr.bf16.mxu0 %v5777
      %5865 = vmatmul.mubr.bf16.gmra.mrb[0].mxu0 %v5776
      %v5866 = vpop.f32.mrb[0].mxu0
      %v5867 = vadd.f32 0.0, %v5866
      %v5868 = vpop.f32.mrb[0].mxu0
      %v5869 = vpop.f32.mrb[0].mxu0
      %v5870 = vadd.f32 0.0, %v5869
      %v5871 = vpop.f32.mrb[0].mxu0
      %5872 = vmatprep.mubr.bf16.mxu0 %v5780
      %5873 = vmatmul.mubr.bf16.gmra.mrb[0].mxu0 %v5779
      %v5874 = vpop.f32.mrb[0].mxu0
      %v5875 = vadd.f32 0.0, %v5874
      %v5876 = vpop.f32.mrb[0].mxu0
      %v5877 = vpop.f32.mrb[0].mxu0
      %v5878 = vadd.f32 0.0, %v5877
      %v5879 = vpop.f32.mrb[0].mxu0
      %5880 = vmatprep.mubr.bf16.mxu0 %v5783
      %5881 = vmatmul.mubr.bf16.gmra.mrb[0].mxu0 %v5782
      %v5882 = vpop.f32.mrb[0].mxu0
      %v5883 = vadd.f32 0.0, %v5882
      %v5884 = vpop.f32.mrb[0].mxu0
      %v5885 = vpop.f32.mrb[0].mxu0
      %v5886 = vadd.f32 0.0, %v5885
      %v5887 = vpop.f32.mrb[0].mxu0
      %5888 = vmatprep.mubr.bf16.mxu0 %v5786
      %5889 = vmatmul.mubr.bf16.gmra.mrb[0].mxu0 %v5785
      %v5890 = vpop.f32.mrb[0].mxu0
      %v5891 = vadd.f32 0.0, %v5890
      %v5892 = vpop.f32.mrb[0].mxu0
      %v5893 = vpop.f32.mrb[0].mxu0
      %v5894 = vadd.f32 0.0, %v5893
      %v5895 = vpop.f32.mrb[0].mxu0
      %5896 = vmatprep.mubr.bf16.mxu0 %v5789
      %5897 = vmatmul.mubr.bf16.gmra.mrb[0].mxu0 %v5788
      %v5898 = vpop.f32.mrb[0].mxu0
      %v5899 = vadd.f32 0.0, %v5898
      %v5900 = vpop.f32.mrb[0].mxu0
      %v5901 = vpop.f32.mrb[0].mxu0
      %v5902 = vadd.f32 0.0, %v5901
      %v5903 = vpop.f32.mrb[0].mxu0
      %5904 = vmatprep.mubr.bf16.mxu0 %v5792
      %5905 = vmatmul.mubr.bf16.gmra.mrb[0].mxu0 %v5791
      %v5906 = vpop.f32.mrb[0].mxu0
      %v5907 = vadd.f32 0.0, %v5906
      %v5908 = vpop.f32.mrb[0].mxu0
      %v5909 = vpop.f32.mrb[0].mxu0
      %v5910 = vadd.f32 0.0, %v5909
      %v5911 = vpop.f32.mrb[0].mxu0
      %5912 = vmatprep.mubr.bf16.mxu0 %v5795
      %5913 = vmatmul.mubr.bf16.gmra.mrb[0].mxu0 %v5794
      %v5914 = vpop.f32.mrb[0].mxu0
      %v5915 = vadd.f32 0.0, %v5914
      %v5916 = vpop.f32.mrb[0].mxu0
      %v5917 = vpop.f32.mrb[0].mxu0
      %v5918 = vadd.f32 0.0, %v5917
      %v5919 = vpop.f32.mrb[0].mxu0
      %5920 = vmatprep.mubr.bf16.mxu0 %v5798
      %5921 = vmatmul.mubr.bf16.gmra.mrb[0].mxu0 %v5797
      %v5922 = vpop.f32.mrb[0].mxu0
      %v5923 = vadd.f32 0.0, %v5922
      %v5924 = vpop.f32.mrb[0].mxu0
      %v5925 = vpop.f32.mrb[0].mxu0
      %v5926 = vadd.f32 0.0, %v5925
      %v5927 = vpop.f32.mrb[0].mxu0
      %5928 = vmatprep.mubr.bf16.mxu0 %v5801
      %5929 = vmatmul.mubr.bf16.gmra.mrb[0].mxu0 %v5800
      %v5930 = vpop.f32.mrb[0].mxu0
      %v5931 = vadd.f32 0.0, %v5930
      %v5932 = vpop.f32.mrb[0].mxu0
      %v5933 = vpop.f32.mrb[0].mxu0
      %v5934 = vadd.f32 0.0, %v5933
      %v5935 = vpop.f32.mrb[0].mxu0
      %5936 = vmatprep.mubr.bf16.mxu0 %v5804
      %5937 = vmatmul.mubr.bf16.gmra.mrb[0].mxu0 %v5803
      %v5938 = vpop.f32.mrb[0].mxu0
      %v5939 = vadd.f32 0.0, %v5938
      %v5940 = vpop.f32.mrb[0].mxu0
      %v5941 = vpop.f32.mrb[0].mxu0
      %v5942 = vadd.f32 0.0, %v5941
      %v5943 = vpop.f32.mrb[0].mxu0
      %5944 = vmatprep.mubr.bf16.mxu0 %v5807
      %5945 = vmatmul.mubr.bf16.gmra.mrb[0].mxu0 %v5806
      %v5946 = vpop.f32.mrb[0].mxu0
      %v5947 = vadd.f32 0.0, %v5946
      %v5948 = vpop.f32.mrb[0].mxu0
      %v5949 = vpop.f32.mrb[0].mxu0
      %v5950 = vadd.f32 0.0, %v5949
      %v5951 = vpop.f32.mrb[0].mxu0
      %5952 = vmatprep.mubr.bf16.mxu0 %v5810
      %5953 = vmatmul.mubr.bf16.gmra.mrb[0].mxu0 %v5809
      %v5954 = vpop.f32.mrb[0].mxu0
      %v5955 = vadd.f32 0.0, %v5954
      %v5956 = vpop.f32.mrb[0].mxu0
      %v5957 = vpop.f32.mrb[0].mxu0
      %v5958 = vadd.f32 0.0, %v5957
      %v5959 = vpop.f32.mrb[0].mxu0
      %5960 = vmatprep.mubr.bf16.mxu0 %v5813
      %5961 = vmatmul.mubr.bf16.gmra.mrb[0].mxu0 %v5812
      %v5962 = vpop.f32.mrb[0].mxu0
      %v5963 = vadd.f32 0.0, %v5962
      %v5964 = vpop.f32.mrb[0].mxu0
      %v5965 = vpop.f32.mrb[0].mxu0
      %v5966 = vadd.f32 0.0, %v5965
      %v5967 = vpop.f32.mrb[0].mxu0
      %5968 = vmatprep.mubr.bf16.mxu0 %v5816
      %5969 = vmatmul.mubr.bf16.gmra.mrb[0].mxu0 %v5815
      %v5970 = vpop.f32.mrb[0].mxu0
      %v5971 = vadd.f32 0.0, %v5970
      %v5972 = vpop.f32.mrb[0].mxu0
      %v5973 = vpop.f32.mrb[0].mxu0
      %v5974 = vadd.f32 0.0, %v5973
      %v5975 = vpop.f32.mrb[0].mxu0
      %5976 = vmatprep.mubr.bf16.mxu0 %v5819
      %5977 = vmatmul.mubr.bf16.gmra.mrb[0].mxu0 %v5818
      %v5978 = vpop.f32.mrb[0].mxu0
      %v5979 = vadd.f32 0.0, %v5978
      %v5980 = vpop.f32.mrb[0].mxu0
      %v5981 = vpop.f32.mrb[0].mxu0
      %v5982 = vadd.f32 0.0, %v5981
      %v5983 = vpop.f32.mrb[0].mxu0
      %5984 = vdwg.mxu0
      %5985 = vmatprep.subr.bf16.mxu0 0
      %5986 = vmatpush1.bf16.msra.mxu0 %v5577
      %5987 = vmatprep.subr.bf16.mxu0 0
      %5988 = vmatpush1.bf16.msra.mxu0 %v5578
      %5989 = vmatprep.subr.bf16.mxu0 0
      %5990 = vmatpush1.bf16.msra.mxu0 %v5579
      %5991 = vmatprep.subr.bf16.mxu0 0
      %5992 = vmatpush1.bf16.msra.mxu0 %v5580
      %5993 = vmatprep.subr.bf16.mxu0 0
      %5994 = vmatpush1.bf16.msra.mxu0 0
      %5995 = vmatprep.subr.bf16.mxu0 0
      %5996 = vmatpush1.bf16.msra.mxu0 0
      %5997 = vmatprep.subr.bf16.mxu0 0
      %5998 = vmatpush1.bf16.msra.mxu0 0
      %5999 = vmatprep.subr.bf16.mxu0 0
      %6000 = vmatpush1.bf16.msra.mxu0 0
      %6001 = vmatprep.subr.bf16.mxu0 0
      %6002 = vmatpush1.bf16.msra.mxu0 0
      %6003 = vmatprep.subr.bf16.mxu0 0
      %6004 = vmatpush1.bf16.msra.mxu0 0
      %6005 = vmatprep.subr.bf16.mxu0 0
      %6006 = vmatpush1.bf16.msra.mxu0 0
      %6007 = vmatprep.subr.bf16.mxu0 0
      %6008 = vmatpush1.bf16.msra.mxu0 0
      %6009 = vmatprep.subr.bf16.mxu0 0
      %6010 = vmatpush1.bf16.msra.mxu0 0
      %6011 = vmatprep.subr.bf16.mxu0 0
      %6012 = vmatpush1.bf16.msra.mxu0 0
      %6013 = vmatprep.subr.bf16.mxu0 0
      %6014 = vmatpush1.bf16.msra.mxu0 0
      %6015 = vmatprep.subr.bf16.mxu0 0
      %6016 = vmatpush1.bf16.msra.mxu0 0
      %6017 = vmatprep.mubr.bf16.mxu0 0
      %6018 = vmatmul.mubr.bf16.gmra.mrb[0].mxu0 %v5775
      %v6019 = vpop.f32.mrb[0].mxu0
      %v6020 = vadd.f32 %v5859, %v6019
      %v6021 = vpop.f32.mrb[0].mxu0
      %v6022 = vpop.f32.mrb[0].mxu0
      %v6023 = vadd.f32 %v5862, %v6022
      %v6024 = vpop.f32.mrb[0].mxu0
      %6025 = vmatprep.mubr.bf16.mxu0 0
      %6026 = vmatmul.mubr.bf16.gmra.mrb[0].mxu0 %v5778
      %v6027 = vpop.f32.mrb[0].mxu0
      %v6028 = vadd.f32 %v5867, %v6027
      %v6029 = vpop.f32.mrb[0].mxu0
      %v6030 = vpop.f32.mrb[0].mxu0
      %v6031 = vadd.f32 %v5870, %v6030
      %v6032 = vpop.f32.mrb[0].mxu0
      %6033 = vmatprep.mubr.bf16.mxu0 0
      %6034 = vmatmul.mubr.bf16.gmra.mrb[0].mxu0 %v5781
      %v6035 = vpop.f32.mrb[0].mxu0
      %v6036 = vadd.f32 %v5875, %v6035
      %v6037 = vpop.f32.mrb[0].mxu0
      %v6038 = vpop.f32.mrb[0].mxu0
      %v6039 = vadd.f32 %v5878, %v6038
      %v6040 = vpop.f32.mrb[0].mxu0
      %6041 = vmatprep.mubr.bf16.mxu0 0
      %6042 = vmatmul.mubr.bf16.gmra.mrb[0].mxu0 %v5784
      %v6043 = vpop.f32.mrb[0].mxu0
      %v6044 = vadd.f32 %v5883, %v6043
      %v6045 = vpop.f32.mrb[0].mxu0
      %v6046 = vpop.f32.mrb[0].mxu0
      %v6047 = vadd.f32 %v5886, %v6046
      %v6048 = vpop.f32.mrb[0].mxu0
      %6049 = vmatprep.mubr.bf16.mxu0 0
      %6050 = vmatmul.mubr.bf16.gmra.mrb[0].mxu0 %v5787
      %v6051 = vpop.f32.mrb[0].mxu0
      %v6052 = vadd.f32 %v5891, %v6051
      %v6053 = vpop.f32.mrb[0].mxu0
      %v6054 = vpop.f32.mrb[0].mxu0
      %v6055 = vadd.f32 %v5894, %v6054
      %v6056 = vpop.f32.mrb[0].mxu0
      %6057 = vmatprep.mubr.bf16.mxu0 0
      %6058 = vmatmul.mubr.bf16.gmra.mrb[0].mxu0 %v5790
      %v6059 = vpop.f32.mrb[0].mxu0
      %v6060 = vadd.f32 %v5899, %v6059
      %v6061 = vpop.f32.mrb[0].mxu0
      %v6062 = vpop.f32.mrb[0].mxu0
      %v6063 = vadd.f32 %v5902, %v6062
      %v6064 = vpop.f32.mrb[0].mxu0
      %6065 = vmatprep.mubr.bf16.mxu0 0
      %6066 = vmatmul.mubr.bf16.gmra.mrb[0].mxu0 %v5793
      %v6067 = vpop.f32.mrb[0].mxu0
      %v6068 = vadd.f32 %v5907, %v6067
      %v6069 = vpop.f32.mrb[0].mxu0
      %v6070 = vpop.f32.mrb[0].mxu0
      %v6071 = vadd.f32 %v5910, %v6070
      %v6072 = vpop.f32.mrb[0].mxu0
      %6073 = vmatprep.mubr.bf16.mxu0 0
      %6074 = vmatmul.mubr.bf16.gmra.mrb[0].mxu0 %v5796
      %v6075 = vpop.f32.mrb[0].mxu0
      %v6076 = vadd.f32 %v5915, %v6075
      %v6077 = vpop.f32.mrb[0].mxu0
      %v6078 = vpop.f32.mrb[0].mxu0
      %v6079 = vadd.f32 %v5918, %v6078
      %v6080 = vpop.f32.mrb[0].mxu0
      %6081 = vmatprep.mubr.bf16.mxu0 0
      %6082 = vmatmul.mubr.bf16.gmra.mrb[0].mxu0 %v5799
      %v6083 = vpop.f32.mrb[0].mxu0
      %v6084 = vadd.f32 %v5923, %v6083
      %v6085 = vpop.f32.mrb[0].mxu0
      %v6086 = vpop.f32.mrb[0].mxu0
      %v6087 = vadd.f32 %v5926, %v6086
      %v6088 = vpop.f32.mrb[0].mxu0
      %6089 = vmatprep.mubr.bf16.mxu0 0
      %6090 = vmatmul.mubr.bf16.gmra.mrb[0].mxu0 %v5802
      %v6091 = vpop.f32.mrb[0].mxu0
      %v6092 = vadd.f32 %v5931, %v6091
      %v6093 = vpop.f32.mrb[0].mxu0
      %v6094 = vpop.f32.mrb[0].mxu0
      %v6095 = vadd.f32 %v5934, %v6094
      %v6096 = vpop.f32.mrb[0].mxu0
      %6097 = vmatprep.mubr.bf16.mxu0 0
      %6098 = vmatmul.mubr.bf16.gmra.mrb[0].mxu0 %v5805
      %v6099 = vpop.f32.mrb[0].mxu0
      %v6100 = vadd.f32 %v5939, %v6099
      %v6101 = vpop.f32.mrb[0].mxu0
      %v6102 = vpop.f32.mrb[0].mxu0
      %v6103 = vadd.f32 %v5942, %v6102
      %v6104 = vpop.f32.mrb[0].mxu0
      %6105 = vmatprep.mubr.bf16.mxu0 0
      %6106 = vmatmul.mubr.bf16.gmra.mrb[0].mxu0 %v5808
      %v6107 = vpop.f32.mrb[0].mxu0
      %v6108 = vadd.f32 %v5947, %v6107
      %v6109 = vpop.f32.mrb[0].mxu0
      %v6110 = vpop.f32.mrb[0].mxu0
      %v6111 = vadd.f32 %v5950, %v6110
      %v6112 = vpop.f32.mrb[0].mxu0
      %6113 = vmatprep.mubr.bf16.mxu0 0
      %6114 = vmatmul.mubr.bf16.gmra.mrb[0].mxu0 %v5811
      %v6115 = vpop.f32.mrb[0].mxu0
      %v6116 = vadd.f32 %v5955, %v6115
      %v6117 = vpop.f32.mrb[0].mxu0
      %v6118 = vpop.f32.mrb[0].mxu0
      %v6119 = vadd.f32 %v5958, %v6118
      %v6120 = vpop.f32.mrb[0].mxu0
      %6121 = vmatprep.mubr.bf16.mxu0 0
      %6122 = vmatmul.mubr.bf16.gmra.mrb[0].mxu0 %v5814
      %v6123 = vpop.f32.mrb[0].mxu0
      %v6124 = vadd.f32 %v5963, %v6123
      %v6125 = vpop.f32.mrb[0].mxu0
      %v6126 = vpop.f32.mrb[0].mxu0
      %v6127 = vadd.f32 %v5966, %v6126
      %v6128 = vpop.f32.mrb[0].mxu0
      %6129 = vmatprep.mubr.bf16.mxu0 0
      %6130 = vmatmul.mubr.bf16.gmra.mrb[0].mxu0 %v5817
      %v6131 = vpop.f32.mrb[0].mxu0
      %v6132 = vadd.f32 %v5971, %v6131
      %v6133 = vpop.f32.mrb[0].mxu0
      %v6134 = vpop.f32.mrb[0].mxu0
      %v6135 = vadd.f32 %v5974, %v6134
      %v6136 = vpop.f32.mrb[0].mxu0
      %6137 = vmatprep.mubr.bf16.mxu0 0
      %6138 = vmatmul.mubr.bf16.gmra.mrb[0].mxu0 %v5820
      %v6139 = vpop.f32.mrb[0].mxu0
      %v6140 = vadd.f32 %v5979, %v6139
      %v6141 = vpop.f32.mrb[0].mxu0
      %v6142 = vpop.f32.mrb[0].mxu0
      %v6143 = vadd.f32 %v5982, %v6142
      %v6144 = vpop.f32.mrb[0].mxu0
      %6145 = vdwg.mxu0
      %6146 = vmatprep.subr.bf16.mxu0 0
      %6147 = vmatpush1.bf16.msra.mxu0 %v5557
      %6148 = vmatprep.subr.bf16.mxu0 0
      %6149 = vmatpush1.bf16.msra.mxu0 %v5558
      %6150 = vmatprep.subr.bf16.mxu0 0
      %6151 = vmatpush1.bf16.msra.mxu0 %v5559
      %6152 = vmatprep.subr.bf16.mxu0 0
      %6153 = vmatpush1.bf16.msra.mxu0 %v5560
      %6154 = vmatprep.subr.bf16.mxu0 0
      %6155 = vmatpush1.bf16.msra.mxu0 0
      %6156 = vmatprep.subr.bf16.mxu0 0
      %6157 = vmatpush1.bf16.msra.mxu0 0
      %6158 = vmatprep.subr.bf16.mxu0 0
      %6159 = vmatpush1.bf16.msra.mxu0 0
      %6160 = vmatprep.subr.bf16.mxu0 0
      %6161 = vmatpush1.bf16.msra.mxu0 0
      %6162 = vmatprep.subr.bf16.mxu0 0
      %6163 = vmatpush1.bf16.msra.mxu0 %v5561
      %6164 = vmatprep.subr.bf16.mxu0 0
      %6165 = vmatpush1.bf16.msra.mxu0 %v5562
      %6166 = vmatprep.subr.bf16.mxu0 0
      %6167 = vmatpush1.bf16.msra.mxu0 %v5563
      %6168 = vmatprep.subr.bf16.mxu0 0
      %6169 = vmatpush1.bf16.msra.mxu0 %v5564
      %6170 = vmatprep.subr.bf16.mxu0 0
      %6171 = vmatpush1.bf16.msra.mxu0 0
      %6172 = vmatprep.subr.bf16.mxu0 0
      %6173 = vmatpush1.bf16.msra.mxu0 0
      %6174 = vmatprep.subr.bf16.mxu0 0
      %6175 = vmatpush1.bf16.msra.mxu0 0
      %6176 = vmatprep.subr.bf16.mxu0 0
      %6177 = vmatpush1.bf16.msra.mxu0 0
      %6178 = vmatprep.mubr.bf16.mxu0 %v5771
      %6179 = vmatmul.mubr.bf16.gmra.mrb[0].mxu0 %v5770
      %v6180 = vpop.f32.mrb[0].mxu0
      %v6181 = vadd.f32 %v6020, %v6180
      %v6182 = vpop.f32.mrb[0].mxu0
      %v6183 = vpop.f32.mrb[0].mxu0
      %v6184 = vadd.f32 %v6023, %v6183
      %v6185 = vpop.f32.mrb[0].mxu0
      %6186 = vmatprep.mubr.bf16.mxu0 %v5774
      %6187 = vmatmul.mubr.bf16.gmra.mrb[0].mxu0 %v5773
      %v6188 = vpop.f32.mrb[0].mxu0
      %v6189 = vadd.f32 %v6028, %v6188
      %v6190 = vpop.f32.mrb[0].mxu0
      %v6191 = vpop.f32.mrb[0].mxu0
      %v6192 = vadd.f32 %v6031, %v6191
      %v6193 = vpop.f32.mrb[0].mxu0
      %6194 = vmatprep.mubr.bf16.mxu0 %v5777
      %6195 = vmatmul.mubr.bf16.gmra.mrb[0].mxu0 %v5776
      %v6196 = vpop.f32.mrb[0].mxu0
      %v6197 = vadd.f32 %v6036, %v6196
      %v6198 = vpop.f32.mrb[0].mxu0
      %v6199 = vpop.f32.mrb[0].mxu0
      %v6200 = vadd.f32 %v6039, %v6199
      %v6201 = vpop.f32.mrb[0].mxu0
      %6202 = vmatprep.mubr.bf16.mxu0 %v5780
      %6203 = vmatmul.mubr.bf16.gmra.mrb[0].mxu0 %v5779
      %v6204 = vpop.f32.mrb[0].mxu0
      %v6205 = vadd.f32 %v6044, %v6204
      %v6206 = vpop.f32.mrb[0].mxu0
      %v6207 = vpop.f32.mrb[0].mxu0
      %v6208 = vadd.f32 %v6047, %v6207
      %v6209 = vpop.f32.mrb[0].mxu0
      %6210 = vmatprep.mubr.bf16.mxu0 %v5783
      %6211 = vmatmul.mubr.bf16.gmra.mrb[0].mxu0 %v5782
      %v6212 = vpop.f32.mrb[0].mxu0
      %v6213 = vadd.f32 %v6052, %v6212
      %v6214 = vpop.f32.mrb[0].mxu0
      %v6215 = vpop.f32.mrb[0].mxu0
      %v6216 = vadd.f32 %v6055, %v6215
      %v6217 = vpop.f32.mrb[0].mxu0
      %6218 = vmatprep.mubr.bf16.mxu0 %v5786
      %6219 = vmatmul.mubr.bf16.gmra.mrb[0].mxu0 %v5785
      %v6220 = vpop.f32.mrb[0].mxu0
      %v6221 = vadd.f32 %v6060, %v6220
      %v6222 = vpop.f32.mrb[0].mxu0
      %v6223 = vpop.f32.mrb[0].mxu0
      %v6224 = vadd.f32 %v6063, %v6223
      %v6225 = vpop.f32.mrb[0].mxu0
      %6226 = vmatprep.mubr.bf16.mxu0 %v5789
      %6227 = vmatmul.mubr.bf16.gmra.mrb[0].mxu0 %v5788
      %v6228 = vpop.f32.mrb[0].mxu0
      %v6229 = vadd.f32 %v6068, %v6228
      %v6230 = vpop.f32.mrb[0].mxu0
      %v6231 = vpop.f32.mrb[0].mxu0
      %v6232 = vadd.f32 %v6071, %v6231
      %v6233 = vpop.f32.mrb[0].mxu0
      %6234 = vmatprep.mubr.bf16.mxu0 %v5792
      %6235 = vmatmul.mubr.bf16.gmra.mrb[0].mxu0 %v5791
      %v6236 = vpop.f32.mrb[0].mxu0
      %v6237 = vadd.f32 %v6076, %v6236
      %v6238 = vpop.f32.mrb[0].mxu0
      %v6239 = vpop.f32.mrb[0].mxu0
      %v6240 = vadd.f32 %v6079, %v6239
      %v6241 = vpop.f32.mrb[0].mxu0
      %6242 = vmatprep.mubr.bf16.mxu0 %v5795
      %6243 = vmatmul.mubr.bf16.gmra.mrb[0].mxu0 %v5794
      %v6244 = vpop.f32.mrb[0].mxu0
      %v6245 = vadd.f32 %v6084, %v6244
      %v6246 = vpop.f32.mrb[0].mxu0
      %v6247 = vpop.f32.mrb[0].mxu0
      %v6248 = vadd.f32 %v6087, %v6247
      %v6249 = vpop.f32.mrb[0].mxu0
      %6250 = vmatprep.mubr.bf16.mxu0 %v5798
      %6251 = vmatmul.mubr.bf16.gmra.mrb[0].mxu0 %v5797
      %v6252 = vpop.f32.mrb[0].mxu0
      %v6253 = vadd.f32 %v6092, %v6252
      %v6254 = vpop.f32.mrb[0].mxu0
      %v6255 = vpop.f32.mrb[0].mxu0
      %v6256 = vadd.f32 %v6095, %v6255
      %v6257 = vpop.f32.mrb[0].mxu0
      %6258 = vmatprep.mubr.bf16.mxu0 %v5801
      %6259 = vmatmul.mubr.bf16.gmra.mrb[0].mxu0 %v5800
      %v6260 = vpop.f32.mrb[0].mxu0
      %v6261 = vadd.f32 %v6100, %v6260
      %v6262 = vpop.f32.mrb[0].mxu0
      %v6263 = vpop.f32.mrb[0].mxu0
      %v6264 = vadd.f32 %v6103, %v6263
      %v6265 = vpop.f32.mrb[0].mxu0
      %6266 = vmatprep.mubr.bf16.mxu0 %v5804
      %6267 = vmatmul.mubr.bf16.gmra.mrb[0].mxu0 %v5803
      %v6268 = vpop.f32.mrb[0].mxu0
      %v6269 = vadd.f32 %v6108, %v6268
      %v6270 = vpop.f32.mrb[0].mxu0
      %v6271 = vpop.f32.mrb[0].mxu0
      %v6272 = vadd.f32 %v6111, %v6271
      %v6273 = vpop.f32.mrb[0].mxu0
      %6274 = vmatprep.mubr.bf16.mxu0 %v5807
      %6275 = vmatmul.mubr.bf16.gmra.mrb[0].mxu0 %v5806
      %v6276 = vpop.f32.mrb[0].mxu0
      %v6277 = vadd.f32 %v6116, %v6276
      %v6278 = vpop.f32.mrb[0].mxu0
      %v6279 = vpop.f32.mrb[0].mxu0
      %v6280 = vadd.f32 %v6119, %v6279
      %v6281 = vpop.f32.mrb[0].mxu0
      %6282 = vmatprep.mubr.bf16.mxu0 %v5810
      %6283 = vmatmul.mubr.bf16.gmra.mrb[0].mxu0 %v5809
      %v6284 = vpop.f32.mrb[0].mxu0
      %v6285 = vadd.f32 %v6124, %v6284
      %v6286 = vpop.f32.mrb[0].mxu0
      %v6287 = vpop.f32.mrb[0].mxu0
      %v6288 = vadd.f32 %v6127, %v6287
      %v6289 = vpop.f32.mrb[0].mxu0
      %6290 = vmatprep.mubr.bf16.mxu0 %v5813
      %6291 = vmatmul.mubr.bf16.gmra.mrb[0].mxu0 %v5812
      %v6292 = vpop.f32.mrb[0].mxu0
      %v6293 = vadd.f32 %v6132, %v6292
      %v6294 = vpop.f32.mrb[0].mxu0
      %v6295 = vpop.f32.mrb[0].mxu0
      %v6296 = vadd.f32 %v6135, %v6295
      %v6297 = vpop.f32.mrb[0].mxu0
      %6298 = vmatprep.mubr.bf16.mxu0 %v5816
      %6299 = vmatmul.mubr.bf16.gmra.mrb[0].mxu0 %v5815
      %v6300 = vpop.f32.mrb[0].mxu0
      %v6301 = vadd.f32 %v6140, %v6300
      %v6302 = vpop.f32.mrb[0].mxu0
      %v6303 = vpop.f32.mrb[0].mxu0
      %v6304 = vadd.f32 %v6143, %v6303
      %v6305 = vpop.f32.mrb[0].mxu0
      %6306 = vdwg.mxu0
      %6307 = vmatprep.subr.bf16.mxu0 0
      %6308 = vmatpush1.bf16.msra.mxu0 %v5565
      %6309 = vmatprep.subr.bf16.mxu0 0
      %6310 = vmatpush1.bf16.msra.mxu0 %v5566
      %6311 = vmatprep.subr.bf16.mxu0 0
      %6312 = vmatpush1.bf16.msra.mxu0 %v5567
      %6313 = vmatprep.subr.bf16.mxu0 0
      %6314 = vmatpush1.bf16.msra.mxu0 %v5568
      %6315 = vmatprep.subr.bf16.mxu0 0
      %6316 = vmatpush1.bf16.msra.mxu0 0
      %6317 = vmatprep.subr.bf16.mxu0 0
      %6318 = vmatpush1.bf16.msra.mxu0 0
      %6319 = vmatprep.subr.bf16.mxu0 0
      %6320 = vmatpush1.bf16.msra.mxu0 0
      %6321 = vmatprep.subr.bf16.mxu0 0
      %6322 = vmatpush1.bf16.msra.mxu0 0
      %6323 = vmatprep.subr.bf16.mxu0 0
      %6324 = vmatpush1.bf16.msra.mxu0 0
      %6325 = vmatprep.subr.bf16.mxu0 0
      %6326 = vmatpush1.bf16.msra.mxu0 0
      %6327 = vmatprep.subr.bf16.mxu0 0
      %6328 = vmatpush1.bf16.msra.mxu0 0
      %6329 = vmatprep.subr.bf16.mxu0 0
      %6330 = vmatpush1.bf16.msra.mxu0 0
      %6331 = vmatprep.subr.bf16.mxu0 0
      %6332 = vmatpush1.bf16.msra.mxu0 0
      %6333 = vmatprep.subr.bf16.mxu0 0
      %6334 = vmatpush1.bf16.msra.mxu0 0
      %6335 = vmatprep.subr.bf16.mxu0 0
      %6336 = vmatpush1.bf16.msra.mxu0 0
      %6337 = vmatprep.subr.bf16.mxu0 0
      %6338 = vmatpush1.bf16.msra.mxu0 0
      %6339 = vmatprep.mubr.bf16.mxu0 0
      %6340 = vmatmul.mubr.bf16.gmra.mrb[0].mxu0 %v5772
      %v6341 = vpop.f32.mrb[0].mxu0
      %v6342 = vadd.f32 %v6181, %v6341
      %v6343 = vpop.f32.mrb[0].mxu0
      %v6344 = vpop.f32.mrb[0].mxu0
      %v6345 = vadd.f32 %v6184, %v6344
      %v6346 = vpop.f32.mrb[0].mxu0
      %6347 = vmatprep.mubr.bf16.mxu0 0
      %6348 = vmatmul.mubr.bf16.gmra.mrb[0].mxu0 %v5775
      %v6349 = vpop.f32.mrb[0].mxu0
      %v6350 = vadd.f32 %v6189, %v6349
      %v6351 = vpop.f32.mrb[0].mxu0
      %v6352 = vpop.f32.mrb[0].mxu0
      %v6353 = vadd.f32 %v6192, %v6352
      %v6354 = vpop.f32.mrb[0].mxu0
      %6355 = vmatprep.mubr.bf16.mxu0 0
      %6356 = vmatmul.mubr.bf16.gmra.mrb[0].mxu0 %v5778
      %v6357 = vpop.f32.mrb[0].mxu0
      %v6358 = vadd.f32 %v6197, %v6357
      %v6359 = vpop.f32.mrb[0].mxu0
      %v6360 = vpop.f32.mrb[0].mxu0
      %v6361 = vadd.f32 %v6200, %v6360
      %v6362 = vpop.f32.mrb[0].mxu0
      %6363 = vmatprep.mubr.bf16.mxu0 0
      %6364 = vmatmul.mubr.bf16.gmra.mrb[0].mxu0 %v5781
      %v6365 = vpop.f32.mrb[0].mxu0
      %v6366 = vadd.f32 %v6205, %v6365
      %v6367 = vpop.f32.mrb[0].mxu0
      %v6368 = vpop.f32.mrb[0].mxu0
      %v6369 = vadd.f32 %v6208, %v6368
      %v6370 = vpop.f32.mrb[0].mxu0
      %6371 = vmatprep.mubr.bf16.mxu0 0
      %6372 = vmatmul.mubr.bf16.gmra.mrb[0].mxu0 %v5784
      %v6373 = vpop.f32.mrb[0].mxu0
      %v6374 = vadd.f32 %v6213, %v6373
      %v6375 = vpop.f32.mrb[0].mxu0
      %v6376 = vpop.f32.mrb[0].mxu0
      %v6377 = vadd.f32 %v6216, %v6376
      %v6378 = vpop.f32.mrb[0].mxu0
      %6379 = vmatprep.mubr.bf16.mxu0 0
      %6380 = vmatmul.mubr.bf16.gmra.mrb[0].mxu0 %v5787
      %v6381 = vpop.f32.mrb[0].mxu0
      %v6382 = vadd.f32 %v6221, %v6381
      %v6383 = vpop.f32.mrb[0].mxu0
      %v6384 = vpop.f32.mrb[0].mxu0
      %v6385 = vadd.f32 %v6224, %v6384
      %v6386 = vpop.f32.mrb[0].mxu0
      %6387 = vmatprep.mubr.bf16.mxu0 0
      %6388 = vmatmul.mubr.bf16.gmra.mrb[0].mxu0 %v5790
      %v6389 = vpop.f32.mrb[0].mxu0
      %v6390 = vadd.f32 %v6229, %v6389
      %v6391 = vpop.f32.mrb[0].mxu0
      %v6392 = vpop.f32.mrb[0].mxu0
      %v6393 = vadd.f32 %v6232, %v6392
      %v6394 = vpop.f32.mrb[0].mxu0
      %6395 = vmatprep.mubr.bf16.mxu0 0
      %6396 = vmatmul.mubr.bf16.gmra.mrb[0].mxu0 %v5793
      %v6397 = vpop.f32.mrb[0].mxu0
      %v6398 = vadd.f32 %v6237, %v6397
      %v6399 = vpop.f32.mrb[0].mxu0
      %v6400 = vpop.f32.mrb[0].mxu0
      %v6401 = vadd.f32 %v6240, %v6400
      %v6402 = vpop.f32.mrb[0].mxu0
      %6403 = vmatprep.mubr.bf16.mxu0 0
      %6404 = vmatmul.mubr.bf16.gmra.mrb[0].mxu0 %v5796
      %v6405 = vpop.f32.mrb[0].mxu0
      %v6406 = vadd.f32 %v6245, %v6405
      %v6407 = vpop.f32.mrb[0].mxu0
      %v6408 = vpop.f32.mrb[0].mxu0
      %v6409 = vadd.f32 %v6248, %v6408
      %v6410 = vpop.f32.mrb[0].mxu0
      %6411 = vmatprep.mubr.bf16.mxu0 0
      %6412 = vmatmul.mubr.bf16.gmra.mrb[0].mxu0 %v5799
      %v6413 = vpop.f32.mrb[0].mxu0
      %v6414 = vadd.f32 %v6253, %v6413
      %v6415 = vpop.f32.mrb[0].mxu0
      %v6416 = vpop.f32.mrb[0].mxu0
      %v6417 = vadd.f32 %v6256, %v6416
      %v6418 = vpop.f32.mrb[0].mxu0
      %6419 = vmatprep.mubr.bf16.mxu0 0
      %6420 = vmatmul.mubr.bf16.gmra.mrb[0].mxu0 %v5802
      %v6421 = vpop.f32.mrb[0].mxu0
      %v6422 = vadd.f32 %v6261, %v6421
      %v6423 = vpop.f32.mrb[0].mxu0
      %v6424 = vpop.f32.mrb[0].mxu0
      %v6425 = vadd.f32 %v6264, %v6424
      %v6426 = vpop.f32.mrb[0].mxu0
      %6427 = vmatprep.mubr.bf16.mxu0 0
      %6428 = vmatmul.mubr.bf16.gmra.mrb[0].mxu0 %v5805
      %v6429 = vpop.f32.mrb[0].mxu0
      %v6430 = vadd.f32 %v6269, %v6429
      %v6431 = vpop.f32.mrb[0].mxu0
      %v6432 = vpop.f32.mrb[0].mxu0
      %v6433 = vadd.f32 %v6272, %v6432
      %v6434 = vpop.f32.mrb[0].mxu0
      %6435 = vmatprep.mubr.bf16.mxu0 0
      %6436 = vmatmul.mubr.bf16.gmra.mrb[0].mxu0 %v5808
      %v6437 = vpop.f32.mrb[0].mxu0
      %v6438 = vadd.f32 %v6277, %v6437
      %v6439 = vpop.f32.mrb[0].mxu0
      %v6440 = vpop.f32.mrb[0].mxu0
      %v6441 = vadd.f32 %v6280, %v6440
      %v6442 = vpop.f32.mrb[0].mxu0
      %6443 = vmatprep.mubr.bf16.mxu0 0
      %6444 = vmatmul.mubr.bf16.gmra.mrb[0].mxu0 %v5811
      %v6445 = vpop.f32.mrb[0].mxu0
      %v6446 = vadd.f32 %v6285, %v6445
      %v6447 = vpop.f32.mrb[0].mxu0
      %v6448 = vpop.f32.mrb[0].mxu0
      %v6449 = vadd.f32 %v6288, %v6448
      %v6450 = vpop.f32.mrb[0].mxu0
      %6451 = vmatprep.mubr.bf16.mxu0 0
      %6452 = vmatmul.mubr.bf16.gmra.mrb[0].mxu0 %v5814
      %v6453 = vpop.f32.mrb[0].mxu0
      %v6454 = vadd.f32 %v6293, %v6453
      %v6455 = vpop.f32.mrb[0].mxu0
      %v6456 = vpop.f32.mrb[0].mxu0
      %v6457 = vadd.f32 %v6296, %v6456
      %v6458 = vpop.f32.mrb[0].mxu0
      %6459 = vmatprep.mubr.bf16.mxu0 0
      %6460 = vmatmul.mubr.bf16.gmra.mrb[0].mxu0 %v5817
      %v6461 = vpop.f32.mrb[0].mxu0
      %v6462 = vadd.f32 %v6301, %v6461
      %v6463 = vpop.f32.mrb[0].mxu0
      %v6464 = vpop.f32.mrb[0].mxu0
      %v6465 = vadd.f32 %v6304, %v6464
      %v6466 = vpop.f32.mrb[0].mxu0
      %6467 = vdwg.mxu0
      %6468 = vmatprep.subr.bf16.mxu0 0
      %6469 = vmatpush1.bf16.msra.mxu0 %v5581
      %6470 = vmatprep.subr.bf16.mxu0 0
      %6471 = vmatpush1.bf16.msra.mxu0 %v5582
      %6472 = vmatprep.subr.bf16.mxu0 0
      %6473 = vmatpush1.bf16.msra.mxu0 %v5583
      %6474 = vmatprep.subr.bf16.mxu0 0
      %6475 = vmatpush1.bf16.msra.mxu0 %v5584
      %6476 = vmatprep.subr.bf16.mxu0 0
      %6477 = vmatpush1.bf16.msra.mxu0 0
      %6478 = vmatprep.subr.bf16.mxu0 0
      %6479 = vmatpush1.bf16.msra.mxu0 0
      %6480 = vmatprep.subr.bf16.mxu0 0
      %6481 = vmatpush1.bf16.msra.mxu0 0
      %6482 = vmatprep.subr.bf16.mxu0 0
      %6483 = vmatpush1.bf16.msra.mxu0 0
      %6484 = vmatprep.subr.bf16.mxu0 0
      %6485 = vmatpush1.bf16.msra.mxu0 %v5585
      %6486 = vmatprep.subr.bf16.mxu0 0
      %6487 = vmatpush1.bf16.msra.mxu0 %v5586
      %6488 = vmatprep.subr.bf16.mxu0 0
      %6489 = vmatpush1.bf16.msra.mxu0 %v5587
      %6490 = vmatprep.subr.bf16.mxu0 0
      %6491 = vmatpush1.bf16.msra.mxu0 %v5588
      %6492 = vmatprep.subr.bf16.mxu0 0
      %6493 = vmatpush1.bf16.msra.mxu0 0
      %6494 = vmatprep.subr.bf16.mxu0 0
      %6495 = vmatpush1.bf16.msra.mxu0 0
      %6496 = vmatprep.subr.bf16.mxu0 0
      %6497 = vmatpush1.bf16.msra.mxu0 0
      %6498 = vmatprep.subr.bf16.mxu0 0
      %6499 = vmatpush1.bf16.msra.mxu0 0
      %6500 = vmatprep.mubr.bf16.mxu0 %v5777
      %6501 = vmatmul.mubr.bf16.gmra.mrb[0].mxu0 %v5776
      %v6502 = vpop.f32.mrb[0].mxu0
      %v6503 = vadd.f32 0.0, %v6502
      %v6504 = vpop.f32.mrb[0].mxu0
      %v6505 = vpop.f32.mrb[0].mxu0
      %v6506 = vadd.f32 0.0, %v6505
      %v6507 = vpop.f32.mrb[0].mxu0
      %6508 = vmatprep.mubr.bf16.mxu0 %v5780
      %6509 = vmatmul.mubr.bf16.gmra.mrb[0].mxu0 %v5779
      %v6510 = vpop.f32.mrb[0].mxu0
      %v6511 = vadd.f32 0.0, %v6510
      %v6512 = vpop.f32.mrb[0].mxu0
      %v6513 = vpop.f32.mrb[0].mxu0
      %v6514 = vadd.f32 0.0, %v6513
      %v6515 = vpop.f32.mrb[0].mxu0
      %6516 = vmatprep.mubr.bf16.mxu0 %v5783
      %6517 = vmatmul.mubr.bf16.gmra.mrb[0].mxu0 %v5782
      %v6518 = vpop.f32.mrb[0].mxu0
      %v6519 = vadd.f32 0.0, %v6518
      %v6520 = vpop.f32.mrb[0].mxu0
      %v6521 = vpop.f32.mrb[0].mxu0
      %v6522 = vadd.f32 0.0, %v6521
      %v6523 = vpop.f32.mrb[0].mxu0
      %6524 = vmatprep.mubr.bf16.mxu0 %v5786
      %6525 = vmatmul.mubr.bf16.gmra.mrb[0].mxu0 %v5785
      %v6526 = vpop.f32.mrb[0].mxu0
      %v6527 = vadd.f32 0.0, %v6526
      %v6528 = vpop.f32.mrb[0].mxu0
      %v6529 = vpop.f32.mrb[0].mxu0
      %v6530 = vadd.f32 0.0, %v6529
      %v6531 = vpop.f32.mrb[0].mxu0
      %6532 = vmatprep.mubr.bf16.mxu0 %v5789
      %6533 = vmatmul.mubr.bf16.gmra.mrb[0].mxu0 %v5788
      %v6534 = vpop.f32.mrb[0].mxu0
      %v6535 = vadd.f32 0.0, %v6534
      %v6536 = vpop.f32.mrb[0].mxu0
      %v6537 = vpop.f32.mrb[0].mxu0
      %v6538 = vadd.f32 0.0, %v6537
      %v6539 = vpop.f32.mrb[0].mxu0
      %6540 = vmatprep.mubr.bf16.mxu0 %v5792
      %6541 = vmatmul.mubr.bf16.gmra.mrb[0].mxu0 %v5791
      %v6542 = vpop.f32.mrb[0].mxu0
      %v6543 = vadd.f32 0.0, %v6542
      %v6544 = vpop.f32.mrb[0].mxu0
      %v6545 = vpop.f32.mrb[0].mxu0
      %v6546 = vadd.f32 0.0, %v6545
      %v6547 = vpop.f32.mrb[0].mxu0
      %6548 = vmatprep.mubr.bf16.mxu0 %v5795
      %6549 = vmatmul.mubr.bf16.gmra.mrb[0].mxu0 %v5794
      %v6550 = vpop.f32.mrb[0].mxu0
      %v6551 = vadd.f32 0.0, %v6550
      %v6552 = vpop.f32.mrb[0].mxu0
      %v6553 = vpop.f32.mrb[0].mxu0
      %v6554 = vadd.f32 0.0, %v6553
      %v6555 = vpop.f32.mrb[0].mxu0
      %6556 = vmatprep.mubr.bf16.mxu0 %v5798
      %6557 = vmatmul.mubr.bf16.gmra.mrb[0].mxu0 %v5797
      %v6558 = vpop.f32.mrb[0].mxu0
      %v6559 = vadd.f32 0.0, %v6558
      %v6560 = vpop.f32.mrb[0].mxu0
      %v6561 = vpop.f32.mrb[0].mxu0
      %v6562 = vadd.f32 0.0, %v6561
      %v6563 = vpop.f32.mrb[0].mxu0
      %6564 = vmatprep.mubr.bf16.mxu0 %v5801
      %6565 = vmatmul.mubr.bf16.gmra.mrb[0].mxu0 %v5800
      %v6566 = vpop.f32.mrb[0].mxu0
      %v6567 = vadd.f32 0.0, %v6566
      %v6568 = vpop.f32.mrb[0].mxu0
      %v6569 = vpop.f32.mrb[0].mxu0
      %v6570 = vadd.f32 0.0, %v6569
      %v6571 = vpop.f32.mrb[0].mxu0
      %6572 = vmatprep.mubr.bf16.mxu0 %v5804
      %6573 = vmatmul.mubr.bf16.gmra.mrb[0].mxu0 %v5803
      %v6574 = vpop.f32.mrb[0].mxu0
      %v6575 = vadd.f32 0.0, %v6574
      %v6576 = vpop.f32.mrb[0].mxu0
      %v6577 = vpop.f32.mrb[0].mxu0
      %v6578 = vadd.f32 0.0, %v6577
      %v6579 = vpop.f32.mrb[0].mxu0
      %6580 = vmatprep.mubr.bf16.mxu0 %v5807
      %6581 = vmatmul.mubr.bf16.gmra.mrb[0].mxu0 %v5806
      %v6582 = vpop.f32.mrb[0].mxu0
      %v6583 = vadd.f32 0.0, %v6582
      %v6584 = vpop.f32.mrb[0].mxu0
      %v6585 = vpop.f32.mrb[0].mxu0
      %v6586 = vadd.f32 0.0, %v6585
      %v6587 = vpop.f32.mrb[0].mxu0
      %6588 = vmatprep.mubr.bf16.mxu0 %v5810
      %6589 = vmatmul.mubr.bf16.gmra.mrb[0].mxu0 %v5809
      %v6590 = vpop.f32.mrb[0].mxu0
      %v6591 = vadd.f32 0.0, %v6590
      %v6592 = vpop.f32.mrb[0].mxu0
      %v6593 = vpop.f32.mrb[0].mxu0
      %v6594 = vadd.f32 0.0, %v6593
      %v6595 = vpop.f32.mrb[0].mxu0
      %6596 = vmatprep.mubr.bf16.mxu0 %v5813
      %6597 = vmatmul.mubr.bf16.gmra.mrb[0].mxu0 %v5812
      %v6598 = vpop.f32.mrb[0].mxu0
      %v6599 = vadd.f32 0.0, %v6598
      %v6600 = vpop.f32.mrb[0].mxu0
      %v6601 = vpop.f32.mrb[0].mxu0
      %v6602 = vadd.f32 0.0, %v6601
      %v6603 = vpop.f32.mrb[0].mxu0
      %6604 = vmatprep.mubr.bf16.mxu0 %v5816
      %6605 = vmatmul.mubr.bf16.gmra.mrb[0].mxu0 %v5815
      %v6606 = vpop.f32.mrb[0].mxu0
      %v6607 = vadd.f32 0.0, %v6606
      %v6608 = vpop.f32.mrb[0].mxu0
      %v6609 = vpop.f32.mrb[0].mxu0
      %v6610 = vadd.f32 0.0, %v6609
      %v6611 = vpop.f32.mrb[0].mxu0
      %6612 = vmatprep.mubr.bf16.mxu0 %v5819
      %6613 = vmatmul.mubr.bf16.gmra.mrb[0].mxu0 %v5818
      %v6614 = vpop.f32.mrb[0].mxu0
      %v6615 = vadd.f32 0.0, %v6614
      %v6616 = vpop.f32.mrb[0].mxu0
      %v6617 = vpop.f32.mrb[0].mxu0
      %v6618 = vadd.f32 0.0, %v6617
      %v6619 = vpop.f32.mrb[0].mxu0
      %6620 = vmatprep.mubr.bf16.mxu0 %v5822
      %6621 = vmatmul.mubr.bf16.gmra.mrb[0].mxu0 %v5821
      %v6622 = vpop.f32.mrb[0].mxu0
      %v6623 = vadd.f32 0.0, %v6622
      %v6624 = vpop.f32.mrb[0].mxu0
      %v6625 = vpop.f32.mrb[0].mxu0
      %v6626 = vadd.f32 0.0, %v6625
      %v6627 = vpop.f32.mrb[0].mxu0
      %6628 = vdwg.mxu0
      %6629 = vmatprep.subr.bf16.mxu0 0
      %6630 = vmatpush1.bf16.msra.mxu0 %v5589
      %6631 = vmatprep.subr.bf16.mxu0 0
      %6632 = vmatpush1.bf16.msra.mxu0 %v5590
      %6633 = vmatprep.subr.bf16.mxu0 0
      %6634 = vmatpush1.bf16.msra.mxu0 %v5591
      %6635 = vmatprep.subr.bf16.mxu0 0
      %6636 = vmatpush1.bf16.msra.mxu0 %v5592
      %6637 = vmatprep.subr.bf16.mxu0 0
      %6638 = vmatpush1.bf16.msra.mxu0 0
      %6639 = vmatprep.subr.bf16.mxu0 0
      %6640 = vmatpush1.bf16.msra.mxu0 0
      %6641 = vmatprep.subr.bf16.mxu0 0
      %6642 = vmatpush1.bf16.msra.mxu0 0
      %6643 = vmatprep.subr.bf16.mxu0 0
      %6644 = vmatpush1.bf16.msra.mxu0 0
      %6645 = vmatprep.subr.bf16.mxu0 0
      %6646 = vmatpush1.bf16.msra.mxu0 0
      %6647 = vmatprep.subr.bf16.mxu0 0
      %6648 = vmatpush1.bf16.msra.mxu0 0
      %6649 = vmatprep.subr.bf16.mxu0 0
      %6650 = vmatpush1.bf16.msra.mxu0 0
      %6651 = vmatprep.subr.bf16.mxu0 0
      %6652 = vmatpush1.bf16.msra.mxu0 0
      %6653 = vmatprep.subr.bf16.mxu0 0
      %6654 = vmatpush1.bf16.msra.mxu0 0
      %6655 = vmatprep.subr.bf16.mxu0 0
      %6656 = vmatpush1.bf16.msra.mxu0 0
      %6657 = vmatprep.subr.bf16.mxu0 0
      %6658 = vmatpush1.bf16.msra.mxu0 0
      %6659 = vmatprep.subr.bf16.mxu0 0
      %6660 = vmatpush1.bf16.msra.mxu0 0
      %6661 = vmatprep.mubr.bf16.mxu0 0
      %6662 = vmatmul.mubr.bf16.gmra.mrb[0].mxu0 %v5778
      %v6663 = vpop.f32.mrb[0].mxu0
      %v6664 = vadd.f32 %v6503, %v6663
      %v6665 = vpop.f32.mrb[0].mxu0
      %v6666 = vpop.f32.mrb[0].mxu0
      %v6667 = vadd.f32 %v6506, %v6666
      %v6668 = vpop.f32.mrb[0].mxu0
      %6669 = vmatprep.mubr.bf16.mxu0 0
      %6670 = vmatmul.mubr.bf16.gmra.mrb[0].mxu0 %v5781
      %v6671 = vpop.f32.mrb[0].mxu0
      %v6672 = vadd.f32 %v6511, %v6671
      %v6673 = vpop.f32.mrb[0].mxu0
      %v6674 = vpop.f32.mrb[0].mxu0
      %v6675 = vadd.f32 %v6514, %v6674
      %v6676 = vpop.f32.mrb[0].mxu0
      %6677 = vmatprep.mubr.bf16.mxu0 0
      %6678 = vmatmul.mubr.bf16.gmra.mrb[0].mxu0 %v5784
      %v6679 = vpop.f32.mrb[0].mxu0
      %v6680 = vadd.f32 %v6519, %v6679
      %v6681 = vpop.f32.mrb[0].mxu0
      %v6682 = vpop.f32.mrb[0].mxu0
      %v6683 = vadd.f32 %v6522, %v6682
      %v6684 = vpop.f32.mrb[0].mxu0
      %6685 = vmatprep.mubr.bf16.mxu0 0
      %6686 = vmatmul.mubr.bf16.gmra.mrb[0].mxu0 %v5787
      %v6687 = vpop.f32.mrb[0].mxu0
      %v6688 = vadd.f32 %v6527, %v6687
      %v6689 = vpop.f32.mrb[0].mxu0
      %v6690 = vpop.f32.mrb[0].mxu0
      %v6691 = vadd.f32 %v6530, %v6690
      %v6692 = vpop.f32.mrb[0].mxu0
      %6693 = vmatprep.mubr.bf16.mxu0 0
      %6694 = vmatmul.mubr.bf16.gmra.mrb[0].mxu0 %v5790
      %v6695 = vpop.f32.mrb[0].mxu0
      %v6696 = vadd.f32 %v6535, %v6695
      %v6697 = vpop.f32.mrb[0].mxu0
      %v6698 = vpop.f32.mrb[0].mxu0
      %v6699 = vadd.f32 %v6538, %v6698
      %v6700 = vpop.f32.mrb[0].mxu0
      %6701 = vmatprep.mubr.bf16.mxu0 0
      %6702 = vmatmul.mubr.bf16.gmra.mrb[0].mxu0 %v5793
      %v6703 = vpop.f32.mrb[0].mxu0
      %v6704 = vadd.f32 %v6543, %v6703
      %v6705 = vpop.f32.mrb[0].mxu0
      %v6706 = vpop.f32.mrb[0].mxu0
      %v6707 = vadd.f32 %v6546, %v6706
      %v6708 = vpop.f32.mrb[0].mxu0
      %6709 = vmatprep.mubr.bf16.mxu0 0
      %6710 = vmatmul.mubr.bf16.gmra.mrb[0].mxu0 %v5796
      %v6711 = vpop.f32.mrb[0].mxu0
      %v6712 = vadd.f32 %v6551, %v6711
      %v6713 = vpop.f32.mrb[0].mxu0
      %v6714 = vpop.f32.mrb[0].mxu0
      %v6715 = vadd.f32 %v6554, %v6714
      %v6716 = vpop.f32.mrb[0].mxu0
      %6717 = vmatprep.mubr.bf16.mxu0 0
      %6718 = vmatmul.mubr.bf16.gmra.mrb[0].mxu0 %v5799
      %v6719 = vpop.f32.mrb[0].mxu0
      %v6720 = vadd.f32 %v6559, %v6719
      %v6721 = vpop.f32.mrb[0].mxu0
      %v6722 = vpop.f32.mrb[0].mxu0
      %v6723 = vadd.f32 %v6562, %v6722
      %v6724 = vpop.f32.mrb[0].mxu0
      %6725 = vmatprep.mubr.bf16.mxu0 0
      %6726 = vmatmul.mubr.bf16.gmra.mrb[0].mxu0 %v5802
      %v6727 = vpop.f32.mrb[0].mxu0
      %v6728 = vadd.f32 %v6567, %v6727
      %v6729 = vpop.f32.mrb[0].mxu0
      %v6730 = vpop.f32.mrb[0].mxu0
      %v6731 = vadd.f32 %v6570, %v6730
      %v6732 = vpop.f32.mrb[0].mxu0
      %6733 = vmatprep.mubr.bf16.mxu0 0
      %6734 = vmatmul.mubr.bf16.gmra.mrb[0].mxu0 %v5805
      %v6735 = vpop.f32.mrb[0].mxu0
      %v6736 = vadd.f32 %v6575, %v6735
      %v6737 = vpop.f32.mrb[0].mxu0
      %v6738 = vpop.f32.mrb[0].mxu0
      %v6739 = vadd.f32 %v6578, %v6738
      %v6740 = vpop.f32.mrb[0].mxu0
      %6741 = vmatprep.mubr.bf16.mxu0 0
      %6742 = vmatmul.mubr.bf16.gmra.mrb[0].mxu0 %v5808
      %v6743 = vpop.f32.mrb[0].mxu0
      %v6744 = vadd.f32 %v6583, %v6743
      %v6745 = vpop.f32.mrb[0].mxu0
      %v6746 = vpop.f32.mrb[0].mxu0
      %v6747 = vadd.f32 %v6586, %v6746
      %v6748 = vpop.f32.mrb[0].mxu0
      %6749 = vmatprep.mubr.bf16.mxu0 0
      %6750 = vmatmul.mubr.bf16.gmra.mrb[0].mxu0 %v5811
      %v6751 = vpop.f32.mrb[0].mxu0
      %v6752 = vadd.f32 %v6591, %v6751
      %v6753 = vpop.f32.mrb[0].mxu0
      %v6754 = vpop.f32.mrb[0].mxu0
      %v6755 = vadd.f32 %v6594, %v6754
      %v6756 = vpop.f32.mrb[0].mxu0
      %6757 = vmatprep.mubr.bf16.mxu0 0
      %6758 = vmatmul.mubr.bf16.gmra.mrb[0].mxu0 %v5814
      %v6759 = vpop.f32.mrb[0].mxu0
      %v6760 = vadd.f32 %v6599, %v6759
      %v6761 = vpop.f32.mrb[0].mxu0
      %v6762 = vpop.f32.mrb[0].mxu0
      %v6763 = vadd.f32 %v6602, %v6762
      %v6764 = vpop.f32.mrb[0].mxu0
      %6765 = vmatprep.mubr.bf16.mxu0 0
      %6766 = vmatmul.mubr.bf16.gmra.mrb[0].mxu0 %v5817
      %v6767 = vpop.f32.mrb[0].mxu0
      %v6768 = vadd.f32 %v6607, %v6767
      %v6769 = vpop.f32.mrb[0].mxu0
      %v6770 = vpop.f32.mrb[0].mxu0
      %v6771 = vadd.f32 %v6610, %v6770
      %v6772 = vpop.f32.mrb[0].mxu0
      %6773 = vmatprep.mubr.bf16.mxu0 0
      %6774 = vmatmul.mubr.bf16.gmra.mrb[0].mxu0 %v5820
      %v6775 = vpop.f32.mrb[0].mxu0
      %v6776 = vadd.f32 %v6615, %v6775
      %v6777 = vpop.f32.mrb[0].mxu0
      %v6778 = vpop.f32.mrb[0].mxu0
      %v6779 = vadd.f32 %v6618, %v6778
      %v6780 = vpop.f32.mrb[0].mxu0
      %6781 = vmatprep.mubr.bf16.mxu0 0
      %6782 = vmatmul.mubr.bf16.gmra.mrb[0].mxu0 %v5823
      %v6783 = vpop.f32.mrb[0].mxu0
      %v6784 = vadd.f32 %v6623, %v6783
      %v6785 = vpop.f32.mrb[0].mxu0
      %v6786 = vpop.f32.mrb[0].mxu0
      %v6787 = vadd.f32 %v6626, %v6786
      %v6788 = vpop.f32.mrb[0].mxu0
      %6789 = vdwg.mxu0
      %v6790 = vadd.f32 %v6342, %v6664
      %v6791 = vadd.f32 %v6345, %v6667
      %v6792 = vadd.f32 %v6350, %v6672
      %v6793 = vadd.f32 %v6353, %v6675
      %v6794 = vadd.f32 %v6358, %v6680
      %v6795 = vadd.f32 %v6361, %v6683
      %v6796 = vadd.f32 %v6366, %v6688
      %v6797 = vadd.f32 %v6369, %v6691
      %v6798 = vadd.f32 %v6374, %v6696
      %v6799 = vadd.f32 %v6377, %v6699
      %v6800 = vadd.f32 %v6382, %v6704
      %v6801 = vadd.f32 %v6385, %v6707
      %v6802 = vadd.f32 %v6390, %v6712
      %v6803 = vadd.f32 %v6393, %v6715
      %v6804 = vadd.f32 %v6398, %v6720
      %v6805 = vadd.f32 %v6401, %v6723
      %v6806 = vadd.f32 %v6406, %v6728
      %v6807 = vadd.f32 %v6409, %v6731
      %v6808 = vadd.f32 %v6414, %v6736
      %v6809 = vadd.f32 %v6417, %v6739
      %v6810 = vadd.f32 %v6422, %v6744
      %v6811 = vadd.f32 %v6425, %v6747
      %v6812 = vadd.f32 %v6430, %v6752
      %v6813 = vadd.f32 %v6433, %v6755
      %v6814 = vadd.f32 %v6438, %v6760
      %v6815 = vadd.f32 %v6441, %v6763
      %v6816 = vadd.f32 %v6446, %v6768
      %v6817 = vadd.f32 %v6449, %v6771
      %v6818 = vadd.f32 %v6454, %v6776
      %v6819 = vadd.f32 %v6457, %v6779
      %v6820 = vadd.f32 %v6462, %v6784
      %v6821 = vadd.f32 %v6465, %v6787
      %v6822 = vld [vmem:[%s6] sm:$0x1]
      %v6823 = vlaneseq
      %v6824 = vshrl.u32 %v6823, 7
      %v6825 = vsub.s32 0, %v6824
      %v6826 = vrot.slane %v6822, %v6825
      %v6827 = vmul.f32 %v6790, %v6826
      %v6828 = vmul.f32 %v6791, %v6826
      %v6829 = vmul.f32 %v6792, %v6826
      %v6830 = vmul.f32 %v6793, %v6826
      %v6831 = vmul.f32 %v6794, %v6826
      %v6832 = vmul.f32 %v6795, %v6826
      %v6833 = vmul.f32 %v6796, %v6826
      %v6834 = vmul.f32 %v6797, %v6826
      %v6835 = vmul.f32 %v6798, %v6826
      %v6836 = vmul.f32 %v6799, %v6826
      %v6837 = vmul.f32 %v6800, %v6826
      %v6838 = vmul.f32 %v6801, %v6826
      %v6839 = vmul.f32 %v6802, %v6826
      %v6840 = vmul.f32 %v6803, %v6826
      %v6841 = vmul.f32 %v6804, %v6826
      %v6842 = vmul.f32 %v6805, %v6826
      %v6843 = vmul.f32 %v6806, %v6826
      %v6844 = vmul.f32 %v6807, %v6826
      %v6845 = vmul.f32 %v6808, %v6826
      %v6846 = vmul.f32 %v6809, %v6826
      %v6847 = vmul.f32 %v6810, %v6826
      %v6848 = vmul.f32 %v6811, %v6826
      %v6849 = vmul.f32 %v6812, %v6826
      %v6850 = vmul.f32 %v6813, %v6826
      %v6851 = vmul.f32 %v6814, %v6826
      %v6852 = vmul.f32 %v6815, %v6826
      %v6853 = vmul.f32 %v6816, %v6826
      %v6854 = vmul.f32 %v6817, %v6826
      %v6855 = vmul.f32 %v6818, %v6826
      %v6856 = vmul.f32 %v6819, %v6826
      %v6857 = vmul.f32 %v6820, %v6826
      %v6858 = vmul.f32 %v6821, %v6826
      %v6859 = vld [vmem:[%s6 + $0x1] sm:$0x1]
      %v6860 = vlaneseq
      %v6861 = vshrl.u32 %v6860, 7
      %v6862 = vsub.s32 0, %v6861
      %v6863 = vrot.slane %v6859, %v6862
      %v6864 = vadd.f32 %v6827, %v6863
      %v6865 = vadd.f32 %v6828, %v6863
      %v6866 = vadd.f32 %v6829, %v6863
      %v6867 = vadd.f32 %v6830, %v6863
      %v6868 = vadd.f32 %v6831, %v6863
      %v6869 = vadd.f32 %v6832, %v6863
      %v6870 = vadd.f32 %v6833, %v6863
      %v6871 = vadd.f32 %v6834, %v6863
      %v6872 = vadd.f32 %v6835, %v6863
      %v6873 = vadd.f32 %v6836, %v6863
      %v6874 = vadd.f32 %v6837, %v6863
      %v6875 = vadd.f32 %v6838, %v6863
      %v6876 = vadd.f32 %v6839, %v6863
      %v6877 = vadd.f32 %v6840, %v6863
      %v6878 = vadd.f32 %v6841, %v6863
      %v6879 = vadd.f32 %v6842, %v6863
      %v6880 = vadd.f32 %v6843, %v6863
      %v6881 = vadd.f32 %v6844, %v6863
      %v6882 = vadd.f32 %v6845, %v6863
      %v6883 = vadd.f32 %v6846, %v6863
      %v6884 = vadd.f32 %v6847, %v6863
      %v6885 = vadd.f32 %v6848, %v6863
      %v6886 = vadd.f32 %v6849, %v6863
      %v6887 = vadd.f32 %v6850, %v6863
      %v6888 = vadd.f32 %v6851, %v6863
      %v6889 = vadd.f32 %v6852, %v6863
      %v6890 = vadd.f32 %v6853, %v6863
      %v6891 = vadd.f32 %v6854, %v6863
      %v6892 = vadd.f32 %v6855, %v6863
      %v6893 = vadd.f32 %v6856, %v6863
      %v6894 = vadd.f32 %v6857, %v6863
      %v6895 = vadd.f32 %v6858, %v6863
      %v6896 = vmax.f32 %v6864, 0.0
      %v6897 = vmax.f32 %v6865, 0.0
      %v6898 = vmax.f32 %v6866, 0.0
      %v6899 = vmax.f32 %v6867, 0.0
      %v6900 = vmax.f32 %v6868, 0.0
      %v6901 = vmax.f32 %v6869, 0.0
      %v6902 = vmax.f32 %v6870, 0.0
      %v6903 = vmax.f32 %v6871, 0.0
      %v6904 = vmax.f32 %v6872, 0.0
      %v6905 = vmax.f32 %v6873, 0.0
      %v6906 = vmax.f32 %v6874, 0.0
      %v6907 = vmax.f32 %v6875, 0.0
      %v6908 = vmax.f32 %v6876, 0.0
      %v6909 = vmax.f32 %v6877, 0.0
      %v6910 = vmax.f32 %v6878, 0.0
      %v6911 = vmax.f32 %v6879, 0.0
      %v6912 = vmax.f32 %v6880, 0.0
      %v6913 = vmax.f32 %v6881, 0.0
      %v6914 = vmax.f32 %v6882, 0.0
      %v6915 = vmax.f32 %v6883, 0.0
      %v6916 = vmax.f32 %v6884, 0.0
      %v6917 = vmax.f32 %v6885, 0.0
      %v6918 = vmax.f32 %v6886, 0.0
      %v6919 = vmax.f32 %v6887, 0.0
      %v6920 = vmax.f32 %v6888, 0.0
      %v6921 = vmax.f32 %v6889, 0.0
      %v6922 = vmax.f32 %v6890, 0.0
      %v6923 = vmax.f32 %v6891, 0.0
      %v6924 = vmax.f32 %v6892, 0.0
      %v6925 = vmax.f32 %v6893, 0.0
      %v6926 = vmax.f32 %v6894, 0.0
      %v6927 = vmax.f32 %v6895, 0.0
      %v6928 = vld [vmem:[%s7] sm:$0xf]
      %v6929 = vld [vmem:[%s7 + $0x4] sm:$0xf]
      %v6930 = vld [vmem:[%s7 + $0x8] sm:$0xf]
      %v6931 = vld [vmem:[%s7 + $0xc] sm:$0xf]
      %v6932 = vld [vmem:[%s7 + $0x10] sm:$0xf]
      %v6933 = vld [vmem:[%s7 + $0x14] sm:$0xf]
      %v6934 = vld [vmem:[%s7 + $0x18] sm:$0xf]
      %v6935 = vld [vmem:[%s7 + $0x1c] sm:$0xf]
      %v6936 = vld [vmem:[%s7 + $0x20] sm:$0xf]
      %v6937 = vld [vmem:[%s7 + $0x24] sm:$0xf]
      %v6938 = vld [vmem:[%s7 + $0x28] sm:$0xf]
      %v6939 = vld [vmem:[%s7 + $0x2c] sm:$0xf]
      %v6940 = vld [vmem:[%s7 + $0x30] sm:$0xf]
      %v6941 = vld [vmem:[%s7 + $0x34] sm:$0xf]
      %v6942 = vld [vmem:[%s7 + $0x38] sm:$0xf]
      %v6943 = vld [vmem:[%s7 + $0x3c] sm:$0xf]
      %v6944 = vld [vmem:[%s7 + $0x40] sm:$0xf]
      %v6945 = vld [vmem:[%s7 + $0x44] sm:$0xf]
      %v6946 = vld [vmem:[%s7 + $0x48] sm:$0xf]
      %v6947 = vld [vmem:[%s7 + $0x4c] sm:$0xf]
      %v6948 = vld [vmem:[%s7 + $0x50] sm:$0xf]
      %v6949 = vld [vmem:[%s7 + $0x54] sm:$0xf]
      %v6950 = vld [vmem:[%s7 + $0x58] sm:$0xf]
      %v6951 = vld [vmem:[%s7 + $0x5c] sm:$0xf]
      %v6952 = vld [vmem:[%s7 + $0x60] sm:$0xf]
      %v6953 = vld [vmem:[%s7 + $0x64] sm:$0xf]
      %v6954 = vld [vmem:[%s7 + $0x68] sm:$0xf]
      %v6955 = vld [vmem:[%s7 + $0x6c] sm:$0xf]
      %v6956 = vld [vmem:[%s7 + $0x70] sm:$0xf]
      %v6957 = vld [vmem:[%s7 + $0x74] sm:$0xf]
      %v6958 = vld [vmem:[%s7 + $0x78] sm:$0xf]
      %v6959 = vld [vmem:[%s7 + $0x7c] sm:$0xf]
      %v6960 = vld [vmem:[%s7 + $0x80] sm:$0xf]
      %v6961 = vld [vmem:[%s7 + $0x84] sm:$0xf]
      %v6962 = vld [vmem:[%s7 + $0x88] sm:$0xf]
      %v6963 = vld [vmem:[%s7 + $0x8c] sm:$0xf]
      %v6964 = vld [vmem:[%s7 + $0x90] sm:$0xf]
      %v6965 = vld [vmem:[%s7 + $0x94] sm:$0xf]
      %v6966 = vld [vmem:[%s7 + $0x98] sm:$0xf]
      %v6967 = vld [vmem:[%s7 + $0x9c] sm:$0xf]
      %v6968 = vld [vmem:[%s7 + $0xa0] sm:$0xf]
      %v6969 = vld [vmem:[%s7 + $0xa4] sm:$0xf]
      %v6970 = vld [vmem:[%s7 + $0xa8] sm:$0xf]
      %v6971 = vld [vmem:[%s7 + $0xac] sm:$0xf]
      %v6972 = vld [vmem:[%s7 + $0xb0] sm:$0xf]
      %v6973 = vld [vmem:[%s7 + $0xb4] sm:$0xf]
      %v6974 = vld [vmem:[%s7 + $0xb8] sm:$0xf]
      %v6975 = vld [vmem:[%s7 + $0xbc] sm:$0xf]
      %v6976 = vld [vmem:[%s7 + $0xc0] sm:$0xf]
      %v6977 = vld [vmem:[%s7 + $0xc4] sm:$0xf]
      %v6978 = vld [vmem:[%s7 + $0xc8] sm:$0xf]
      %v6979 = vld [vmem:[%s7 + $0xcc] sm:$0xf]
      %v6980 = vld [vmem:[%s7 + $0xd0] sm:$0xf]
      %v6981 = vld [vmem:[%s7 + $0xd4] sm:$0xf]
      %v7036 = vunpack.c.l.b16 %v6928
      %v7037 = vunpack.c.l.b16 %v6929
      %v7038 = vunpack.c.l.b16 %v6930
      %v7039 = vunpack.c.l.b16 %v6931
      %v7040 = vunpack.c.l.b16 %v6932
      %v7041 = vunpack.c.l.b16 %v6933
      %v7042 = vunpack.c.l.b16 %v6934
      %v7043 = vunpack.c.l.b16 %v6935
      %v7044 = vunpack.c.l.b16 %v6936
      %v7045 = vunpack.c.l.b16 %v6937
      %v7046 = vunpack.c.l.b16 %v6938
      %v7047 = vunpack.c.l.b16 %v6939
      %v7048 = vunpack.c.l.b16 %v6940
      %v7049 = vunpack.c.l.b16 %v6941
      %v7050 = vunpack.c.l.b16 %v6942
      %v7051 = vunpack.c.l.b16 %v6943
      %v7052 = vunpack.c.l.b16 %v6944
      %v7053 = vunpack.c.l.b16 %v6945
      %v7054 = vunpack.c.l.b16 %v6946
      %v7055 = vunpack.c.l.b16 %v6947
      %v7056 = vunpack.c.l.b16 %v6948
      %v7057 = vunpack.c.l.b16 %v6949
      %v7058 = vunpack.c.l.b16 %v6950
      %v7059 = vunpack.c.l.b16 %v6951
      %v7060 = vunpack.c.l.b16 %v6952
      %v7061 = vunpack.c.l.b16 %v6953
      %v7062 = vunpack.c.l.b16 %v6954
      %v7063 = vunpack.c.l.b16 %v6955
      %v7064 = vunpack.c.l.b16 %v6956
      %v7065 = vunpack.c.l.b16 %v6957
      %v7066 = vunpack.c.l.b16 %v6958
      %v7067 = vunpack.c.l.b16 %v6959
      %v7068 = vunpack.c.l.b16 %v6960
      %v7069 = vunpack.c.l.b16 %v6961
      %v7070 = vunpack.c.l.b16 %v6962
      %v7071 = vunpack.c.l.b16 %v6963
      %v7072 = vunpack.c.l.b16 %v6964
      %v7073 = vunpack.c.l.b16 %v6965
      %v7074 = vunpack.c.l.b16 %v6966
      %v7075 = vunpack.c.l.b16 %v6967
      %v7076 = vunpack.c.l.b16 %v6968
      %v7077 = vunpack.c.l.b16 %v6969
      %v7078 = vunpack.c.l.b16 %v6970
      %v7079 = vunpack.c.l.b16 %v6971
      %v7080 = vunpack.c.l.b16 %v6972
      %v7081 = vunpack.c.l.b16 %v6973
      %v7082 = vunpack.c.l.b16 %v6974
      %v7083 = vunpack.c.l.b16 %v6975
      %v7084 = vunpack.c.l.b16 %v6976
      %v7085 = vunpack.c.l.b16 %v6977
      %v7086 = vunpack.c.l.b16 %v6978
      %v7087 = vunpack.c.l.b16 %v6979
      %v7088 = vunpack.c.l.b16 %v6980
      %v7089 = vunpack.c.l.b16 %v6981
      %v7090 = vpack.c.b16 %v7037, %v7036
      %v7091 = vpack.c.b16 %v7039, %v7038
      %v7092 = vpack.c.b16 %v7041, %v7040
      %v7093 = vpack.c.b16 %v7043, %v7042
      %v7094 = vpack.c.b16 %v7045, %v7044
      %v7095 = vpack.c.b16 %v7047, %v7046
      %v7096 = vpack.c.b16 %v7049, %v7048
      %v7097 = vpack.c.b16 %v7051, %v7050
      %v7098 = vpack.c.b16 %v7053, %v7052
      %v7099 = vpack.c.b16 %v7055, %v7054
      %v7100 = vpack.c.b16 %v7057, %v7056
      %v7101 = vpack.c.b16 %v7059, %v7058
      %v7102 = vpack.c.b16 %v7061, %v7060
      %v7103 = vpack.c.b16 %v7063, %v7062
      %v7104 = vpack.c.b16 %v7065, %v7064
      %v7105 = vpack.c.b16 %v7067, %v7066
      %v7106 = vpack.c.b16 %v7069, %v7068
      %v7107 = vpack.c.b16 %v7071, %v7070
      %v7108 = vpack.c.b16 %v7073, %v7072
      %v7109 = vpack.c.b16 %v7075, %v7074
      %v7110 = vpack.c.b16 %v7077, %v7076
      %v7111 = vpack.c.b16 %v7079, %v7078
      %v7112 = vpack.c.b16 %v7081, %v7080
      %v7113 = vpack.c.b16 %v7083, %v7082
      %v7114 = vpack.c.b16 %v7085, %v7084
      %v7115 = vpack.c.b16 %v7087, %v7086
      %v7116 = vpack.c.b16 %v7089, %v7088
      %vm7144 = vcmask 392192
      %7145 = vst.msk [vmem:[%s3610 + $0x1] sm:$0xff] %vm7144, %v6896
      %7146 = vst.msk [vmem:[%s3610 + $0x9] sm:$0xff] %vm7144, %v6897
      %7147 = vst.msk [vmem:[%s3610 + $0x19] sm:$0xff] %vm7144, %v6898
      %7148 = vst.msk [vmem:[%s3610 + $0x21] sm:$0xff] %vm7144, %v6899
      %7149 = vst.msk [vmem:[%s3610 + $0x31] sm:$0xff] %vm7144, %v6900
      %7150 = vst.msk [vmem:[%s3610 + $0x39] sm:$0xff] %vm7144, %v6901
      %7151 = vst.msk [vmem:[%s3610 + $0x49] sm:$0xff] %vm7144, %v6902
      %7152 = vst.msk [vmem:[%s3610 + $0x51] sm:$0xff] %vm7144, %v6903
      %7153 = vst.msk [vmem:[%s3610 + $0x61] sm:$0xff] %vm7144, %v6904
      %7154 = vst.msk [vmem:[%s3610 + $0x69] sm:$0xff] %vm7144, %v6905
      %7155 = vst.msk [vmem:[%s3610 + $0x79] sm:$0xff] %vm7144, %v6906
      %7156 = vst.msk [vmem:[%s3610 + $0x81] sm:$0xff] %vm7144, %v6907
      %7157 = vst.msk [vmem:[%s3610 + $0x91] sm:$0xff] %vm7144, %v6908
      %7158 = vst.msk [vmem:[%s3610 + $0x99] sm:$0xff] %vm7144, %v6909
      %7159 = vst.msk [vmem:[%s3610 + $0xa9] sm:$0xff] %vm7144, %v6910
      %7160 = vst.msk [vmem:[%s3610 + $0xb1] sm:$0xff] %vm7144, %v6911
      %7161 = vst.msk [vmem:[%s3610 + $0xc1] sm:$0xff] %vm7144, %v6912
      %7162 = vst.msk [vmem:[%s3610 + $0xc9] sm:$0xff] %vm7144, %v6913
      %7163 = vst.msk [vmem:[%s3610 + $0xd9] sm:$0xff] %vm7144, %v6914
      %7164 = vst.msk [vmem:[%s3610 + $0xe1] sm:$0xff] %vm7144, %v6915
      %7165 = vst.msk [vmem:[%s3610 + $0xf1] sm:$0xff] %vm7144, %v6916
      %7166 = vst.msk [vmem:[%s3610 + $0xf9] sm:$0xff] %vm7144, %v6917
      %7167 = vst.msk [vmem:[%s3610 + $0x109] sm:$0xff] %vm7144, %v6918
      %7168 = vst.msk [vmem:[%s3610 + $0x111] sm:$0xff] %vm7144, %v6919
      %7169 = vst.msk [vmem:[%s3610 + $0x121] sm:$0xff] %vm7144, %v6920
      %7170 = vst.msk [vmem:[%s3610 + $0x129] sm:$0xff] %vm7144, %v6921
      %7171 = vst.msk [vmem:[%s3610 + $0x139] sm:$0xff] %vm7144, %v6922
      %7172 = vst.msk [vmem:[%s3610 + $0x141] sm:$0xff] %vm7144, %v6923
      %7173 = vst.msk [vmem:[%s3610 + $0x151] sm:$0xff] %vm7144, %v6924
      %7174 = vst.msk [vmem:[%s3610 + $0x159] sm:$0xff] %vm7144, %v6925
      %7175 = vst.msk [vmem:[%s3610 + $0x169] sm:$0xff] %vm7144, %v6926
      %7176 = vst.msk [vmem:[%s3610 + $0x171] sm:$0xff] %vm7144, %v6927
      %v7177 = vld [vmem:[#allocation3] sm:$0xff]
      %v7178 = vld [vmem:[#allocation3 + $0x8] sm:$0xff]
      %v7179 = vld [vmem:[#allocation3 + $0x18] sm:$0xff]
      %v7180 = vld [vmem:[#allocation3 + $0x20] sm:$0xff]
      %v7181 = vld [vmem:[#allocation3 + $0x30] sm:$0xff]
      %v7182 = vld [vmem:[#allocation3 + $0x38] sm:$0xff]
      %v7183 = vld [vmem:[#allocation3 + $0x48] sm:$0xff]
      %v7184 = vld [vmem:[#allocation3 + $0x50] sm:$0xff]
      %v7185 = vld [vmem:[#allocation3 + $0x60] sm:$0xff]
      %v7186 = vld [vmem:[#allocation3 + $0x68] sm:$0xff]
      %v7187 = vld [vmem:[#allocation3 + $0x78] sm:$0xff]
      %v7188 = vld [vmem:[#allocation3 + $0x80] sm:$0xff]
      %v7189 = vld [vmem:[#allocation3 + $0x90] sm:$0xff]
      %v7190 = vld [vmem:[#allocation3 + $0x98] sm:$0xff]
      %v7191 = vld [vmem:[#allocation3 + $0xa8] sm:$0xff]
      %v7192 = vld [vmem:[#allocation3 + $0xb0] sm:$0xff]
      %v7193 = vld [vmem:[#allocation3 + $0xc0] sm:$0xff]
      %v7194 = vld [vmem:[#allocation3 + $0xc8] sm:$0xff]
      %v7195 = vld [vmem:[#allocation3 + $0xd8] sm:$0xff]
      %v7196 = vld [vmem:[#allocation3 + $0xe0] sm:$0xff]
      %v7197 = vld [vmem:[#allocation3 + $0xf0] sm:$0xff]
      %v7198 = vld [vmem:[#allocation3 + $0xf8] sm:$0xff]
      %v7199 = vld [vmem:[#allocation3 + $0x108] sm:$0xff]
      %v7200 = vld [vmem:[#allocation3 + $0x110] sm:$0xff]
      %v7201 = vld [vmem:[#allocation3 + $0x120] sm:$0xff]
      %v7202 = vld [vmem:[#allocation3 + $0x128] sm:$0xff]
      %v7203 = vld [vmem:[#allocation3 + $0x138] sm:$0xff]
      %v7204 = vld [vmem:[#allocation3 + $0x140] sm:$0xff]
      %v7205 = vld [vmem:[#allocation3 + $0x150] sm:$0xff]
      %v7206 = vld [vmem:[#allocation3 + $0x158] sm:$0xff]
      %v7207 = vld [vmem:[#allocation3 + $0x168] sm:$0xff]
      %v7208 = vld [vmem:[#allocation3 + $0x170] sm:$0xff]
      %v7209 = vld [vmem:[#allocation3 + $0x180] sm:$0xff]
      %v7210 = vld [vmem:[#allocation3 + $0x188] sm:$0xff]
      %v7211 = vld [vmem:[#allocation3 + $0x198] sm:$0xff]
      %v7212 = vld [vmem:[#allocation3 + $0x1a0] sm:$0xff]
      %v7213 = vld [vmem:[#allocation3 + $0x1] sm:$0xff]
      %v7214 = vld [vmem:[#allocation3 + $0x9] sm:$0xff]
      %v7215 = vld [vmem:[#allocation3 + $0x19] sm:$0xff]
      %v7216 = vld [vmem:[#allocation3 + $0x21] sm:$0xff]
      %v7217 = vld [vmem:[#allocation3 + $0x31] sm:$0xff]
      %v7218 = vld [vmem:[#allocation3 + $0x39] sm:$0xff]
      %v7219 = vld [vmem:[#allocation3 + $0x49] sm:$0xff]
      %v7220 = vld [vmem:[#allocation3 + $0x51] sm:$0xff]
      %v7221 = vld [vmem:[#allocation3 + $0x61] sm:$0xff]
      %v7222 = vld [vmem:[#allocation3 + $0x69] sm:$0xff]
      %v7223 = vld [vmem:[#allocation3 + $0x79] sm:$0xff]
      %v7224 = vld [vmem:[#allocation3 + $0x81] sm:$0xff]
      %v7225 = vld [vmem:[#allocation3 + $0x91] sm:$0xff]
      %v7226 = vld [vmem:[#allocation3 + $0x99] sm:$0xff]
      %v7227 = vld [vmem:[#allocation3 + $0xa9] sm:$0xff]
      %v7228 = vld [vmem:[#allocation3 + $0xb1] sm:$0xff]
      %v7229 = vld [vmem:[#allocation3 + $0xc1] sm:$0xff]
      %v7230 = vld [vmem:[#allocation3 + $0xc9] sm:$0xff]
      %v7231 = vld [vmem:[#allocation3 + $0xd9] sm:$0xff]
      %v7232 = vld [vmem:[#allocation3 + $0xe1] sm:$0xff]
      %v7233 = vld [vmem:[#allocation3 + $0xf1] sm:$0xff]
      %v7234 = vld [vmem:[#allocation3 + $0xf9] sm:$0xff]
      %v7235 = vld [vmem:[#allocation3 + $0x109] sm:$0xff]
      %v7236 = vld [vmem:[#allocation3 + $0x111] sm:$0xff]
      %v7237 = vld [vmem:[#allocation3 + $0x121] sm:$0xff]
      %v7238 = vld [vmem:[#allocation3 + $0x129] sm:$0xff]
      %v7239 = vld [vmem:[#allocation3 + $0x139] sm:$0xff]
      %v7240 = vld [vmem:[#allocation3 + $0x141] sm:$0xff]
      %v7241 = vld [vmem:[#allocation3 + $0x151] sm:$0xff]
      %v7242 = vld [vmem:[#allocation3 + $0x159] sm:$0xff]
      %v7243 = vld [vmem:[#allocation3 + $0x169] sm:$0xff]
      %v7244 = vld [vmem:[#allocation3 + $0x171] sm:$0xff]
      %v7245 = vld [vmem:[#allocation3 + $0x181] sm:$0xff]
      %v7246 = vld [vmem:[#allocation3 + $0x189] sm:$0xff]
      %v7247 = vld [vmem:[#allocation3 + $0x199] sm:$0xff]
      %v7248 = vld [vmem:[#allocation3 + $0x1a1] sm:$0xff]
      %v7249 = vld [vmem:[#allocation3 + $0x2] sm:$0xff]
      %v7250 = vld [vmem:[#allocation3 + $0xa] sm:$0xff]
      %v7251 = vld [vmem:[#allocation3 + $0x1a] sm:$0xff]
      %v7252 = vld [vmem:[#allocation3 + $0x22] sm:$0xff]
      %v7253 = vld [vmem:[#allocation3 + $0x32] sm:$0xff]
      %v7254 = vld [vmem:[#allocation3 + $0x3a] sm:$0xff]
      %v7255 = vld [vmem:[#allocation3 + $0x4a] sm:$0xff]
      %v7256 = vld [vmem:[#allocation3 + $0x52] sm:$0xff]
      %v7257 = vld [vmem:[#allocation3 + $0x62] sm:$0xff]
      %v7258 = vld [vmem:[#allocation3 + $0x6a] sm:$0xff]
      %v7259 = vld [vmem:[#allocation3 + $0x7a] sm:$0xff]
      %v7260 = vld [vmem:[#allocation3 + $0x82] sm:$0xff]
      %v7261 = vld [vmem:[#allocation3 + $0x92] sm:$0xff]
      %v7262 = vld [vmem:[#allocation3 + $0x9a] sm:$0xff]
      %v7263 = vld [vmem:[#allocation3 + $0xaa] sm:$0xff]
      %v7264 = vld [vmem:[#allocation3 + $0xb2] sm:$0xff]
      %v7265 = vld [vmem:[#allocation3 + $0xc2] sm:$0xff]
      %v7266 = vld [vmem:[#allocation3 + $0xca] sm:$0xff]
      %v7267 = vld [vmem:[#allocation3 + $0xda] sm:$0xff]
      %v7268 = vld [vmem:[#allocation3 + $0xe2] sm:$0xff]
      %v7269 = vld [vmem:[#allocation3 + $0xf2] sm:$0xff]
      %v7270 = vld [vmem:[#allocation3 + $0xfa] sm:$0xff]
      %v7271 = vld [vmem:[#allocation3 + $0x10a] sm:$0xff]
      %v7272 = vld [vmem:[#allocation3 + $0x112] sm:$0xff]
      %v7273 = vld [vmem:[#allocation3 + $0x122] sm:$0xff]
      %v7274 = vld [vmem:[#allocation3 + $0x12a] sm:$0xff]
      %v7275 = vld [vmem:[#allocation3 + $0x13a] sm:$0xff]
      %v7276 = vld [vmem:[#allocation3 + $0x142] sm:$0xff]
      %v7277 = vld [vmem:[#allocation3 + $0x152] sm:$0xff]
      %v7278 = vld [vmem:[#allocation3 + $0x15a] sm:$0xff]
      %v7279 = vld [vmem:[#allocation3 + $0x16a] sm:$0xff]
      %v7280 = vld [vmem:[#allocation3 + $0x172] sm:$0xff]
      %v7281 = vld [vmem:[#allocation3 + $0x182] sm:$0xff]
      %v7282 = vld [vmem:[#allocation3 + $0x18a] sm:$0xff]
      %v7283 = vld [vmem:[#allocation3 + $0x19a] sm:$0xff]
      %v7284 = vld [vmem:[#allocation3 + $0x1a2] sm:$0xff]
      %v7285 = vpack.c.bf16 %v7178, %v7177
      %v7286 = vpack.c.bf16 %v7214, %v7213
      %v7287 = vpack.c.bf16 %v7250, %v7249
      %v7288 = vpack.c.bf16 %v7180, %v7179
      %v7289 = vpack.c.bf16 %v7216, %v7215
      %v7290 = vpack.c.bf16 %v7252, %v7251
      %v7291 = vpack.c.bf16 %v7182, %v7181
      %v7292 = vpack.c.bf16 %v7218, %v7217
      %v7293 = vpack.c.bf16 %v7254, %v7253
      %v7294 = vpack.c.bf16 %v7184, %v7183
      %v7295 = vpack.c.bf16 %v7220, %v7219
      %v7296 = vpack.c.bf16 %v7256, %v7255
      %v7297 = vpack.c.bf16 %v7186, %v7185
      %v7298 = vpack.c.bf16 %v7222, %v7221
      %v7299 = vpack.c.bf16 %v7258, %v7257
      %v7300 = vpack.c.bf16 %v7188, %v7187
      %v7301 = vpack.c.bf16 %v7224, %v7223
      %v7302 = vpack.c.bf16 %v7260, %v7259
      %v7303 = vpack.c.bf16 %v7190, %v7189
      %v7304 = vpack.c.bf16 %v7226, %v7225
      %v7305 = vpack.c.bf16 %v7262, %v7261
      %v7306 = vpack.c.bf16 %v7192, %v7191
      %v7307 = vpack.c.bf16 %v7228, %v7227
      %v7308 = vpack.c.bf16 %v7264, %v7263
      %v7309 = vpack.c.bf16 %v7194, %v7193
      %v7310 = vpack.c.bf16 %v7230, %v7229
      %v7311 = vpack.c.bf16 %v7266, %v7265
      %v7312 = vpack.c.bf16 %v7196, %v7195
      %v7313 = vpack.c.bf16 %v7232, %v7231
      %v7314 = vpack.c.bf16 %v7268, %v7267
      %v7315 = vpack.c.bf16 %v7198, %v7197
      %v7316 = vpack.c.bf16 %v7234, %v7233
      %v7317 = vpack.c.bf16 %v7270, %v7269
      %v7318 = vpack.c.bf16 %v7200, %v7199
      %v7319 = vpack.c.bf16 %v7236, %v7235
      %v7320 = vpack.c.bf16 %v7272, %v7271
      %v7321 = vpack.c.bf16 %v7202, %v7201
      %v7322 = vpack.c.bf16 %v7238, %v7237
      %v7323 = vpack.c.bf16 %v7274, %v7273
      %v7324 = vpack.c.bf16 %v7204, %v7203
      %v7325 = vpack.c.bf16 %v7240, %v7239
      %v7326 = vpack.c.bf16 %v7276, %v7275
      %v7327 = vpack.c.bf16 %v7206, %v7205
      %v7328 = vpack.c.bf16 %v7242, %v7241
      %v7329 = vpack.c.bf16 %v7278, %v7277
      %v7330 = vpack.c.bf16 %v7208, %v7207
      %v7331 = vpack.c.bf16 %v7244, %v7243
      %v7332 = vpack.c.bf16 %v7280, %v7279
      %v7333 = vpack.c.bf16 %v7210, %v7209
      %v7334 = vpack.c.bf16 %v7246, %v7245
      %v7335 = vpack.c.bf16 %v7282, %v7281
      %v7336 = vpack.c.bf16 %v7212, %v7211
      %v7337 = vpack.c.bf16 %v7248, %v7247
      %v7338 = vpack.c.bf16 %v7284, %v7283
      %7339 = vmatprep.subr.bf16.mxu0 0
      %7340 = vmatpush1.bf16.msra.mxu0 %v7099
      %7341 = vmatprep.subr.bf16.mxu0 0
      %7342 = vmatpush1.bf16.msra.mxu0 %v7100
      %7343 = vmatprep.subr.bf16.mxu0 0
      %7344 = vmatpush1.bf16.msra.mxu0 %v7101
      %7345 = vmatprep.subr.bf16.mxu0 0
      %7346 = vmatpush1.bf16.msra.mxu0 0
      %7347 = vmatprep.subr.bf16.mxu0 0
      %7348 = vmatpush1.bf16.msra.mxu0 0
      %7349 = vmatprep.subr.bf16.mxu0 0
      %7350 = vmatpush1.bf16.msra.mxu0 0
      %7351 = vmatprep.subr.bf16.mxu0 0
      %7352 = vmatpush1.bf16.msra.mxu0 0
      %7353 = vmatprep.subr.bf16.mxu0 0
      %7354 = vmatpush1.bf16.msra.mxu0 0
      %7355 = vmatprep.subr.bf16.mxu0 0
      %7356 = vmatpush1.bf16.msra.mxu0 %v7102
      %7357 = vmatprep.subr.bf16.mxu0 0
      %7358 = vmatpush1.bf16.msra.mxu0 %v7103
      %7359 = vmatprep.subr.bf16.mxu0 0
      %7360 = vmatpush1.bf16.msra.mxu0 %v7104
      %7361 = vmatprep.subr.bf16.mxu0 0
      %7362 = vmatpush1.bf16.msra.mxu0 0
      %7363 = vmatprep.subr.bf16.mxu0 0
      %7364 = vmatpush1.bf16.msra.mxu0 0
      %7365 = vmatprep.subr.bf16.mxu0 0
      %7366 = vmatpush1.bf16.msra.mxu0 0
      %7367 = vmatprep.subr.bf16.mxu0 0
      %7368 = vmatpush1.bf16.msra.mxu0 0
      %7369 = vmatprep.subr.bf16.mxu0 0
      %7370 = vmatpush1.bf16.msra.mxu0 0
      %7371 = vmatprep.mubr.bf16.mxu0 %v7289
      %7372 = vmatmul.mubr.bf16.gmra.mrb[0].mxu0 %v7288
      %v7373 = vpop.f32.mrb[0].mxu0
      %v7374 = vadd.f32 0.0, %v7373
      %v7375 = vpop.f32.mrb[0].mxu0
      %v7376 = vpop.f32.mrb[0].mxu0
      %v7377 = vadd.f32 0.0, %v7376
      %v7378 = vpop.f32.mrb[0].mxu0
      %7379 = vmatprep.mubr.bf16.mxu0 %v7292
      %7380 = vmatmul.mubr.bf16.gmra.mrb[0].mxu0 %v7291
      %v7381 = vpop.f32.mrb[0].mxu0
      %v7382 = vadd.f32 0.0, %v7381
      %v7383 = vpop.f32.mrb[0].mxu0
      %v7384 = vpop.f32.mrb[0].mxu0
      %v7385 = vadd.f32 0.0, %v7384
      %v7386 = vpop.f32.mrb[0].mxu0
      %7387 = vmatprep.mubr.bf16.mxu0 %v7295
      %7388 = vmatmul.mubr.bf16.gmra.mrb[0].mxu0 %v7294
      %v7389 = vpop.f32.mrb[0].mxu0
      %v7390 = vadd.f32 0.0, %v7389
      %v7391 = vpop.f32.mrb[0].mxu0
      %v7392 = vpop.f32.mrb[0].mxu0
      %v7393 = vadd.f32 0.0, %v7392
      %v7394 = vpop.f32.mrb[0].mxu0
      %7395 = vmatprep.mubr.bf16.mxu0 %v7298
      %7396 = vmatmul.mubr.bf16.gmra.mrb[0].mxu0 %v7297
      %v7397 = vpop.f32.mrb[0].mxu0
      %v7398 = vadd.f32 0.0, %v7397
      %v7399 = vpop.f32.mrb[0].mxu0
      %v7400 = vpop.f32.mrb[0].mxu0
      %v7401 = vadd.f32 0.0, %v7400
      %v7402 = vpop.f32.mrb[0].mxu0
      %7403 = vmatprep.mubr.bf16.mxu0 %v7301
      %7404 = vmatmul.mubr.bf16.gmra.mrb[0].mxu0 %v7300
      %v7405 = vpop.f32.mrb[0].mxu0
      %v7406 = vadd.f32 0.0, %v7405
      %v7407 = vpop.f32.mrb[0].mxu0
      %v7408 = vpop.f32.mrb[0].mxu0
      %v7409 = vadd.f32 0.0, %v7408
      %v7410 = vpop.f32.mrb[0].mxu0
      %7411 = vmatprep.mubr.bf16.mxu0 %v7304
      %7412 = vmatmul.mubr.bf16.gmra.mrb[0].mxu0 %v7303
      %v7413 = vpop.f32.mrb[0].mxu0
      %v7414 = vadd.f32 0.0, %v7413
      %v7415 = vpop.f32.mrb[0].mxu0
      %v7416 = vpop.f32.mrb[0].mxu0
      %v7417 = vadd.f32 0.0, %v7416
      %v7418 = vpop.f32.mrb[0].mxu0
      %7419 = vmatprep.mubr.bf16.mxu0 %v7307
      %7420 = vmatmul.mubr.bf16.gmra.mrb[0].mxu0 %v7306
      %v7421 = vpop.f32.mrb[0].mxu0
      %v7422 = vadd.f32 0.0, %v7421
      %v7423 = vpop.f32.mrb[0].mxu0
      %v7424 = vpop.f32.mrb[0].mxu0
      %v7425 = vadd.f32 0.0, %v7424
      %v7426 = vpop.f32.mrb[0].mxu0
      %7427 = vmatprep.mubr.bf16.mxu0 %v7310
      %7428 = vmatmul.mubr.bf16.gmra.mrb[0].mxu0 %v7309
      %v7429 = vpop.f32.mrb[0].mxu0
      %v7430 = vadd.f32 0.0, %v7429
      %v7431 = vpop.f32.mrb[0].mxu0
      %v7432 = vpop.f32.mrb[0].mxu0
      %v7433 = vadd.f32 0.0, %v7432
      %v7434 = vpop.f32.mrb[0].mxu0
      %7435 = vmatprep.mubr.bf16.mxu0 %v7313
      %7436 = vmatmul.mubr.bf16.gmra.mrb[0].mxu0 %v7312
      %v7437 = vpop.f32.mrb[0].mxu0
      %v7438 = vadd.f32 0.0, %v7437
      %v7439 = vpop.f32.mrb[0].mxu0
      %v7440 = vpop.f32.mrb[0].mxu0
      %v7441 = vadd.f32 0.0, %v7440
      %v7442 = vpop.f32.mrb[0].mxu0
      %7443 = vmatprep.mubr.bf16.mxu0 %v7316
      %7444 = vmatmul.mubr.bf16.gmra.mrb[0].mxu0 %v7315
      %v7445 = vpop.f32.mrb[0].mxu0
      %v7446 = vadd.f32 0.0, %v7445
      %v7447 = vpop.f32.mrb[0].mxu0
      %v7448 = vpop.f32.mrb[0].mxu0
      %v7449 = vadd.f32 0.0, %v7448
      %v7450 = vpop.f32.mrb[0].mxu0
      %7451 = vmatprep.mubr.bf16.mxu0 %v7319
      %7452 = vmatmul.mubr.bf16.gmra.mrb[0].mxu0 %v7318
      %v7453 = vpop.f32.mrb[0].mxu0
      %v7454 = vadd.f32 0.0, %v7453
      %v7455 = vpop.f32.mrb[0].mxu0
      %v7456 = vpop.f32.mrb[0].mxu0
      %v7457 = vadd.f32 0.0, %v7456
      %v7458 = vpop.f32.mrb[0].mxu0
      %7459 = vmatprep.mubr.bf16.mxu0 %v7322
      %7460 = vmatmul.mubr.bf16.gmra.mrb[0].mxu0 %v7321
      %v7461 = vpop.f32.mrb[0].mxu0
      %v7462 = vadd.f32 0.0, %v7461
      %v7463 = vpop.f32.mrb[0].mxu0
      %v7464 = vpop.f32.mrb[0].mxu0
      %v7465 = vadd.f32 0.0, %v7464
      %v7466 = vpop.f32.mrb[0].mxu0
      %7467 = vmatprep.mubr.bf16.mxu0 %v7325
      %7468 = vmatmul.mubr.bf16.gmra.mrb[0].mxu0 %v7324
      %v7469 = vpop.f32.mrb[0].mxu0
      %v7470 = vadd.f32 0.0, %v7469
      %v7471 = vpop.f32.mrb[0].mxu0
      %v7472 = vpop.f32.mrb[0].mxu0
      %v7473 = vadd.f32 0.0, %v7472
      %v7474 = vpop.f32.mrb[0].mxu0
      %7475 = vmatprep.mubr.bf16.mxu0 %v7328
      %7476 = vmatmul.mubr.bf16.gmra.mrb[0].mxu0 %v7327
      %v7477 = vpop.f32.mrb[0].mxu0
      %v7478 = vadd.f32 0.0, %v7477
      %v7479 = vpop.f32.mrb[0].mxu0
      %v7480 = vpop.f32.mrb[0].mxu0
      %v7481 = vadd.f32 0.0, %v7480
      %v7482 = vpop.f32.mrb[0].mxu0
      %7483 = vmatprep.mubr.bf16.mxu0 %v7331
      %7484 = vmatmul.mubr.bf16.gmra.mrb[0].mxu0 %v7330
      %v7485 = vpop.f32.mrb[0].mxu0
      %v7486 = vadd.f32 0.0, %v7485
      %v7487 = vpop.f32.mrb[0].mxu0
      %v7488 = vpop.f32.mrb[0].mxu0
      %v7489 = vadd.f32 0.0, %v7488
      %v7490 = vpop.f32.mrb[0].mxu0
      %7491 = vmatprep.mubr.bf16.mxu0 %v7334
      %7492 = vmatmul.mubr.bf16.gmra.mrb[0].mxu0 %v7333
      %v7493 = vpop.f32.mrb[0].mxu0
      %v7494 = vadd.f32 0.0, %v7493
      %v7495 = vpop.f32.mrb[0].mxu0
      %v7496 = vpop.f32.mrb[0].mxu0
      %v7497 = vadd.f32 0.0, %v7496
      %v7498 = vpop.f32.mrb[0].mxu0
      %7499 = vdwg.mxu0
      %7500 = vmatprep.subr.bf16.mxu0 0
      %7501 = vmatpush1.bf16.msra.mxu0 %v7105
      %7502 = vmatprep.subr.bf16.mxu0 0
      %7503 = vmatpush1.bf16.msra.mxu0 %v7106
      %7504 = vmatprep.subr.bf16.mxu0 0
      %7505 = vmatpush1.bf16.msra.mxu0 %v7107
      %7506 = vmatprep.subr.bf16.mxu0 0
      %7507 = vmatpush1.bf16.msra.mxu0 0
      %7508 = vmatprep.subr.bf16.mxu0 0
      %7509 = vmatpush1.bf16.msra.mxu0 0
      %7510 = vmatprep.subr.bf16.mxu0 0
      %7511 = vmatpush1.bf16.msra.mxu0 0
      %7512 = vmatprep.subr.bf16.mxu0 0
      %7513 = vmatpush1.bf16.msra.mxu0 0
      %7514 = vmatprep.subr.bf16.mxu0 0
      %7515 = vmatpush1.bf16.msra.mxu0 0
      %7516 = vmatprep.subr.bf16.mxu0 0
      %7517 = vmatpush1.bf16.msra.mxu0 0
      %7518 = vmatprep.subr.bf16.mxu0 0
      %7519 = vmatpush1.bf16.msra.mxu0 0
      %7520 = vmatprep.subr.bf16.mxu0 0
      %7521 = vmatpush1.bf16.msra.mxu0 0
      %7522 = vmatprep.subr.bf16.mxu0 0
      %7523 = vmatpush1.bf16.msra.mxu0 0
      %7524 = vmatprep.subr.bf16.mxu0 0
      %7525 = vmatpush1.bf16.msra.mxu0 0
      %7526 = vmatprep.subr.bf16.mxu0 0
      %7527 = vmatpush1.bf16.msra.mxu0 0
      %7528 = vmatprep.subr.bf16.mxu0 0
      %7529 = vmatpush1.bf16.msra.mxu0 0
      %7530 = vmatprep.subr.bf16.mxu0 0
      %7531 = vmatpush1.bf16.msra.mxu0 0
      %7532 = vmatprep.mubr.bf16.mxu0 0
      %7533 = vmatmul.mubr.bf16.gmra.mrb[0].mxu0 %v7290
      %v7534 = vpop.f32.mrb[0].mxu0
      %v7535 = vadd.f32 %v7374, %v7534
      %v7536 = vpop.f32.mrb[0].mxu0
      %v7537 = vpop.f32.mrb[0].mxu0
      %v7538 = vadd.f32 %v7377, %v7537
      %v7539 = vpop.f32.mrb[0].mxu0
      %7540 = vmatprep.mubr.bf16.mxu0 0
      %7541 = vmatmul.mubr.bf16.gmra.mrb[0].mxu0 %v7293
      %v7542 = vpop.f32.mrb[0].mxu0
      %v7543 = vadd.f32 %v7382, %v7542
      %v7544 = vpop.f32.mrb[0].mxu0
      %v7545 = vpop.f32.mrb[0].mxu0
      %v7546 = vadd.f32 %v7385, %v7545
      %v7547 = vpop.f32.mrb[0].mxu0
      %7548 = vmatprep.mubr.bf16.mxu0 0
      %7549 = vmatmul.mubr.bf16.gmra.mrb[0].mxu0 %v7296
      %v7550 = vpop.f32.mrb[0].mxu0
      %v7551 = vadd.f32 %v7390, %v7550
      %v7552 = vpop.f32.mrb[0].mxu0
      %v7553 = vpop.f32.mrb[0].mxu0
      %v7554 = vadd.f32 %v7393, %v7553
      %v7555 = vpop.f32.mrb[0].mxu0
      %7556 = vmatprep.mubr.bf16.mxu0 0
      %7557 = vmatmul.mubr.bf16.gmra.mrb[0].mxu0 %v7299
      %v7558 = vpop.f32.mrb[0].mxu0
      %v7559 = vadd.f32 %v7398, %v7558
      %v7560 = vpop.f32.mrb[0].mxu0
      %v7561 = vpop.f32.mrb[0].mxu0
      %v7562 = vadd.f32 %v7401, %v7561
      %v7563 = vpop.f32.mrb[0].mxu0
      %7564 = vmatprep.mubr.bf16.mxu0 0
      %7565 = vmatmul.mubr.bf16.gmra.mrb[0].mxu0 %v7302
      %v7566 = vpop.f32.mrb[0].mxu0
      %v7567 = vadd.f32 %v7406, %v7566
      %v7568 = vpop.f32.mrb[0].mxu0
      %v7569 = vpop.f32.mrb[0].mxu0
      %v7570 = vadd.f32 %v7409, %v7569
      %v7571 = vpop.f32.mrb[0].mxu0
      %7572 = vmatprep.mubr.bf16.mxu0 0
      %7573 = vmatmul.mubr.bf16.gmra.mrb[0].mxu0 %v7305
      %v7574 = vpop.f32.mrb[0].mxu0
      %v7575 = vadd.f32 %v7414, %v7574
      %v7576 = vpop.f32.mrb[0].mxu0
      %v7577 = vpop.f32.mrb[0].mxu0
      %v7578 = vadd.f32 %v7417, %v7577
      %v7579 = vpop.f32.mrb[0].mxu0
      %7580 = vmatprep.mubr.bf16.mxu0 0
      %7581 = vmatmul.mubr.bf16.gmra.mrb[0].mxu0 %v7308
      %v7582 = vpop.f32.mrb[0].mxu0
      %v7583 = vadd.f32 %v7422, %v7582
      %v7584 = vpop.f32.mrb[0].mxu0
      %v7585 = vpop.f32.mrb[0].mxu0
      %v7586 = vadd.f32 %v7425, %v7585
      %v7587 = vpop.f32.mrb[0].mxu0
      %7588 = vmatprep.mubr.bf16.mxu0 0
      %7589 = vmatmul.mubr.bf16.gmra.mrb[0].mxu0 %v7311
      %v7590 = vpop.f32.mrb[0].mxu0
      %v7591 = vadd.f32 %v7430, %v7590
      %v7592 = vpop.f32.mrb[0].mxu0
      %v7593 = vpop.f32.mrb[0].mxu0
      %v7594 = vadd.f32 %v7433, %v7593
      %v7595 = vpop.f32.mrb[0].mxu0
      %7596 = vmatprep.mubr.bf16.mxu0 0
      %7597 = vmatmul.mubr.bf16.gmra.mrb[0].mxu0 %v7314
      %v7598 = vpop.f32.mrb[0].mxu0
      %v7599 = vadd.f32 %v7438, %v7598
      %v7600 = vpop.f32.mrb[0].mxu0
      %v7601 = vpop.f32.mrb[0].mxu0
      %v7602 = vadd.f32 %v7441, %v7601
      %v7603 = vpop.f32.mrb[0].mxu0
      %7604 = vmatprep.mubr.bf16.mxu0 0
      %7605 = vmatmul.mubr.bf16.gmra.mrb[0].mxu0 %v7317
      %v7606 = vpop.f32.mrb[0].mxu0
      %v7607 = vadd.f32 %v7446, %v7606
      %v7608 = vpop.f32.mrb[0].mxu0
      %v7609 = vpop.f32.mrb[0].mxu0
      %v7610 = vadd.f32 %v7449, %v7609
      %v7611 = vpop.f32.mrb[0].mxu0
      %7612 = vmatprep.mubr.bf16.mxu0 0
      %7613 = vmatmul.mubr.bf16.gmra.mrb[0].mxu0 %v7320
      %v7614 = vpop.f32.mrb[0].mxu0
      %v7615 = vadd.f32 %v7454, %v7614
      %v7616 = vpop.f32.mrb[0].mxu0
      %v7617 = vpop.f32.mrb[0].mxu0
      %v7618 = vadd.f32 %v7457, %v7617
      %v7619 = vpop.f32.mrb[0].mxu0
      %7620 = vmatprep.mubr.bf16.mxu0 0
      %7621 = vmatmul.mubr.bf16.gmra.mrb[0].mxu0 %v7323
      %v7622 = vpop.f32.mrb[0].mxu0
      %v7623 = vadd.f32 %v7462, %v7622
      %v7624 = vpop.f32.mrb[0].mxu0
      %v7625 = vpop.f32.mrb[0].mxu0
      %v7626 = vadd.f32 %v7465, %v7625
      %v7627 = vpop.f32.mrb[0].mxu0
      %7628 = vmatprep.mubr.bf16.mxu0 0
      %7629 = vmatmul.mubr.bf16.gmra.mrb[0].mxu0 %v7326
      %v7630 = vpop.f32.mrb[0].mxu0
      %v7631 = vadd.f32 %v7470, %v7630
      %v7632 = vpop.f32.mrb[0].mxu0
      %v7633 = vpop.f32.mrb[0].mxu0
      %v7634 = vadd.f32 %v7473, %v7633
      %v7635 = vpop.f32.mrb[0].mxu0
      %7636 = vmatprep.mubr.bf16.mxu0 0
      %7637 = vmatmul.mubr.bf16.gmra.mrb[0].mxu0 %v7329
      %v7638 = vpop.f32.mrb[0].mxu0
      %v7639 = vadd.f32 %v7478, %v7638
      %v7640 = vpop.f32.mrb[0].mxu0
      %v7641 = vpop.f32.mrb[0].mxu0
      %v7642 = vadd.f32 %v7481, %v7641
      %v7643 = vpop.f32.mrb[0].mxu0
      %7644 = vmatprep.mubr.bf16.mxu0 0
      %7645 = vmatmul.mubr.bf16.gmra.mrb[0].mxu0 %v7332
      %v7646 = vpop.f32.mrb[0].mxu0
      %v7647 = vadd.f32 %v7486, %v7646
      %v7648 = vpop.f32.mrb[0].mxu0
      %v7649 = vpop.f32.mrb[0].mxu0
      %v7650 = vadd.f32 %v7489, %v7649
      %v7651 = vpop.f32.mrb[0].mxu0
      %7652 = vmatprep.mubr.bf16.mxu0 0
      %7653 = vmatmul.mubr.bf16.gmra.mrb[0].mxu0 %v7335
      %v7654 = vpop.f32.mrb[0].mxu0
      %v7655 = vadd.f32 %v7494, %v7654
      %v7656 = vpop.f32.mrb[0].mxu0
      %v7657 = vpop.f32.mrb[0].mxu0
      %v7658 = vadd.f32 %v7497, %v7657
      %v7659 = vpop.f32.mrb[0].mxu0
      %7660 = vdwg.mxu0
      %7661 = vmatprep.subr.bf16.mxu0 0
      %7662 = vmatpush1.bf16.msra.mxu0 %v7090
      %7663 = vmatprep.subr.bf16.mxu0 0
      %7664 = vmatpush1.bf16.msra.mxu0 %v7091
      %7665 = vmatprep.subr.bf16.mxu0 0
      %7666 = vmatpush1.bf16.msra.mxu0 %v7092
      %7667 = vmatprep.subr.bf16.mxu0 0
      %7668 = vmatpush1.bf16.msra.mxu0 0
      %7669 = vmatprep.subr.bf16.mxu0 0
      %7670 = vmatpush1.bf16.msra.mxu0 0
      %7671 = vmatprep.subr.bf16.mxu0 0
      %7672 = vmatpush1.bf16.msra.mxu0 0
      %7673 = vmatprep.subr.bf16.mxu0 0
      %7674 = vmatpush1.bf16.msra.mxu0 0
      %7675 = vmatprep.subr.bf16.mxu0 0
      %7676 = vmatpush1.bf16.msra.mxu0 0
      %7677 = vmatprep.subr.bf16.mxu0 0
      %7678 = vmatpush1.bf16.msra.mxu0 %v7093
      %7679 = vmatprep.subr.bf16.mxu0 0
      %7680 = vmatpush1.bf16.msra.mxu0 %v7094
      %7681 = vmatprep.subr.bf16.mxu0 0
      %7682 = vmatpush1.bf16.msra.mxu0 %v7095
      %7683 = vmatprep.subr.bf16.mxu0 0
      %7684 = vmatpush1.bf16.msra.mxu0 0
      %7685 = vmatprep.subr.bf16.mxu0 0
      %7686 = vmatpush1.bf16.msra.mxu0 0
      %7687 = vmatprep.subr.bf16.mxu0 0
      %7688 = vmatpush1.bf16.msra.mxu0 0
      %7689 = vmatprep.subr.bf16.mxu0 0
      %7690 = vmatpush1.bf16.msra.mxu0 0
      %7691 = vmatprep.subr.bf16.mxu0 0
      %7692 = vmatpush1.bf16.msra.mxu0 0
      %7693 = vmatprep.mubr.bf16.mxu0 %v7286
      %7694 = vmatmul.mubr.bf16.gmra.mrb[0].mxu0 %v7285
      %v7695 = vpop.f32.mrb[0].mxu0
      %v7696 = vadd.f32 %v7535, %v7695
      %v7697 = vpop.f32.mrb[0].mxu0
      %v7698 = vpop.f32.mrb[0].mxu0
      %v7699 = vadd.f32 %v7538, %v7698
      %v7700 = vpop.f32.mrb[0].mxu0
      %7701 = vmatprep.mubr.bf16.mxu0 %v7289
      %7702 = vmatmul.mubr.bf16.gmra.mrb[0].mxu0 %v7288
      %v7703 = vpop.f32.mrb[0].mxu0
      %v7704 = vadd.f32 %v7543, %v7703
      %v7705 = vpop.f32.mrb[0].mxu0
      %v7706 = vpop.f32.mrb[0].mxu0
      %v7707 = vadd.f32 %v7546, %v7706
      %v7708 = vpop.f32.mrb[0].mxu0
      %7709 = vmatprep.mubr.bf16.mxu0 %v7292
      %7710 = vmatmul.mubr.bf16.gmra.mrb[0].mxu0 %v7291
      %v7711 = vpop.f32.mrb[0].mxu0
      %v7712 = vadd.f32 %v7551, %v7711
      %v7713 = vpop.f32.mrb[0].mxu0
      %v7714 = vpop.f32.mrb[0].mxu0
      %v7715 = vadd.f32 %v7554, %v7714
      %v7716 = vpop.f32.mrb[0].mxu0
      %7717 = vmatprep.mubr.bf16.mxu0 %v7295
      %7718 = vmatmul.mubr.bf16.gmra.mrb[0].mxu0 %v7294
      %v7719 = vpop.f32.mrb[0].mxu0
      %v7720 = vadd.f32 %v7559, %v7719
      %v7721 = vpop.f32.mrb[0].mxu0
      %v7722 = vpop.f32.mrb[0].mxu0
      %v7723 = vadd.f32 %v7562, %v7722
      %v7724 = vpop.f32.mrb[0].mxu0
      %7725 = vmatprep.mubr.bf16.mxu0 %v7298
      %7726 = vmatmul.mubr.bf16.gmra.mrb[0].mxu0 %v7297
      %v7727 = vpop.f32.mrb[0].mxu0
      %v7728 = vadd.f32 %v7567, %v7727
      %v7729 = vpop.f32.mrb[0].mxu0
      %v7730 = vpop.f32.mrb[0].mxu0
      %v7731 = vadd.f32 %v7570, %v7730
      %v7732 = vpop.f32.mrb[0].mxu0
      %7733 = vmatprep.mubr.bf16.mxu0 %v7301
      %7734 = vmatmul.mubr.bf16.gmra.mrb[0].mxu0 %v7300
      %v7735 = vpop.f32.mrb[0].mxu0
      %v7736 = vadd.f32 %v7575, %v7735
      %v7737 = vpop.f32.mrb[0].mxu0
      %v7738 = vpop.f32.mrb[0].mxu0
      %v7739 = vadd.f32 %v7578, %v7738
      %v7740 = vpop.f32.mrb[0].mxu0
      %7741 = vmatprep.mubr.bf16.mxu0 %v7304
      %7742 = vmatmul.mubr.bf16.gmra.mrb[0].mxu0 %v7303
      %v7743 = vpop.f32.mrb[0].mxu0
      %v7744 = vadd.f32 %v7583, %v7743
      %v7745 = vpop.f32.mrb[0].mxu0
      %v7746 = vpop.f32.mrb[0].mxu0
      %v7747 = vadd.f32 %v7586, %v7746
      %v7748 = vpop.f32.mrb[0].mxu0
      %7749 = vmatprep.mubr.bf16.mxu0 %v7307
      %7750 = vmatmul.mubr.bf16.gmra.mrb[0].mxu0 %v7306
      %v7751 = vpop.f32.mrb[0].mxu0
      %v7752 = vadd.f32 %v7591, %v7751
      %v7753 = vpop.f32.mrb[0].mxu0
      %v7754 = vpop.f32.mrb[0].mxu0
      %v7755 = vadd.f32 %v7594, %v7754
      %v7756 = vpop.f32.mrb[0].mxu0
      %7757 = vmatprep.mubr.bf16.mxu0 %v7310
      %7758 = vmatmul.mubr.bf16.gmra.mrb[0].mxu0 %v7309
      %v7759 = vpop.f32.mrb[0].mxu0
      %v7760 = vadd.f32 %v7599, %v7759
      %v7761 = vpop.f32.mrb[0].mxu0
      %v7762 = vpop.f32.mrb[0].mxu0
      %v7763 = vadd.f32 %v7602, %v7762
      %v7764 = vpop.f32.mrb[0].mxu0
      %7765 = vmatprep.mubr.bf16.mxu0 %v7313
      %7766 = vmatmul.mubr.bf16.gmra.mrb[0].mxu0 %v7312
      %v7767 = vpop.f32.mrb[0].mxu0
      %v7768 = vadd.f32 %v7607, %v7767
      %v7769 = vpop.f32.mrb[0].mxu0
      %v7770 = vpop.f32.mrb[0].mxu0
      %v7771 = vadd.f32 %v7610, %v7770
      %v7772 = vpop.f32.mrb[0].mxu0
      %7773 = vmatprep.mubr.bf16.mxu0 %v7316
      %7774 = vmatmul.mubr.bf16.gmra.mrb[0].mxu0 %v7315
      %v7775 = vpop.f32.mrb[0].mxu0
      %v7776 = vadd.f32 %v7615, %v7775
      %v7777 = vpop.f32.mrb[0].mxu0
      %v7778 = vpop.f32.mrb[0].mxu0
      %v7779 = vadd.f32 %v7618, %v7778
      %v7780 = vpop.f32.mrb[0].mxu0
      %7781 = vmatprep.mubr.bf16.mxu0 %v7319
      %7782 = vmatmul.mubr.bf16.gmra.mrb[0].mxu0 %v7318
      %v7783 = vpop.f32.mrb[0].mxu0
      %v7784 = vadd.f32 %v7623, %v7783
      %v7785 = vpop.f32.mrb[0].mxu0
      %v7786 = vpop.f32.mrb[0].mxu0
      %v7787 = vadd.f32 %v7626, %v7786
      %v7788 = vpop.f32.mrb[0].mxu0
      %7789 = vmatprep.mubr.bf16.mxu0 %v7322
      %7790 = vmatmul.mubr.bf16.gmra.mrb[0].mxu0 %v7321
      %v7791 = vpop.f32.mrb[0].mxu0
      %v7792 = vadd.f32 %v7631, %v7791
      %v7793 = vpop.f32.mrb[0].mxu0
      %v7794 = vpop.f32.mrb[0].mxu0
      %v7795 = vadd.f32 %v7634, %v7794
      %v7796 = vpop.f32.mrb[0].mxu0
      %7797 = vmatprep.mubr.bf16.mxu0 %v7325
      %7798 = vmatmul.mubr.bf16.gmra.mrb[0].mxu0 %v7324
      %v7799 = vpop.f32.mrb[0].mxu0
      %v7800 = vadd.f32 %v7639, %v7799
      %v7801 = vpop.f32.mrb[0].mxu0
      %v7802 = vpop.f32.mrb[0].mxu0
      %v7803 = vadd.f32 %v7642, %v7802
      %v7804 = vpop.f32.mrb[0].mxu0
      %7805 = vmatprep.mubr.bf16.mxu0 %v7328
      %7806 = vmatmul.mubr.bf16.gmra.mrb[0].mxu0 %v7327
      %v7807 = vpop.f32.mrb[0].mxu0
      %v7808 = vadd.f32 %v7647, %v7807
      %v7809 = vpop.f32.mrb[0].mxu0
      %v7810 = vpop.f32.mrb[0].mxu0
      %v7811 = vadd.f32 %v7650, %v7810
      %v7812 = vpop.f32.mrb[0].mxu0
      %7813 = vmatprep.mubr.bf16.mxu0 %v7331
      %7814 = vmatmul.mubr.bf16.gmra.mrb[0].mxu0 %v7330
      %v7815 = vpop.f32.mrb[0].mxu0
      %v7816 = vadd.f32 %v7655, %v7815
      %v7817 = vpop.f32.mrb[0].mxu0
      %v7818 = vpop.f32.mrb[0].mxu0
      %v7819 = vadd.f32 %v7658, %v7818
      %v7820 = vpop.f32.mrb[0].mxu0
      %7821 = vdwg.mxu0
      %7822 = vmatprep.subr.bf16.mxu0 0
      %7823 = vmatpush1.bf16.msra.mxu0 %v7096
      %7824 = vmatprep.subr.bf16.mxu0 0
      %7825 = vmatpush1.bf16.msra.mxu0 %v7097
      %7826 = vmatprep.subr.bf16.mxu0 0
      %7827 = vmatpush1.bf16.msra.mxu0 %v7098
      %7828 = vmatprep.subr.bf16.mxu0 0
      %7829 = vmatpush1.bf16.msra.mxu0 0
      %7830 = vmatprep.subr.bf16.mxu0 0
      %7831 = vmatpush1.bf16.msra.mxu0 0
      %7832 = vmatprep.subr.bf16.mxu0 0
      %7833 = vmatpush1.bf16.msra.mxu0 0
      %7834 = vmatprep.subr.bf16.mxu0 0
      %7835 = vmatpush1.bf16.msra.mxu0 0
      %7836 = vmatprep.subr.bf16.mxu0 0
      %7837 = vmatpush1.bf16.msra.mxu0 0
      %7838 = vmatprep.subr.bf16.mxu0 0
      %7839 = vmatpush1.bf16.msra.mxu0 0
      %7840 = vmatprep.subr.bf16.mxu0 0
      %7841 = vmatpush1.bf16.msra.mxu0 0
      %7842 = vmatprep.subr.bf16.mxu0 0
      %7843 = vmatpush1.bf16.msra.mxu0 0
      %7844 = vmatprep.subr.bf16.mxu0 0
      %7845 = vmatpush1.bf16.msra.mxu0 0
      %7846 = vmatprep.subr.bf16.mxu0 0
      %7847 = vmatpush1.bf16.msra.mxu0 0
      %7848 = vmatprep.subr.bf16.mxu0 0
      %7849 = vmatpush1.bf16.msra.mxu0 0
      %7850 = vmatprep.subr.bf16.mxu0 0
      %7851 = vmatpush1.bf16.msra.mxu0 0
      %7852 = vmatprep.subr.bf16.mxu0 0
      %7853 = vmatpush1.bf16.msra.mxu0 0
      %7854 = vmatprep.mubr.bf16.mxu0 0
      %7855 = vmatmul.mubr.bf16.gmra.mrb[0].mxu0 %v7287
      %v7856 = vpop.f32.mrb[0].mxu0
      %v7857 = vadd.f32 %v7696, %v7856
      %v7858 = vpop.f32.mrb[0].mxu0
      %v7859 = vpop.f32.mrb[0].mxu0
      %v7860 = vadd.f32 %v7699, %v7859
      %v7861 = vpop.f32.mrb[0].mxu0
      %7862 = vmatprep.mubr.bf16.mxu0 0
      %7863 = vmatmul.mubr.bf16.gmra.mrb[0].mxu0 %v7290
      %v7864 = vpop.f32.mrb[0].mxu0
      %v7865 = vadd.f32 %v7704, %v7864
      %v7866 = vpop.f32.mrb[0].mxu0
      %v7867 = vpop.f32.mrb[0].mxu0
      %v7868 = vadd.f32 %v7707, %v7867
      %v7869 = vpop.f32.mrb[0].mxu0
      %7870 = vmatprep.mubr.bf16.mxu0 0
      %7871 = vmatmul.mubr.bf16.gmra.mrb[0].mxu0 %v7293
      %v7872 = vpop.f32.mrb[0].mxu0
      %v7873 = vadd.f32 %v7712, %v7872
      %v7874 = vpop.f32.mrb[0].mxu0
      %v7875 = vpop.f32.mrb[0].mxu0
      %v7876 = vadd.f32 %v7715, %v7875
      %v7877 = vpop.f32.mrb[0].mxu0
      %7878 = vmatprep.mubr.bf16.mxu0 0
      %7879 = vmatmul.mubr.bf16.gmra.mrb[0].mxu0 %v7296
      %v7880 = vpop.f32.mrb[0].mxu0
      %v7881 = vadd.f32 %v7720, %v7880
      %v7882 = vpop.f32.mrb[0].mxu0
      %v7883 = vpop.f32.mrb[0].mxu0
      %v7884 = vadd.f32 %v7723, %v7883
      %v7885 = vpop.f32.mrb[0].mxu0
      %7886 = vmatprep.mubr.bf16.mxu0 0
      %7887 = vmatmul.mubr.bf16.gmra.mrb[0].mxu0 %v7299
      %v7888 = vpop.f32.mrb[0].mxu0
      %v7889 = vadd.f32 %v7728, %v7888
      %v7890 = vpop.f32.mrb[0].mxu0
      %v7891 = vpop.f32.mrb[0].mxu0
      %v7892 = vadd.f32 %v7731, %v7891
      %v7893 = vpop.f32.mrb[0].mxu0
      %7894 = vmatprep.mubr.bf16.mxu0 0
      %7895 = vmatmul.mubr.bf16.gmra.mrb[0].mxu0 %v7302
      %v7896 = vpop.f32.mrb[0].mxu0
      %v7897 = vadd.f32 %v7736, %v7896
      %v7898 = vpop.f32.mrb[0].mxu0
      %v7899 = vpop.f32.mrb[0].mxu0
      %v7900 = vadd.f32 %v7739, %v7899
      %v7901 = vpop.f32.mrb[0].mxu0
      %7902 = vmatprep.mubr.bf16.mxu0 0
      %7903 = vmatmul.mubr.bf16.gmra.mrb[0].mxu0 %v7305
      %v7904 = vpop.f32.mrb[0].mxu0
      %v7905 = vadd.f32 %v7744, %v7904
      %v7906 = vpop.f32.mrb[0].mxu0
      %v7907 = vpop.f32.mrb[0].mxu0
      %v7908 = vadd.f32 %v7747, %v7907
      %v7909 = vpop.f32.mrb[0].mxu0
      %7910 = vmatprep.mubr.bf16.mxu0 0
      %7911 = vmatmul.mubr.bf16.gmra.mrb[0].mxu0 %v7308
      %v7912 = vpop.f32.mrb[0].mxu0
      %v7913 = vadd.f32 %v7752, %v7912
      %v7914 = vpop.f32.mrb[0].mxu0
      %v7915 = vpop.f32.mrb[0].mxu0
      %v7916 = vadd.f32 %v7755, %v7915
      %v7917 = vpop.f32.mrb[0].mxu0
      %7918 = vmatprep.mubr.bf16.mxu0 0
      %7919 = vmatmul.mubr.bf16.gmra.mrb[0].mxu0 %v7311
      %v7920 = vpop.f32.mrb[0].mxu0
      %v7921 = vadd.f32 %v7760, %v7920
      %v7922 = vpop.f32.mrb[0].mxu0
      %v7923 = vpop.f32.mrb[0].mxu0
      %v7924 = vadd.f32 %v7763, %v7923
      %v7925 = vpop.f32.mrb[0].mxu0
      %7926 = vmatprep.mubr.bf16.mxu0 0
      %7927 = vmatmul.mubr.bf16.gmra.mrb[0].mxu0 %v7314
      %v7928 = vpop.f32.mrb[0].mxu0
      %v7929 = vadd.f32 %v7768, %v7928
      %v7930 = vpop.f32.mrb[0].mxu0
      %v7931 = vpop.f32.mrb[0].mxu0
      %v7932 = vadd.f32 %v7771, %v7931
      %v7933 = vpop.f32.mrb[0].mxu0
      %7934 = vmatprep.mubr.bf16.mxu0 0
      %7935 = vmatmul.mubr.bf16.gmra.mrb[0].mxu0 %v7317
      %v7936 = vpop.f32.mrb[0].mxu0
      %v7937 = vadd.f32 %v7776, %v7936
      %v7938 = vpop.f32.mrb[0].mxu0
      %v7939 = vpop.f32.mrb[0].mxu0
      %v7940 = vadd.f32 %v7779, %v7939
      %v7941 = vpop.f32.mrb[0].mxu0
      %7942 = vmatprep.mubr.bf16.mxu0 0
      %7943 = vmatmul.mubr.bf16.gmra.mrb[0].mxu0 %v7320
      %v7944 = vpop.f32.mrb[0].mxu0
      %v7945 = vadd.f32 %v7784, %v7944
      %v7946 = vpop.f32.mrb[0].mxu0
      %v7947 = vpop.f32.mrb[0].mxu0
      %v7948 = vadd.f32 %v7787, %v7947
      %v7949 = vpop.f32.mrb[0].mxu0
      %7950 = vmatprep.mubr.bf16.mxu0 0
      %7951 = vmatmul.mubr.bf16.gmra.mrb[0].mxu0 %v7323
      %v7952 = vpop.f32.mrb[0].mxu0
      %v7953 = vadd.f32 %v7792, %v7952
      %v7954 = vpop.f32.mrb[0].mxu0
      %v7955 = vpop.f32.mrb[0].mxu0
      %v7956 = vadd.f32 %v7795, %v7955
      %v7957 = vpop.f32.mrb[0].mxu0
      %7958 = vmatprep.mubr.bf16.mxu0 0
      %7959 = vmatmul.mubr.bf16.gmra.mrb[0].mxu0 %v7326
      %v7960 = vpop.f32.mrb[0].mxu0
      %v7961 = vadd.f32 %v7800, %v7960
      %v7962 = vpop.f32.mrb[0].mxu0
      %v7963 = vpop.f32.mrb[0].mxu0
      %v7964 = vadd.f32 %v7803, %v7963
      %v7965 = vpop.f32.mrb[0].mxu0
      %7966 = vmatprep.mubr.bf16.mxu0 0
      %7967 = vmatmul.mubr.bf16.gmra.mrb[0].mxu0 %v7329
      %v7968 = vpop.f32.mrb[0].mxu0
      %v7969 = vadd.f32 %v7808, %v7968
      %v7970 = vpop.f32.mrb[0].mxu0
      %v7971 = vpop.f32.mrb[0].mxu0
      %v7972 = vadd.f32 %v7811, %v7971
      %v7973 = vpop.f32.mrb[0].mxu0
      %7974 = vmatprep.mubr.bf16.mxu0 0
      %7975 = vmatmul.mubr.bf16.gmra.mrb[0].mxu0 %v7332
      %v7976 = vpop.f32.mrb[0].mxu0
      %v7977 = vadd.f32 %v7816, %v7976
      %v7978 = vpop.f32.mrb[0].mxu0
      %v7979 = vpop.f32.mrb[0].mxu0
      %v7980 = vadd.f32 %v7819, %v7979
      %v7981 = vpop.f32.mrb[0].mxu0
      %7982 = vdwg.mxu0
      %7983 = vmatprep.subr.bf16.mxu0 0
      %7984 = vmatpush1.bf16.msra.mxu0 %v7108
      %7985 = vmatprep.subr.bf16.mxu0 0
      %7986 = vmatpush1.bf16.msra.mxu0 %v7109
      %7987 = vmatprep.subr.bf16.mxu0 0
      %7988 = vmatpush1.bf16.msra.mxu0 %v7110
      %7989 = vmatprep.subr.bf16.mxu0 0
      %7990 = vmatpush1.bf16.msra.mxu0 0
      %7991 = vmatprep.subr.bf16.mxu0 0
      %7992 = vmatpush1.bf16.msra.mxu0 0
      %7993 = vmatprep.subr.bf16.mxu0 0
      %7994 = vmatpush1.bf16.msra.mxu0 0
      %7995 = vmatprep.subr.bf16.mxu0 0
      %7996 = vmatpush1.bf16.msra.mxu0 0
      %7997 = vmatprep.subr.bf16.mxu0 0
      %7998 = vmatpush1.bf16.msra.mxu0 0
      %7999 = vmatprep.subr.bf16.mxu0 0
      %8000 = vmatpush1.bf16.msra.mxu0 %v7111
      %8001 = vmatprep.subr.bf16.mxu0 0
      %8002 = vmatpush1.bf16.msra.mxu0 %v7112
      %8003 = vmatprep.subr.bf16.mxu0 0
      %8004 = vmatpush1.bf16.msra.mxu0 %v7113
      %8005 = vmatprep.subr.bf16.mxu0 0
      %8006 = vmatpush1.bf16.msra.mxu0 0
      %8007 = vmatprep.subr.bf16.mxu0 0
      %8008 = vmatpush1.bf16.msra.mxu0 0
      %8009 = vmatprep.subr.bf16.mxu0 0
      %8010 = vmatpush1.bf16.msra.mxu0 0
      %8011 = vmatprep.subr.bf16.mxu0 0
      %8012 = vmatpush1.bf16.msra.mxu0 0
      %8013 = vmatprep.subr.bf16.mxu0 0
      %8014 = vmatpush1.bf16.msra.mxu0 0
      %8015 = vmatprep.mubr.bf16.mxu0 %v7292
      %8016 = vmatmul.mubr.bf16.gmra.mrb[0].mxu0 %v7291
      %v8017 = vpop.f32.mrb[0].mxu0
      %v8018 = vadd.f32 0.0, %v8017
      %v8019 = vpop.f32.mrb[0].mxu0
      %v8020 = vpop.f32.mrb[0].mxu0
      %v8021 = vadd.f32 0.0, %v8020
      %v8022 = vpop.f32.mrb[0].mxu0
      %8023 = vmatprep.mubr.bf16.mxu0 %v7295
      %8024 = vmatmul.mubr.bf16.gmra.mrb[0].mxu0 %v7294
      %v8025 = vpop.f32.mrb[0].mxu0
      %v8026 = vadd.f32 0.0, %v8025
      %v8027 = vpop.f32.mrb[0].mxu0
      %v8028 = vpop.f32.mrb[0].mxu0
      %v8029 = vadd.f32 0.0, %v8028
      %v8030 = vpop.f32.mrb[0].mxu0
      %8031 = vmatprep.mubr.bf16.mxu0 %v7298
      %8032 = vmatmul.mubr.bf16.gmra.mrb[0].mxu0 %v7297
      %v8033 = vpop.f32.mrb[0].mxu0
      %v8034 = vadd.f32 0.0, %v8033
      %v8035 = vpop.f32.mrb[0].mxu0
      %v8036 = vpop.f32.mrb[0].mxu0
      %v8037 = vadd.f32 0.0, %v8036
      %v8038 = vpop.f32.mrb[0].mxu0
      %8039 = vmatprep.mubr.bf16.mxu0 %v7301
      %8040 = vmatmul.mubr.bf16.gmra.mrb[0].mxu0 %v7300
      %v8041 = vpop.f32.mrb[0].mxu0
      %v8042 = vadd.f32 0.0, %v8041
      %v8043 = vpop.f32.mrb[0].mxu0
      %v8044 = vpop.f32.mrb[0].mxu0
      %v8045 = vadd.f32 0.0, %v8044
      %v8046 = vpop.f32.mrb[0].mxu0
      %8047 = vmatprep.mubr.bf16.mxu0 %v7304
      %8048 = vmatmul.mubr.bf16.gmra.mrb[0].mxu0 %v7303
      %v8049 = vpop.f32.mrb[0].mxu0
      %v8050 = vadd.f32 0.0, %v8049
      %v8051 = vpop.f32.mrb[0].mxu0
      %v8052 = vpop.f32.mrb[0].mxu0
      %v8053 = vadd.f32 0.0, %v8052
      %v8054 = vpop.f32.mrb[0].mxu0
      %8055 = vmatprep.mubr.bf16.mxu0 %v7307
      %8056 = vmatmul.mubr.bf16.gmra.mrb[0].mxu0 %v7306
      %v8057 = vpop.f32.mrb[0].mxu0
      %v8058 = vadd.f32 0.0, %v8057
      %v8059 = vpop.f32.mrb[0].mxu0
      %v8060 = vpop.f32.mrb[0].mxu0
      %v8061 = vadd.f32 0.0, %v8060
      %v8062 = vpop.f32.mrb[0].mxu0
      %8063 = vmatprep.mubr.bf16.mxu0 %v7310
      %8064 = vmatmul.mubr.bf16.gmra.mrb[0].mxu0 %v7309
      %v8065 = vpop.f32.mrb[0].mxu0
      %v8066 = vadd.f32 0.0, %v8065
      %v8067 = vpop.f32.mrb[0].mxu0
      %v8068 = vpop.f32.mrb[0].mxu0
      %v8069 = vadd.f32 0.0, %v8068
      %v8070 = vpop.f32.mrb[0].mxu0
      %8071 = vmatprep.mubr.bf16.mxu0 %v7313
      %8072 = vmatmul.mubr.bf16.gmra.mrb[0].mxu0 %v7312
      %v8073 = vpop.f32.mrb[0].mxu0
      %v8074 = vadd.f32 0.0, %v8073
      %v8075 = vpop.f32.mrb[0].mxu0
      %v8076 = vpop.f32.mrb[0].mxu0
      %v8077 = vadd.f32 0.0, %v8076
      %v8078 = vpop.f32.mrb[0].mxu0
      %8079 = vmatprep.mubr.bf16.mxu0 %v7316
      %8080 = vmatmul.mubr.bf16.gmra.mrb[0].mxu0 %v7315
      %v8081 = vpop.f32.mrb[0].mxu0
      %v8082 = vadd.f32 0.0, %v8081
      %v8083 = vpop.f32.mrb[0].mxu0
      %v8084 = vpop.f32.mrb[0].mxu0
      %v8085 = vadd.f32 0.0, %v8084
      %v8086 = vpop.f32.mrb[0].mxu0
      %8087 = vmatprep.mubr.bf16.mxu0 %v7319
      %8088 = vmatmul.mubr.bf16.gmra.mrb[0].mxu0 %v7318
      %v8089 = vpop.f32.mrb[0].mxu0
      %v8090 = vadd.f32 0.0, %v8089
      %v8091 = vpop.f32.mrb[0].mxu0
      %v8092 = vpop.f32.mrb[0].mxu0
      %v8093 = vadd.f32 0.0, %v8092
      %v8094 = vpop.f32.mrb[0].mxu0
      %8095 = vmatprep.mubr.bf16.mxu0 %v7322
      %8096 = vmatmul.mubr.bf16.gmra.mrb[0].mxu0 %v7321
      %v8097 = vpop.f32.mrb[0].mxu0
      %v8098 = vadd.f32 0.0, %v8097
      %v8099 = vpop.f32.mrb[0].mxu0
      %v8100 = vpop.f32.mrb[0].mxu0
      %v8101 = vadd.f32 0.0, %v8100
      %v8102 = vpop.f32.mrb[0].mxu0
      %8103 = vmatprep.mubr.bf16.mxu0 %v7325
      %8104 = vmatmul.mubr.bf16.gmra.mrb[0].mxu0 %v7324
      %v8105 = vpop.f32.mrb[0].mxu0
      %v8106 = vadd.f32 0.0, %v8105
      %v8107 = vpop.f32.mrb[0].mxu0
      %v8108 = vpop.f32.mrb[0].mxu0
      %v8109 = vadd.f32 0.0, %v8108
      %v8110 = vpop.f32.mrb[0].mxu0
      %8111 = vmatprep.mubr.bf16.mxu0 %v7328
      %8112 = vmatmul.mubr.bf16.gmra.mrb[0].mxu0 %v7327
      %v8113 = vpop.f32.mrb[0].mxu0
      %v8114 = vadd.f32 0.0, %v8113
      %v8115 = vpop.f32.mrb[0].mxu0
      %v8116 = vpop.f32.mrb[0].mxu0
      %v8117 = vadd.f32 0.0, %v8116
      %v8118 = vpop.f32.mrb[0].mxu0
      %8119 = vmatprep.mubr.bf16.mxu0 %v7331
      %8120 = vmatmul.mubr.bf16.gmra.mrb[0].mxu0 %v7330
      %v8121 = vpop.f32.mrb[0].mxu0
      %v8122 = vadd.f32 0.0, %v8121
      %v8123 = vpop.f32.mrb[0].mxu0
      %v8124 = vpop.f32.mrb[0].mxu0
      %v8125 = vadd.f32 0.0, %v8124
      %v8126 = vpop.f32.mrb[0].mxu0
      %8127 = vmatprep.mubr.bf16.mxu0 %v7334
      %8128 = vmatmul.mubr.bf16.gmra.mrb[0].mxu0 %v7333
      %v8129 = vpop.f32.mrb[0].mxu0
      %v8130 = vadd.f32 0.0, %v8129
      %v8131 = vpop.f32.mrb[0].mxu0
      %v8132 = vpop.f32.mrb[0].mxu0
      %v8133 = vadd.f32 0.0, %v8132
      %v8134 = vpop.f32.mrb[0].mxu0
      %8135 = vmatprep.mubr.bf16.mxu0 %v7337
      %8136 = vmatmul.mubr.bf16.gmra.mrb[0].mxu0 %v7336
      %v8137 = vpop.f32.mrb[0].mxu0
      %v8138 = vadd.f32 0.0, %v8137
      %v8139 = vpop.f32.mrb[0].mxu0
      %v8140 = vpop.f32.mrb[0].mxu0
      %v8141 = vadd.f32 0.0, %v8140
      %v8142 = vpop.f32.mrb[0].mxu0
      %8143 = vdwg.mxu0
      %8144 = vmatprep.subr.bf16.mxu0 0
      %8145 = vmatpush1.bf16.msra.mxu0 %v7114
      %8146 = vmatprep.subr.bf16.mxu0 0
      %8147 = vmatpush1.bf16.msra.mxu0 %v7115
      %8148 = vmatprep.subr.bf16.mxu0 0
      %8149 = vmatpush1.bf16.msra.mxu0 %v7116
      %8150 = vmatprep.subr.bf16.mxu0 0
      %8151 = vmatpush1.bf16.msra.mxu0 0
      %8152 = vmatprep.subr.bf16.mxu0 0
      %8153 = vmatpush1.bf16.msra.mxu0 0
      %8154 = vmatprep.subr.bf16.mxu0 0
      %8155 = vmatpush1.bf16.msra.mxu0 0
      %8156 = vmatprep.subr.bf16.mxu0 0
      %8157 = vmatpush1.bf16.msra.mxu0 0
      %8158 = vmatprep.subr.bf16.mxu0 0
      %8159 = vmatpush1.bf16.msra.mxu0 0
      %8160 = vmatprep.subr.bf16.mxu0 0
      %8161 = vmatpush1.bf16.msra.mxu0 0
      %8162 = vmatprep.subr.bf16.mxu0 0
      %8163 = vmatpush1.bf16.msra.mxu0 0
      %8164 = vmatprep.subr.bf16.mxu0 0
      %8165 = vmatpush1.bf16.msra.mxu0 0
      %8166 = vmatprep.subr.bf16.mxu0 0
      %8167 = vmatpush1.bf16.msra.mxu0 0
      %8168 = vmatprep.subr.bf16.mxu0 0
      %8169 = vmatpush1.bf16.msra.mxu0 0
      %8170 = vmatprep.subr.bf16.mxu0 0
      %8171 = vmatpush1.bf16.msra.mxu0 0
      %8172 = vmatprep.subr.bf16.mxu0 0
      %8173 = vmatpush1.bf16.msra.mxu0 0
      %8174 = vmatprep.subr.bf16.mxu0 0
      %8175 = vmatpush1.bf16.msra.mxu0 0
      %8176 = vmatprep.mubr.bf16.mxu0 0
      %8177 = vmatmul.mubr.bf16.gmra.mrb[0].mxu0 %v7293
      %v8178 = vpop.f32.mrb[0].mxu0
      %v8179 = vadd.f32 %v8018, %v8178
      %v8180 = vpop.f32.mrb[0].mxu0
      %v8181 = vpop.f32.mrb[0].mxu0
      %v8182 = vadd.f32 %v8021, %v8181
      %v8183 = vpop.f32.mrb[0].mxu0
      %8184 = vmatprep.mubr.bf16.mxu0 0
      %8185 = vmatmul.mubr.bf16.gmra.mrb[0].mxu0 %v7296
      %v8186 = vpop.f32.mrb[0].mxu0
      %v8187 = vadd.f32 %v8026, %v8186
      %v8188 = vpop.f32.mrb[0].mxu0
      %v8189 = vpop.f32.mrb[0].mxu0
      %v8190 = vadd.f32 %v8029, %v8189
      %v8191 = vpop.f32.mrb[0].mxu0
      %8192 = vmatprep.mubr.bf16.mxu0 0
      %8193 = vmatmul.mubr.bf16.gmra.mrb[0].mxu0 %v7299
      %v8194 = vpop.f32.mrb[0].mxu0
      %v8195 = vadd.f32 %v8034, %v8194
      %v8196 = vpop.f32.mrb[0].mxu0
      %v8197 = vpop.f32.mrb[0].mxu0
      %v8198 = vadd.f32 %v8037, %v8197
      %v8199 = vpop.f32.mrb[0].mxu0
      %8200 = vmatprep.mubr.bf16.mxu0 0
      %8201 = vmatmul.mubr.bf16.gmra.mrb[0].mxu0 %v7302
      %v8202 = vpop.f32.mrb[0].mxu0
      %v8203 = vadd.f32 %v8042, %v8202
      %v8204 = vpop.f32.mrb[0].mxu0
      %v8205 = vpop.f32.mrb[0].mxu0
      %v8206 = vadd.f32 %v8045, %v8205
      %v8207 = vpop.f32.mrb[0].mxu0
      %8208 = vmatprep.mubr.bf16.mxu0 0
      %8209 = vmatmul.mubr.bf16.gmra.mrb[0].mxu0 %v7305
      %v8210 = vpop.f32.mrb[0].mxu0
      %v8211 = vadd.f32 %v8050, %v8210
      %v8212 = vpop.f32.mrb[0].mxu0
      %v8213 = vpop.f32.mrb[0].mxu0
      %v8214 = vadd.f32 %v8053, %v8213
      %v8215 = vpop.f32.mrb[0].mxu0
      %8216 = vmatprep.mubr.bf16.mxu0 0
      %8217 = vmatmul.mubr.bf16.gmra.mrb[0].mxu0 %v7308
      %v8218 = vpop.f32.mrb[0].mxu0
      %v8219 = vadd.f32 %v8058, %v8218
      %v8220 = vpop.f32.mrb[0].mxu0
      %v8221 = vpop.f32.mrb[0].mxu0
      %v8222 = vadd.f32 %v8061, %v8221
      %v8223 = vpop.f32.mrb[0].mxu0
      %8224 = vmatprep.mubr.bf16.mxu0 0
      %8225 = vmatmul.mubr.bf16.gmra.mrb[0].mxu0 %v7311
      %v8226 = vpop.f32.mrb[0].mxu0
      %v8227 = vadd.f32 %v8066, %v8226
      %v8228 = vpop.f32.mrb[0].mxu0
      %v8229 = vpop.f32.mrb[0].mxu0
      %v8230 = vadd.f32 %v8069, %v8229
      %v8231 = vpop.f32.mrb[0].mxu0
      %8232 = vmatprep.mubr.bf16.mxu0 0
      %8233 = vmatmul.mubr.bf16.gmra.mrb[0].mxu0 %v7314
      %v8234 = vpop.f32.mrb[0].mxu0
      %v8235 = vadd.f32 %v8074, %v8234
      %v8236 = vpop.f32.mrb[0].mxu0
      %v8237 = vpop.f32.mrb[0].mxu0
      %v8238 = vadd.f32 %v8077, %v8237
      %v8239 = vpop.f32.mrb[0].mxu0
      %8240 = vmatprep.mubr.bf16.mxu0 0
      %8241 = vmatmul.mubr.bf16.gmra.mrb[0].mxu0 %v7317
      %v8242 = vpop.f32.mrb[0].mxu0
      %v8243 = vadd.f32 %v8082, %v8242
      %v8244 = vpop.f32.mrb[0].mxu0
      %v8245 = vpop.f32.mrb[0].mxu0
      %v8246 = vadd.f32 %v8085, %v8245
      %v8247 = vpop.f32.mrb[0].mxu0
      %8248 = vmatprep.mubr.bf16.mxu0 0
      %8249 = vmatmul.mubr.bf16.gmra.mrb[0].mxu0 %v7320
      %v8250 = vpop.f32.mrb[0].mxu0
      %v8251 = vadd.f32 %v8090, %v8250
      %v8252 = vpop.f32.mrb[0].mxu0
      %v8253 = vpop.f32.mrb[0].mxu0
      %v8254 = vadd.f32 %v8093, %v8253
      %v8255 = vpop.f32.mrb[0].mxu0
      %8256 = vmatprep.mubr.bf16.mxu0 0
      %8257 = vmatmul.mubr.bf16.gmra.mrb[0].mxu0 %v7323
      %v8258 = vpop.f32.mrb[0].mxu0
      %v8259 = vadd.f32 %v8098, %v8258
      %v8260 = vpop.f32.mrb[0].mxu0
      %v8261 = vpop.f32.mrb[0].mxu0
      %v8262 = vadd.f32 %v8101, %v8261
      %v8263 = vpop.f32.mrb[0].mxu0
      %8264 = vmatprep.mubr.bf16.mxu0 0
      %8265 = vmatmul.mubr.bf16.gmra.mrb[0].mxu0 %v7326
      %v8266 = vpop.f32.mrb[0].mxu0
      %v8267 = vadd.f32 %v8106, %v8266
      %v8268 = vpop.f32.mrb[0].mxu0
      %v8269 = vpop.f32.mrb[0].mxu0
      %v8270 = vadd.f32 %v8109, %v8269
      %v8271 = vpop.f32.mrb[0].mxu0
      %8272 = vmatprep.mubr.bf16.mxu0 0
      %8273 = vmatmul.mubr.bf16.gmra.mrb[0].mxu0 %v7329
      %v8274 = vpop.f32.mrb[0].mxu0
      %v8275 = vadd.f32 %v8114, %v8274
      %v8276 = vpop.f32.mrb[0].mxu0
      %v8277 = vpop.f32.mrb[0].mxu0
      %v8278 = vadd.f32 %v8117, %v8277
      %v8279 = vpop.f32.mrb[0].mxu0
      %8280 = vmatprep.mubr.bf16.mxu0 0
      %8281 = vmatmul.mubr.bf16.gmra.mrb[0].mxu0 %v7332
      %v8282 = vpop.f32.mrb[0].mxu0
      %v8283 = vadd.f32 %v8122, %v8282
      %v8284 = vpop.f32.mrb[0].mxu0
      %v8285 = vpop.f32.mrb[0].mxu0
      %v8286 = vadd.f32 %v8125, %v8285
      %v8287 = vpop.f32.mrb[0].mxu0
      %8288 = vmatprep.mubr.bf16.mxu0 0
      %8289 = vmatmul.mubr.bf16.gmra.mrb[0].mxu0 %v7335
      %v8290 = vpop.f32.mrb[0].mxu0
      %v8291 = vadd.f32 %v8130, %v8290
      %v8292 = vpop.f32.mrb[0].mxu0
      %v8293 = vpop.f32.mrb[0].mxu0
      %v8294 = vadd.f32 %v8133, %v8293
      %v8295 = vpop.f32.mrb[0].mxu0
      %8296 = vmatprep.mubr.bf16.mxu0 0
      %8297 = vmatmul.mubr.bf16.gmra.mrb[0].mxu0 %v7338
      %v8298 = vpop.f32.mrb[0].mxu0
      %v8299 = vadd.f32 %v8138, %v8298
      %v8300 = vpop.f32.mrb[0].mxu0
      %v8301 = vpop.f32.mrb[0].mxu0
      %v8302 = vadd.f32 %v8141, %v8301
      %v8303 = vpop.f32.mrb[0].mxu0
      %8304 = vdwg.mxu0
      %v8305 = vadd.f32 %v7857, %v8179
      %v8306 = vadd.f32 %v7860, %v8182
      %v8307 = vadd.f32 %v7865, %v8187
      %v8308 = vadd.f32 %v7868, %v8190
      %v8309 = vadd.f32 %v7873, %v8195
      %v8310 = vadd.f32 %v7876, %v8198
      %v8311 = vadd.f32 %v7881, %v8203
      %v8312 = vadd.f32 %v7884, %v8206
      %v8313 = vadd.f32 %v7889, %v8211
      %v8314 = vadd.f32 %v7892, %v8214
      %v8315 = vadd.f32 %v7897, %v8219
      %v8316 = vadd.f32 %v7900, %v8222
      %v8317 = vadd.f32 %v7905, %v8227
      %v8318 = vadd.f32 %v7908, %v8230
      %v8319 = vadd.f32 %v7913, %v8235
      %v8320 = vadd.f32 %v7916, %v8238
      %v8321 = vadd.f32 %v7921, %v8243
      %v8322 = vadd.f32 %v7924, %v8246
      %v8323 = vadd.f32 %v7929, %v8251
      %v8324 = vadd.f32 %v7932, %v8254
      %v8325 = vadd.f32 %v7937, %v8259
      %v8326 = vadd.f32 %v7940, %v8262
      %v8327 = vadd.f32 %v7945, %v8267
      %v8328 = vadd.f32 %v7948, %v8270
      %v8329 = vadd.f32 %v7953, %v8275
      %v8330 = vadd.f32 %v7956, %v8278
      %v8331 = vadd.f32 %v7961, %v8283
      %v8332 = vadd.f32 %v7964, %v8286
      %v8333 = vadd.f32 %v7969, %v8291
      %v8334 = vadd.f32 %v7972, %v8294
      %v8335 = vadd.f32 %v7977, %v8299
      %v8336 = vadd.f32 %v7980, %v8302
      %v8337 = vld [vmem:[%s8] sm:$0x1]
      %v8338 = vlaneseq
      %v8339 = vshrl.u32 %v8338, 7
      %v8340 = vsub.s32 0, %v8339
      %v8341 = vrot.slane %v8337, %v8340
      %v8342 = vmul.f32 %v8305, %v8341
      %v8343 = vmul.f32 %v8306, %v8341
      %v8344 = vmul.f32 %v8307, %v8341
      %v8345 = vmul.f32 %v8308, %v8341
      %v8346 = vmul.f32 %v8309, %v8341
      %v8347 = vmul.f32 %v8310, %v8341
      %v8348 = vmul.f32 %v8311, %v8341
      %v8349 = vmul.f32 %v8312, %v8341
      %v8350 = vmul.f32 %v8313, %v8341
      %v8351 = vmul.f32 %v8314, %v8341
      %v8352 = vmul.f32 %v8315, %v8341
      %v8353 = vmul.f32 %v8316, %v8341
      %v8354 = vmul.f32 %v8317, %v8341
      %v8355 = vmul.f32 %v8318, %v8341
      %v8356 = vmul.f32 %v8319, %v8341
      %v8357 = vmul.f32 %v8320, %v8341
      %v8358 = vmul.f32 %v8321, %v8341
      %v8359 = vmul.f32 %v8322, %v8341
      %v8360 = vmul.f32 %v8323, %v8341
      %v8361 = vmul.f32 %v8324, %v8341
      %v8362 = vmul.f32 %v8325, %v8341
      %v8363 = vmul.f32 %v8326, %v8341
      %v8364 = vmul.f32 %v8327, %v8341
      %v8365 = vmul.f32 %v8328, %v8341
      %v8366 = vmul.f32 %v8329, %v8341
      %v8367 = vmul.f32 %v8330, %v8341
      %v8368 = vmul.f32 %v8331, %v8341
      %v8369 = vmul.f32 %v8332, %v8341
      %v8370 = vmul.f32 %v8333, %v8341
      %v8371 = vmul.f32 %v8334, %v8341
      %v8372 = vmul.f32 %v8335, %v8341
      %v8373 = vmul.f32 %v8336, %v8341
      %v8374 = vld [vmem:[%s8 + $0x1] sm:$0x1]
      %v8375 = vlaneseq
      %v8376 = vshrl.u32 %v8375, 7
      %v8377 = vsub.s32 0, %v8376
      %v8378 = vrot.slane %v8374, %v8377
      %v8379 = vadd.f32 %v8342, %v8378
      %v8380 = vadd.f32 %v8343, %v8378
      %v8381 = vadd.f32 %v8344, %v8378
      %v8382 = vadd.f32 %v8345, %v8378
      %v8383 = vadd.f32 %v8346, %v8378
      %v8384 = vadd.f32 %v8347, %v8378
      %v8385 = vadd.f32 %v8348, %v8378
      %v8386 = vadd.f32 %v8349, %v8378
      %v8387 = vadd.f32 %v8350, %v8378
      %v8388 = vadd.f32 %v8351, %v8378
      %v8389 = vadd.f32 %v8352, %v8378
      %v8390 = vadd.f32 %v8353, %v8378
      %v8391 = vadd.f32 %v8354, %v8378
      %v8392 = vadd.f32 %v8355, %v8378
      %v8393 = vadd.f32 %v8356, %v8378
      %v8394 = vadd.f32 %v8357, %v8378
      %v8395 = vadd.f32 %v8358, %v8378
      %v8396 = vadd.f32 %v8359, %v8378
      %v8397 = vadd.f32 %v8360, %v8378
      %v8398 = vadd.f32 %v8361, %v8378
      %v8399 = vadd.f32 %v8362, %v8378
      %v8400 = vadd.f32 %v8363, %v8378
      %v8401 = vadd.f32 %v8364, %v8378
      %v8402 = vadd.f32 %v8365, %v8378
      %v8403 = vadd.f32 %v8366, %v8378
      %v8404 = vadd.f32 %v8367, %v8378
      %v8405 = vadd.f32 %v8368, %v8378
      %v8406 = vadd.f32 %v8369, %v8378
      %v8407 = vadd.f32 %v8370, %v8378
      %v8408 = vadd.f32 %v8371, %v8378
      %v8409 = vadd.f32 %v8372, %v8378
      %v8410 = vadd.f32 %v8373, %v8378
      %v8411 = vmax.f32 %v8379, 0.0
      %v8412 = vmax.f32 %v8380, 0.0
      %v8413 = vmax.f32 %v8381, 0.0
      %v8414 = vmax.f32 %v8382, 0.0
      %v8415 = vmax.f32 %v8383, 0.0
      %v8416 = vmax.f32 %v8384, 0.0
      %v8417 = vmax.f32 %v8385, 0.0
      %v8418 = vmax.f32 %v8386, 0.0
      %v8419 = vmax.f32 %v8387, 0.0
      %v8420 = vmax.f32 %v8388, 0.0
      %v8421 = vmax.f32 %v8389, 0.0
      %v8422 = vmax.f32 %v8390, 0.0
      %v8423 = vmax.f32 %v8391, 0.0
      %v8424 = vmax.f32 %v8392, 0.0
      %v8425 = vmax.f32 %v8393, 0.0
      %v8426 = vmax.f32 %v8394, 0.0
      %v8427 = vmax.f32 %v8395, 0.0
      %v8428 = vmax.f32 %v8396, 0.0
      %v8429 = vmax.f32 %v8397, 0.0
      %v8430 = vmax.f32 %v8398, 0.0
      %v8431 = vmax.f32 %v8399, 0.0
      %v8432 = vmax.f32 %v8400, 0.0
      %v8433 = vmax.f32 %v8401, 0.0
      %v8434 = vmax.f32 %v8402, 0.0
      %v8435 = vmax.f32 %v8403, 0.0
      %v8436 = vmax.f32 %v8404, 0.0
      %v8437 = vmax.f32 %v8405, 0.0
      %v8438 = vmax.f32 %v8406, 0.0
      %v8439 = vmax.f32 %v8407, 0.0
      %v8440 = vmax.f32 %v8408, 0.0
      %v8441 = vmax.f32 %v8409, 0.0
      %v8442 = vmax.f32 %v8410, 0.0
      %v8443 = vpack.c.bf16 %v8412, %v8411
      %v8444 = vpack.c.bf16 %v8414, %v8413
      %v8445 = vpack.c.bf16 %v8416, %v8415
      %v8446 = vpack.c.bf16 %v8418, %v8417
      %v8447 = vpack.c.bf16 %v8420, %v8419
      %v8448 = vpack.c.bf16 %v8422, %v8421
      %v8449 = vpack.c.bf16 %v8424, %v8423
      %v8450 = vpack.c.bf16 %v8426, %v8425
      %v8451 = vpack.c.bf16 %v8428, %v8427
      %v8452 = vpack.c.bf16 %v8430, %v8429
      %v8453 = vpack.c.bf16 %v8432, %v8431
      %v8454 = vpack.c.bf16 %v8434, %v8433
      %v8455 = vpack.c.bf16 %v8436, %v8435
      %v8456 = vpack.c.bf16 %v8438, %v8437
      %v8457 = vpack.c.bf16 %v8440, %v8439
      %v8458 = vpack.c.bf16 %v8442, %v8441
      %v8459 = vld [vmem:[%s9] sm:$0xf]
      %v8460 = vld [vmem:[%s9 + $0x4] sm:$0xf]
      %v8461 = vld [vmem:[%s9 + $0x8] sm:$0xf]
      %v8462 = vld [vmem:[%s9 + $0xc] sm:$0xf]
      %v8463 = vld [vmem:[%s9 + $0x10] sm:$0xf]
      %v8464 = vld [vmem:[%s9 + $0x14] sm:$0xf]
      %v8465 = vld [vmem:[%s10] sm:$0x1]
      %v8467 = vlaneseq
      %v8468 = vshrl.u32 %v8467, 7
      %v8469 = vsub.s32 0, %v8468
      %v8470 = vrot.slane %v8465, %v8469
      %v8478 = vunpack.c.l.b16 %v8459
      %v8479 = vunpack.c.l.b16 %v8460
      %v8480 = vunpack.c.l.b16 %v8461
      %v8481 = vunpack.c.l.b16 %v8462
      %v8482 = vunpack.c.l.b16 %v8463
      %v8483 = vunpack.c.l.b16 %v8464
      %v8484 = vpack.c.b16 %v8479, %v8478
      %v8485 = vpack.c.b16 %v8481, %v8480
      %v8486 = vpack.c.b16 %v8483, %v8482
      %v8491 = vsel %vm7144, %v8443, 0
      %v8494 = vsel %vm7144, %v8444, 0
      %v8497 = vsel %vm7144, %v8445, 0
      %v8500 = vsel %vm7144, %v8446, 0
      %v8503 = vsel %vm7144, %v8447, 0
      %v8506 = vsel %vm7144, %v8448, 0
      %v8509 = vsel %vm7144, %v8449, 0
      %v8512 = vsel %vm7144, %v8450, 0
      %v8515 = vsel %vm7144, %v8451, 0
      %v8518 = vsel %vm7144, %v8452, 0
      %v8521 = vsel %vm7144, %v8453, 0
      %v8524 = vsel %vm7144, %v8454, 0
      %v8527 = vsel %vm7144, %v8455, 0
      %v8530 = vsel %vm7144, %v8456, 0
      %v8533 = vsel %vm7144, %v8457, 0
      %v8536 = vsel %vm7144, %v8458, 0
      %8538 = vmatprep.subr.bf16.mxu0 0
      %8539 = vmatpush1.bf16.msra.mxu0 %v8484
      %8540 = vmatprep.subr.bf16.mxu0 0
      %8541 = vmatpush1.bf16.msra.mxu0 %v8485
      %8542 = vmatprep.subr.bf16.mxu0 0
      %8543 = vmatpush1.bf16.msra.mxu0 %v8486
      %8544 = vmatprep.subr.bf16.mxu0 0
      %8545 = vmatpush1.bf16.msra.mxu0 0
      %8546 = vmatprep.subr.bf16.mxu0 0
      %8547 = vmatpush1.bf16.msra.mxu0 0
      %8548 = vmatprep.subr.bf16.mxu0 0
      %8549 = vmatpush1.bf16.msra.mxu0 0
      %8550 = vmatprep.subr.bf16.mxu0 0
      %8551 = vmatpush1.bf16.msra.mxu0 0
      %8552 = vmatprep.subr.bf16.mxu0 0
      %8553 = vmatpush1.bf16.msra.mxu0 0
      %8554 = vmatprep.subr.bf16.mxu0 0
      %8555 = vmatpush1.bf16.msra.mxu0 0
      %8556 = vmatprep.subr.bf16.mxu0 0
      %8557 = vmatpush1.bf16.msra.mxu0 0
      %8558 = vmatprep.subr.bf16.mxu0 0
      %8559 = vmatpush1.bf16.msra.mxu0 0
      %8560 = vmatprep.subr.bf16.mxu0 0
      %8561 = vmatpush1.bf16.msra.mxu0 0
      %8562 = vmatprep.subr.bf16.mxu0 0
      %8563 = vmatpush1.bf16.msra.mxu0 0
      %8564 = vmatprep.subr.bf16.mxu0 0
      %8565 = vmatpush1.bf16.msra.mxu0 0
      %8566 = vmatprep.subr.bf16.mxu0 0
      %8567 = vmatpush1.bf16.msra.mxu0 0
      %8568 = vmatprep.subr.bf16.mxu0 0
      %8569 = vmatpush1.bf16.msra.mxu0 0
      %8570 = vmatprep.mubr.bf16.mxu0 0
      %8571 = vmatmul.mubr.bf16.gmra.mrb[0].mxu0 %v8491
      %v8572 = vpop.f32.mrb[0].mxu0
      %v8573 = vadd.f32 %v8470, %v8572
      %v8574 = vpop.f32.mrb[0].mxu0
      %v8575 = vpop.f32.mrb[0].mxu0
      %v8576 = vadd.f32 %v8470, %v8575
      %v8577 = vpop.f32.mrb[0].mxu0
      %8578 = vmatprep.mubr.bf16.mxu0 0
      %8579 = vmatmul.mubr.bf16.gmra.mrb[0].mxu0 %v8494
      %v8580 = vpop.f32.mrb[0].mxu0
      %v8581 = vadd.f32 %v8470, %v8580
      %v8582 = vpop.f32.mrb[0].mxu0
      %v8583 = vpop.f32.mrb[0].mxu0
      %v8584 = vadd.f32 %v8470, %v8583
      %v8585 = vpop.f32.mrb[0].mxu0
      %8586 = vmatprep.mubr.bf16.mxu0 0
      %8587 = vmatmul.mubr.bf16.gmra.mrb[0].mxu0 %v8497
      %v8588 = vpop.f32.mrb[0].mxu0
      %v8589 = vadd.f32 %v8470, %v8588
      %v8590 = vpop.f32.mrb[0].mxu0
      %v8591 = vpop.f32.mrb[0].mxu0
      %v8592 = vadd.f32 %v8470, %v8591
      %v8593 = vpop.f32.mrb[0].mxu0
      %8594 = vmatprep.mubr.bf16.mxu0 0
      %8595 = vmatmul.mubr.bf16.gmra.mrb[0].mxu0 %v8500
      %v8596 = vpop.f32.mrb[0].mxu0
      %v8597 = vadd.f32 %v8470, %v8596
      %v8598 = vpop.f32.mrb[0].mxu0
      %v8599 = vpop.f32.mrb[0].mxu0
      %v8600 = vadd.f32 %v8470, %v8599
      %v8601 = vpop.f32.mrb[0].mxu0
      %8602 = vmatprep.mubr.bf16.mxu0 0
      %8603 = vmatmul.mubr.bf16.gmra.mrb[0].mxu0 %v8503
      %v8604 = vpop.f32.mrb[0].mxu0
      %v8605 = vadd.f32 %v8470, %v8604
      %v8606 = vpop.f32.mrb[0].mxu0
      %v8607 = vpop.f32.mrb[0].mxu0
      %v8608 = vadd.f32 %v8470, %v8607
      %v8609 = vpop.f32.mrb[0].mxu0
      %8610 = vmatprep.mubr.bf16.mxu0 0
      %8611 = vmatmul.mubr.bf16.gmra.mrb[0].mxu0 %v8506
      %v8612 = vpop.f32.mrb[0].mxu0
      %v8613 = vadd.f32 %v8470, %v8612
      %v8614 = vpop.f32.mrb[0].mxu0
      %v8615 = vpop.f32.mrb[0].mxu0
      %v8616 = vadd.f32 %v8470, %v8615
      %v8617 = vpop.f32.mrb[0].mxu0
      %8618 = vmatprep.mubr.bf16.mxu0 0
      %8619 = vmatmul.mubr.bf16.gmra.mrb[0].mxu0 %v8509
      %v8620 = vpop.f32.mrb[0].mxu0
      %v8621 = vadd.f32 %v8470, %v8620
      %v8622 = vpop.f32.mrb[0].mxu0
      %v8623 = vpop.f32.mrb[0].mxu0
      %v8624 = vadd.f32 %v8470, %v8623
      %v8625 = vpop.f32.mrb[0].mxu0
      %8626 = vmatprep.mubr.bf16.mxu0 0
      %8627 = vmatmul.mubr.bf16.gmra.mrb[0].mxu0 %v8512
      %v8628 = vpop.f32.mrb[0].mxu0
      %v8629 = vadd.f32 %v8470, %v8628
      %v8630 = vpop.f32.mrb[0].mxu0
      %v8631 = vpop.f32.mrb[0].mxu0
      %v8632 = vadd.f32 %v8470, %v8631
      %v8633 = vpop.f32.mrb[0].mxu0
      %8634 = vmatprep.mubr.bf16.mxu0 0
      %8635 = vmatmul.mubr.bf16.gmra.mrb[0].mxu0 %v8515
      %v8636 = vpop.f32.mrb[0].mxu0
      %v8637 = vadd.f32 %v8470, %v8636
      %v8638 = vpop.f32.mrb[0].mxu0
      %v8639 = vpop.f32.mrb[0].mxu0
      %v8640 = vadd.f32 %v8470, %v8639
      %v8641 = vpop.f32.mrb[0].mxu0
      %8642 = vmatprep.mubr.bf16.mxu0 0
      %8643 = vmatmul.mubr.bf16.gmra.mrb[0].mxu0 %v8518
      %v8644 = vpop.f32.mrb[0].mxu0
      %v8645 = vadd.f32 %v8470, %v8644
      %v8646 = vpop.f32.mrb[0].mxu0
      %v8647 = vpop.f32.mrb[0].mxu0
      %v8648 = vadd.f32 %v8470, %v8647
      %v8649 = vpop.f32.mrb[0].mxu0
      %8650 = vmatprep.mubr.bf16.mxu0 0
      %8651 = vmatmul.mubr.bf16.gmra.mrb[0].mxu0 %v8521
      %v8652 = vpop.f32.mrb[0].mxu0
      %v8653 = vadd.f32 %v8470, %v8652
      %v8654 = vpop.f32.mrb[0].mxu0
      %v8655 = vpop.f32.mrb[0].mxu0
      %v8656 = vadd.f32 %v8470, %v8655
      %v8657 = vpop.f32.mrb[0].mxu0
      %8658 = vmatprep.mubr.bf16.mxu0 0
      %8659 = vmatmul.mubr.bf16.gmra.mrb[0].mxu0 %v8524
      %v8660 = vpop.f32.mrb[0].mxu0
      %v8661 = vadd.f32 %v8470, %v8660
      %v8662 = vpop.f32.mrb[0].mxu0
      %v8663 = vpop.f32.mrb[0].mxu0
      %v8664 = vadd.f32 %v8470, %v8663
      %v8665 = vpop.f32.mrb[0].mxu0
      %8666 = vmatprep.mubr.bf16.mxu0 0
      %8667 = vmatmul.mubr.bf16.gmra.mrb[0].mxu0 %v8527
      %v8668 = vpop.f32.mrb[0].mxu0
      %v8669 = vadd.f32 %v8470, %v8668
      %v8670 = vpop.f32.mrb[0].mxu0
      %v8671 = vpop.f32.mrb[0].mxu0
      %v8672 = vadd.f32 %v8470, %v8671
      %v8673 = vpop.f32.mrb[0].mxu0
      %8674 = vmatprep.mubr.bf16.mxu0 0
      %8675 = vmatmul.mubr.bf16.gmra.mrb[0].mxu0 %v8530
      %v8676 = vpop.f32.mrb[0].mxu0
      %v8677 = vadd.f32 %v8470, %v8676
      %v8678 = vpop.f32.mrb[0].mxu0
      %v8679 = vpop.f32.mrb[0].mxu0
      %v8680 = vadd.f32 %v8470, %v8679
      %v8681 = vpop.f32.mrb[0].mxu0
      %8682 = vmatprep.mubr.bf16.mxu0 0
      %8683 = vmatmul.mubr.bf16.gmra.mrb[0].mxu0 %v8533
      %v8684 = vpop.f32.mrb[0].mxu0
      %v8685 = vadd.f32 %v8470, %v8684
      %v8686 = vpop.f32.mrb[0].mxu0
      %v8687 = vpop.f32.mrb[0].mxu0
      %v8688 = vadd.f32 %v8470, %v8687
      %v8689 = vpop.f32.mrb[0].mxu0
      %8690 = vmatprep.mubr.bf16.mxu0 0
      %8691 = vmatmul.mubr.bf16.gmra.mrb[0].mxu0 %v8536
      %v8692 = vpop.f32.mrb[0].mxu0
      %v8693 = vadd.f32 %v8470, %v8692
      %v8694 = vpop.f32.mrb[0].mxu0
      %v8695 = vpop.f32.mrb[0].mxu0
      %v8696 = vadd.f32 %v8470, %v8695
      %v8697 = vpop.f32.mrb[0].mxu0
      %8698 = vdwg.mxu0
      %8699 = vst [vmem:[%s386] sm:$0xff] %v8573
      %8700 = vst [vmem:[%s386 + $0x8] sm:$0xff] %v8576
      %8701 = vst [vmem:[%s386 + $0x10] sm:$0xff] %v8581
      %8702 = vst [vmem:[%s386 + $0x18] sm:$0xff] %v8584
      %8703 = vst [vmem:[%s386 + $0x20] sm:$0xff] %v8589
      %8704 = vst [vmem:[%s386 + $0x28] sm:$0xff] %v8592
      %8705 = vst [vmem:[%s386 + $0x30] sm:$0xff] %v8597
      %8706 = vst [vmem:[%s386 + $0x38] sm:$0xff] %v8600
      %8707 = vst [vmem:[%s386 + $0x40] sm:$0xff] %v8605
      %8708 = vst [vmem:[%s386 + $0x48] sm:$0xff] %v8608
      %8709 = vst [vmem:[%s386 + $0x50] sm:$0xff] %v8613
      %8710 = vst [vmem:[%s386 + $0x58] sm:$0xff] %v8616
      %8711 = vst [vmem:[%s386 + $0x60] sm:$0xff] %v8621
      %8712 = vst [vmem:[%s386 + $0x68] sm:$0xff] %v8624
      %8713 = vst [vmem:[%s386 + $0x70] sm:$0xff] %v8629
      %8714 = vst [vmem:[%s386 + $0x78] sm:$0xff] %v8632
      %8715 = vst [vmem:[%s386 + $0x80] sm:$0xff] %v8637
      %8716 = vst [vmem:[%s386 + $0x88] sm:$0xff] %v8640
      %8717 = vst [vmem:[%s386 + $0x90] sm:$0xff] %v8645
      %8718 = vst [vmem:[%s386 + $0x98] sm:$0xff] %v8648
      %8719 = vst [vmem:[%s386 + $0xa0] sm:$0xff] %v8653
      %8720 = vst [vmem:[%s386 + $0xa8] sm:$0xff] %v8656
      %8721 = vst [vmem:[%s386 + $0xb0] sm:$0xff] %v8661
      %8722 = vst [vmem:[%s386 + $0xb8] sm:$0xff] %v8664
      %8723 = vst [vmem:[%s386 + $0xc0] sm:$0xff] %v8669
      %8724 = vst [vmem:[%s386 + $0xc8] sm:$0xff] %v8672
      %8725 = vst [vmem:[%s386 + $0xd0] sm:$0xff] %v8677
      %8726 = vst [vmem:[%s386 + $0xd8] sm:$0xff] %v8680
      %8727 = vst [vmem:[%s386 + $0xe0] sm:$0xff] %v8685
      %8728 = vst [vmem:[%s386 + $0xe8] sm:$0xff] %v8688
      %8729 = vst [vmem:[%s386 + $0xf0] sm:$0xff] %v8693
      %8730 = vst [vmem:[%s386 + $0xf8] sm:$0xff] %v8696
      %p8731 = scmp.lt.s32.totalorder %s22, 1
      %s8732 = scalar_select %p8731, %s22, 1
      %s8733 = smul.addr %s8732, 32
      %s8734 = smul.addr %s8733, 8
      %s8735 = scalar_lea.vmem %s11, %s8734
      // Predicated region
      $region65: #{decoder_forward.1} parent=63 // pred_check
        %p8736 = pneg %p276
      $region66: #{decoder_forward.1} parent=63 // pred_check_branch
        %8738 = sbr.rel (%p8736) target = $region68
      $region67: #{decoder_forward.1} parent=63 // pred_region
        _
      $region68: #{decoder_forward.1} parent=63 // pred_fallthru
        _
    $region64: #{decoder_forward.1} parent=5 // pred_fallthru
      _
    %p8739 = scmp.le.s32.totalorder 2, %s17
    // Predicated region
    $region69: #{decoder_forward.1} parent=5 // pred_check
      %p8740 = pneg %p8739
    $region70: #{decoder_forward.1} parent=5 // pred_check_branch
      %8742 = sbr.rel (%p8740) target = $region72
    $region71: #{decoder_forward.1} parent=5 // pred_region
      %s8743 = ssub.s32 %s17, 2
      // Predicated region
      $region73: #{decoder_forward.1} parent=71 // pred_check
        %p8744 = pneg %p282
      $region74: #{decoder_forward.1} parent=71 // pred_check_branch
        %8746 = sbr.rel (%p8744) target = $region76
      $region75: #{decoder_forward.1} parent=71 // pred_region
        %p8747 = scmp.lt.s32.totalorder %s23, 1
        %s8748 = scalar_select %p8747, %s23, 1
        %s8749 = smul.addr %s8748, 32
        %s8750 = smul.addr %s8749, 8
        %s8751 = scalar_lea.vmem %s11, %s8750
      $region76: #{decoder_forward.1} parent=71 // pred_fallthru
        _
    $region72: #{decoder_forward.1} parent=5 // pred_fallthru
      _
  $region6: #{decoder_forward.1} parent=0 // loop_footer
    %s21 = sadd.s32 1, %s17
  $region7: #{decoder_forward.1} parent=0 // loop_footer_branch
    %16 = sbr.rel target = $region3
  $region8: #{decoder_forward.1} parent=0 // loop_exit
    _

</llo_original>
